<compile_context>
chip_gen: v7x
topology: tpu7x:2x2x1
jax: 0.10.0
libtpu: 0.0.40
codegen_flags: <defaults>
</compile_context>

<pallas_src>
import functools

import numpy as np

import jax
import jax.numpy as jnp
from jax.experimental import pallas as pl
from jax.experimental.pallas import tpu as pltpu


# ------------------------------ Pallas kernel -------------------------------

def _forward_kernel(num_conv, *refs):
    """Whole ModelConvolutional forward for one batch tile.

    Ref order:
      refs[0]                  x tile (1, H*bt, W)                     bf16
      refs[1+2l], refs[2+2l]   conv banded weight (kh, Wi*Ci, Wo*Co)   bf16,
                               conv bias row      (1, Wo*Co)           f32
      then: fc_w (S, hidden, S*C) bf16, fc_b (1, hidden) f32,
            out_w (hidden, n_cls) bf16, out_b (1, n_cls) f32,
            mask (bt, hidden) f32  (pre-scaled inverted-dropout mask)
      next                     o_ref (bt, n_cls) f32                   [output]
      rest                     per-conv-layer activation scratch
                               (H_l*bt, W_l*C) bf16 in VMEM            [scratch]
    """
    x_ref = refs[0]
    conv_w = [refs[1 + 2 * l] for l in range(num_conv)]
    conv_b = [refs[2 + 2 * l] for l in range(num_conv)]
    base = 1 + 2 * num_conv
    wfc_ref, bfc_ref, wout_ref, bout_ref, mask_ref, o_ref = refs[base:base + 6]
    act_refs = refs[base + 6:]

    bt = o_ref.shape[0]

    def rows(ref, start_row, n_rows):
        # (n_rows*bt, features) slice.  start/size are static multiples of bt
        # (bt % 8 == 0), so the slice is sublane-aligned and layout-free.
        if len(ref.shape) == 3:          # the (1, H*bt, W) input block
            return ref[0, start_row * bt:(start_row + n_rows) * bt, :]
        return ref[start_row * bt:(start_row + n_rows) * bt, :]

    # ---- conv stack: each layer = kh large matmuls (one per vertical tap) ---
    src = x_ref
    for l in range(num_conv):
        w_l, b_l, dst = conv_w[l], conv_b[l], act_refs[l]
        kh = w_l.shape[0]
        h_out = dst.shape[0] // bt
        acc = jnp.dot(rows(src, 0, h_out), w_l[0],
                      preferred_element_type=jnp.float32)
        for i in range(1, kh):
            acc = acc + jnp.dot(rows(src, i, h_out), w_l[i],
                                preferred_element_type=jnp.float32)
        dst[...] = jnp.maximum(acc + b_l[...], 0.0).astype(dst.dtype)
        src = dst

    # ---- fc layer: statically unrolled per-row accumulation -----------------
    n_rows_fc = wfc_ref.shape[0]              # = S (height of last conv)
    hidden = wfc_ref.shape[1]
    contract_last = (((1,), (1,)), ((), ()))  # row @ w_h.T  (lane-dense fc_w)
    hacc = jnp.zeros((bt, hidden), jnp.float32)
    for h in range(n_rows_fc):
        hacc = hacc + jax.lax.dot_general(
            rows(src, h, 1), wfc_ref[h], contract_last,
            preferred_element_type=jnp.float32)

    hvec = jnp.maximum(hacc + bfc_ref[...], 0.0)
    hvec = hvec * mask_ref[...]               # inverted dropout (1/keep or 0)

    # ---- output layer + log_softmax(dim=1) ----------------------------------
    # (last dim 10 < 128 lanes -> masked store; negligible at these tile sizes)
    logits = jnp.dot(hvec.astype(wout_ref.dtype), wout_ref[...],
                     preferred_element_type=jnp.float32) + bout_ref[...]
    m = jnp.max(logits, axis=-1, keepdims=True)
    s = logits - m
    lse = jnp.log(jnp.sum(jnp.exp(s), axis=-1, keepdims=True))
    o_ref[...] = (s - lse).astype(o_ref.dtype)


# --------------------------- parameters (host side) -------------------------

def init_params(key, num_hidden=1, fc_hidden_size=32, num_filters=16,
                filter_size=3, output_size=10):
    """Random parameters in the PyTorch module's native layouts."""
    assert num_hidden > 0
    n_conv = num_hidden + 1
    keys = list(jax.random.split(key, 2 * n_conv + 4))
    kit = iter(keys)
    params = {"conv_w": [], "conv_b": []}
    cin = 1
    for _ in range(n_conv):
        params["conv_w"].append(0.05 * jax.random.normal(
            next(kit), (num_filters, cin, filter_size, filter_size),
            jnp.float32))
        params["conv_b"].append(0.05 * jax.random.normal(
            next(kit), (num_filters,), jnp.float32))
        cin = num_filters
    size_after = 28 - (filter_size - 1) * n_conv
    fc_in = size_after * size_after * num_filters
    params["fc_w"] = 0.02 * jax.random.normal(
        next(kit), (fc_hidden_size, fc_in), jnp.float32)
    params["fc_b"] = 0.02 * jax.random.normal(
        next(kit), (fc_hidden_size,), jnp.float32)
    params["out_w"] = 0.1 * jax.random.normal(
        next(kit), (output_size, fc_hidden_size), jnp.float32)
    params["out_b"] = 0.1 * jax.random.normal(
        next(kit), (output_size,), jnp.float32)
    return params


def prepare_params(params, input_size=(28, 28)):
    """One-time host-side repack of PyTorch-layout weights into kernel layouts.

    * Conv (cout, cin, kh, kw) -> banded (kh, W_in*cin, W_out*cout) bf16:
      column (wo*cout + co), row ((wo+j)*cin + ci) holds W[co, ci, i, j], so
      one dense matmul per vertical tap produces all output rows at once.
    * Conv bias (cout,) -> f32 (1, W_out*cout) row.
    * fc weight (hidden, C*S*S) with PyTorch NCHW flatten order
      (c*S*S + h*S + w) -> lane-dense (S, hidden, S*C) bf16, indexed by
      activation row h and the kernel's per-row feature order (w*C + c): the
      flatten transpose is folded into the weight.
    """
    n_conv = len(params["conv_w"])
    h_in, w_in = input_size
    c_in = 1
    conv_banded, conv_bias_rows = [], []
    for l in range(n_conv):
        w = np.asarray(params["conv_w"][l], np.float32)
        b = np.asarray(params["conv_b"][l], np.float32)
        cout, cin, kh, kw = w.shape
        assert cin == c_in
        w_out = w_in - kw + 1
        banded = np.zeros((kh, w_in * cin, w_out * cout), np.float32)
        for i in range(kh):
            for j in range(kw):
                blk = w[:, :, i, j].T                    # (cin, cout)
                for wo in range(w_out):
                    banded[i,
                           (wo + j) * cin:(wo + j + 1) * cin,
                           wo * cout:(wo + 1) * cout] = blk
        conv_banded.append(jnp.asarray(banded, jnp.bfloat16))
        conv_bias_rows.append(
            jnp.asarray(np.tile(b, w_out)[None, :], jnp.float32))
        w_in, c_in = w_out, cout
        h_in = h_in - kh + 1

    S, C = h_in, c_in
    assert S == w_in
    fcw = np.asarray(params["fc_w"], np.float32)         # (hidden, C*S*S)
    hidden = fcw.shape[0]
    assert fcw.shape[1] == C * S * S
    # gather index [h, w, c] -> PyTorch flat index c*S*S + h*S + w
    src = (np.arange(C)[None, None, :] * (S * S)
           + np.arange(S)[:, None, None] * S
           + np.arange(S)[None, :, None])                # (h, w, c)
    wfc = fcw[:, src.reshape(-1)].reshape(hidden, S, S * C)   # (hidden, h, w*C+c)
    wfc = np.ascontiguousarray(wfc.transpose(1, 0, 2))        # (S, hidden, S*C)

    return {
        "conv_w": conv_banded,
        "conv_b": conv_bias_rows,
        "fc_w": jnp.asarray(wfc, jnp.bfloat16),
        "fc_b": jnp.asarray(np.asarray(params["fc_b"], np.float32)[None, :]),
        "out_w": jnp.asarray(np.asarray(params["out_w"], np.float32).T,
                             jnp.bfloat16),
        "out_b": jnp.asarray(np.asarray(params["out_b"], np.float32)[None, :]),
        "input_size": input_size,
    }


# ------------------------------- forward pass --------------------------------

def _round_up(n, m):
    return ((n + m - 1) // m) * m


def _choose_batch_tile(batch, max_tile=128):
    """Multiple-of-8 tile, <= max_tile; avoids excess padding for tiny batches
    and yields >=2 grid steps for larger batches (v7x has 2 TensorCores)."""
    if batch <= max_tile:
        return max(8, _round_up(batch, 8))
    return min(max_tile, _round_up((batch + 1) // 2, 8))


def model_forward(prepared, inputs, dropout_rate=0.5, seed=0, batch_tile=None):
    conv_ws, conv_bs = prepared["conv_w"], prepared["conv_b"]
    n_conv = len(conv_ws)
    h_img, w_img = prepared["input_size"]
    fc_hidden = prepared["fc_b"].shape[1]
    out_dim = prepared["out_w"].shape[1]

    x = inputs.reshape(-1, 1, h_img, w_img).astype(jnp.float32)[:, 0]  # (B,H,W)
    B = x.shape[0]
    bt = int(batch_tile) if batch_tile is not None else _choose_batch_tile(B)
    assert bt % 8 == 0
    num_tiles = -(-B // bt)
    Bp = num_tiles * bt
    if Bp != B:
        x = jnp.pad(x, ((0, Bp - B), (0, 0), (0, 0)))
    # Tile-major 2-D layout: row (h*bt + b) of tile m is image row h of batch
    # element m*bt + b.  Cast to bf16 (MXU operand, halves DMA/VMEM).
    x_tiled = (x.reshape(num_tiles, bt, h_img, w_img)
                .transpose(0, 2, 1, 3)
                .reshape(num_tiles, h_img * bt, w_img)
                .astype(jnp.bfloat16))

    # conv output geometry from the banded weights
    heights, lane_widths = [], []
    h_cur = h_img
    for l in range(n_conv):
        h_cur = h_cur - (conv_ws[l].shape[0] - 1)
        heights.append(h_cur)
        lane_widths.append(conv_ws[l].shape[2])          # W_out * C_out

    # Host-side inverted-dropout mask (tiny: (Bp, 32) f32), pre-scaled.
    # TODO(synk): not bit-identical to torch.nn.functional.dropout's RNG.
    keep_prob = 1.0 - float(dropout_rate)
    if keep_prob >= 1.0:
        mask = jnp.ones((Bp, fc_hidden), jnp.float32)
    elif keep_prob <= 0.0:
        mask = jnp.zeros((Bp, fc_hidden), jnp.float32)
    else:
        keep = jax.random.bernoulli(jax.random.PRNGKey(seed), keep_prob,
                                    (Bp, fc_hidden))
        mask = keep.astype(jnp.float32) * (1.0 / keep_prob)

    def _const(rank):
        idx = (0,) * rank
        return lambda m: idx

    in_specs = [pl.BlockSpec((1, h_img * bt, w_img), lambda m: (m, 0, 0))]
    inputs_list = [x_tiled]
    for l in range(n_conv):
        in_specs.append(pl.BlockSpec(conv_ws[l].shape, _const(3)))
        in_specs.append(pl.BlockSpec(conv_bs[l].shape, _const(2)))
        inputs_list += [conv_ws[l], conv_bs[l]]
    in_specs += [
        pl.BlockSpec(prepared["fc_w"].shape, _const(3)),
        pl.BlockSpec(prepared["fc_b"].shape, _const(2)),
        pl.BlockSpec(prepared["out_w"].shape, _const(2)),
        pl.BlockSpec(prepared["out_b"].shape, _const(2)),
        pl.BlockSpec((bt, fc_hidden), lambda m: (m, 0)),
    ]
    inputs_list += [prepared["fc_w"], prepared["fc_b"],
                    prepared["out_w"], prepared["out_b"], mask]

    scratch_shapes = [
        pltpu.VMEM((heights[l] * bt, lane_widths[l]), jnp.bfloat16)
        for l in range(n_conv)
    ]

    out = pl.pallas_call(
        functools.partial(_forward_kernel, n_conv),
        out_shape=jax.ShapeDtypeStruct((Bp, out_dim), jnp.float32),
        grid=(num_tiles,),
        in_specs=in_specs,
        out_specs=pl.BlockSpec((bt, out_dim), lambda m: (m, 0)),
        scratch_shapes=scratch_shapes,
        compiler_params=pltpu.CompilerParams(
            dimension_semantics=("parallel",),
            vmem_limit_bytes=48 * 1024 * 1024,
        ),
    )(*inputs_list)
    return out[:B]


# --------------------------- pure-JAX reference ------------------------------

def reference_forward(params, inputs):
    """Non-Pallas f32 reference (dropout disabled)."""
    x = inputs.reshape(-1, 1, 28, 28).astype(jnp.float32)
    for w, b in zip(params["conv_w"], params["conv_b"]):
        x = jax.lax.conv_general_dilated(
            x, w, window_strides=(1, 1), padding="VALID",
            dimension_numbers=("NCHW", "OIHW", "NCHW"),
            precision=jax.lax.Precision.HIGHEST)
        x = jax.nn.relu(x + b.reshape(1, -1, 1, 1))
    feat = x.reshape(x.shape[0], -1)
    h = jax.nn.relu(
        jnp.dot(feat, params["fc_w"].T,
                precision=jax.lax.Precision.HIGHEST) + params["fc_b"])
    logits = jnp.dot(h, params["out_w"].T,
                     precision=jax.lax.Precision.HIGHEST) + params["out_b"]
    return jax.nn.log_softmax(logits, axis=1)


if __name__ == "__main__":
    key = jax.random.PRNGKey(0)
    pkey, xkey = jax.random.split(key)

    params = init_params(pkey)          # PyTorch-layout parameters
    prepared = prepare_params(params)   # kernel-layout (banded / permuted, bf16)

    x = jax.random.normal(xkey, (2, 1, 28, 28), jnp.float32)

    # 1) dropout disabled -> must match the pure-JAX f32 reference
    #    (bf16 MXU operands in the kernel => slightly loose tolerance)
    out_eval = jax.block_until_ready(
        model_forward(prepared, x, dropout_rate=0.0))
    ref = jax.block_until_ready(reference_forward(params, x))
    assert out_eval.shape == (2, 10), out_eval.shape
    max_err = float(jnp.max(jnp.abs(out_eval - ref)))
    assert max_err < 3e-2, f"mismatch vs reference: max|diff|={max_err}"

    # 2) dropout enabled (training-mode forward, as F.dropout defaults to)
    out_train = jax.block_until_ready(
        model_forward(prepared, x, dropout_rate=0.5, seed=123))
    assert out_train.shape == (2, 10), out_train.shape
    row_sums = jnp.exp(out_train).sum(axis=1)
    assert bool(jnp.all(jnp.abs(row_sums - 1.0) < 1e-3)), row_sums

    print("KERNEL_OK")
</pallas_src>

<mosaic_0001>
module attributes {stable_mosaic.version = 11 : i64} {
  func.func @_forward_kernel(%arg0: i32, %arg1: memref<1x224x28xbf16, #tpu.memory_space<vmem>>, %arg2: memref<3x28x416xbf16, #tpu.memory_space<vmem>>, %arg3: memref<1x416xf32, #tpu.memory_space<vmem>>, %arg4: memref<3x416x384xbf16, #tpu.memory_space<vmem>>, %arg5: memref<1x384xf32, #tpu.memory_space<vmem>>, %arg6: memref<24x32x384xbf16, #tpu.memory_space<vmem>>, %arg7: memref<1x32xf32, #tpu.memory_space<vmem>>, %arg8: memref<32x10xbf16, #tpu.memory_space<vmem>>, %arg9: memref<1x10xf32, #tpu.memory_space<vmem>>, %arg10: memref<8x32xf32, #tpu.memory_space<vmem>>, %arg11: memref<8x10xf32, #tpu.memory_space<vmem>>, %arg12: memref<208x416xbf16, #tpu.memory_space<vmem>>, %arg13: memref<192x384xbf16, #tpu.memory_space<vmem>>) attributes {dimension_semantics = [#tpu.dimension_semantics<parallel>], iteration_bounds = array<i64: 1>, scalar_prefetch = 0 : i64, scratch_operands = 2 : i64, tpu.core_type = #tpu.core_type<tc>, window_params = [{transform_indices = @transform_0, window_bounds = array<i64: 1, 224, 28>}, {pipeline_mode = #tpu.pipeline_mode<synchronous>, transform_indices = @transform_1, window_bounds = array<i64: 3, 28, 416>}, {pipeline_mode = #tpu.pipeline_mode<synchronous>, transform_indices = @transform_2, window_bounds = array<i64: 1, 416>}, {pipeline_mode = #tpu.pipeline_mode<synchronous>, transform_indices = @transform_3, window_bounds = array<i64: 3, 416, 384>}, {pipeline_mode = #tpu.pipeline_mode<synchronous>, transform_indices = @transform_4, window_bounds = array<i64: 1, 384>}, {pipeline_mode = #tpu.pipeline_mode<synchronous>, transform_indices = @transform_5, window_bounds = array<i64: 24, 32, 384>}, {pipeline_mode = #tpu.pipeline_mode<synchronous>, transform_indices = @transform_6, window_bounds = array<i64: 1, 32>}, {pipeline_mode = #tpu.pipeline_mode<synchronous>, transform_indices = @transform_7, window_bounds = array<i64: 32, 10>}, {pipeline_mode = #tpu.pipeline_mode<synchronous>, transform_indices = @transform_8, window_bounds = array<i64: 1, 10>}, {transform_indices = @transform_9, window_bounds = array<i64: 8, 32>}, {transform_indices = @transform_10, window_bounds = array<i64: 8, 10>}]} {
    %c0 = arith.constant 0 : index
    %c0_0 = arith.constant 0 : index
    %c0_1 = arith.constant 0 : index
    %0 = vector.load %arg1[%c0, %c0_0, %c0_1] : memref<1x224x28xbf16, #tpu.memory_space<vmem>>, vector<1x208x28xbf16>
    %1 = vector.shape_cast %0 : vector<1x208x28xbf16> to vector<208x28xbf16>
    %c0_2 = arith.constant 0 : index
    %c0_3 = arith.constant 0 : index
    %c0_4 = arith.constant 0 : index
    %2 = vector.load %arg2[%c0_2, %c0_3, %c0_4] : memref<3x28x416xbf16, #tpu.memory_space<vmem>>, vector<1x28x416xbf16>
    %3 = vector.shape_cast %2 : vector<1x28x416xbf16> to vector<28x416xbf16>
    %cst = arith.constant dense<0.000000e+00> : vector<208x416xf32>
    %4 = tpu.matmul %1, %3, %cst {dimension_numbers = #tpu.dot_dimension_numbers<[1], [0], [0], [1], [0, 0, 1, 1], [], []>} : vector<208x28xbf16>, vector<28x416xbf16>, vector<208x416xf32> -> vector<208x416xf32>
    %c0_5 = arith.constant 0 : index
    %c8 = arith.constant 8 : index
    %c0_6 = arith.constant 0 : index
    %5 = vector.load %arg1[%c0_5, %c8, %c0_6] : memref<1x224x28xbf16, #tpu.memory_space<vmem>>, vector<1x208x28xbf16>
    %6 = vector.shape_cast %5 : vector<1x208x28xbf16> to vector<208x28xbf16>
    %c1 = arith.constant 1 : index
    %c0_7 = arith.constant 0 : index
    %c0_8 = arith.constant 0 : index
    %7 = vector.load %arg2[%c1, %c0_7, %c0_8] : memref<3x28x416xbf16, #tpu.memory_space<vmem>>, vector<1x28x416xbf16>
    %8 = vector.shape_cast %7 : vector<1x28x416xbf16> to vector<28x416xbf16>
    %cst_9 = arith.constant dense<0.000000e+00> : vector<208x416xf32>
    %9 = tpu.matmul %6, %8, %cst_9 {dimension_numbers = #tpu.dot_dimension_numbers<[1], [0], [0], [1], [0, 0, 1, 1], [], []>} : vector<208x28xbf16>, vector<28x416xbf16>, vector<208x416xf32> -> vector<208x416xf32>
    %10 = arith.addf %4, %9 : vector<208x416xf32>
    %c0_10 = arith.constant 0 : index
    %c16 = arith.constant 16 : index
    %c0_11 = arith.constant 0 : index
    %11 = vector.load %arg1[%c0_10, %c16, %c0_11] : memref<1x224x28xbf16, #tpu.memory_space<vmem>>, vector<1x208x28xbf16>
    %12 = vector.shape_cast %11 : vector<1x208x28xbf16> to vector<208x28xbf16>
    %c2 = arith.constant 2 : index
    %c0_12 = arith.constant 0 : index
    %c0_13 = arith.constant 0 : index
    %13 = vector.load %arg2[%c2, %c0_12, %c0_13] : memref<3x28x416xbf16, #tpu.memory_space<vmem>>, vector<1x28x416xbf16>
    %14 = vector.shape_cast %13 : vector<1x28x416xbf16> to vector<28x416xbf16>
    %cst_14 = arith.constant dense<0.000000e+00> : vector<208x416xf32>
    %15 = tpu.matmul %12, %14, %cst_14 {dimension_numbers = #tpu.dot_dimension_numbers<[1], [0], [0], [1], [0, 0, 1, 1], [], []>} : vector<208x28xbf16>, vector<28x416xbf16>, vector<208x416xf32> -> vector<208x416xf32>
    %16 = arith.addf %10, %15 : vector<208x416xf32>
    %c0_15 = arith.constant 0 : index
    %c0_16 = arith.constant 0 : index
    %17 = vector.load %arg3[%c0_15, %c0_16] : memref<1x416xf32, #tpu.memory_space<vmem>>, vector<1x416xf32>
    %18 = vector.broadcast %17 : vector<1x416xf32> to vector<208x416xf32>
    %19 = arith.addf %16, %18 : vector<208x416xf32>
    %cst_17 = arith.constant 0.000000e+00 : f32
    %20 = vector.broadcast %cst_17 : f32 to vector<208x416xf32>
    %21 = arith.maximumf %19, %20 : vector<208x416xf32>
    %22 = arith.truncf %21 : vector<208x416xf32> to vector<208x416xbf16>
    %c0_18 = arith.constant 0 : index
    %c0_19 = arith.constant 0 : index
    %23 = vector.load %arg12[%c0_18, %c0_19] : memref<208x416xbf16, #tpu.memory_space<vmem>>, vector<208x416xbf16>
    tpu.vector_store %arg12[%c0_18, %c0_19], %22 {strides = array<i32>} : memref<208x416xbf16, #tpu.memory_space<vmem>>, vector<208x416xbf16>,
    %c0_20 = arith.constant 0 : index
    %c0_21 = arith.constant 0 : index
    %24 = vector.load %arg12[%c0_20, %c0_21] : memref<208x416xbf16, #tpu.memory_space<vmem>>, vector<192x416xbf16>
    %c0_22 = arith.constant 0 : index
    %c0_23 = arith.constant 0 : index
    %c0_24 = arith.constant 0 : index
    %25 = vector.load %arg4[%c0_22, %c0_23, %c0_24] : memref<3x416x384xbf16, #tpu.memory_space<vmem>>, vector<1x416x384xbf16>
    %26 = vector.shape_cast %25 : vector<1x416x384xbf16> to vector<416x384xbf16>
    %cst_25 = arith.constant dense<0.000000e+00> : vector<192x384xf32>
    %27 = tpu.matmul %24, %26, %cst_25 {dimension_numbers = #tpu.dot_dimension_numbers<[1], [0], [0], [1], [0, 0, 1, 1], [], []>} : vector<192x416xbf16>, vector<416x384xbf16>, vector<192x384xf32> -> vector<192x384xf32>
    %c8_26 = arith.constant 8 : index
    %c0_27 = arith.constant 0 : index
    %28 = vector.load %arg12[%c8_26, %c0_27] : memref<208x416xbf16, #tpu.memory_space<vmem>>, vector<192x416xbf16>
    %c1_28 = arith.constant 1 : index
    %c0_29 = arith.constant 0 : index
    %c0_30 = arith.constant 0 : index
    %29 = vector.load %arg4[%c1_28, %c0_29, %c0_30] : memref<3x416x384xbf16, #tpu.memory_space<vmem>>, vector<1x416x384xbf16>
    %30 = vector.shape_cast %29 : vector<1x416x384xbf16> to vector<416x384xbf16>
    %cst_31 = arith.constant dense<0.000000e+00> : vector<192x384xf32>
    %31 = tpu.matmul %28, %30, %cst_31 {dimension_numbers = #tpu.dot_dimension_numbers<[1], [0], [0], [1], [0, 0, 1, 1], [], []>} : vector<192x416xbf16>, vector<416x384xbf16>, vector<192x384xf32> -> vector<192x384xf32>
    %32 = arith.addf %27, %31 : vector<192x384xf32>
    %c16_32 = arith.constant 16 : index
    %c0_33 = arith.constant 0 : index
    %33 = vector.load %arg12[%c16_32, %c0_33] : memref<208x416xbf16, #tpu.memory_space<vmem>>, vector<192x416xbf16>
    %c2_34 = arith.constant 2 : index
    %c0_35 = arith.constant 0 : index
    %c0_36 = arith.constant 0 : index
    %34 = vector.load %arg4[%c2_34, %c0_35, %c0_36] : memref<3x416x384xbf16, #tpu.memory_space<vmem>>, vector<1x416x384xbf16>
    %35 = vector.shape_cast %34 : vector<1x416x384xbf16> to vector<416x384xbf16>
    %cst_37 = arith.constant dense<0.000000e+00> : vector<192x384xf32>
    %36 = tpu.matmul %33, %35, %cst_37 {dimension_numbers = #tpu.dot_dimension_numbers<[1], [0], [0], [1], [0, 0, 1, 1], [], []>} : vector<192x416xbf16>, vector<416x384xbf16>, vector<192x384xf32> -> vector<192x384xf32>
    %37 = arith.addf %32, %36 : vector<192x384xf32>
    %c0_38 = arith.constant 0 : index
    %c0_39 = arith.constant 0 : index
    %38 = vector.load %arg5[%c0_38, %c0_39] : memref<1x384xf32, #tpu.memory_space<vmem>>, vector<1x384xf32>
    %39 = vector.broadcast %38 : vector<1x384xf32> to vector<192x384xf32>
    %40 = arith.addf %37, %39 : vector<192x384xf32>
    %cst_40 = arith.constant 0.000000e+00 : f32
    %41 = vector.broadcast %cst_40 : f32 to vector<192x384xf32>
    %42 = arith.maximumf %40, %41 : vector<192x384xf32>
    %43 = arith.truncf %42 : vector<192x384xf32> to vector<192x384xbf16>
    %c0_41 = arith.constant 0 : index
    %c0_42 = arith.constant 0 : index
    %44 = vector.load %arg13[%c0_41, %c0_42] : memref<192x384xbf16, #tpu.memory_space<vmem>>, vector<192x384xbf16>
    tpu.vector_store %arg13[%c0_41, %c0_42], %43 {strides = array<i32>} : memref<192x384xbf16, #tpu.memory_space<vmem>>, vector<192x384xbf16>,
    %cst_43 = arith.constant 0.000000e+00 : f32
    %45 = vector.broadcast %cst_43 : f32 to vector<8x32xf32>
    %c0_44 = arith.constant 0 : index
    %c0_45 = arith.constant 0 : index
    %46 = vector.load %arg13[%c0_44, %c0_45] : memref<192x384xbf16, #tpu.memory_space<vmem>>, vector<8x384xbf16>
    %c0_46 = arith.constant 0 : index
    %c0_47 = arith.constant 0 : index
    %c0_48 = arith.constant 0 : index
    %47 = vector.load %arg6[%c0_46, %c0_47, %c0_48] : memref<24x32x384xbf16, #tpu.memory_space<vmem>>, vector<1x32x384xbf16>
    %48 = vector.shape_cast %47 : vector<1x32x384xbf16> to vector<32x384xbf16>
    %cst_49 = arith.constant dense<0.000000e+00> : vector<8x32xf32>
    %49 = tpu.matmul %46, %48, %cst_49 {dimension_numbers = #tpu.dot_dimension_numbers<[1], [1], [0], [0], [0, 0, 1, 0], [], []>} : vector<8x384xbf16>, vector<32x384xbf16>, vector<8x32xf32> -> vector<8x32xf32>
    %50 = arith.addf %45, %49 : vector<8x32xf32>
    %c8_50 = arith.constant 8 : index
    %c0_51 = arith.constant 0 : index
    %51 = vector.load %arg13[%c8_50, %c0_51] : memref<192x384xbf16, #tpu.memory_space<vmem>>, vector<8x384xbf16>
    %c1_52 = arith.constant 1 : index
    %c0_53 = arith.constant 0 : index
    %c0_54 = arith.constant 0 : index
    %52 = vector.load %arg6[%c1_52, %c0_53, %c0_54] : memref<24x32x384xbf16, #tpu.memory_space<vmem>>, vector<1x32x384xbf16>
    %53 = vector.shape_cast %52 : vector<1x32x384xbf16> to vector<32x384xbf16>
    %cst_55 = arith.constant dense<0.000000e+00> : vector<8x32xf32>
    %54 = tpu.matmul %51, %53, %cst_55 {dimension_numbers = #tpu.dot_dimension_numbers<[1], [1], [0], [0], [0, 0, 1, 0], [], []>} : vector<8x384xbf16>, vector<32x384xbf16>, vector<8x32xf32> -> vector<8x32xf32>
    %55 = arith.addf %50, %54 : vector<8x32xf32>
    %c16_56 = arith.constant 16 : index
    %c0_57 = arith.constant 0 : index
    %56 = vector.load %arg13[%c16_56, %c0_57] : memref<192x384xbf16, #tpu.memory_space<vmem>>, vector<8x384xbf16>
    %c2_58 = arith.constant 2 : index
    %c0_59 = arith.constant 0 : index
    %c0_60 = arith.constant 0 : index
    %57 = vector.load %arg6[%c2_58, %c0_59, %c0_60] : memref<24x32x384xbf16, #tpu.memory_space<vmem>>, vector<1x32x384xbf16>
    %58 = vector.shape_cast %57 : vector<1x32x384xbf16> to vector<32x384xbf16>
    %cst_61 = arith.constant dense<0.000000e+00> : vector<8x32xf32>
    %59 = tpu.matmul %56, %58, %cst_61 {dimension_numbers = #tpu.dot_dimension_numbers<[1], [1], [0], [0], [0, 0, 1, 0], [], []>} : vector<8x384xbf16>, vector<32x384xbf16>, vector<8x32xf32> -> vector<8x32xf32>
    %60 = arith.addf %55, %59 : vector<8x32xf32>
    %c24 = arith.constant 24 : index
    %c0_62 = arith.constant 0 : index
    %61 = vector.load %arg13[%c24, %c0_62] : memref<192x384xbf16, #tpu.memory_space<vmem>>, vector<8x384xbf16>
    %c3 = arith.constant 3 : index
    %c0_63 = arith.constant 0 : index
    %c0_64 = arith.constant 0 : index
    %62 = vector.load %arg6[%c3, %c0_63, %c0_64] : memref<24x32x384xbf16, #tpu.memory_space<vmem>>, vector<1x32x384xbf16>
    %63 = vector.shape_cast %62 : vector<1x32x384xbf16> to vector<32x384xbf16>
    %cst_65 = arith.constant dense<0.000000e+00> : vector<8x32xf32>
    %64 = tpu.matmul %61, %63, %cst_65 {dimension_numbers = #tpu.dot_dimension_numbers<[1], [1], [0], [0], [0, 0, 1, 0], [], []>} : vector<8x384xbf16>, vector<32x384xbf16>, vector<8x32xf32> -> vector<8x32xf32>
    %65 = arith.addf %60, %64 : vector<8x32xf32>
    %c32 = arith.constant 32 : index
    %c0_66 = arith.constant 0 : index
    %66 = vector.load %arg13[%c32, %c0_66] : memref<192x384xbf16, #tpu.memory_space<vmem>>, vector<8x384xbf16>
    %c4 = arith.constant 4 : index
    %c0_67 = arith.constant 0 : index
    %c0_68 = arith.constant 0 : index
    %67 = vector.load %arg6[%c4, %c0_67, %c0_68] : memref<24x32x384xbf16, #tpu.memory_space<vmem>>, vector<1x32x384xbf16>
    %68 = vector.shape_cast %67 : vector<1x32x384xbf16> to vector<32x384xbf16>
    %cst_69 = arith.constant dense<0.000000e+00> : vector<8x32xf32>
    %69 = tpu.matmul %66, %68, %cst_69 {dimension_numbers = #tpu.dot_dimension_numbers<[1], [1], [0], [0], [0, 0, 1, 0], [], []>} : vector<8x384xbf16>, vector<32x384xbf16>, vector<8x32xf32> -> vector<8x32xf32>
    %70 = arith.addf %65, %69 : vector<8x32xf32>
    %c40 = arith.constant 40 : index
    %c0_70 = arith.constant 0 : index
    %71 = vector.load %arg13[%c40, %c0_70] : memref<192x384xbf16, #tpu.memory_space<vmem>>, vector<8x384xbf16>
    %c5 = arith.constant 5 : index
    %c0_71 = arith.constant 0 : index
    %c0_72 = arith.constant 0 : index
    %72 = vector.load %arg6[%c5, %c0_71, %c0_72] : memref<24x32x384xbf16, #tpu.memory_space<vmem>>, vector<1x32x384xbf16>
    %73 = vector.shape_cast %72 : vector<1x32x384xbf16> to vector<32x384xbf16>
    %cst_73 = arith.constant dense<0.000000e+00> : vector<8x32xf32>
    %74 = tpu.matmul %71, %73, %cst_73 {dimension_numbers = #tpu.dot_dimension_numbers<[1], [1], [0], [0], [0, 0, 1, 0], [], []>} : vector<8x384xbf16>, vector<32x384xbf16>, vector<8x32xf32> -> vector<8x32xf32>
    %75 = arith.addf %70, %74 : vector<8x32xf32>
    %c48 = arith.constant 48 : index
    %c0_74 = arith.constant 0 : index
    %76 = vector.load %arg13[%c48, %c0_74] : memref<192x384xbf16, #tpu.memory_space<vmem>>, vector<8x384xbf16>
    %c6 = arith.constant 6 : index
    %c0_75 = arith.constant 0 : index
    %c0_76 = arith.constant 0 : index
    %77 = vector.load %arg6[%c6, %c0_75, %c0_76] : memref<24x32x384xbf16, #tpu.memory_space<vmem>>, vector<1x32x384xbf16>
    %78 = vector.shape_cast %77 : vector<1x32x384xbf16> to vector<32x384xbf16>
    %cst_77 = arith.constant dense<0.000000e+00> : vector<8x32xf32>
    %79 = tpu.matmul %76, %78, %cst_77 {dimension_numbers = #tpu.dot_dimension_numbers<[1], [1], [0], [0], [0, 0, 1, 0], [], []>} : vector<8x384xbf16>, vector<32x384xbf16>, vector<8x32xf32> -> vector<8x32xf32>
    %80 = arith.addf %75, %79 : vector<8x32xf32>
    %c56 = arith.constant 56 : index
    %c0_78 = arith.constant 0 : index
    %81 = vector.load %arg13[%c56, %c0_78] : memref<192x384xbf16, #tpu.memory_space<vmem>>, vector<8x384xbf16>
    %c7 = arith.constant 7 : index
    %c0_79 = arith.constant 0 : index
    %c0_80 = arith.constant 0 : index
    %82 = vector.load %arg6[%c7, %c0_79, %c0_80] : memref<24x32x384xbf16, #tpu.memory_space<vmem>>, vector<1x32x384xbf16>
    %83 = vector.shape_cast %82 : vector<1x32x384xbf16> to vector<32x384xbf16>
    %cst_81 = arith.constant dense<0.000000e+00> : vector<8x32xf32>
    %84 = tpu.matmul %81, %83, %cst_81 {dimension_numbers = #tpu.dot_dimension_numbers<[1], [1], [0], [0], [0, 0, 1, 0], [], []>} : vector<8x384xbf16>, vector<32x384xbf16>, vector<8x32xf32> -> vector<8x32xf32>
    %85 = arith.addf %80, %84 : vector<8x32xf32>
    %c64 = arith.constant 64 : index
    %c0_82 = arith.constant 0 : index
    %86 = vector.load %arg13[%c64, %c0_82] : memref<192x384xbf16, #tpu.memory_space<vmem>>, vector<8x384xbf16>
    %c8_83 = arith.constant 8 : index
    %c0_84 = arith.constant 0 : index
    %c0_85 = arith.constant 0 : index
    %87 = vector.load %arg6[%c8_83, %c0_84, %c0_85] : memref<24x32x384xbf16, #tpu.memory_space<vmem>>, vector<1x32x384xbf16>
    %88 = vector.shape_cast %87 : vector<1x32x384xbf16> to vector<32x384xbf16>
    %cst_86 = arith.constant dense<0.000000e+00> : vector<8x32xf32>
    %89 = tpu.matmul %86, %88, %cst_86 {dimension_numbers = #tpu.dot_dimension_numbers<[1], [1], [0], [0], [0, 0, 1, 0], [], []>} : vector<8x384xbf16>, vector<32x384xbf16>, vector<8x32xf32> -> vector<8x32xf32>
    %90 = arith.addf %85, %89 : vector<8x32xf32>
    %c72 = arith.constant 72 : index
    %c0_87 = arith.constant 0 : index
    %91 = vector.load %arg13[%c72, %c0_87] : memref<192x384xbf16, #tpu.memory_space<vmem>>, vector<8x384xbf16>
    %c9 = arith.constant 9 : index
    %c0_88 = arith.constant 0 : index
    %c0_89 = arith.constant 0 : index
    %92 = vector.load %arg6[%c9, %c0_88, %c0_89] : memref<24x32x384xbf16, #tpu.memory_space<vmem>>, vector<1x32x384xbf16>
    %93 = vector.shape_cast %92 : vector<1x32x384xbf16> to vector<32x384xbf16>
    %cst_90 = arith.constant dense<0.000000e+00> : vector<8x32xf32>
    %94 = tpu.matmul %91, %93, %cst_90 {dimension_numbers = #tpu.dot_dimension_numbers<[1], [1], [0], [0], [0, 0, 1, 0], [], []>} : vector<8x384xbf16>, vector<32x384xbf16>, vector<8x32xf32> -> vector<8x32xf32>
    %95 = arith.addf %90, %94 : vector<8x32xf32>
    %c80 = arith.constant 80 : index
    %c0_91 = arith.constant 0 : index
    %96 = vector.load %arg13[%c80, %c0_91] : memref<192x384xbf16, #tpu.memory_space<vmem>>, vector<8x384xbf16>
    %c10 = arith.constant 10 : index
    %c0_92 = arith.constant 0 : index
    %c0_93 = arith.constant 0 : index
    %97 = vector.load %arg6[%c10, %c0_92, %c0_93] : memref<24x32x384xbf16, #tpu.memory_space<vmem>>, vector<1x32x384xbf16>
    %98 = vector.shape_cast %97 : vector<1x32x384xbf16> to vector<32x384xbf16>
    %cst_94 = arith.constant dense<0.000000e+00> : vector<8x32xf32>
    %99 = tpu.matmul %96, %98, %cst_94 {dimension_numbers = #tpu.dot_dimension_numbers<[1], [1], [0], [0], [0, 0, 1, 0], [], []>} : vector<8x384xbf16>, vector<32x384xbf16>, vector<8x32xf32> -> vector<8x32xf32>
    %100 = arith.addf %95, %99 : vector<8x32xf32>
    %c88 = arith.constant 88 : index
    %c0_95 = arith.constant 0 : index
    %101 = vector.load %arg13[%c88, %c0_95] : memref<192x384xbf16, #tpu.memory_space<vmem>>, vector<8x384xbf16>
    %c11 = arith.constant 11 : index
    %c0_96 = arith.constant 0 : index
    %c0_97 = arith.constant 0 : index
    %102 = vector.load %arg6[%c11, %c0_96, %c0_97] : memref<24x32x384xbf16, #tpu.memory_space<vmem>>, vector<1x32x384xbf16>
    %103 = vector.shape_cast %102 : vector<1x32x384xbf16> to vector<32x384xbf16>
    %cst_98 = arith.constant dense<0.000000e+00> : vector<8x32xf32>
    %104 = tpu.matmul %101, %103, %cst_98 {dimension_numbers = #tpu.dot_dimension_numbers<[1], [1], [0], [0], [0, 0, 1, 0], [], []>} : vector<8x384xbf16>, vector<32x384xbf16>, vector<8x32xf32> -> vector<8x32xf32>
    %105 = arith.addf %100, %104 : vector<8x32xf32>
    %c96 = arith.constant 96 : index
    %c0_99 = arith.constant 0 : index
    %106 = vector.load %arg13[%c96, %c0_99] : memref<192x384xbf16, #tpu.memory_space<vmem>>, vector<8x384xbf16>
    %c12 = arith.constant 12 : index
    %c0_100 = arith.constant 0 : index
    %c0_101 = arith.constant 0 : index
    %107 = vector.load %arg6[%c12, %c0_100, %c0_101] : memref<24x32x384xbf16, #tpu.memory_space<vmem>>, vector<1x32x384xbf16>
    %108 = vector.shape_cast %107 : vector<1x32x384xbf16> to vector<32x384xbf16>
    %cst_102 = arith.constant dense<0.000000e+00> : vector<8x32xf32>
    %109 = tpu.matmul %106, %108, %cst_102 {dimension_numbers = #tpu.dot_dimension_numbers<[1], [1], [0], [0], [0, 0, 1, 0], [], []>} : vector<8x384xbf16>, vector<32x384xbf16>, vector<8x32xf32> -> vector<8x32xf32>
    %110 = arith.addf %105, %109 : vector<8x32xf32>
    %c104 = arith.constant 104 : index
    %c0_103 = arith.constant 0 : index
    %111 = vector.load %arg13[%c104, %c0_103] : memref<192x384xbf16, #tpu.memory_space<vmem>>, vector<8x384xbf16>
    %c13 = arith.constant 13 : index
    %c0_104 = arith.constant 0 : index
    %c0_105 = arith.constant 0 : index
    %112 = vector.load %arg6[%c13, %c0_104, %c0_105] : memref<24x32x384xbf16, #tpu.memory_space<vmem>>, vector<1x32x384xbf16>
    %113 = vector.shape_cast %112 : vector<1x32x384xbf16> to vector<32x384xbf16>
    %cst_106 = arith.constant dense<0.000000e+00> : vector<8x32xf32>
    %114 = tpu.matmul %111, %113, %cst_106 {dimension_numbers = #tpu.dot_dimension_numbers<[1], [1], [0], [0], [0, 0, 1, 0], [], []>} : vector<8x384xbf16>, vector<32x384xbf16>, vector<8x32xf32> -> vector<8x32xf32>
    %115 = arith.addf %110, %114 : vector<8x32xf32>
    %c112 = arith.constant 112 : index
    %c0_107 = arith.constant 0 : index
    %116 = vector.load %arg13[%c112, %c0_107] : memref<192x384xbf16, #tpu.memory_space<vmem>>, vector<8x384xbf16>
    %c14 = arith.constant 14 : index
    %c0_108 = arith.constant 0 : index
    %c0_109 = arith.constant 0 : index
    %117 = vector.load %arg6[%c14, %c0_108, %c0_109] : memref<24x32x384xbf16, #tpu.memory_space<vmem>>, vector<1x32x384xbf16>
    %118 = vector.shape_cast %117 : vector<1x32x384xbf16> to vector<32x384xbf16>
    %cst_110 = arith.constant dense<0.000000e+00> : vector<8x32xf32>
    %119 = tpu.matmul %116, %118, %cst_110 {dimension_numbers = #tpu.dot_dimension_numbers<[1], [1], [0], [0], [0, 0, 1, 0], [], []>} : vector<8x384xbf16>, vector<32x384xbf16>, vector<8x32xf32> -> vector<8x32xf32>
    %120 = arith.addf %115, %119 : vector<8x32xf32>
    %c120 = arith.constant 120 : index
    %c0_111 = arith.constant 0 : index
    %121 = vector.load %arg13[%c120, %c0_111] : memref<192x384xbf16, #tpu.memory_space<vmem>>, vector<8x384xbf16>
    %c15 = arith.constant 15 : index
    %c0_112 = arith.constant 0 : index
    %c0_113 = arith.constant 0 : index
    %122 = vector.load %arg6[%c15, %c0_112, %c0_113] : memref<24x32x384xbf16, #tpu.memory_space<vmem>>, vector<1x32x384xbf16>
    %123 = vector.shape_cast %122 : vector<1x32x384xbf16> to vector<32x384xbf16>
    %cst_114 = arith.constant dense<0.000000e+00> : vector<8x32xf32>
    %124 = tpu.matmul %121, %123, %cst_114 {dimension_numbers = #tpu.dot_dimension_numbers<[1], [1], [0], [0], [0, 0, 1, 0], [], []>} : vector<8x384xbf16>, vector<32x384xbf16>, vector<8x32xf32> -> vector<8x32xf32>
    %125 = arith.addf %120, %124 : vector<8x32xf32>
    %c128 = arith.constant 128 : index
    %c0_115 = arith.constant 0 : index
    %126 = vector.load %arg13[%c128, %c0_115] : memref<192x384xbf16, #tpu.memory_space<vmem>>, vector<8x384xbf16>
    %c16_116 = arith.constant 16 : index
    %c0_117 = arith.constant 0 : index
    %c0_118 = arith.constant 0 : index
    %127 = vector.load %arg6[%c16_116, %c0_117, %c0_118] : memref<24x32x384xbf16, #tpu.memory_space<vmem>>, vector<1x32x384xbf16>
    %128 = vector.shape_cast %127 : vector<1x32x384xbf16> to vector<32x384xbf16>
    %cst_119 = arith.constant dense<0.000000e+00> : vector<8x32xf32>
    %129 = tpu.matmul %126, %128, %cst_119 {dimension_numbers = #tpu.dot_dimension_numbers<[1], [1], [0], [0], [0, 0, 1, 0], [], []>} : vector<8x384xbf16>, vector<32x384xbf16>, vector<8x32xf32> -> vector<8x32xf32>
    %130 = arith.addf %125, %129 : vector<8x32xf32>
    %c136 = arith.constant 136 : index
    %c0_120 = arith.constant 0 : index
    %131 = vector.load %arg13[%c136, %c0_120] : memref<192x384xbf16, #tpu.memory_space<vmem>>, vector<8x384xbf16>
    %c17 = arith.constant 17 : index
    %c0_121 = arith.constant 0 : index
    %c0_122 = arith.constant 0 : index
    %132 = vector.load %arg6[%c17, %c0_121, %c0_122] : memref<24x32x384xbf16, #tpu.memory_space<vmem>>, vector<1x32x384xbf16>
    %133 = vector.shape_cast %132 : vector<1x32x384xbf16> to vector<32x384xbf16>
    %cst_123 = arith.constant dense<0.000000e+00> : vector<8x32xf32>
    %134 = tpu.matmul %131, %133, %cst_123 {dimension_numbers = #tpu.dot_dimension_numbers<[1], [1], [0], [0], [0, 0, 1, 0], [], []>} : vector<8x384xbf16>, vector<32x384xbf16>, vector<8x32xf32> -> vector<8x32xf32>
    %135 = arith.addf %130, %134 : vector<8x32xf32>
    %c144 = arith.constant 144 : index
    %c0_124 = arith.constant 0 : index
    %136 = vector.load %arg13[%c144, %c0_124] : memref<192x384xbf16, #tpu.memory_space<vmem>>, vector<8x384xbf16>
    %c18 = arith.constant 18 : index
    %c0_125 = arith.constant 0 : index
    %c0_126 = arith.constant 0 : index
    %137 = vector.load %arg6[%c18, %c0_125, %c0_126] : memref<24x32x384xbf16, #tpu.memory_space<vmem>>, vector<1x32x384xbf16>
    %138 = vector.shape_cast %137 : vector<1x32x384xbf16> to vector<32x384xbf16>
    %cst_127 = arith.constant dense<0.000000e+00> : vector<8x32xf32>
    %139 = tpu.matmul %136, %138, %cst_127 {dimension_numbers = #tpu.dot_dimension_numbers<[1], [1], [0], [0], [0, 0, 1, 0], [], []>} : vector<8x384xbf16>, vector<32x384xbf16>, vector<8x32xf32> -> vector<8x32xf32>
    %140 = arith.addf %135, %139 : vector<8x32xf32>
    %c152 = arith.constant 152 : index
    %c0_128 = arith.constant 0 : index
    %141 = vector.load %arg13[%c152, %c0_128] : memref<192x384xbf16, #tpu.memory_space<vmem>>, vector<8x384xbf16>
    %c19 = arith.constant 19 : index
    %c0_129 = arith.constant 0 : index
    %c0_130 = arith.constant 0 : index
    %142 = vector.load %arg6[%c19, %c0_129, %c0_130] : memref<24x32x384xbf16, #tpu.memory_space<vmem>>, vector<1x32x384xbf16>
    %143 = vector.shape_cast %142 : vector<1x32x384xbf16> to vector<32x384xbf16>
    %cst_131 = arith.constant dense<0.000000e+00> : vector<8x32xf32>
    %144 = tpu.matmul %141, %143, %cst_131 {dimension_numbers = #tpu.dot_dimension_numbers<[1], [1], [0], [0], [0, 0, 1, 0], [], []>} : vector<8x384xbf16>, vector<32x384xbf16>, vector<8x32xf32> -> vector<8x32xf32>
    %145 = arith.addf %140, %144 : vector<8x32xf32>
    %c160 = arith.constant 160 : index
    %c0_132 = arith.constant 0 : index
    %146 = vector.load %arg13[%c160, %c0_132] : memref<192x384xbf16, #tpu.memory_space<vmem>>, vector<8x384xbf16>
    %c20 = arith.constant 20 : index
    %c0_133 = arith.constant 0 : index
    %c0_134 = arith.constant 0 : index
    %147 = vector.load %arg6[%c20, %c0_133, %c0_134] : memref<24x32x384xbf16, #tpu.memory_space<vmem>>, vector<1x32x384xbf16>
    %148 = vector.shape_cast %147 : vector<1x32x384xbf16> to vector<32x384xbf16>
    %cst_135 = arith.constant dense<0.000000e+00> : vector<8x32xf32>
    %149 = tpu.matmul %146, %148, %cst_135 {dimension_numbers = #tpu.dot_dimension_numbers<[1], [1], [0], [0], [0, 0, 1, 0], [], []>} : vector<8x384xbf16>, vector<32x384xbf16>, vector<8x32xf32> -> vector<8x32xf32>
    %150 = arith.addf %145, %149 : vector<8x32xf32>
    %c168 = arith.constant 168 : index
    %c0_136 = arith.constant 0 : index
    %151 = vector.load %arg13[%c168, %c0_136] : memref<192x384xbf16, #tpu.memory_space<vmem>>, vector<8x384xbf16>
    %c21 = arith.constant 21 : index
    %c0_137 = arith.constant 0 : index
    %c0_138 = arith.constant 0 : index
    %152 = vector.load %arg6[%c21, %c0_137, %c0_138] : memref<24x32x384xbf16, #tpu.memory_space<vmem>>, vector<1x32x384xbf16>
    %153 = vector.shape_cast %152 : vector<1x32x384xbf16> to vector<32x384xbf16>
    %cst_139 = arith.constant dense<0.000000e+00> : vector<8x32xf32>
    %154 = tpu.matmul %151, %153, %cst_139 {dimension_numbers = #tpu.dot_dimension_numbers<[1], [1], [0], [0], [0, 0, 1, 0], [], []>} : vector<8x384xbf16>, vector<32x384xbf16>, vector<8x32xf32> -> vector<8x32xf32>
    %155 = arith.addf %150, %154 : vector<8x32xf32>
    %c176 = arith.constant 176 : index
    %c0_140 = arith.constant 0 : index
    %156 = vector.load %arg13[%c176, %c0_140] : memref<192x384xbf16, #tpu.memory_space<vmem>>, vector<8x384xbf16>
    %c22 = arith.constant 22 : index
    %c0_141 = arith.constant 0 : index
    %c0_142 = arith.constant 0 : index
    %157 = vector.load %arg6[%c22, %c0_141, %c0_142] : memref<24x32x384xbf16, #tpu.memory_space<vmem>>, vector<1x32x384xbf16>
    %158 = vector.shape_cast %157 : vector<1x32x384xbf16> to vector<32x384xbf16>
    %cst_143 = arith.constant dense<0.000000e+00> : vector<8x32xf32>
    %159 = tpu.matmul %156, %158, %cst_143 {dimension_numbers = #tpu.dot_dimension_numbers<[1], [1], [0], [0], [0, 0, 1, 0], [], []>} : vector<8x384xbf16>, vector<32x384xbf16>, vector<8x32xf32> -> vector<8x32xf32>
    %160 = arith.addf %155, %159 : vector<8x32xf32>
    %c184 = arith.constant 184 : index
    %c0_144 = arith.constant 0 : index
    %161 = vector.load %arg13[%c184, %c0_144] : memref<192x384xbf16, #tpu.memory_space<vmem>>, vector<8x384xbf16>
    %c23 = arith.constant 23 : index
    %c0_145 = arith.constant 0 : index
    %c0_146 = arith.constant 0 : index
    %162 = vector.load %arg6[%c23, %c0_145, %c0_146] : memref<24x32x384xbf16, #tpu.memory_space<vmem>>, vector<1x32x384xbf16>
    %163 = vector.shape_cast %162 : vector<1x32x384xbf16> to vector<32x384xbf16>
    %cst_147 = arith.constant dense<0.000000e+00> : vector<8x32xf32>
    %164 = tpu.matmul %161, %163, %cst_147 {dimension_numbers = #tpu.dot_dimension_numbers<[1], [1], [0], [0], [0, 0, 1, 0], [], []>} : vector<8x384xbf16>, vector<32x384xbf16>, vector<8x32xf32> -> vector<8x32xf32>
    %165 = arith.addf %160, %164 : vector<8x32xf32>
    %c0_148 = arith.constant 0 : index
    %c0_149 = arith.constant 0 : index
    %166 = vector.load %arg7[%c0_148, %c0_149] : memref<1x32xf32, #tpu.memory_space<vmem>>, vector<1x32xf32>
    %167 = vector.broadcast %166 : vector<1x32xf32> to vector<8x32xf32>
    %168 = arith.addf %165, %167 : vector<8x32xf32>
    %cst_150 = arith.constant 0.000000e+00 : f32
    %169 = vector.broadcast %cst_150 : f32 to vector<8x32xf32>
    %170 = arith.maximumf %168, %169 : vector<8x32xf32>
    %c0_151 = arith.constant 0 : index
    %c0_152 = arith.constant 0 : index
    %171 = vector.load %arg10[%c0_151, %c0_152] : memref<8x32xf32, #tpu.memory_space<vmem>>, vector<8x32xf32>
    %172 = arith.mulf %170, %171 : vector<8x32xf32>
    %173 = arith.truncf %172 : vector<8x32xf32> to vector<8x32xbf16>
    %c0_153 = arith.constant 0 : index
    %c0_154 = arith.constant 0 : index
    %174 = vector.load %arg8[%c0_153, %c0_154] : memref<32x10xbf16, #tpu.memory_space<vmem>>, vector<32x10xbf16>
    %cst_155 = arith.constant dense<0.000000e+00> : vector<8x10xf32>
    %175 = tpu.matmul %173, %174, %cst_155 {dimension_numbers = #tpu.dot_dimension_numbers<[1], [0], [0], [1], [0, 0, 1, 1], [], []>} : vector<8x32xbf16>, vector<32x10xbf16>, vector<8x10xf32> -> vector<8x10xf32>
    %c0_156 = arith.constant 0 : index
    %c0_157 = arith.constant 0 : index
    %176 = vector.load %arg9[%c0_156, %c0_157] : memref<1x10xf32, #tpu.memory_space<vmem>>, vector<1x10xf32>
    %177 = vector.broadcast %176 : vector<1x10xf32> to vector<8x10xf32>
    %178 = arith.addf %175, %177 : vector<8x10xf32>
    %cst_158 = arith.constant dense<0xFF800000> : vector<8xf32>
    %179 = vector.multi_reduction <maximumf>, %178, %cst_158 [1] : vector<8x10xf32> to vector<8xf32>
    %180 = vector.shape_cast %179 : vector<8xf32> to vector<8x1xf32>
    %181 = vector.broadcast %180 : vector<8x1xf32> to vector<8x10xf32>
    %182 = arith.subf %178, %181 : vector<8x10xf32>
    %183 = math.exp %182 : vector<8x10xf32>
    %cst_159 = arith.constant dense<0.000000e+00> : vector<8xf32>
    %184 = vector.multi_reduction <add>, %183, %cst_159 [1] : vector<8x10xf32> to vector<8xf32>
    %185 = vector.shape_cast %184 : vector<8xf32> to vector<8x1xf32>
    %186 = math.log %185 : vector<8x1xf32>
    %187 = vector.broadcast %186 : vector<8x1xf32> to vector<8x10xf32>
    %188 = arith.subf %182, %187 : vector<8x10xf32>
    %c0_160 = arith.constant 0 : index
    %c0_161 = arith.constant 0 : index
    %189 = vector.load %arg11[%c0_160, %c0_161] : memref<8x10xf32, #tpu.memory_space<vmem>>, vector<8x10xf32>
    tpu.vector_store %arg11[%c0_160, %c0_161], %188 {strides = array<i32>} : memref<8x10xf32, #tpu.memory_space<vmem>>, vector<8x10xf32>,
    return
  }
  func.func @transform_0(%arg0: i32) -> (i32, i32, i32) {
    %c0_i32 = arith.constant 0 : i32
    %c0_i32_0 = arith.constant 0 : i32
    %c0_i32_1 = arith.constant 0 : i32
    return %arg0, %c0_i32, %c0_i32_0 : i32, i32, i32
  }
  func.func @transform_1(%arg0: i32) -> (i32, i32, i32) {
    %c0_i32 = arith.constant 0 : i32
    %c0_i32_0 = arith.constant 0 : i32
    %c0_i32_1 = arith.constant 0 : i32
    %c0_i32_2 = arith.constant 0 : i32
    return %c0_i32, %c0_i32_0, %c0_i32_1 : i32, i32, i32
  }
  func.func @transform_2(%arg0: i32) -> (i32, i32) {
    %c0_i32 = arith.constant 0 : i32
    %c0_i32_0 = arith.constant 0 : i32
    %c0_i32_1 = arith.constant 0 : i32
    return %c0_i32, %c0_i32_0 : i32, i32
  }
  func.func @transform_3(%arg0: i32) -> (i32, i32, i32) {
    %c0_i32 = arith.constant 0 : i32
    %c0_i32_0 = arith.constant 0 : i32
    %c0_i32_1 = arith.constant 0 : i32
    %c0_i32_2 = arith.constant 0 : i32
    return %c0_i32, %c0_i32_0, %c0_i32_1 : i32, i32, i32
  }
  func.func @transform_4(%arg0: i32) -> (i32, i32) {
    %c0_i32 = arith.constant 0 : i32
    %c0_i32_0 = arith.constant 0 : i32
    %c0_i32_1 = arith.constant 0 : i32
    return %c0_i32, %c0_i32_0 : i32, i32
  }
  func.func @transform_5(%arg0: i32) -> (i32, i32, i32) {
    %c0_i32 = arith.constant 0 : i32
    %c0_i32_0 = arith.constant 0 : i32
    %c0_i32_1 = arith.constant 0 : i32
    %c0_i32_2 = arith.constant 0 : i32
    return %c0_i32, %c0_i32_0, %c0_i32_1 : i32, i32, i32
  }
  func.func @transform_6(%arg0: i32) -> (i32, i32) {
    %c0_i32 = arith.constant 0 : i32
    %c0_i32_0 = arith.constant 0 : i32
    %c0_i32_1 = arith.constant 0 : i32
    return %c0_i32, %c0_i32_0 : i32, i32
  }
  func.func @transform_7(%arg0: i32) -> (i32, i32) {
    %c0_i32 = arith.constant 0 : i32
    %c0_i32_0 = arith.constant 0 : i32
    %c0_i32_1 = arith.constant 0 : i32
    return %c0_i32, %c0_i32_0 : i32, i32
  }
  func.func @transform_8(%arg0: i32) -> (i32, i32) {
    %c0_i32 = arith.constant 0 : i32
    %c0_i32_0 = arith.constant 0 : i32
    %c0_i32_1 = arith.constant 0 : i32
    return %c0_i32, %c0_i32_0 : i32, i32
  }
  func.func @transform_9(%arg0: i32) -> (i32, i32) {
    %c0_i32 = arith.constant 0 : i32
    %c0_i32_0 = arith.constant 0 : i32
    return %arg0, %c0_i32 : i32, i32
  }
  func.func @transform_10(%arg0: i32) -> (i32, i32) {
    %c0_i32 = arith.constant 0 : i32
    %c0_i32_0 = arith.constant 0 : i32
    return %arg0, %c0_i32 : i32, i32
  }
}

</mosaic_0001>

<llo_original>
// kernel: tpu_custom_call.1
$region0: #{tpu_custom_call.1}
  #allocation0 [shape = 'u32[]', space=smem, size = 0x4, offset = 0x4, fixed_abs, tag = 'smem constant byte address 0x4 - core index']
  #allocation1 [shape = 'u32[144,128]{1,0:T(1,128)}', space=vmem, size = 0x12000, scoped, tag = 'internal scratch']
  #allocation2 [shape = 'bf16[208,416]{1,0:T(16,128)(2,1)}', space=vmem, size = 0x34000, scoped, tag = 'scratch operand']
  #allocation3 [shape = 'bf16[192,384]{1,0:T(16,128)(2,1)}', space=vmem, size = 0x24000, scoped, tag = 'scratch operand']
  %s0 = inlined_call_operand.vmem [shape: bf16[1,224,28], index: 0, kind: input, shape index: {}]
  %s1 = inlined_call_operand.hbm [shape: bf16[3,28,416], index: 1, kind: input, shape index: {}]
  %s2 = inlined_call_operand.vmem [shape: f32[1,416], index: 2, kind: input, shape index: {}]
  %s3 = inlined_call_operand.hbm [shape: bf16[3,416,384], index: 3, kind: input, shape index: {}]
  %s4 = inlined_call_operand.vmem [shape: f32[1,384], index: 4, kind: input, shape index: {}]
  %s5 = inlined_call_operand.hbm [shape: bf16[24,32,384], index: 5, kind: input, shape index: {}]
  %s6 = inlined_call_operand.vmem [shape: f32[1,32], index: 6, kind: input, shape index: {}]
  %s7 = inlined_call_operand.vmem [shape: bf16[32,10], index: 7, kind: input, shape index: {}]
  %s8 = inlined_call_operand.vmem [shape: f32[1,10], index: 8, kind: input, shape index: {}]
  %s9 = inlined_call_operand.vmem [shape: f32[8,32], index: 9, kind: input, shape index: {}]
  %s10 = inlined_call_operand.hbm [shape: f32[8,10], index: 10, kind: output, shape index: {}]
  %s11 = sld [smem:[#allocation0]]
  $region62: #{tpu_custom_call.1} parent=0
    _
  %s13 = ssub.s32 1, %s11
  %s14 = scalar_select 0, %s13, %s11
  $region1: #{tpu_custom_call.1} parent=0
    #allocation4 [shape = 'u8[98304]{0}', space=vmem, size = 0x18000, scoped, tag = 'input window, operand 1, single buffered']
    #allocation5 [shape = 's32[1]{0}', space=sflag, size = 0x4, scoped, tag = 'scoped memory for tpu_custom_call.1']
    #allocation6 [shape = 's32[1]{0}', space=sflag, size = 0x4, scoped, tag = 'scoped memory for tpu_custom_call.1']
    #allocation7 [shape = 'u8[958464]{0}', space=vmem, size = 0xea000, scoped, tag = 'input window, operand 3, single buffered']
    #allocation8 [shape = 's32[1]{0}', space=sflag, size = 0x4, scoped, tag = 'scoped memory for tpu_custom_call.1']
    #allocation9 [shape = 'u8[589824]{0}', space=vmem, size = 0x90000, scoped, tag = 'input window, operand 5, single buffered']
    #allocation10 [shape = 'u8[4096]{0}', space=vmem, size = 0x1000, scoped, tag = 'output window, operand 0, single buffered']
    %15 = vsyncpa [#allocation5], 0
    %16 = vsyncpa [#allocation8], 0
    %17 = vsyncpa [#allocation6], 0
    // Predicated region
    $region2: #{tpu_custom_call.1} parent=1 // pred_check
      _
    $region3: #{tpu_custom_call.1} parent=1 // pred_check_branch
      %19 = sbr.rel (0) target = $region5
    $region4: #{tpu_custom_call.1} parent=1 // pred_region
      _
    $region5: #{tpu_custom_call.1} parent=1 // pred_fallthru
      _
    // Predicated region
    $region6: #{tpu_custom_call.1} parent=1 // pred_check
      _
    $region7: #{tpu_custom_call.1} parent=1 // pred_check_branch
      %21 = sbr.rel (0) target = $region9
    $region8: #{tpu_custom_call.1} parent=1 // pred_region
      %s23 = ssub.s32 3072, 3072
      %24 = vsyncadd [#allocation5], %s23
      %s25 = sshll.u32 [#allocation4], 4
      %s26 = int_to_ptr.vmem [resolvable:$true] %s25
      %31 = dma.hbm_to_vmem [thread:$0]  %s1, 3072, %s26, [#allocation5], 256, 256, 16
    $region9: #{tpu_custom_call.1} parent=1 // pred_fallthru
      _
    // Predicated region
    $region10: #{tpu_custom_call.1} parent=1 // pred_check
      _
    $region11: #{tpu_custom_call.1} parent=1 // pred_check_branch
      %33 = sbr.rel (0) target = $region13
    $region12: #{tpu_custom_call.1} parent=1 // pred_region
      _
    $region13: #{tpu_custom_call.1} parent=1 // pred_fallthru
      _
    // Predicated region
    $region14: #{tpu_custom_call.1} parent=1 // pred_check
      _
    $region15: #{tpu_custom_call.1} parent=1 // pred_check_branch
      %35 = sbr.rel (0) target = $region17
    $region16: #{tpu_custom_call.1} parent=1 // pred_region
      %s37 = ssub.s32 29952, 29952
      %38 = vsyncadd [#allocation8], %s37
      %s39 = sshll.u32 [#allocation7], 4
      %s40 = int_to_ptr.vmem [resolvable:$true] %s39
      %45 = dma.hbm_to_vmem [thread:$0]  %s3, 29952, %s40, [#allocation8], 192, 192, 12
    $region17: #{tpu_custom_call.1} parent=1 // pred_fallthru
      _
    // Predicated region
    $region18: #{tpu_custom_call.1} parent=1 // pred_check
      _
    $region19: #{tpu_custom_call.1} parent=1 // pred_check_branch
      %47 = sbr.rel (0) target = $region21
    $region20: #{tpu_custom_call.1} parent=1 // pred_region
      _
    $region21: #{tpu_custom_call.1} parent=1 // pred_fallthru
      _
    // Predicated region
    $region22: #{tpu_custom_call.1} parent=1 // pred_check
      _
    $region23: #{tpu_custom_call.1} parent=1 // pred_check_branch
      %49 = sbr.rel (0) target = $region25
    $region24: #{tpu_custom_call.1} parent=1 // pred_region
      %s51 = ssub.s32 18432, 18432
      %52 = vsyncadd [#allocation8], %s51
      %s53 = sshll.u32 [#allocation9], 4
      %s54 = int_to_ptr.vmem [resolvable:$true] %s53
      %59 = dma.hbm_to_vmem [thread:$0]  %s5, 18432, %s54, [#allocation8], 192, 192, 12
    $region25: #{tpu_custom_call.1} parent=1 // pred_fallthru
      _
    // Predicated region
    $region26: #{tpu_custom_call.1} parent=1 // pred_check
      _
    $region27: #{tpu_custom_call.1} parent=1 // pred_check_branch
      %61 = sbr.rel (0) target = $region29
    $region28: #{tpu_custom_call.1} parent=1 // pred_region
      _
    $region29: #{tpu_custom_call.1} parent=1 // pred_fallthru
      _
    // Predicated region
    $region30: #{tpu_custom_call.1} parent=1 // pred_check
      _
    $region31: #{tpu_custom_call.1} parent=1 // pred_check_branch
      %63 = sbr.rel (0) target = $region33
    $region32: #{tpu_custom_call.1} parent=1 // pred_region
      _
    $region33: #{tpu_custom_call.1} parent=1 // pred_fallthru
      _
    // Predicated region
    $region34: #{tpu_custom_call.1} parent=1 // pred_check
      _
    $region35: #{tpu_custom_call.1} parent=1 // pred_check_branch
      %65 = sbr.rel (0) target = $region37
    $region36: #{tpu_custom_call.1} parent=1 // pred_region
      _
    $region37: #{tpu_custom_call.1} parent=1 // pred_fallthru
      _
    // Predicated region
    $region38: #{tpu_custom_call.1} parent=1 // pred_check
      _
    $region39: #{tpu_custom_call.1} parent=1 // pred_check_branch
      %67 = sbr.rel (0) target = $region41
    $region40: #{tpu_custom_call.1} parent=1 // pred_region
      _
    $region41: #{tpu_custom_call.1} parent=1 // pred_fallthru
      _
    // Predicated region
    $region42: #{tpu_custom_call.1} parent=1 // pred_check
      _
    $region43: #{tpu_custom_call.1} parent=1 // pred_check_branch
      %69 = sbr.rel (0) target = $region45
    $region44: #{tpu_custom_call.1} parent=1 // pred_region
      %70 = dma.done [#allocation5], 3072
    $region45: #{tpu_custom_call.1} parent=1 // pred_fallthru
      _
    // Predicated region
    $region46: #{tpu_custom_call.1} parent=1 // pred_check
      _
    $region47: #{tpu_custom_call.1} parent=1 // pred_check_branch
      %72 = sbr.rel (0) target = $region49
    $region48: #{tpu_custom_call.1} parent=1 // pred_region
      %73 = dma.done [#allocation8], 29952
    $region49: #{tpu_custom_call.1} parent=1 // pred_fallthru
      _
    // Predicated region
    $region50: #{tpu_custom_call.1} parent=1 // pred_check
      _
    $region51: #{tpu_custom_call.1} parent=1 // pred_check_branch
      %75 = sbr.rel (0) target = $region53
    $region52: #{tpu_custom_call.1} parent=1 // pred_region
      %76 = dma.done [#allocation8], 18432
    $region53: #{tpu_custom_call.1} parent=1 // pred_fallthru
      _
    %v78 = vld [vmem:[%s0] sm:$0xf]
    %v79 = vld [vmem:[%s0 + $0x4] sm:$0xf]
    %v80 = vld [vmem:[%s0 + $0x8] sm:$0xf]
    %v81 = vld [vmem:[%s0 + $0xc] sm:$0xf]
    %v82 = vld [vmem:[%s0 + $0x10] sm:$0xf]
    %v83 = vld [vmem:[%s0 + $0x14] sm:$0xf]
    %v84 = vld [vmem:[%s0 + $0x18] sm:$0xf]
    %v85 = vld [vmem:[%s0 + $0x1c] sm:$0xf]
    %v86 = vld [vmem:[%s0 + $0x20] sm:$0xf]
    %v87 = vld [vmem:[%s0 + $0x24] sm:$0xf]
    %v88 = vld [vmem:[%s0 + $0x28] sm:$0xf]
    %v89 = vld [vmem:[%s0 + $0x2c] sm:$0xf]
    %v90 = vld [vmem:[%s0 + $0x30] sm:$0xf]
    %v91 = vld [vmem:[%s0 + $0x34] sm:$0xf]
    %v92 = vld [vmem:[%s0 + $0x38] sm:$0xf]
    %v93 = vld [vmem:[%s0 + $0x3c] sm:$0xf]
    %v94 = vld [vmem:[%s0 + $0x40] sm:$0xf]
    %v95 = vld [vmem:[%s0 + $0x44] sm:$0xf]
    %v96 = vld [vmem:[%s0 + $0x48] sm:$0xf]
    %v97 = vld [vmem:[%s0 + $0x4c] sm:$0xf]
    %v98 = vld [vmem:[%s0 + $0x50] sm:$0xf]
    %v99 = vld [vmem:[%s0 + $0x54] sm:$0xf]
    %v100 = vld [vmem:[%s0 + $0x58] sm:$0xf]
    %v101 = vld [vmem:[%s0 + $0x5c] sm:$0xf]
    %v102 = vld [vmem:[%s0 + $0x60] sm:$0xf]
    %v103 = vld [vmem:[%s0 + $0x64] sm:$0xf]
    %v104 = vld [vmem:[#allocation4] sm:$0xff]
    %v105 = vld [vmem:[#allocation4 + $0x8] sm:$0xff]
    %v106 = vld [vmem:[#allocation4 + $0x10] sm:$0xff]
    %v107 = vld [vmem:[#allocation4 + $0x18] sm:$0xff]
    %v108 = vld [vmem:[#allocation4 + $0x20] sm:$0xff]
    %v109 = vld [vmem:[#allocation4 + $0x28] sm:$0xff]
    %v110 = vld [vmem:[#allocation4 + $0x30] sm:$0x33]
    %v111 = vld [vmem:[#allocation4 + $0x38] sm:$0x33]
    %v112 = vld [vmem:[%s0 + $0x68] sm:$0xf]
    %s113 = scalar_lea.vmem [#allocation4], 64
    %v114 = vld [vmem:[%s113] sm:$0xff]
    %v115 = vld [vmem:[%s113 + $0x8] sm:$0xff]
    %v116 = vld [vmem:[%s113 + $0x10] sm:$0xff]
    %v117 = vld [vmem:[%s113 + $0x18] sm:$0xff]
    %v118 = vld [vmem:[%s113 + $0x20] sm:$0xff]
    %v119 = vld [vmem:[%s113 + $0x28] sm:$0xff]
    %v120 = vld [vmem:[%s113 + $0x30] sm:$0x33]
    %v121 = vld [vmem:[%s113 + $0x38] sm:$0x33]
    %v148 = vunpack.c.l.b16 %v79
    %v149 = vunpack.c.l.b16 %v80
    %v150 = vunpack.c.l.b16 %v81
    %v151 = vunpack.c.l.b16 %v82
    %v152 = vunpack.c.l.b16 %v83
    %v153 = vunpack.c.l.b16 %v84
    %v154 = vunpack.c.l.b16 %v85
    %v155 = vunpack.c.l.b16 %v86
    %v156 = vunpack.c.l.b16 %v87
    %v157 = vunpack.c.l.b16 %v88
    %v158 = vunpack.c.l.b16 %v89
    %v159 = vunpack.c.l.b16 %v90
    %v160 = vunpack.c.l.b16 %v91
    %v161 = vunpack.c.l.b16 %v92
    %v162 = vunpack.c.l.b16 %v93
    %v163 = vunpack.c.l.b16 %v94
    %v164 = vunpack.c.l.b16 %v95
    %v165 = vunpack.c.l.b16 %v96
    %v166 = vunpack.c.l.b16 %v97
    %v167 = vunpack.c.l.b16 %v98
    %v168 = vunpack.c.l.b16 %v99
    %v169 = vunpack.c.l.b16 %v100
    %v170 = vunpack.c.l.b16 %v101
    %v171 = vunpack.c.l.b16 %v102
    %v172 = vunpack.c.l.b16 %v103
    %v173 = vunpack.c.l.b16 %v112
    %v174 = vpack.c.b16 %v149, %v148
    %v175 = vpack.c.b16 %v151, %v150
    %v176 = vpack.c.b16 %v153, %v152
    %v177 = vpack.c.b16 %v155, %v154
    %v178 = vpack.c.b16 %v157, %v156
    %v179 = vpack.c.b16 %v159, %v158
    %v180 = vpack.c.b16 %v161, %v160
    %v181 = vpack.c.b16 %v163, %v162
    %v182 = vpack.c.b16 %v165, %v164
    %v183 = vpack.c.b16 %v167, %v166
    %v184 = vpack.c.b16 %v169, %v168
    %v185 = vpack.c.b16 %v171, %v170
    %v186 = vpack.c.b16 %v173, %v172
    %v195 = vunpack.c.l.b16 %v114
    %v196 = vunpack.c.h.b16 %v114
    %v197 = vunpack.c.l.b16 %v115
    %v198 = vunpack.c.h.b16 %v115
    %v199 = vunpack.c.l.b16 %v116
    %v200 = vunpack.c.h.b16 %v116
    %v201 = vunpack.c.l.b16 %v117
    %v202 = vunpack.c.h.b16 %v117
    %v203 = vunpack.c.l.b16 %v118
    %v204 = vunpack.c.h.b16 %v118
    %v205 = vunpack.c.l.b16 %v119
    %v206 = vunpack.c.h.b16 %v119
    %v207 = vunpack.c.l.b16 %v120
    %v208 = vunpack.c.h.b16 %v120
    %v209 = vunpack.c.l.b16 %v121
    %v210 = vunpack.c.h.b16 %v121
    %v211 = vpack.c.b16 %v199, %v195
    %v212 = vpack.c.b16 %v200, %v196
    %v213 = vpack.c.b16 %v201, %v197
    %v214 = vpack.c.b16 %v202, %v198
    %v215 = vpack.c.b16 %v207, %v203
    %v216 = vpack.c.b16 %v208, %v204
    %v217 = vpack.c.b16 %v209, %v205
    %v218 = vpack.c.b16 %v210, %v206
    %vm223 = vcmask 228352
    %v225 = vsel %vm223, %v174, 0
    %v228 = vsel %vm223, %v175, 0
    %v231 = vsel %vm223, %v176, 0
    %v234 = vsel %vm223, %v177, 0
    %v237 = vsel %vm223, %v178, 0
    %v240 = vsel %vm223, %v179, 0
    %v243 = vsel %vm223, %v180, 0
    %v246 = vsel %vm223, %v181, 0
    %v249 = vsel %vm223, %v182, 0
    %v252 = vsel %vm223, %v183, 0
    %v255 = vsel %vm223, %v184, 0
    %v258 = vsel %vm223, %v185, 0
    %v261 = vsel %vm223, %v186, 0
    %vm263 = vcmask 1045504
    %v265 = vsel %vm263, %v215, 0
    %v268 = vsel %vm263, %v216, 0
    %v271 = vsel %vm263, %v217, 0
    %v274 = vsel %vm263, %v218, 0
    %276 = vmatprep.subr.bf16.mxu0 %v212
    %277 = vmatpush1.bf16.msra.mxu0 %v211
    %278 = vmatprep.subr.bf16.mxu0 %v268
    %279 = vmatpush1.bf16.msra.mxu0 %v265
    %280 = vmatprep.subr.bf16.mxu0 0
    %281 = vmatpush1.bf16.msra.mxu0 0
    %282 = vmatprep.subr.bf16.mxu0 0
    %283 = vmatpush1.bf16.msra.mxu0 0
    %284 = vmatprep.subr.bf16.mxu0 0
    %285 = vmatpush1.bf16.msra.mxu0 0
    %286 = vmatprep.subr.bf16.mxu0 0
    %287 = vmatpush1.bf16.msra.mxu0 0
    %288 = vmatprep.subr.bf16.mxu0 0
    %289 = vmatpush1.bf16.msra.mxu0 0
    %290 = vmatprep.subr.bf16.mxu0 0
    %291 = vmatpush1.bf16.msra.mxu0 0
    %292 = vmatprep.subr.bf16.mxu0 0
    %293 = vmatpush1.bf16.msra.mxu0 0
    %294 = vmatprep.subr.bf16.mxu0 0
    %295 = vmatpush1.bf16.msra.mxu0 0
    %296 = vmatprep.subr.bf16.mxu0 0
    %297 = vmatpush1.bf16.msra.mxu0 0
    %298 = vmatprep.subr.bf16.mxu0 0
    %299 = vmatpush1.bf16.msra.mxu0 0
    %300 = vmatprep.subr.bf16.mxu0 0
    %301 = vmatpush1.bf16.msra.mxu0 0
    %302 = vmatprep.subr.bf16.mxu0 0
    %303 = vmatpush1.bf16.msra.mxu0 0
    %304 = vmatprep.subr.bf16.mxu0 0
    %305 = vmatpush1.bf16.msra.mxu0 0
    %306 = vmatprep.subr.bf16.mxu0 0
    %307 = vmatpush1.bf16.msra.mxu0 0
    %308 = vmatprep.mubr.bf16.mxu0 0
    %309 = vmatmul.mubr.bf16.gmra.mrb[0].mxu0 %v225
    %v310 = vpop.f32.mrb[0].mxu0
    %v311 = vadd.f32 0.0, %v310
    %v312 = vpop.f32.mrb[0].mxu0
    %v313 = vadd.f32 0.0, %v312
    %v314 = vpop.f32.mrb[0].mxu0
    %v315 = vadd.f32 0.0, %v314
    %v316 = vpop.f32.mrb[0].mxu0
    %v317 = vadd.f32 0.0, %v316
    %318 = vmatprep.mubr.bf16.mxu0 0
    %319 = vmatmul.mubr.bf16.gmra.mrb[0].mxu0 %v228
    %v320 = vpop.f32.mrb[0].mxu0
    %v321 = vadd.f32 0.0, %v320
    %v322 = vpop.f32.mrb[0].mxu0
    %v323 = vadd.f32 0.0, %v322
    %v324 = vpop.f32.mrb[0].mxu0
    %v325 = vadd.f32 0.0, %v324
    %v326 = vpop.f32.mrb[0].mxu0
    %v327 = vadd.f32 0.0, %v326
    %328 = vmatprep.mubr.bf16.mxu0 0
    %329 = vmatmul.mubr.bf16.gmra.mrb[0].mxu0 %v231
    %v330 = vpop.f32.mrb[0].mxu0
    %v331 = vadd.f32 0.0, %v330
    %v332 = vpop.f32.mrb[0].mxu0
    %v333 = vadd.f32 0.0, %v332
    %v334 = vpop.f32.mrb[0].mxu0
    %v335 = vadd.f32 0.0, %v334
    %v336 = vpop.f32.mrb[0].mxu0
    %v337 = vadd.f32 0.0, %v336
    %338 = vmatprep.mubr.bf16.mxu0 0
    %339 = vmatmul.mubr.bf16.gmra.mrb[0].mxu0 %v234
    %v340 = vpop.f32.mrb[0].mxu0
    %v341 = vadd.f32 0.0, %v340
    %v342 = vpop.f32.mrb[0].mxu0
    %v343 = vadd.f32 0.0, %v342
    %v344 = vpop.f32.mrb[0].mxu0
    %v345 = vadd.f32 0.0, %v344
    %v346 = vpop.f32.mrb[0].mxu0
    %v347 = vadd.f32 0.0, %v346
    %348 = vmatprep.mubr.bf16.mxu0 0
    %349 = vmatmul.mubr.bf16.gmra.mrb[0].mxu0 %v237
    %v350 = vpop.f32.mrb[0].mxu0
    %v351 = vadd.f32 0.0, %v350
    %v352 = vpop.f32.mrb[0].mxu0
    %v353 = vadd.f32 0.0, %v352
    %v354 = vpop.f32.mrb[0].mxu0
    %v355 = vadd.f32 0.0, %v354
    %v356 = vpop.f32.mrb[0].mxu0
    %v357 = vadd.f32 0.0, %v356
    %358 = vmatprep.mubr.bf16.mxu0 0
    %359 = vmatmul.mubr.bf16.gmra.mrb[0].mxu0 %v240
    %v360 = vpop.f32.mrb[0].mxu0
    %v361 = vadd.f32 0.0, %v360
    %v362 = vpop.f32.mrb[0].mxu0
    %v363 = vadd.f32 0.0, %v362
    %v364 = vpop.f32.mrb[0].mxu0
    %v365 = vadd.f32 0.0, %v364
    %v366 = vpop.f32.mrb[0].mxu0
    %v367 = vadd.f32 0.0, %v366
    %368 = vmatprep.mubr.bf16.mxu0 0
    %369 = vmatmul.mubr.bf16.gmra.mrb[0].mxu0 %v243
    %v370 = vpop.f32.mrb[0].mxu0
    %v371 = vadd.f32 0.0, %v370
    %v372 = vpop.f32.mrb[0].mxu0
    %v373 = vadd.f32 0.0, %v372
    %v374 = vpop.f32.mrb[0].mxu0
    %v375 = vadd.f32 0.0, %v374
    %v376 = vpop.f32.mrb[0].mxu0
    %v377 = vadd.f32 0.0, %v376
    %378 = vmatprep.mubr.bf16.mxu0 0
    %379 = vmatmul.mubr.bf16.gmra.mrb[0].mxu0 %v246
    %v380 = vpop.f32.mrb[0].mxu0
    %v381 = vadd.f32 0.0, %v380
    %v382 = vpop.f32.mrb[0].mxu0
    %v383 = vadd.f32 0.0, %v382
    %v384 = vpop.f32.mrb[0].mxu0
    %v385 = vadd.f32 0.0, %v384
    %v386 = vpop.f32.mrb[0].mxu0
    %v387 = vadd.f32 0.0, %v386
    %388 = vmatprep.mubr.bf16.mxu0 0
    %389 = vmatmul.mubr.bf16.gmra.mrb[0].mxu0 %v249
    %v390 = vpop.f32.mrb[0].mxu0
    %v391 = vadd.f32 0.0, %v390
    %v392 = vpop.f32.mrb[0].mxu0
    %v393 = vadd.f32 0.0, %v392
    %v394 = vpop.f32.mrb[0].mxu0
    %v395 = vadd.f32 0.0, %v394
    %v396 = vpop.f32.mrb[0].mxu0
    %v397 = vadd.f32 0.0, %v396
    %398 = vmatprep.mubr.bf16.mxu0 0
    %399 = vmatmul.mubr.bf16.gmra.mrb[0].mxu0 %v252
    %v400 = vpop.f32.mrb[0].mxu0
    %v401 = vadd.f32 0.0, %v400
    %v402 = vpop.f32.mrb[0].mxu0
    %v403 = vadd.f32 0.0, %v402
    %v404 = vpop.f32.mrb[0].mxu0
    %v405 = vadd.f32 0.0, %v404
    %v406 = vpop.f32.mrb[0].mxu0
    %v407 = vadd.f32 0.0, %v406
    %408 = vmatprep.mubr.bf16.mxu0 0
    %409 = vmatmul.mubr.bf16.gmra.mrb[0].mxu0 %v255
    %v410 = vpop.f32.mrb[0].mxu0
    %v411 = vadd.f32 0.0, %v410
    %v412 = vpop.f32.mrb[0].mxu0
    %v413 = vadd.f32 0.0, %v412
    %v414 = vpop.f32.mrb[0].mxu0
    %v415 = vadd.f32 0.0, %v414
    %v416 = vpop.f32.mrb[0].mxu0
    %v417 = vadd.f32 0.0, %v416
    %418 = vmatprep.mubr.bf16.mxu0 0
    %419 = vmatmul.mubr.bf16.gmra.mrb[0].mxu0 %v258
    %v420 = vpop.f32.mrb[0].mxu0
    %v421 = vadd.f32 0.0, %v420
    %v422 = vpop.f32.mrb[0].mxu0
    %v423 = vadd.f32 0.0, %v422
    %v424 = vpop.f32.mrb[0].mxu0
    %v425 = vadd.f32 0.0, %v424
    %v426 = vpop.f32.mrb[0].mxu0
    %v427 = vadd.f32 0.0, %v426
    %428 = vmatprep.mubr.bf16.mxu0 0
    %429 = vmatmul.mubr.bf16.gmra.mrb[0].mxu0 %v261
    %v430 = vpop.f32.mrb[0].mxu0
    %v431 = vadd.f32 0.0, %v430
    %v432 = vpop.f32.mrb[0].mxu0
    %v433 = vadd.f32 0.0, %v432
    %v434 = vpop.f32.mrb[0].mxu0
    %v435 = vadd.f32 0.0, %v434
    %v436 = vpop.f32.mrb[0].mxu0
    %v437 = vadd.f32 0.0, %v436
    %438 = vdwg.mxu0
    %439 = vmatprep.subr.bf16.mxu0 %v214
    %440 = vmatpush1.bf16.msra.mxu0 %v213
    %441 = vmatprep.subr.bf16.mxu0 %v274
    %442 = vmatpush1.bf16.msra.mxu0 %v271
    %443 = vmatprep.subr.bf16.mxu0 0
    %444 = vmatpush1.bf16.msra.mxu0 0
    %445 = vmatprep.subr.bf16.mxu0 0
    %446 = vmatpush1.bf16.msra.mxu0 0
    %447 = vmatprep.subr.bf16.mxu0 0
    %448 = vmatpush1.bf16.msra.mxu0 0
    %449 = vmatprep.subr.bf16.mxu0 0
    %450 = vmatpush1.bf16.msra.mxu0 0
    %451 = vmatprep.subr.bf16.mxu0 0
    %452 = vmatpush1.bf16.msra.mxu0 0
    %453 = vmatprep.subr.bf16.mxu0 0
    %454 = vmatpush1.bf16.msra.mxu0 0
    %455 = vmatprep.subr.bf16.mxu0 0
    %456 = vmatpush1.bf16.msra.mxu0 0
    %457 = vmatprep.subr.bf16.mxu0 0
    %458 = vmatpush1.bf16.msra.mxu0 0
    %459 = vmatprep.subr.bf16.mxu0 0
    %460 = vmatpush1.bf16.msra.mxu0 0
    %461 = vmatprep.subr.bf16.mxu0 0
    %462 = vmatpush1.bf16.msra.mxu0 0
    %463 = vmatprep.subr.bf16.mxu0 0
    %464 = vmatpush1.bf16.msra.mxu0 0
    %465 = vmatprep.subr.bf16.mxu0 0
    %466 = vmatpush1.bf16.msra.mxu0 0
    %467 = vmatprep.subr.bf16.mxu0 0
    %468 = vmatpush1.bf16.msra.mxu0 0
    %469 = vmatprep.subr.bf16.mxu0 0
    %470 = vmatpush1.bf16.msra.mxu0 0
    %471 = vmatprep.mubr.bf16.mxu0 0
    %472 = vmatmul.mubr.bf16.gmra.mrb[0].mxu0 %v225
    %v473 = vpop.f32.mrb[0].mxu0
    %v474 = vadd.f32 0.0, %v473
    %v475 = vpop.f32.mrb[0].mxu0
    %v476 = vadd.f32 0.0, %v475
    %v477 = vpop.f32.mrb[0].mxu0
    %v478 = vadd.f32 0.0, %v477
    %v479 = vpop.f32.mrb[0].mxu0
    %v480 = vadd.f32 0.0, %v479
    %481 = vmatprep.mubr.bf16.mxu0 0
    %482 = vmatmul.mubr.bf16.gmra.mrb[0].mxu0 %v228
    %v483 = vpop.f32.mrb[0].mxu0
    %v484 = vadd.f32 0.0, %v483
    %v485 = vpop.f32.mrb[0].mxu0
    %v486 = vadd.f32 0.0, %v485
    %v487 = vpop.f32.mrb[0].mxu0
    %v488 = vadd.f32 0.0, %v487
    %v489 = vpop.f32.mrb[0].mxu0
    %v490 = vadd.f32 0.0, %v489
    %491 = vmatprep.mubr.bf16.mxu0 0
    %492 = vmatmul.mubr.bf16.gmra.mrb[0].mxu0 %v231
    %v493 = vpop.f32.mrb[0].mxu0
    %v494 = vadd.f32 0.0, %v493
    %v495 = vpop.f32.mrb[0].mxu0
    %v496 = vadd.f32 0.0, %v495
    %v497 = vpop.f32.mrb[0].mxu0
    %v498 = vadd.f32 0.0, %v497
    %v499 = vpop.f32.mrb[0].mxu0
    %v500 = vadd.f32 0.0, %v499
    %501 = vmatprep.mubr.bf16.mxu0 0
    %502 = vmatmul.mubr.bf16.gmra.mrb[0].mxu0 %v234
    %v503 = vpop.f32.mrb[0].mxu0
    %v504 = vadd.f32 0.0, %v503
    %v505 = vpop.f32.mrb[0].mxu0
    %v506 = vadd.f32 0.0, %v505
    %v507 = vpop.f32.mrb[0].mxu0
    %v508 = vadd.f32 0.0, %v507
    %v509 = vpop.f32.mrb[0].mxu0
    %v510 = vadd.f32 0.0, %v509
    %511 = vmatprep.mubr.bf16.mxu0 0
    %512 = vmatmul.mubr.bf16.gmra.mrb[0].mxu0 %v237
    %v513 = vpop.f32.mrb[0].mxu0
    %v514 = vadd.f32 0.0, %v513
    %v515 = vpop.f32.mrb[0].mxu0
    %v516 = vadd.f32 0.0, %v515
    %v517 = vpop.f32.mrb[0].mxu0
    %v518 = vadd.f32 0.0, %v517
    %v519 = vpop.f32.mrb[0].mxu0
    %v520 = vadd.f32 0.0, %v519
    %521 = vmatprep.mubr.bf16.mxu0 0
    %522 = vmatmul.mubr.bf16.gmra.mrb[0].mxu0 %v240
    %v523 = vpop.f32.mrb[0].mxu0
    %v524 = vadd.f32 0.0, %v523
    %v525 = vpop.f32.mrb[0].mxu0
    %v526 = vadd.f32 0.0, %v525
    %v527 = vpop.f32.mrb[0].mxu0
    %v528 = vadd.f32 0.0, %v527
    %v529 = vpop.f32.mrb[0].mxu0
    %v530 = vadd.f32 0.0, %v529
    %531 = vmatprep.mubr.bf16.mxu0 0
    %532 = vmatmul.mubr.bf16.gmra.mrb[0].mxu0 %v243
    %v533 = vpop.f32.mrb[0].mxu0
    %v534 = vadd.f32 0.0, %v533
    %v535 = vpop.f32.mrb[0].mxu0
    %v536 = vadd.f32 0.0, %v535
    %v537 = vpop.f32.mrb[0].mxu0
    %v538 = vadd.f32 0.0, %v537
    %v539 = vpop.f32.mrb[0].mxu0
    %v540 = vadd.f32 0.0, %v539
    %541 = vmatprep.mubr.bf16.mxu0 0
    %542 = vmatmul.mubr.bf16.gmra.mrb[0].mxu0 %v246
    %v543 = vpop.f32.mrb[0].mxu0
    %v544 = vadd.f32 0.0, %v543
    %v545 = vpop.f32.mrb[0].mxu0
    %v546 = vadd.f32 0.0, %v545
    %v547 = vpop.f32.mrb[0].mxu0
    %v548 = vadd.f32 0.0, %v547
    %v549 = vpop.f32.mrb[0].mxu0
    %v550 = vadd.f32 0.0, %v549
    %551 = vmatprep.mubr.bf16.mxu0 0
    %552 = vmatmul.mubr.bf16.gmra.mrb[0].mxu0 %v249
    %v553 = vpop.f32.mrb[0].mxu0
    %v554 = vadd.f32 0.0, %v553
    %v555 = vpop.f32.mrb[0].mxu0
    %v556 = vadd.f32 0.0, %v555
    %v557 = vpop.f32.mrb[0].mxu0
    %v558 = vadd.f32 0.0, %v557
    %v559 = vpop.f32.mrb[0].mxu0
    %v560 = vadd.f32 0.0, %v559
    %561 = vmatprep.mubr.bf16.mxu0 0
    %562 = vmatmul.mubr.bf16.gmra.mrb[0].mxu0 %v252
    %v563 = vpop.f32.mrb[0].mxu0
    %v564 = vadd.f32 0.0, %v563
    %v565 = vpop.f32.mrb[0].mxu0
    %v566 = vadd.f32 0.0, %v565
    %v567 = vpop.f32.mrb[0].mxu0
    %v568 = vadd.f32 0.0, %v567
    %v569 = vpop.f32.mrb[0].mxu0
    %v570 = vadd.f32 0.0, %v569
    %571 = vmatprep.mubr.bf16.mxu0 0
    %572 = vmatmul.mubr.bf16.gmra.mrb[0].mxu0 %v255
    %v573 = vpop.f32.mrb[0].mxu0
    %v574 = vadd.f32 0.0, %v573
    %v575 = vpop.f32.mrb[0].mxu0
    %v576 = vadd.f32 0.0, %v575
    %v577 = vpop.f32.mrb[0].mxu0
    %v578 = vadd.f32 0.0, %v577
    %v579 = vpop.f32.mrb[0].mxu0
    %v580 = vadd.f32 0.0, %v579
    %581 = vmatprep.mubr.bf16.mxu0 0
    %582 = vmatmul.mubr.bf16.gmra.mrb[0].mxu0 %v258
    %v583 = vpop.f32.mrb[0].mxu0
    %v584 = vadd.f32 0.0, %v583
    %v585 = vpop.f32.mrb[0].mxu0
    %v586 = vadd.f32 0.0, %v585
    %v587 = vpop.f32.mrb[0].mxu0
    %v588 = vadd.f32 0.0, %v587
    %v589 = vpop.f32.mrb[0].mxu0
    %v590 = vadd.f32 0.0, %v589
    %591 = vmatprep.mubr.bf16.mxu0 0
    %592 = vmatmul.mubr.bf16.gmra.mrb[0].mxu0 %v261
    %v593 = vpop.f32.mrb[0].mxu0
    %v594 = vadd.f32 0.0, %v593
    %v595 = vpop.f32.mrb[0].mxu0
    %v596 = vadd.f32 0.0, %v595
    %v597 = vpop.f32.mrb[0].mxu0
    %v598 = vadd.f32 0.0, %v597
    %v599 = vpop.f32.mrb[0].mxu0
    %v600 = vadd.f32 0.0, %v599
    %601 = vdwg.mxu0
    %v603 = vunpack.c.l.b16 %v78
    %v604 = vpack.c.b16 %v148, %v603
    %v605 = vpack.c.b16 %v150, %v149
    %v606 = vpack.c.b16 %v152, %v151
    %v607 = vpack.c.b16 %v154, %v153
    %v608 = vpack.c.b16 %v156, %v155
    %v609 = vpack.c.b16 %v158, %v157
    %v610 = vpack.c.b16 %v160, %v159
    %v611 = vpack.c.b16 %v162, %v161
    %v612 = vpack.c.b16 %v164, %v163
    %v613 = vpack.c.b16 %v166, %v165
    %v614 = vpack.c.b16 %v168, %v167
    %v615 = vpack.c.b16 %v170, %v169
    %v616 = vpack.c.b16 %v172, %v171
    %v625 = vunpack.c.l.b16 %v104
    %v626 = vunpack.c.h.b16 %v104
    %v627 = vunpack.c.l.b16 %v105
    %v628 = vunpack.c.h.b16 %v105
    %v629 = vunpack.c.l.b16 %v106
    %v630 = vunpack.c.h.b16 %v106
    %v631 = vunpack.c.l.b16 %v107
    %v632 = vunpack.c.h.b16 %v107
    %v633 = vunpack.c.l.b16 %v108
    %v634 = vunpack.c.h.b16 %v108
    %v635 = vunpack.c.l.b16 %v109
    %v636 = vunpack.c.h.b16 %v109
    %v637 = vunpack.c.l.b16 %v110
    %v638 = vunpack.c.h.b16 %v110
    %v639 = vunpack.c.l.b16 %v111
    %v640 = vunpack.c.h.b16 %v111
    %v641 = vpack.c.b16 %v629, %v625
    %v642 = vpack.c.b16 %v630, %v626
    %v643 = vpack.c.b16 %v631, %v627
    %v644 = vpack.c.b16 %v632, %v628
    %v645 = vpack.c.b16 %v637, %v633
    %v646 = vpack.c.b16 %v638, %v634
    %v647 = vpack.c.b16 %v639, %v635
    %v648 = vpack.c.b16 %v640, %v636
    %v654 = vsel %vm223, %v604, 0
    %v657 = vsel %vm223, %v605, 0
    %v660 = vsel %vm223, %v606, 0
    %v663 = vsel %vm223, %v607, 0
    %v666 = vsel %vm223, %v608, 0
    %v669 = vsel %vm223, %v609, 0
    %v672 = vsel %vm223, %v610, 0
    %v675 = vsel %vm223, %v611, 0
    %v678 = vsel %vm223, %v612, 0
    %v681 = vsel %vm223, %v613, 0
    %v684 = vsel %vm223, %v614, 0
    %v687 = vsel %vm223, %v615, 0
    %v690 = vsel %vm223, %v616, 0
    %v693 = vsel %vm263, %v645, 0
    %v696 = vsel %vm263, %v646, 0
    %v699 = vsel %vm263, %v647, 0
    %v702 = vsel %vm263, %v648, 0
    %704 = vmatprep.subr.bf16.mxu0 %v642
    %705 = vmatpush1.bf16.msra.mxu0 %v641
    %706 = vmatprep.subr.bf16.mxu0 %v696
    %707 = vmatpush1.bf16.msra.mxu0 %v693
    %708 = vmatprep.subr.bf16.mxu0 0
    %709 = vmatpush1.bf16.msra.mxu0 0
    %710 = vmatprep.subr.bf16.mxu0 0
    %711 = vmatpush1.bf16.msra.mxu0 0
    %712 = vmatprep.subr.bf16.mxu0 0
    %713 = vmatpush1.bf16.msra.mxu0 0
    %714 = vmatprep.subr.bf16.mxu0 0
    %715 = vmatpush1.bf16.msra.mxu0 0
    %716 = vmatprep.subr.bf16.mxu0 0
    %717 = vmatpush1.bf16.msra.mxu0 0
    %718 = vmatprep.subr.bf16.mxu0 0
    %719 = vmatpush1.bf16.msra.mxu0 0
    %720 = vmatprep.subr.bf16.mxu0 0
    %721 = vmatpush1.bf16.msra.mxu0 0
    %722 = vmatprep.subr.bf16.mxu0 0
    %723 = vmatpush1.bf16.msra.mxu0 0
    %724 = vmatprep.subr.bf16.mxu0 0
    %725 = vmatpush1.bf16.msra.mxu0 0
    %726 = vmatprep.subr.bf16.mxu0 0
    %727 = vmatpush1.bf16.msra.mxu0 0
    %728 = vmatprep.subr.bf16.mxu0 0
    %729 = vmatpush1.bf16.msra.mxu0 0
    %730 = vmatprep.subr.bf16.mxu0 0
    %731 = vmatpush1.bf16.msra.mxu0 0
    %732 = vmatprep.subr.bf16.mxu0 0
    %733 = vmatpush1.bf16.msra.mxu0 0
    %734 = vmatprep.subr.bf16.mxu0 0
    %735 = vmatpush1.bf16.msra.mxu0 0
    %736 = vmatprep.mubr.bf16.mxu0 0
    %737 = vmatmul.mubr.bf16.gmra.mrb[0].mxu0 %v654
    %v738 = vpop.f32.mrb[0].mxu0
    %v739 = vadd.f32 %v311, %v738
    %v740 = vpop.f32.mrb[0].mxu0
    %v741 = vadd.f32 %v313, %v740
    %v742 = vpop.f32.mrb[0].mxu0
    %v743 = vadd.f32 %v315, %v742
    %v744 = vpop.f32.mrb[0].mxu0
    %v745 = vadd.f32 %v317, %v744
    %746 = vmatprep.mubr.bf16.mxu0 0
    %747 = vmatmul.mubr.bf16.gmra.mrb[0].mxu0 %v657
    %v748 = vpop.f32.mrb[0].mxu0
    %v749 = vadd.f32 %v321, %v748
    %v750 = vpop.f32.mrb[0].mxu0
    %v751 = vadd.f32 %v323, %v750
    %v752 = vpop.f32.mrb[0].mxu0
    %v753 = vadd.f32 %v325, %v752
    %v754 = vpop.f32.mrb[0].mxu0
    %v755 = vadd.f32 %v327, %v754
    %756 = vmatprep.mubr.bf16.mxu0 0
    %757 = vmatmul.mubr.bf16.gmra.mrb[0].mxu0 %v660
    %v758 = vpop.f32.mrb[0].mxu0
    %v759 = vadd.f32 %v331, %v758
    %v760 = vpop.f32.mrb[0].mxu0
    %v761 = vadd.f32 %v333, %v760
    %v762 = vpop.f32.mrb[0].mxu0
    %v763 = vadd.f32 %v335, %v762
    %v764 = vpop.f32.mrb[0].mxu0
    %v765 = vadd.f32 %v337, %v764
    %766 = vmatprep.mubr.bf16.mxu0 0
    %767 = vmatmul.mubr.bf16.gmra.mrb[0].mxu0 %v663
    %v768 = vpop.f32.mrb[0].mxu0
    %v769 = vadd.f32 %v341, %v768
    %v770 = vpop.f32.mrb[0].mxu0
    %v771 = vadd.f32 %v343, %v770
    %v772 = vpop.f32.mrb[0].mxu0
    %v773 = vadd.f32 %v345, %v772
    %v774 = vpop.f32.mrb[0].mxu0
    %v775 = vadd.f32 %v347, %v774
    %776 = vmatprep.mubr.bf16.mxu0 0
    %777 = vmatmul.mubr.bf16.gmra.mrb[0].mxu0 %v666
    %v778 = vpop.f32.mrb[0].mxu0
    %v779 = vadd.f32 %v351, %v778
    %v780 = vpop.f32.mrb[0].mxu0
    %v781 = vadd.f32 %v353, %v780
    %v782 = vpop.f32.mrb[0].mxu0
    %v783 = vadd.f32 %v355, %v782
    %v784 = vpop.f32.mrb[0].mxu0
    %v785 = vadd.f32 %v357, %v784
    %786 = vmatprep.mubr.bf16.mxu0 0
    %787 = vmatmul.mubr.bf16.gmra.mrb[0].mxu0 %v669
    %v788 = vpop.f32.mrb[0].mxu0
    %v789 = vadd.f32 %v361, %v788
    %v790 = vpop.f32.mrb[0].mxu0
    %v791 = vadd.f32 %v363, %v790
    %v792 = vpop.f32.mrb[0].mxu0
    %v793 = vadd.f32 %v365, %v792
    %v794 = vpop.f32.mrb[0].mxu0
    %v795 = vadd.f32 %v367, %v794
    %796 = vmatprep.mubr.bf16.mxu0 0
    %797 = vmatmul.mubr.bf16.gmra.mrb[0].mxu0 %v672
    %v798 = vpop.f32.mrb[0].mxu0
    %v799 = vadd.f32 %v371, %v798
    %v800 = vpop.f32.mrb[0].mxu0
    %v801 = vadd.f32 %v373, %v800
    %v802 = vpop.f32.mrb[0].mxu0
    %v803 = vadd.f32 %v375, %v802
    %v804 = vpop.f32.mrb[0].mxu0
    %v805 = vadd.f32 %v377, %v804
    %806 = vmatprep.mubr.bf16.mxu0 0
    %807 = vmatmul.mubr.bf16.gmra.mrb[0].mxu0 %v675
    %v808 = vpop.f32.mrb[0].mxu0
    %v809 = vadd.f32 %v381, %v808
    %v810 = vpop.f32.mrb[0].mxu0
    %v811 = vadd.f32 %v383, %v810
    %v812 = vpop.f32.mrb[0].mxu0
    %v813 = vadd.f32 %v385, %v812
    %v814 = vpop.f32.mrb[0].mxu0
    %v815 = vadd.f32 %v387, %v814
    %816 = vmatprep.mubr.bf16.mxu0 0
    %817 = vmatmul.mubr.bf16.gmra.mrb[0].mxu0 %v678
    %v818 = vpop.f32.mrb[0].mxu0
    %v819 = vadd.f32 %v391, %v818
    %v820 = vpop.f32.mrb[0].mxu0
    %v821 = vadd.f32 %v393, %v820
    %v822 = vpop.f32.mrb[0].mxu0
    %v823 = vadd.f32 %v395, %v822
    %v824 = vpop.f32.mrb[0].mxu0
    %v825 = vadd.f32 %v397, %v824
    %826 = vmatprep.mubr.bf16.mxu0 0
    %827 = vmatmul.mubr.bf16.gmra.mrb[0].mxu0 %v681
    %v828 = vpop.f32.mrb[0].mxu0
    %v829 = vadd.f32 %v401, %v828
    %v830 = vpop.f32.mrb[0].mxu0
    %v831 = vadd.f32 %v403, %v830
    %v832 = vpop.f32.mrb[0].mxu0
    %v833 = vadd.f32 %v405, %v832
    %v834 = vpop.f32.mrb[0].mxu0
    %v835 = vadd.f32 %v407, %v834
    %836 = vmatprep.mubr.bf16.mxu0 0
    %837 = vmatmul.mubr.bf16.gmra.mrb[0].mxu0 %v684
    %v838 = vpop.f32.mrb[0].mxu0
    %v839 = vadd.f32 %v411, %v838
    %v840 = vpop.f32.mrb[0].mxu0
    %v841 = vadd.f32 %v413, %v840
    %v842 = vpop.f32.mrb[0].mxu0
    %v843 = vadd.f32 %v415, %v842
    %v844 = vpop.f32.mrb[0].mxu0
    %v845 = vadd.f32 %v417, %v844
    %846 = vmatprep.mubr.bf16.mxu0 0
    %847 = vmatmul.mubr.bf16.gmra.mrb[0].mxu0 %v687
    %v848 = vpop.f32.mrb[0].mxu0
    %v849 = vadd.f32 %v421, %v848
    %v850 = vpop.f32.mrb[0].mxu0
    %v851 = vadd.f32 %v423, %v850
    %v852 = vpop.f32.mrb[0].mxu0
    %v853 = vadd.f32 %v425, %v852
    %v854 = vpop.f32.mrb[0].mxu0
    %v855 = vadd.f32 %v427, %v854
    %856 = vmatprep.mubr.bf16.mxu0 0
    %857 = vmatmul.mubr.bf16.gmra.mrb[0].mxu0 %v690
    %v858 = vpop.f32.mrb[0].mxu0
    %v859 = vadd.f32 %v431, %v858
    %v860 = vpop.f32.mrb[0].mxu0
    %v861 = vadd.f32 %v433, %v860
    %v862 = vpop.f32.mrb[0].mxu0
    %v863 = vadd.f32 %v435, %v862
    %v864 = vpop.f32.mrb[0].mxu0
    %v865 = vadd.f32 %v437, %v864
    %866 = vdwg.mxu0
    %867 = vmatprep.subr.bf16.mxu0 %v644
    %868 = vmatpush1.bf16.msra.mxu0 %v643
    %869 = vmatprep.subr.bf16.mxu0 %v702
    %870 = vmatpush1.bf16.msra.mxu0 %v699
    %871 = vmatprep.subr.bf16.mxu0 0
    %872 = vmatpush1.bf16.msra.mxu0 0
    %873 = vmatprep.subr.bf16.mxu0 0
    %874 = vmatpush1.bf16.msra.mxu0 0
    %875 = vmatprep.subr.bf16.mxu0 0
    %876 = vmatpush1.bf16.msra.mxu0 0
    %877 = vmatprep.subr.bf16.mxu0 0
    %878 = vmatpush1.bf16.msra.mxu0 0
    %879 = vmatprep.subr.bf16.mxu0 0
    %880 = vmatpush1.bf16.msra.mxu0 0
    %881 = vmatprep.subr.bf16.mxu0 0
    %882 = vmatpush1.bf16.msra.mxu0 0
    %883 = vmatprep.subr.bf16.mxu0 0
    %884 = vmatpush1.bf16.msra.mxu0 0
    %885 = vmatprep.subr.bf16.mxu0 0
    %886 = vmatpush1.bf16.msra.mxu0 0
    %887 = vmatprep.subr.bf16.mxu0 0
    %888 = vmatpush1.bf16.msra.mxu0 0
    %889 = vmatprep.subr.bf16.mxu0 0
    %890 = vmatpush1.bf16.msra.mxu0 0
    %891 = vmatprep.subr.bf16.mxu0 0
    %892 = vmatpush1.bf16.msra.mxu0 0
    %893 = vmatprep.subr.bf16.mxu0 0
    %894 = vmatpush1.bf16.msra.mxu0 0
    %895 = vmatprep.subr.bf16.mxu0 0
    %896 = vmatpush1.bf16.msra.mxu0 0
    %897 = vmatprep.subr.bf16.mxu0 0
    %898 = vmatpush1.bf16.msra.mxu0 0
    %899 = vmatprep.mubr.bf16.mxu0 0
    %900 = vmatmul.mubr.bf16.gmra.mrb[0].mxu0 %v654
    %v901 = vpop.f32.mrb[0].mxu0
    %v902 = vadd.f32 %v474, %v901
    %v903 = vpop.f32.mrb[0].mxu0
    %v904 = vadd.f32 %v476, %v903
    %v905 = vpop.f32.mrb[0].mxu0
    %v906 = vadd.f32 %v478, %v905
    %v907 = vpop.f32.mrb[0].mxu0
    %v908 = vadd.f32 %v480, %v907
    %909 = vmatprep.mubr.bf16.mxu0 0
    %910 = vmatmul.mubr.bf16.gmra.mrb[0].mxu0 %v657
    %v911 = vpop.f32.mrb[0].mxu0
    %v912 = vadd.f32 %v484, %v911
    %v913 = vpop.f32.mrb[0].mxu0
    %v914 = vadd.f32 %v486, %v913
    %v915 = vpop.f32.mrb[0].mxu0
    %v916 = vadd.f32 %v488, %v915
    %v917 = vpop.f32.mrb[0].mxu0
    %v918 = vadd.f32 %v490, %v917
    %919 = vmatprep.mubr.bf16.mxu0 0
    %920 = vmatmul.mubr.bf16.gmra.mrb[0].mxu0 %v660
    %v921 = vpop.f32.mrb[0].mxu0
    %v922 = vadd.f32 %v494, %v921
    %v923 = vpop.f32.mrb[0].mxu0
    %v924 = vadd.f32 %v496, %v923
    %v925 = vpop.f32.mrb[0].mxu0
    %v926 = vadd.f32 %v498, %v925
    %v927 = vpop.f32.mrb[0].mxu0
    %v928 = vadd.f32 %v500, %v927
    %929 = vmatprep.mubr.bf16.mxu0 0
    %930 = vmatmul.mubr.bf16.gmra.mrb[0].mxu0 %v663
    %v931 = vpop.f32.mrb[0].mxu0
    %v932 = vadd.f32 %v504, %v931
    %v933 = vpop.f32.mrb[0].mxu0
    %v934 = vadd.f32 %v506, %v933
    %v935 = vpop.f32.mrb[0].mxu0
    %v936 = vadd.f32 %v508, %v935
    %v937 = vpop.f32.mrb[0].mxu0
    %v938 = vadd.f32 %v510, %v937
    %939 = vmatprep.mubr.bf16.mxu0 0
    %940 = vmatmul.mubr.bf16.gmra.mrb[0].mxu0 %v666
    %v941 = vpop.f32.mrb[0].mxu0
    %v942 = vadd.f32 %v514, %v941
    %v943 = vpop.f32.mrb[0].mxu0
    %v944 = vadd.f32 %v516, %v943
    %v945 = vpop.f32.mrb[0].mxu0
    %v946 = vadd.f32 %v518, %v945
    %v947 = vpop.f32.mrb[0].mxu0
    %v948 = vadd.f32 %v520, %v947
    %949 = vmatprep.mubr.bf16.mxu0 0
    %950 = vmatmul.mubr.bf16.gmra.mrb[0].mxu0 %v669
    %v951 = vpop.f32.mrb[0].mxu0
    %v952 = vadd.f32 %v524, %v951
    %v953 = vpop.f32.mrb[0].mxu0
    %v954 = vadd.f32 %v526, %v953
    %v955 = vpop.f32.mrb[0].mxu0
    %v956 = vadd.f32 %v528, %v955
    %v957 = vpop.f32.mrb[0].mxu0
    %v958 = vadd.f32 %v530, %v957
    %959 = vmatprep.mubr.bf16.mxu0 0
    %960 = vmatmul.mubr.bf16.gmra.mrb[0].mxu0 %v672
    %v961 = vpop.f32.mrb[0].mxu0
    %v962 = vadd.f32 %v534, %v961
    %v963 = vpop.f32.mrb[0].mxu0
    %v964 = vadd.f32 %v536, %v963
    %v965 = vpop.f32.mrb[0].mxu0
    %v966 = vadd.f32 %v538, %v965
    %v967 = vpop.f32.mrb[0].mxu0
    %v968 = vadd.f32 %v540, %v967
    %969 = vmatprep.mubr.bf16.mxu0 0
    %970 = vmatmul.mubr.bf16.gmra.mrb[0].mxu0 %v675
    %v971 = vpop.f32.mrb[0].mxu0
    %v972 = vadd.f32 %v544, %v971
    %v973 = vpop.f32.mrb[0].mxu0
    %v974 = vadd.f32 %v546, %v973
    %v975 = vpop.f32.mrb[0].mxu0
    %v976 = vadd.f32 %v548, %v975
    %v977 = vpop.f32.mrb[0].mxu0
    %v978 = vadd.f32 %v550, %v977
    %979 = vmatprep.mubr.bf16.mxu0 0
    %980 = vmatmul.mubr.bf16.gmra.mrb[0].mxu0 %v678
    %v981 = vpop.f32.mrb[0].mxu0
    %v982 = vadd.f32 %v554, %v981
    %v983 = vpop.f32.mrb[0].mxu0
    %v984 = vadd.f32 %v556, %v983
    %v985 = vpop.f32.mrb[0].mxu0
    %v986 = vadd.f32 %v558, %v985
    %v987 = vpop.f32.mrb[0].mxu0
    %v988 = vadd.f32 %v560, %v987
    %989 = vmatprep.mubr.bf16.mxu0 0
    %990 = vmatmul.mubr.bf16.gmra.mrb[0].mxu0 %v681
    %v991 = vpop.f32.mrb[0].mxu0
    %v992 = vadd.f32 %v564, %v991
    %v993 = vpop.f32.mrb[0].mxu0
    %v994 = vadd.f32 %v566, %v993
    %v995 = vpop.f32.mrb[0].mxu0
    %v996 = vadd.f32 %v568, %v995
    %v997 = vpop.f32.mrb[0].mxu0
    %v998 = vadd.f32 %v570, %v997
    %999 = vmatprep.mubr.bf16.mxu0 0
    %1000 = vmatmul.mubr.bf16.gmra.mrb[0].mxu0 %v684
    %v1001 = vpop.f32.mrb[0].mxu0
    %v1002 = vadd.f32 %v574, %v1001
    %v1003 = vpop.f32.mrb[0].mxu0
    %v1004 = vadd.f32 %v576, %v1003
    %v1005 = vpop.f32.mrb[0].mxu0
    %v1006 = vadd.f32 %v578, %v1005
    %v1007 = vpop.f32.mrb[0].mxu0
    %v1008 = vadd.f32 %v580, %v1007
    %1009 = vmatprep.mubr.bf16.mxu0 0
    %1010 = vmatmul.mubr.bf16.gmra.mrb[0].mxu0 %v687
    %v1011 = vpop.f32.mrb[0].mxu0
    %v1012 = vadd.f32 %v584, %v1011
    %v1013 = vpop.f32.mrb[0].mxu0
    %v1014 = vadd.f32 %v586, %v1013
    %v1015 = vpop.f32.mrb[0].mxu0
    %v1016 = vadd.f32 %v588, %v1015
    %v1017 = vpop.f32.mrb[0].mxu0
    %v1018 = vadd.f32 %v590, %v1017
    %1019 = vmatprep.mubr.bf16.mxu0 0
    %1020 = vmatmul.mubr.bf16.gmra.mrb[0].mxu0 %v690
    %v1021 = vpop.f32.mrb[0].mxu0
    %v1022 = vadd.f32 %v594, %v1021
    %v1023 = vpop.f32.mrb[0].mxu0
    %v1024 = vadd.f32 %v596, %v1023
    %v1025 = vpop.f32.mrb[0].mxu0
    %v1026 = vadd.f32 %v598, %v1025
    %v1027 = vpop.f32.mrb[0].mxu0
    %v1028 = vadd.f32 %v600, %v1027
    %1029 = vdwg.mxu0
    %v1030 = vld [vmem:[%s0 + $0x8] sm:$0xf]
    %v1031 = vld [vmem:[%s0 + $0xc] sm:$0xf]
    %v1032 = vld [vmem:[%s0 + $0x10] sm:$0xf]
    %v1033 = vld [vmem:[%s0 + $0x14] sm:$0xf]
    %v1034 = vld [vmem:[%s0 + $0x18] sm:$0xf]
    %v1035 = vld [vmem:[%s0 + $0x1c] sm:$0xf]
    %v1036 = vld [vmem:[%s0 + $0x20] sm:$0xf]
    %v1037 = vld [vmem:[%s0 + $0x24] sm:$0xf]
    %v1038 = vld [vmem:[%s0 + $0x28] sm:$0xf]
    %v1039 = vld [vmem:[%s0 + $0x2c] sm:$0xf]
    %v1040 = vld [vmem:[%s0 + $0x30] sm:$0xf]
    %v1041 = vld [vmem:[%s0 + $0x34] sm:$0xf]
    %v1042 = vld [vmem:[%s0 + $0x38] sm:$0xf]
    %v1043 = vld [vmem:[%s0 + $0x3c] sm:$0xf]
    %v1044 = vld [vmem:[%s0 + $0x40] sm:$0xf]
    %v1045 = vld [vmem:[%s0 + $0x44] sm:$0xf]
    %v1046 = vld [vmem:[%s0 + $0x48] sm:$0xf]
    %v1047 = vld [vmem:[%s0 + $0x4c] sm:$0xf]
    %v1048 = vld [vmem:[%s0 + $0x50] sm:$0xf]
    %v1049 = vld [vmem:[%s0 + $0x54] sm:$0xf]
    %v1050 = vld [vmem:[%s0 + $0x58] sm:$0xf]
    %v1051 = vld [vmem:[%s0 + $0x5c] sm:$0xf]
    %v1052 = vld [vmem:[%s0 + $0x60] sm:$0xf]
    %v1053 = vld [vmem:[%s0 + $0x64] sm:$0xf]
    %v1054 = vld [vmem:[%s0 + $0x68] sm:$0xf]
    %v1055 = vld [vmem:[%s0 + $0x6c] sm:$0xf]
    %s1056 = scalar_lea.vmem [#allocation4], 128
    %v1057 = vld [vmem:[%s1056] sm:$0xff]
    %v1058 = vld [vmem:[%s1056 + $0x8] sm:$0xff]
    %v1059 = vld [vmem:[%s1056 + $0x10] sm:$0xff]
    %v1060 = vld [vmem:[%s1056 + $0x18] sm:$0xff]
    %v1061 = vld [vmem:[%s1056 + $0x20] sm:$0xff]
    %v1062 = vld [vmem:[%s1056 + $0x28] sm:$0xff]
    %v1063 = vld [vmem:[%s1056 + $0x30] sm:$0x33]
    %v1064 = vld [vmem:[%s1056 + $0x38] sm:$0x33]
    %v1091 = vunpack.c.l.b16 %v1030
    %v1092 = vunpack.c.l.b16 %v1031
    %v1093 = vunpack.c.l.b16 %v1032
    %v1094 = vunpack.c.l.b16 %v1033
    %v1095 = vunpack.c.l.b16 %v1034
    %v1096 = vunpack.c.l.b16 %v1035
    %v1097 = vunpack.c.l.b16 %v1036
    %v1098 = vunpack.c.l.b16 %v1037
    %v1099 = vunpack.c.l.b16 %v1038
    %v1100 = vunpack.c.l.b16 %v1039
    %v1101 = vunpack.c.l.b16 %v1040
    %v1102 = vunpack.c.l.b16 %v1041
    %v1103 = vunpack.c.l.b16 %v1042
    %v1104 = vunpack.c.l.b16 %v1043
    %v1105 = vunpack.c.l.b16 %v1044
    %v1106 = vunpack.c.l.b16 %v1045
    %v1107 = vunpack.c.l.b16 %v1046
    %v1108 = vunpack.c.l.b16 %v1047
    %v1109 = vunpack.c.l.b16 %v1048
    %v1110 = vunpack.c.l.b16 %v1049
    %v1111 = vunpack.c.l.b16 %v1050
    %v1112 = vunpack.c.l.b16 %v1051
    %v1113 = vunpack.c.l.b16 %v1052
    %v1114 = vunpack.c.l.b16 %v1053
    %v1115 = vunpack.c.l.b16 %v1054
    %v1116 = vunpack.c.l.b16 %v1055
    %v1117 = vpack.c.b16 %v1092, %v1091
    %v1118 = vpack.c.b16 %v1094, %v1093
    %v1119 = vpack.c.b16 %v1096, %v1095
    %v1120 = vpack.c.b16 %v1098, %v1097
    %v1121 = vpack.c.b16 %v1100, %v1099
    %v1122 = vpack.c.b16 %v1102, %v1101
    %v1123 = vpack.c.b16 %v1104, %v1103
    %v1124 = vpack.c.b16 %v1106, %v1105
    %v1125 = vpack.c.b16 %v1108, %v1107
    %v1126 = vpack.c.b16 %v1110, %v1109
    %v1127 = vpack.c.b16 %v1112, %v1111
    %v1128 = vpack.c.b16 %v1114, %v1113
    %v1129 = vpack.c.b16 %v1116, %v1115
    %v1138 = vunpack.c.l.b16 %v1057
    %v1139 = vunpack.c.h.b16 %v1057
    %v1140 = vunpack.c.l.b16 %v1058
    %v1141 = vunpack.c.h.b16 %v1058
    %v1142 = vunpack.c.l.b16 %v1059
    %v1143 = vunpack.c.h.b16 %v1059
    %v1144 = vunpack.c.l.b16 %v1060
    %v1145 = vunpack.c.h.b16 %v1060
    %v1146 = vunpack.c.l.b16 %v1061
    %v1147 = vunpack.c.h.b16 %v1061
    %v1148 = vunpack.c.l.b16 %v1062
    %v1149 = vunpack.c.h.b16 %v1062
    %v1150 = vunpack.c.l.b16 %v1063
    %v1151 = vunpack.c.h.b16 %v1063
    %v1152 = vunpack.c.l.b16 %v1064
    %v1153 = vunpack.c.h.b16 %v1064
    %v1154 = vpack.c.b16 %v1142, %v1138
    %v1155 = vpack.c.b16 %v1143, %v1139
    %v1156 = vpack.c.b16 %v1144, %v1140
    %v1157 = vpack.c.b16 %v1145, %v1141
    %v1158 = vpack.c.b16 %v1150, %v1146
    %v1159 = vpack.c.b16 %v1151, %v1147
    %v1160 = vpack.c.b16 %v1152, %v1148
    %v1161 = vpack.c.b16 %v1153, %v1149
    %v1167 = vsel %vm223, %v1117, 0
    %v1170 = vsel %vm223, %v1118, 0
    %v1173 = vsel %vm223, %v1119, 0
    %v1176 = vsel %vm223, %v1120, 0
    %v1179 = vsel %vm223, %v1121, 0
    %v1182 = vsel %vm223, %v1122, 0
    %v1185 = vsel %vm223, %v1123, 0
    %v1188 = vsel %vm223, %v1124, 0
    %v1191 = vsel %vm223, %v1125, 0
    %v1194 = vsel %vm223, %v1126, 0
    %v1197 = vsel %vm223, %v1127, 0
    %v1200 = vsel %vm223, %v1128, 0
    %v1203 = vsel %vm223, %v1129, 0
    %v1206 = vsel %vm263, %v1158, 0
    %v1209 = vsel %vm263, %v1159, 0
    %v1212 = vsel %vm263, %v1160, 0
    %v1215 = vsel %vm263, %v1161, 0
    %1217 = vmatprep.subr.bf16.mxu0 %v1155
    %1218 = vmatpush1.bf16.msra.mxu0 %v1154
    %1219 = vmatprep.subr.bf16.mxu0 %v1209
    %1220 = vmatpush1.bf16.msra.mxu0 %v1206
    %1221 = vmatprep.subr.bf16.mxu0 0
    %1222 = vmatpush1.bf16.msra.mxu0 0
    %1223 = vmatprep.subr.bf16.mxu0 0
    %1224 = vmatpush1.bf16.msra.mxu0 0
    %1225 = vmatprep.subr.bf16.mxu0 0
    %1226 = vmatpush1.bf16.msra.mxu0 0
    %1227 = vmatprep.subr.bf16.mxu0 0
    %1228 = vmatpush1.bf16.msra.mxu0 0
    %1229 = vmatprep.subr.bf16.mxu0 0
    %1230 = vmatpush1.bf16.msra.mxu0 0
    %1231 = vmatprep.subr.bf16.mxu0 0
    %1232 = vmatpush1.bf16.msra.mxu0 0
    %1233 = vmatprep.subr.bf16.mxu0 0
    %1234 = vmatpush1.bf16.msra.mxu0 0
    %1235 = vmatprep.subr.bf16.mxu0 0
    %1236 = vmatpush1.bf16.msra.mxu0 0
    %1237 = vmatprep.subr.bf16.mxu0 0
    %1238 = vmatpush1.bf16.msra.mxu0 0
    %1239 = vmatprep.subr.bf16.mxu0 0
    %1240 = vmatpush1.bf16.msra.mxu0 0
    %1241 = vmatprep.subr.bf16.mxu0 0
    %1242 = vmatpush1.bf16.msra.mxu0 0
    %1243 = vmatprep.subr.bf16.mxu0 0
    %1244 = vmatpush1.bf16.msra.mxu0 0
    %1245 = vmatprep.subr.bf16.mxu0 0
    %1246 = vmatpush1.bf16.msra.mxu0 0
    %1247 = vmatprep.subr.bf16.mxu0 0
    %1248 = vmatpush1.bf16.msra.mxu0 0
    %1249 = vmatprep.mubr.bf16.mxu0 0
    %1250 = vmatmul.mubr.bf16.gmra.mrb[0].mxu0 %v1167
    %v1251 = vpop.f32.mrb[0].mxu0
    %v1252 = vadd.f32 0.0, %v1251
    %v1253 = vpop.f32.mrb[0].mxu0
    %v1254 = vadd.f32 0.0, %v1253
    %v1255 = vpop.f32.mrb[0].mxu0
    %v1256 = vadd.f32 0.0, %v1255
    %v1257 = vpop.f32.mrb[0].mxu0
    %v1258 = vadd.f32 0.0, %v1257
    %1259 = vmatprep.mubr.bf16.mxu0 0
    %1260 = vmatmul.mubr.bf16.gmra.mrb[0].mxu0 %v1170
    %v1261 = vpop.f32.mrb[0].mxu0
    %v1262 = vadd.f32 0.0, %v1261
    %v1263 = vpop.f32.mrb[0].mxu0
    %v1264 = vadd.f32 0.0, %v1263
    %v1265 = vpop.f32.mrb[0].mxu0
    %v1266 = vadd.f32 0.0, %v1265
    %v1267 = vpop.f32.mrb[0].mxu0
    %v1268 = vadd.f32 0.0, %v1267
    %1269 = vmatprep.mubr.bf16.mxu0 0
    %1270 = vmatmul.mubr.bf16.gmra.mrb[0].mxu0 %v1173
    %v1271 = vpop.f32.mrb[0].mxu0
    %v1272 = vadd.f32 0.0, %v1271
    %v1273 = vpop.f32.mrb[0].mxu0
    %v1274 = vadd.f32 0.0, %v1273
    %v1275 = vpop.f32.mrb[0].mxu0
    %v1276 = vadd.f32 0.0, %v1275
    %v1277 = vpop.f32.mrb[0].mxu0
    %v1278 = vadd.f32 0.0, %v1277
    %1279 = vmatprep.mubr.bf16.mxu0 0
    %1280 = vmatmul.mubr.bf16.gmra.mrb[0].mxu0 %v1176
    %v1281 = vpop.f32.mrb[0].mxu0
    %v1282 = vadd.f32 0.0, %v1281
    %v1283 = vpop.f32.mrb[0].mxu0
    %v1284 = vadd.f32 0.0, %v1283
    %v1285 = vpop.f32.mrb[0].mxu0
    %v1286 = vadd.f32 0.0, %v1285
    %v1287 = vpop.f32.mrb[0].mxu0
    %v1288 = vadd.f32 0.0, %v1287
    %1289 = vmatprep.mubr.bf16.mxu0 0
    %1290 = vmatmul.mubr.bf16.gmra.mrb[0].mxu0 %v1179
    %v1291 = vpop.f32.mrb[0].mxu0
    %v1292 = vadd.f32 0.0, %v1291
    %v1293 = vpop.f32.mrb[0].mxu0
    %v1294 = vadd.f32 0.0, %v1293
    %v1295 = vpop.f32.mrb[0].mxu0
    %v1296 = vadd.f32 0.0, %v1295
    %v1297 = vpop.f32.mrb[0].mxu0
    %v1298 = vadd.f32 0.0, %v1297
    %1299 = vmatprep.mubr.bf16.mxu0 0
    %1300 = vmatmul.mubr.bf16.gmra.mrb[0].mxu0 %v1182
    %v1301 = vpop.f32.mrb[0].mxu0
    %v1302 = vadd.f32 0.0, %v1301
    %v1303 = vpop.f32.mrb[0].mxu0
    %v1304 = vadd.f32 0.0, %v1303
    %v1305 = vpop.f32.mrb[0].mxu0
    %v1306 = vadd.f32 0.0, %v1305
    %v1307 = vpop.f32.mrb[0].mxu0
    %v1308 = vadd.f32 0.0, %v1307
    %1309 = vmatprep.mubr.bf16.mxu0 0
    %1310 = vmatmul.mubr.bf16.gmra.mrb[0].mxu0 %v1185
    %v1311 = vpop.f32.mrb[0].mxu0
    %v1312 = vadd.f32 0.0, %v1311
    %v1313 = vpop.f32.mrb[0].mxu0
    %v1314 = vadd.f32 0.0, %v1313
    %v1315 = vpop.f32.mrb[0].mxu0
    %v1316 = vadd.f32 0.0, %v1315
    %v1317 = vpop.f32.mrb[0].mxu0
    %v1318 = vadd.f32 0.0, %v1317
    %1319 = vmatprep.mubr.bf16.mxu0 0
    %1320 = vmatmul.mubr.bf16.gmra.mrb[0].mxu0 %v1188
    %v1321 = vpop.f32.mrb[0].mxu0
    %v1322 = vadd.f32 0.0, %v1321
    %v1323 = vpop.f32.mrb[0].mxu0
    %v1324 = vadd.f32 0.0, %v1323
    %v1325 = vpop.f32.mrb[0].mxu0
    %v1326 = vadd.f32 0.0, %v1325
    %v1327 = vpop.f32.mrb[0].mxu0
    %v1328 = vadd.f32 0.0, %v1327
    %1329 = vmatprep.mubr.bf16.mxu0 0
    %1330 = vmatmul.mubr.bf16.gmra.mrb[0].mxu0 %v1191
    %v1331 = vpop.f32.mrb[0].mxu0
    %v1332 = vadd.f32 0.0, %v1331
    %v1333 = vpop.f32.mrb[0].mxu0
    %v1334 = vadd.f32 0.0, %v1333
    %v1335 = vpop.f32.mrb[0].mxu0
    %v1336 = vadd.f32 0.0, %v1335
    %v1337 = vpop.f32.mrb[0].mxu0
    %v1338 = vadd.f32 0.0, %v1337
    %1339 = vmatprep.mubr.bf16.mxu0 0
    %1340 = vmatmul.mubr.bf16.gmra.mrb[0].mxu0 %v1194
    %v1341 = vpop.f32.mrb[0].mxu0
    %v1342 = vadd.f32 0.0, %v1341
    %v1343 = vpop.f32.mrb[0].mxu0
    %v1344 = vadd.f32 0.0, %v1343
    %v1345 = vpop.f32.mrb[0].mxu0
    %v1346 = vadd.f32 0.0, %v1345
    %v1347 = vpop.f32.mrb[0].mxu0
    %v1348 = vadd.f32 0.0, %v1347
    %1349 = vmatprep.mubr.bf16.mxu0 0
    %1350 = vmatmul.mubr.bf16.gmra.mrb[0].mxu0 %v1197
    %v1351 = vpop.f32.mrb[0].mxu0
    %v1352 = vadd.f32 0.0, %v1351
    %v1353 = vpop.f32.mrb[0].mxu0
    %v1354 = vadd.f32 0.0, %v1353
    %v1355 = vpop.f32.mrb[0].mxu0
    %v1356 = vadd.f32 0.0, %v1355
    %v1357 = vpop.f32.mrb[0].mxu0
    %v1358 = vadd.f32 0.0, %v1357
    %1359 = vmatprep.mubr.bf16.mxu0 0
    %1360 = vmatmul.mubr.bf16.gmra.mrb[0].mxu0 %v1200
    %v1361 = vpop.f32.mrb[0].mxu0
    %v1362 = vadd.f32 0.0, %v1361
    %v1363 = vpop.f32.mrb[0].mxu0
    %v1364 = vadd.f32 0.0, %v1363
    %v1365 = vpop.f32.mrb[0].mxu0
    %v1366 = vadd.f32 0.0, %v1365
    %v1367 = vpop.f32.mrb[0].mxu0
    %v1368 = vadd.f32 0.0, %v1367
    %1369 = vmatprep.mubr.bf16.mxu0 0
    %1370 = vmatmul.mubr.bf16.gmra.mrb[0].mxu0 %v1203
    %v1371 = vpop.f32.mrb[0].mxu0
    %v1372 = vadd.f32 0.0, %v1371
    %v1373 = vpop.f32.mrb[0].mxu0
    %v1374 = vadd.f32 0.0, %v1373
    %v1375 = vpop.f32.mrb[0].mxu0
    %v1376 = vadd.f32 0.0, %v1375
    %v1377 = vpop.f32.mrb[0].mxu0
    %v1378 = vadd.f32 0.0, %v1377
    %1379 = vdwg.mxu0
    %1380 = vmatprep.subr.bf16.mxu0 %v1157
    %1381 = vmatpush1.bf16.msra.mxu0 %v1156
    %1382 = vmatprep.subr.bf16.mxu0 %v1215
    %1383 = vmatpush1.bf16.msra.mxu0 %v1212
    %1384 = vmatprep.subr.bf16.mxu0 0
    %1385 = vmatpush1.bf16.msra.mxu0 0
    %1386 = vmatprep.subr.bf16.mxu0 0
    %1387 = vmatpush1.bf16.msra.mxu0 0
    %1388 = vmatprep.subr.bf16.mxu0 0
    %1389 = vmatpush1.bf16.msra.mxu0 0
    %1390 = vmatprep.subr.bf16.mxu0 0
    %1391 = vmatpush1.bf16.msra.mxu0 0
    %1392 = vmatprep.subr.bf16.mxu0 0
    %1393 = vmatpush1.bf16.msra.mxu0 0
    %1394 = vmatprep.subr.bf16.mxu0 0
    %1395 = vmatpush1.bf16.msra.mxu0 0
    %1396 = vmatprep.subr.bf16.mxu0 0
    %1397 = vmatpush1.bf16.msra.mxu0 0
    %1398 = vmatprep.subr.bf16.mxu0 0
    %1399 = vmatpush1.bf16.msra.mxu0 0
    %1400 = vmatprep.subr.bf16.mxu0 0
    %1401 = vmatpush1.bf16.msra.mxu0 0
    %1402 = vmatprep.subr.bf16.mxu0 0
    %1403 = vmatpush1.bf16.msra.mxu0 0
    %1404 = vmatprep.subr.bf16.mxu0 0
    %1405 = vmatpush1.bf16.msra.mxu0 0
    %1406 = vmatprep.subr.bf16.mxu0 0
    %1407 = vmatpush1.bf16.msra.mxu0 0
    %1408 = vmatprep.subr.bf16.mxu0 0
    %1409 = vmatpush1.bf16.msra.mxu0 0
    %1410 = vmatprep.subr.bf16.mxu0 0
    %1411 = vmatpush1.bf16.msra.mxu0 0
    %1412 = vmatprep.mubr.bf16.mxu0 0
    %1413 = vmatmul.mubr.bf16.gmra.mrb[0].mxu0 %v1167
    %v1414 = vpop.f32.mrb[0].mxu0
    %v1415 = vadd.f32 0.0, %v1414
    %v1416 = vpop.f32.mrb[0].mxu0
    %v1417 = vadd.f32 0.0, %v1416
    %v1418 = vpop.f32.mrb[0].mxu0
    %v1419 = vadd.f32 0.0, %v1418
    %v1420 = vpop.f32.mrb[0].mxu0
    %v1421 = vadd.f32 0.0, %v1420
    %1422 = vmatprep.mubr.bf16.mxu0 0
    %1423 = vmatmul.mubr.bf16.gmra.mrb[0].mxu0 %v1170
    %v1424 = vpop.f32.mrb[0].mxu0
    %v1425 = vadd.f32 0.0, %v1424
    %v1426 = vpop.f32.mrb[0].mxu0
    %v1427 = vadd.f32 0.0, %v1426
    %v1428 = vpop.f32.mrb[0].mxu0
    %v1429 = vadd.f32 0.0, %v1428
    %v1430 = vpop.f32.mrb[0].mxu0
    %v1431 = vadd.f32 0.0, %v1430
    %1432 = vmatprep.mubr.bf16.mxu0 0
    %1433 = vmatmul.mubr.bf16.gmra.mrb[0].mxu0 %v1173
    %v1434 = vpop.f32.mrb[0].mxu0
    %v1435 = vadd.f32 0.0, %v1434
    %v1436 = vpop.f32.mrb[0].mxu0
    %v1437 = vadd.f32 0.0, %v1436
    %v1438 = vpop.f32.mrb[0].mxu0
    %v1439 = vadd.f32 0.0, %v1438
    %v1440 = vpop.f32.mrb[0].mxu0
    %v1441 = vadd.f32 0.0, %v1440
    %1442 = vmatprep.mubr.bf16.mxu0 0
    %1443 = vmatmul.mubr.bf16.gmra.mrb[0].mxu0 %v1176
    %v1444 = vpop.f32.mrb[0].mxu0
    %v1445 = vadd.f32 0.0, %v1444
    %v1446 = vpop.f32.mrb[0].mxu0
    %v1447 = vadd.f32 0.0, %v1446
    %v1448 = vpop.f32.mrb[0].mxu0
    %v1449 = vadd.f32 0.0, %v1448
    %v1450 = vpop.f32.mrb[0].mxu0
    %v1451 = vadd.f32 0.0, %v1450
    %1452 = vmatprep.mubr.bf16.mxu0 0
    %1453 = vmatmul.mubr.bf16.gmra.mrb[0].mxu0 %v1179
    %v1454 = vpop.f32.mrb[0].mxu0
    %v1455 = vadd.f32 0.0, %v1454
    %v1456 = vpop.f32.mrb[0].mxu0
    %v1457 = vadd.f32 0.0, %v1456
    %v1458 = vpop.f32.mrb[0].mxu0
    %v1459 = vadd.f32 0.0, %v1458
    %v1460 = vpop.f32.mrb[0].mxu0
    %v1461 = vadd.f32 0.0, %v1460
    %1462 = vmatprep.mubr.bf16.mxu0 0
    %1463 = vmatmul.mubr.bf16.gmra.mrb[0].mxu0 %v1182
    %v1464 = vpop.f32.mrb[0].mxu0
    %v1465 = vadd.f32 0.0, %v1464
    %v1466 = vpop.f32.mrb[0].mxu0
    %v1467 = vadd.f32 0.0, %v1466
    %v1468 = vpop.f32.mrb[0].mxu0
    %v1469 = vadd.f32 0.0, %v1468
    %v1470 = vpop.f32.mrb[0].mxu0
    %v1471 = vadd.f32 0.0, %v1470
    %1472 = vmatprep.mubr.bf16.mxu0 0
    %1473 = vmatmul.mubr.bf16.gmra.mrb[0].mxu0 %v1185
    %v1474 = vpop.f32.mrb[0].mxu0
    %v1475 = vadd.f32 0.0, %v1474
    %v1476 = vpop.f32.mrb[0].mxu0
    %v1477 = vadd.f32 0.0, %v1476
    %v1478 = vpop.f32.mrb[0].mxu0
    %v1479 = vadd.f32 0.0, %v1478
    %v1480 = vpop.f32.mrb[0].mxu0
    %v1481 = vadd.f32 0.0, %v1480
    %1482 = vmatprep.mubr.bf16.mxu0 0
    %1483 = vmatmul.mubr.bf16.gmra.mrb[0].mxu0 %v1188
    %v1484 = vpop.f32.mrb[0].mxu0
    %v1485 = vadd.f32 0.0, %v1484
    %v1486 = vpop.f32.mrb[0].mxu0
    %v1487 = vadd.f32 0.0, %v1486
    %v1488 = vpop.f32.mrb[0].mxu0
    %v1489 = vadd.f32 0.0, %v1488
    %v1490 = vpop.f32.mrb[0].mxu0
    %v1491 = vadd.f32 0.0, %v1490
    %1492 = vmatprep.mubr.bf16.mxu0 0
    %1493 = vmatmul.mubr.bf16.gmra.mrb[0].mxu0 %v1191
    %v1494 = vpop.f32.mrb[0].mxu0
    %v1495 = vadd.f32 0.0, %v1494
    %v1496 = vpop.f32.mrb[0].mxu0
    %v1497 = vadd.f32 0.0, %v1496
    %v1498 = vpop.f32.mrb[0].mxu0
    %v1499 = vadd.f32 0.0, %v1498
    %v1500 = vpop.f32.mrb[0].mxu0
    %v1501 = vadd.f32 0.0, %v1500
    %1502 = vmatprep.mubr.bf16.mxu0 0
    %1503 = vmatmul.mubr.bf16.gmra.mrb[0].mxu0 %v1194
    %v1504 = vpop.f32.mrb[0].mxu0
    %v1505 = vadd.f32 0.0, %v1504
    %v1506 = vpop.f32.mrb[0].mxu0
    %v1507 = vadd.f32 0.0, %v1506
    %v1508 = vpop.f32.mrb[0].mxu0
    %v1509 = vadd.f32 0.0, %v1508
    %v1510 = vpop.f32.mrb[0].mxu0
    %v1511 = vadd.f32 0.0, %v1510
    %1512 = vmatprep.mubr.bf16.mxu0 0
    %1513 = vmatmul.mubr.bf16.gmra.mrb[0].mxu0 %v1197
    %v1514 = vpop.f32.mrb[0].mxu0
    %v1515 = vadd.f32 0.0, %v1514
    %v1516 = vpop.f32.mrb[0].mxu0
    %v1517 = vadd.f32 0.0, %v1516
    %v1518 = vpop.f32.mrb[0].mxu0
    %v1519 = vadd.f32 0.0, %v1518
    %v1520 = vpop.f32.mrb[0].mxu0
    %v1521 = vadd.f32 0.0, %v1520
    %1522 = vmatprep.mubr.bf16.mxu0 0
    %1523 = vmatmul.mubr.bf16.gmra.mrb[0].mxu0 %v1200
    %v1524 = vpop.f32.mrb[0].mxu0
    %v1525 = vadd.f32 0.0, %v1524
    %v1526 = vpop.f32.mrb[0].mxu0
    %v1527 = vadd.f32 0.0, %v1526
    %v1528 = vpop.f32.mrb[0].mxu0
    %v1529 = vadd.f32 0.0, %v1528
    %v1530 = vpop.f32.mrb[0].mxu0
    %v1531 = vadd.f32 0.0, %v1530
    %1532 = vmatprep.mubr.bf16.mxu0 0
    %1533 = vmatmul.mubr.bf16.gmra.mrb[0].mxu0 %v1203
    %v1534 = vpop.f32.mrb[0].mxu0
    %v1535 = vadd.f32 0.0, %v1534
    %v1536 = vpop.f32.mrb[0].mxu0
    %v1537 = vadd.f32 0.0, %v1536
    %v1538 = vpop.f32.mrb[0].mxu0
    %v1539 = vadd.f32 0.0, %v1538
    %v1540 = vpop.f32.mrb[0].mxu0
    %v1541 = vadd.f32 0.0, %v1540
    %1542 = vdwg.mxu0
    %v1543 = vadd.f32 %v739, %v1252
    %v1544 = vadd.f32 %v741, %v1254
    %v1545 = vadd.f32 %v902, %v1415
    %v1546 = vadd.f32 %v904, %v1417
    %v1547 = vadd.f32 %v743, %v1256
    %v1548 = vadd.f32 %v745, %v1258
    %v1549 = vadd.f32 %v906, %v1419
    %v1550 = vadd.f32 %v908, %v1421
    %v1551 = vadd.f32 %v749, %v1262
    %v1552 = vadd.f32 %v751, %v1264
    %v1553 = vadd.f32 %v912, %v1425
    %v1554 = vadd.f32 %v914, %v1427
    %v1555 = vadd.f32 %v753, %v1266
    %v1556 = vadd.f32 %v755, %v1268
    %v1557 = vadd.f32 %v916, %v1429
    %v1558 = vadd.f32 %v918, %v1431
    %v1559 = vadd.f32 %v759, %v1272
    %v1560 = vadd.f32 %v761, %v1274
    %v1561 = vadd.f32 %v922, %v1435
    %v1562 = vadd.f32 %v924, %v1437
    %v1563 = vadd.f32 %v763, %v1276
    %v1564 = vadd.f32 %v765, %v1278
    %v1565 = vadd.f32 %v926, %v1439
    %v1566 = vadd.f32 %v928, %v1441
    %v1567 = vadd.f32 %v769, %v1282
    %v1568 = vadd.f32 %v771, %v1284
    %v1569 = vadd.f32 %v932, %v1445
    %v1570 = vadd.f32 %v934, %v1447
    %v1571 = vadd.f32 %v773, %v1286
    %v1572 = vadd.f32 %v775, %v1288
    %v1573 = vadd.f32 %v936, %v1449
    %v1574 = vadd.f32 %v938, %v1451
    %v1575 = vadd.f32 %v779, %v1292
    %v1576 = vadd.f32 %v781, %v1294
    %v1577 = vadd.f32 %v942, %v1455
    %v1578 = vadd.f32 %v944, %v1457
    %v1579 = vadd.f32 %v783, %v1296
    %v1580 = vadd.f32 %v785, %v1298
    %v1581 = vadd.f32 %v946, %v1459
    %v1582 = vadd.f32 %v948, %v1461
    %v1583 = vadd.f32 %v789, %v1302
    %v1584 = vadd.f32 %v791, %v1304
    %v1585 = vadd.f32 %v952, %v1465
    %v1586 = vadd.f32 %v954, %v1467
    %v1587 = vadd.f32 %v793, %v1306
    %v1588 = vadd.f32 %v795, %v1308
    %v1589 = vadd.f32 %v956, %v1469
    %v1590 = vadd.f32 %v958, %v1471
    %v1591 = vadd.f32 %v799, %v1312
    %v1592 = vadd.f32 %v801, %v1314
    %v1593 = vadd.f32 %v962, %v1475
    %v1594 = vadd.f32 %v964, %v1477
    %v1595 = vadd.f32 %v803, %v1316
    %v1596 = vadd.f32 %v805, %v1318
    %v1597 = vadd.f32 %v966, %v1479
    %v1598 = vadd.f32 %v968, %v1481
    %v1599 = vadd.f32 %v809, %v1322
    %v1600 = vadd.f32 %v811, %v1324
    %v1601 = vadd.f32 %v972, %v1485
    %v1602 = vadd.f32 %v974, %v1487
    %v1603 = vadd.f32 %v813, %v1326
    %v1604 = vadd.f32 %v815, %v1328
    %v1605 = vadd.f32 %v976, %v1489
    %v1606 = vadd.f32 %v978, %v1491
    %v1607 = vadd.f32 %v819, %v1332
    %v1608 = vadd.f32 %v821, %v1334
    %v1609 = vadd.f32 %v982, %v1495
    %v1610 = vadd.f32 %v984, %v1497
    %v1611 = vadd.f32 %v823, %v1336
    %v1612 = vadd.f32 %v825, %v1338
    %v1613 = vadd.f32 %v986, %v1499
    %v1614 = vadd.f32 %v988, %v1501
    %v1615 = vadd.f32 %v829, %v1342
    %v1616 = vadd.f32 %v831, %v1344
    %v1617 = vadd.f32 %v992, %v1505
    %v1618 = vadd.f32 %v994, %v1507
    %v1619 = vadd.f32 %v833, %v1346
    %v1620 = vadd.f32 %v835, %v1348
    %v1621 = vadd.f32 %v996, %v1509
    %v1622 = vadd.f32 %v998, %v1511
    %v1623 = vadd.f32 %v839, %v1352
    %v1624 = vadd.f32 %v841, %v1354
    %v1625 = vadd.f32 %v1002, %v1515
    %v1626 = vadd.f32 %v1004, %v1517
    %v1627 = vadd.f32 %v843, %v1356
    %v1628 = vadd.f32 %v845, %v1358
    %v1629 = vadd.f32 %v1006, %v1519
    %v1630 = vadd.f32 %v1008, %v1521
    %v1631 = vadd.f32 %v849, %v1362
    %v1632 = vadd.f32 %v851, %v1364
    %v1633 = vadd.f32 %v1012, %v1525
    %v1634 = vadd.f32 %v1014, %v1527
    %v1635 = vadd.f32 %v853, %v1366
    %v1636 = vadd.f32 %v855, %v1368
    %v1637 = vadd.f32 %v1016, %v1529
    %v1638 = vadd.f32 %v1018, %v1531
    %v1639 = vadd.f32 %v859, %v1372
    %v1640 = vadd.f32 %v861, %v1374
    %v1641 = vadd.f32 %v1022, %v1535
    %v1642 = vadd.f32 %v1024, %v1537
    %v1643 = vadd.f32 %v863, %v1376
    %v1644 = vadd.f32 %v865, %v1378
    %v1645 = vadd.f32 %v1026, %v1539
    %v1646 = vadd.f32 %v1028, %v1541
    %v1647 = vld [vmem:[%s2] sm:$0xf]
    %v1649 = vlaneseq
    %v1650 = vshrl.u32 %v1649, 7
    %v1651 = vsub.s32 0, %v1650
    %v1652 = vrot.slane %v1647, %v1651
    %v1653 = vlaneseq
    %v1654 = vshrl.u32 %v1653, 7
    %v1655 = vsub.s32 1, %v1654
    %v1656 = vrot.slane %v1647, %v1655
    %v1657 = vlaneseq
    %v1658 = vshrl.u32 %v1657, 7
    %v1659 = vsub.s32 2, %v1658
    %v1660 = vrot.slane %v1647, %v1659
    %v1661 = vlaneseq
    %v1662 = vshrl.u32 %v1661, 7
    %v1663 = vsub.s32 3, %v1662
    %v1664 = vrot.slane %v1647, %v1663
    %v1669 = vadd.f32 %v1543, %v1652
    %v1670 = vadd.f32 %v1544, %v1656
    %v1671 = vadd.f32 %v1545, %v1660
    %v1672 = vadd.f32 %v1546, %v1664
    %v1673 = vadd.f32 %v1547, %v1652
    %v1674 = vadd.f32 %v1548, %v1656
    %v1675 = vadd.f32 %v1549, %v1660
    %v1676 = vadd.f32 %v1550, %v1664
    %v1677 = vadd.f32 %v1551, %v1652
    %v1678 = vadd.f32 %v1552, %v1656
    %v1679 = vadd.f32 %v1553, %v1660
    %v1680 = vadd.f32 %v1554, %v1664
    %v1681 = vadd.f32 %v1555, %v1652
    %v1682 = vadd.f32 %v1556, %v1656
    %v1683 = vadd.f32 %v1557, %v1660
    %v1684 = vadd.f32 %v1558, %v1664
    %v1685 = vadd.f32 %v1559, %v1652
    %v1686 = vadd.f32 %v1560, %v1656
    %v1687 = vadd.f32 %v1561, %v1660
    %v1688 = vadd.f32 %v1562, %v1664
    %v1689 = vadd.f32 %v1563, %v1652
    %v1690 = vadd.f32 %v1564, %v1656
    %v1691 = vadd.f32 %v1565, %v1660
    %v1692 = vadd.f32 %v1566, %v1664
    %v1693 = vadd.f32 %v1567, %v1652
    %v1694 = vadd.f32 %v1568, %v1656
    %v1695 = vadd.f32 %v1569, %v1660
    %v1696 = vadd.f32 %v1570, %v1664
    %v1697 = vadd.f32 %v1571, %v1652
    %v1698 = vadd.f32 %v1572, %v1656
    %v1699 = vadd.f32 %v1573, %v1660
    %v1700 = vadd.f32 %v1574, %v1664
    %v1701 = vadd.f32 %v1575, %v1652
    %v1702 = vadd.f32 %v1576, %v1656
    %v1703 = vadd.f32 %v1577, %v1660
    %v1704 = vadd.f32 %v1578, %v1664
    %v1705 = vadd.f32 %v1579, %v1652
    %v1706 = vadd.f32 %v1580, %v1656
    %v1707 = vadd.f32 %v1581, %v1660
    %v1708 = vadd.f32 %v1582, %v1664
    %v1709 = vadd.f32 %v1583, %v1652
    %v1710 = vadd.f32 %v1584, %v1656
    %v1711 = vadd.f32 %v1585, %v1660
    %v1712 = vadd.f32 %v1586, %v1664
    %v1713 = vadd.f32 %v1587, %v1652
    %v1714 = vadd.f32 %v1588, %v1656
    %v1715 = vadd.f32 %v1589, %v1660
    %v1716 = vadd.f32 %v1590, %v1664
    %v1717 = vadd.f32 %v1591, %v1652
    %v1718 = vadd.f32 %v1592, %v1656
    %v1719 = vadd.f32 %v1593, %v1660
    %v1720 = vadd.f32 %v1594, %v1664
    %v1721 = vadd.f32 %v1595, %v1652
    %v1722 = vadd.f32 %v1596, %v1656
    %v1723 = vadd.f32 %v1597, %v1660
    %v1724 = vadd.f32 %v1598, %v1664
    %v1725 = vadd.f32 %v1599, %v1652
    %v1726 = vadd.f32 %v1600, %v1656
    %v1727 = vadd.f32 %v1601, %v1660
    %v1728 = vadd.f32 %v1602, %v1664
    %v1729 = vadd.f32 %v1603, %v1652
    %v1730 = vadd.f32 %v1604, %v1656
    %v1731 = vadd.f32 %v1605, %v1660
    %v1732 = vadd.f32 %v1606, %v1664
    %v1733 = vadd.f32 %v1607, %v1652
    %v1734 = vadd.f32 %v1608, %v1656
    %v1735 = vadd.f32 %v1609, %v1660
    %v1736 = vadd.f32 %v1610, %v1664
    %v1737 = vadd.f32 %v1611, %v1652
    %v1738 = vadd.f32 %v1612, %v1656
    %v1739 = vadd.f32 %v1613, %v1660
    %v1740 = vadd.f32 %v1614, %v1664
    %v1741 = vadd.f32 %v1615, %v1652
    %v1742 = vadd.f32 %v1616, %v1656
    %v1743 = vadd.f32 %v1617, %v1660
    %v1744 = vadd.f32 %v1618, %v1664
    %v1745 = vadd.f32 %v1619, %v1652
    %v1746 = vadd.f32 %v1620, %v1656
    %v1747 = vadd.f32 %v1621, %v1660
    %v1748 = vadd.f32 %v1622, %v1664
    %v1749 = vadd.f32 %v1623, %v1652
    %v1750 = vadd.f32 %v1624, %v1656
    %v1751 = vadd.f32 %v1625, %v1660
    %v1752 = vadd.f32 %v1626, %v1664
    %v1753 = vadd.f32 %v1627, %v1652
    %v1754 = vadd.f32 %v1628, %v1656
    %v1755 = vadd.f32 %v1629, %v1660
    %v1756 = vadd.f32 %v1630, %v1664
    %v1757 = vadd.f32 %v1631, %v1652
    %v1758 = vadd.f32 %v1632, %v1656
    %v1759 = vadd.f32 %v1633, %v1660
    %v1760 = vadd.f32 %v1634, %v1664
    %v1761 = vadd.f32 %v1635, %v1652
    %v1762 = vadd.f32 %v1636, %v1656
    %v1763 = vadd.f32 %v1637, %v1660
    %v1764 = vadd.f32 %v1638, %v1664
    %v1765 = vadd.f32 %v1639, %v1652
    %v1766 = vadd.f32 %v1640, %v1656
    %v1767 = vadd.f32 %v1641, %v1660
    %v1768 = vadd.f32 %v1642, %v1664
    %v1769 = vadd.f32 %v1643, %v1652
    %v1770 = vadd.f32 %v1644, %v1656
    %v1771 = vadd.f32 %v1645, %v1660
    %v1772 = vadd.f32 %v1646, %v1664
    %v1773 = vmax.f32 %v1669, 0.0
    %v1774 = vmax.f32 %v1670, 0.0
    %v1775 = vmax.f32 %v1671, 0.0
    %v1776 = vmax.f32 %v1672, 0.0
    %v1777 = vmax.f32 %v1673, 0.0
    %v1778 = vmax.f32 %v1674, 0.0
    %v1779 = vmax.f32 %v1675, 0.0
    %v1780 = vmax.f32 %v1676, 0.0
    %v1781 = vmax.f32 %v1677, 0.0
    %v1782 = vmax.f32 %v1678, 0.0
    %v1783 = vmax.f32 %v1679, 0.0
    %v1784 = vmax.f32 %v1680, 0.0
    %v1785 = vmax.f32 %v1681, 0.0
    %v1786 = vmax.f32 %v1682, 0.0
    %v1787 = vmax.f32 %v1683, 0.0
    %v1788 = vmax.f32 %v1684, 0.0
    %v1789 = vmax.f32 %v1685, 0.0
    %v1790 = vmax.f32 %v1686, 0.0
    %v1791 = vmax.f32 %v1687, 0.0
    %v1792 = vmax.f32 %v1688, 0.0
    %v1793 = vmax.f32 %v1689, 0.0
    %v1794 = vmax.f32 %v1690, 0.0
    %v1795 = vmax.f32 %v1691, 0.0
    %v1796 = vmax.f32 %v1692, 0.0
    %v1797 = vmax.f32 %v1693, 0.0
    %v1798 = vmax.f32 %v1694, 0.0
    %v1799 = vmax.f32 %v1695, 0.0
    %v1800 = vmax.f32 %v1696, 0.0
    %v1801 = vmax.f32 %v1697, 0.0
    %v1802 = vmax.f32 %v1698, 0.0
    %v1803 = vmax.f32 %v1699, 0.0
    %v1804 = vmax.f32 %v1700, 0.0
    %v1805 = vmax.f32 %v1701, 0.0
    %v1806 = vmax.f32 %v1702, 0.0
    %v1807 = vmax.f32 %v1703, 0.0
    %v1808 = vmax.f32 %v1704, 0.0
    %v1809 = vmax.f32 %v1705, 0.0
    %v1810 = vmax.f32 %v1706, 0.0
    %v1811 = vmax.f32 %v1707, 0.0
    %v1812 = vmax.f32 %v1708, 0.0
    %v1813 = vmax.f32 %v1709, 0.0
    %v1814 = vmax.f32 %v1710, 0.0
    %v1815 = vmax.f32 %v1711, 0.0
    %v1816 = vmax.f32 %v1712, 0.0
    %v1817 = vmax.f32 %v1713, 0.0
    %v1818 = vmax.f32 %v1714, 0.0
    %v1819 = vmax.f32 %v1715, 0.0
    %v1820 = vmax.f32 %v1716, 0.0
    %v1821 = vmax.f32 %v1717, 0.0
    %v1822 = vmax.f32 %v1718, 0.0
    %v1823 = vmax.f32 %v1719, 0.0
    %v1824 = vmax.f32 %v1720, 0.0
    %v1825 = vmax.f32 %v1721, 0.0
    %v1826 = vmax.f32 %v1722, 0.0
    %v1827 = vmax.f32 %v1723, 0.0
    %v1828 = vmax.f32 %v1724, 0.0
    %v1829 = vmax.f32 %v1725, 0.0
    %v1830 = vmax.f32 %v1726, 0.0
    %v1831 = vmax.f32 %v1727, 0.0
    %v1832 = vmax.f32 %v1728, 0.0
    %v1833 = vmax.f32 %v1729, 0.0
    %v1834 = vmax.f32 %v1730, 0.0
    %v1835 = vmax.f32 %v1731, 0.0
    %v1836 = vmax.f32 %v1732, 0.0
    %v1837 = vmax.f32 %v1733, 0.0
    %v1838 = vmax.f32 %v1734, 0.0
    %v1839 = vmax.f32 %v1735, 0.0
    %v1840 = vmax.f32 %v1736, 0.0
    %v1841 = vmax.f32 %v1737, 0.0
    %v1842 = vmax.f32 %v1738, 0.0
    %v1843 = vmax.f32 %v1739, 0.0
    %v1844 = vmax.f32 %v1740, 0.0
    %v1845 = vmax.f32 %v1741, 0.0
    %v1846 = vmax.f32 %v1742, 0.0
    %v1847 = vmax.f32 %v1743, 0.0
    %v1848 = vmax.f32 %v1744, 0.0
    %v1849 = vmax.f32 %v1745, 0.0
    %v1850 = vmax.f32 %v1746, 0.0
    %v1851 = vmax.f32 %v1747, 0.0
    %v1852 = vmax.f32 %v1748, 0.0
    %v1853 = vmax.f32 %v1749, 0.0
    %v1854 = vmax.f32 %v1750, 0.0
    %v1855 = vmax.f32 %v1751, 0.0
    %v1856 = vmax.f32 %v1752, 0.0
    %v1857 = vmax.f32 %v1753, 0.0
    %v1858 = vmax.f32 %v1754, 0.0
    %v1859 = vmax.f32 %v1755, 0.0
    %v1860 = vmax.f32 %v1756, 0.0
    %v1861 = vmax.f32 %v1757, 0.0
    %v1862 = vmax.f32 %v1758, 0.0
    %v1863 = vmax.f32 %v1759, 0.0
    %v1864 = vmax.f32 %v1760, 0.0
    %v1865 = vmax.f32 %v1761, 0.0
    %v1866 = vmax.f32 %v1762, 0.0
    %v1867 = vmax.f32 %v1763, 0.0
    %v1868 = vmax.f32 %v1764, 0.0
    %v1869 = vmax.f32 %v1765, 0.0
    %v1870 = vmax.f32 %v1766, 0.0
    %v1871 = vmax.f32 %v1767, 0.0
    %v1872 = vmax.f32 %v1768, 0.0
    %v1873 = vmax.f32 %v1769, 0.0
    %v1874 = vmax.f32 %v1770, 0.0
    %v1875 = vmax.f32 %v1771, 0.0
    %v1876 = vmax.f32 %v1772, 0.0
    %v1877 = vpack.c.bf16 %v1777, %v1773
    %v1878 = vpack.c.bf16 %v1778, %v1774
    %v1879 = vpack.c.bf16 %v1779, %v1775
    %v1880 = vpack.c.bf16 %v1780, %v1776
    %v1881 = vpack.c.bf16 %v1785, %v1781
    %v1882 = vpack.c.bf16 %v1786, %v1782
    %v1883 = vpack.c.bf16 %v1787, %v1783
    %v1884 = vpack.c.bf16 %v1788, %v1784
    %v1885 = vpack.c.bf16 %v1793, %v1789
    %v1886 = vpack.c.bf16 %v1794, %v1790
    %v1887 = vpack.c.bf16 %v1795, %v1791
    %v1888 = vpack.c.bf16 %v1796, %v1792
    %v1889 = vpack.c.bf16 %v1801, %v1797
    %v1890 = vpack.c.bf16 %v1802, %v1798
    %v1891 = vpack.c.bf16 %v1803, %v1799
    %v1892 = vpack.c.bf16 %v1804, %v1800
    %v1893 = vpack.c.bf16 %v1809, %v1805
    %v1894 = vpack.c.bf16 %v1810, %v1806
    %v1895 = vpack.c.bf16 %v1811, %v1807
    %v1896 = vpack.c.bf16 %v1812, %v1808
    %v1897 = vpack.c.bf16 %v1817, %v1813
    %v1898 = vpack.c.bf16 %v1818, %v1814
    %v1899 = vpack.c.bf16 %v1819, %v1815
    %v1900 = vpack.c.bf16 %v1820, %v1816
    %v1901 = vpack.c.bf16 %v1825, %v1821
    %v1902 = vpack.c.bf16 %v1826, %v1822
    %v1903 = vpack.c.bf16 %v1827, %v1823
    %v1904 = vpack.c.bf16 %v1828, %v1824
    %v1905 = vpack.c.bf16 %v1833, %v1829
    %v1906 = vpack.c.bf16 %v1834, %v1830
    %v1907 = vpack.c.bf16 %v1835, %v1831
    %v1908 = vpack.c.bf16 %v1836, %v1832
    %v1909 = vpack.c.bf16 %v1841, %v1837
    %v1910 = vpack.c.bf16 %v1842, %v1838
    %v1911 = vpack.c.bf16 %v1843, %v1839
    %v1912 = vpack.c.bf16 %v1844, %v1840
    %v1913 = vpack.c.bf16 %v1849, %v1845
    %v1914 = vpack.c.bf16 %v1850, %v1846
    %v1915 = vpack.c.bf16 %v1851, %v1847
    %v1916 = vpack.c.bf16 %v1852, %v1848
    %v1917 = vpack.c.bf16 %v1857, %v1853
    %v1918 = vpack.c.bf16 %v1858, %v1854
    %v1919 = vpack.c.bf16 %v1859, %v1855
    %v1920 = vpack.c.bf16 %v1860, %v1856
    %v1921 = vpack.c.bf16 %v1865, %v1861
    %v1922 = vpack.c.bf16 %v1866, %v1862
    %v1923 = vpack.c.bf16 %v1867, %v1863
    %v1924 = vpack.c.bf16 %v1868, %v1864
    %v1925 = vpack.c.bf16 %v1873, %v1869
    %v1926 = vpack.c.bf16 %v1874, %v1870
    %v1927 = vpack.c.bf16 %v1875, %v1871
    %v1928 = vpack.c.bf16 %v1876, %v1872
    %1929 = vst [vmem:[#allocation2] sm:$0xff] %v1877
    %1930 = vst [vmem:[#allocation2 + $0x8] sm:$0xff] %v1878
    %1931 = vst [vmem:[#allocation2 + $0x10] sm:$0xff] %v1879
    %vm1932 = vcmask 261120
    %1933 = vst.msk [vmem:[#allocation2 + $0x18] sm:$0xff] %vm1932, %v1880
    %1934 = vst [vmem:[#allocation2 + $0x20] sm:$0xff] %v1881
    %1935 = vst [vmem:[#allocation2 + $0x28] sm:$0xff] %v1882
    %1936 = vst [vmem:[#allocation2 + $0x30] sm:$0xff] %v1883
    %1937 = vst.msk [vmem:[#allocation2 + $0x38] sm:$0xff] %vm1932, %v1884
    %1938 = vst [vmem:[#allocation2 + $0x40] sm:$0xff] %v1885
    %1939 = vst [vmem:[#allocation2 + $0x48] sm:$0xff] %v1886
    %1940 = vst [vmem:[#allocation2 + $0x50] sm:$0xff] %v1887
    %1941 = vst.msk [vmem:[#allocation2 + $0x58] sm:$0xff] %vm1932, %v1888
    %1942 = vst [vmem:[#allocation2 + $0x60] sm:$0xff] %v1889
    %1943 = vst [vmem:[#allocation2 + $0x68] sm:$0xff] %v1890
    %1944 = vst [vmem:[#allocation2 + $0x70] sm:$0xff] %v1891
    %1945 = vst.msk [vmem:[#allocation2 + $0x78] sm:$0xff] %vm1932, %v1892
    %1946 = vst [vmem:[#allocation2 + $0x80] sm:$0xff] %v1893
    %1947 = vst [vmem:[#allocation2 + $0x88] sm:$0xff] %v1894
    %1948 = vst [vmem:[#allocation2 + $0x90] sm:$0xff] %v1895
    %1949 = vst.msk [vmem:[#allocation2 + $0x98] sm:$0xff] %vm1932, %v1896
    %1950 = vst [vmem:[#allocation2 + $0xa0] sm:$0xff] %v1897
    %1951 = vst [vmem:[#allocation2 + $0xa8] sm:$0xff] %v1898
    %1952 = vst [vmem:[#allocation2 + $0xb0] sm:$0xff] %v1899
    %1953 = vst.msk [vmem:[#allocation2 + $0xb8] sm:$0xff] %vm1932, %v1900
    %1954 = vst [vmem:[#allocation2 + $0xc0] sm:$0xff] %v1901
    %1955 = vst [vmem:[#allocation2 + $0xc8] sm:$0xff] %v1902
    %1956 = vst [vmem:[#allocation2 + $0xd0] sm:$0xff] %v1903
    %1957 = vst.msk [vmem:[#allocation2 + $0xd8] sm:$0xff] %vm1932, %v1904
    %1958 = vst [vmem:[#allocation2 + $0xe0] sm:$0xff] %v1905
    %1959 = vst [vmem:[#allocation2 + $0xe8] sm:$0xff] %v1906
    %1960 = vst [vmem:[#allocation2 + $0xf0] sm:$0xff] %v1907
    %1961 = vst.msk [vmem:[#allocation2 + $0xf8] sm:$0xff] %vm1932, %v1908
    %1962 = vst [vmem:[#allocation2 + $0x100] sm:$0xff] %v1909
    %1963 = vst [vmem:[#allocation2 + $0x108] sm:$0xff] %v1910
    %1964 = vst [vmem:[#allocation2 + $0x110] sm:$0xff] %v1911
    %1965 = vst.msk [vmem:[#allocation2 + $0x118] sm:$0xff] %vm1932, %v1912
    %1966 = vst [vmem:[#allocation2 + $0x120] sm:$0xff] %v1913
    %1967 = vst [vmem:[#allocation2 + $0x128] sm:$0xff] %v1914
    %1968 = vst [vmem:[#allocation2 + $0x130] sm:$0xff] %v1915
    %1969 = vst.msk [vmem:[#allocation2 + $0x138] sm:$0xff] %vm1932, %v1916
    %1970 = vst [vmem:[#allocation2 + $0x140] sm:$0xff] %v1917
    %1971 = vst [vmem:[#allocation2 + $0x148] sm:$0xff] %v1918
    %1972 = vst [vmem:[#allocation2 + $0x150] sm:$0xff] %v1919
    %1973 = vst.msk [vmem:[#allocation2 + $0x158] sm:$0xff] %vm1932, %v1920
    %1974 = vst [vmem:[#allocation2 + $0x160] sm:$0xff] %v1921
    %1975 = vst [vmem:[#allocation2 + $0x168] sm:$0xff] %v1922
    %1976 = vst [vmem:[#allocation2 + $0x170] sm:$0xff] %v1923
    %1977 = vst.msk [vmem:[#allocation2 + $0x178] sm:$0xff] %vm1932, %v1924
    %1978 = vst [vmem:[#allocation2 + $0x180] sm:$0xff] %v1925
    %1979 = vst [vmem:[#allocation2 + $0x188] sm:$0xff] %v1926
    %1980 = vst [vmem:[#allocation2 + $0x190] sm:$0xff] %v1927
    %1981 = vst.msk [vmem:[#allocation2 + $0x198] sm:$0xff] %vm1932, %v1928
    %v1982 = vld [vmem:[#allocation2] sm:$0xff]
    %v1983 = vld [vmem:[#allocation2 + $0x8] sm:$0xff]
    %v1984 = vld [vmem:[#allocation2 + $0x10] sm:$0xff]
    %v1985 = vld [vmem:[#allocation2 + $0x18] sm:$0xff]
    %v1986 = vld [vmem:[#allocation2 + $0x20] sm:$0xff]
    %v1987 = vld [vmem:[#allocation2 + $0x28] sm:$0xff]
    %v1988 = vld [vmem:[#allocation2 + $0x30] sm:$0xff]
    %v1989 = vld [vmem:[#allocation2 + $0x38] sm:$0xff]
    %v1990 = vld [vmem:[#allocation2 + $0x40] sm:$0xff]
    %v1991 = vld [vmem:[#allocation2 + $0x48] sm:$0xff]
    %v1992 = vld [vmem:[#allocation2 + $0x50] sm:$0xff]
    %v1993 = vld [vmem:[#allocation2 + $0x58] sm:$0xff]
    %v1994 = vld [vmem:[#allocation2 + $0x60] sm:$0xff]
    %v1995 = vld [vmem:[#allocation2 + $0x68] sm:$0xff]
    %v1996 = vld [vmem:[#allocation2 + $0x70] sm:$0xff]
    %v1997 = vld [vmem:[#allocation2 + $0x78] sm:$0xff]
    %v1998 = vld [vmem:[#allocation2 + $0x80] sm:$0xff]
    %v1999 = vld [vmem:[#allocation2 + $0x88] sm:$0xff]
    %v2000 = vld [vmem:[#allocation2 + $0x90] sm:$0xff]
    %v2001 = vld [vmem:[#allocation2 + $0x98] sm:$0xff]
    %v2002 = vld [vmem:[#allocation2 + $0xa0] sm:$0xff]
    %v2003 = vld [vmem:[#allocation2 + $0xa8] sm:$0xff]
    %v2004 = vld [vmem:[#allocation2 + $0xb0] sm:$0xff]
    %v2005 = vld [vmem:[#allocation2 + $0xb8] sm:$0xff]
    %v2006 = vld [vmem:[#allocation2 + $0xc0] sm:$0xff]
    %v2007 = vld [vmem:[#allocation2 + $0xc8] sm:$0xff]
    %v2008 = vld [vmem:[#allocation2 + $0xd0] sm:$0xff]
    %v2009 = vld [vmem:[#allocation2 + $0xd8] sm:$0xff]
    %v2010 = vld [vmem:[#allocation2 + $0xe0] sm:$0xff]
    %v2011 = vld [vmem:[#allocation2 + $0xe8] sm:$0xff]
    %v2012 = vld [vmem:[#allocation2 + $0xf0] sm:$0xff]
    %v2013 = vld [vmem:[#allocation2 + $0xf8] sm:$0xff]
    %v2014 = vld [vmem:[#allocation2 + $0x100] sm:$0xff]
    %v2015 = vld [vmem:[#allocation2 + $0x108] sm:$0xff]
    %v2016 = vld [vmem:[#allocation2 + $0x110] sm:$0xff]
    %v2017 = vld [vmem:[#allocation2 + $0x118] sm:$0xff]
    %v2018 = vld [vmem:[#allocation2 + $0x120] sm:$0xff]
    %v2019 = vld [vmem:[#allocation2 + $0x128] sm:$0xff]
    %v2020 = vld [vmem:[#allocation2 + $0x130] sm:$0xff]
    %v2021 = vld [vmem:[#allocation2 + $0x138] sm:$0xff]
    %v2022 = vld [vmem:[#allocation2 + $0x140] sm:$0xff]
    %v2023 = vld [vmem:[#allocation2 + $0x148] sm:$0xff]
    %v2024 = vld [vmem:[#allocation2 + $0x150] sm:$0xff]
    %v2025 = vld [vmem:[#allocation2 + $0x158] sm:$0xff]
    %v2026 = vld [vmem:[#allocation2 + $0x160] sm:$0xff]
    %v2027 = vld [vmem:[#allocation2 + $0x168] sm:$0xff]
    %v2028 = vld [vmem:[#allocation2 + $0x170] sm:$0xff]
    %v2029 = vld [vmem:[#allocation2 + $0x178] sm:$0xff]
    %v2030 = vld [vmem:[#allocation7] sm:$0xff]
    %v2031 = vld [vmem:[#allocation7 + $0x8] sm:$0xf]
    %v2032 = vld [vmem:[#allocation7 + $0xc] sm:$0xff]
    %v2033 = vld [vmem:[#allocation7 + $0x14] sm:$0xf]
    %v2034 = vld [vmem:[#allocation7 + $0x18] sm:$0xff]
    %v2035 = vld [vmem:[#allocation7 + $0x20] sm:$0xf]
    %v2036 = vld [vmem:[#allocation7 + $0x24] sm:$0xff]
    %v2037 = vld [vmem:[#allocation7 + $0x2c] sm:$0xf]
    %v2038 = vld [vmem:[#allocation7 + $0x30] sm:$0xff]
    %v2039 = vld [vmem:[#allocation7 + $0x38] sm:$0xf]
    %v2040 = vld [vmem:[#allocation7 + $0x3c] sm:$0xff]
    %v2041 = vld [vmem:[#allocation7 + $0x44] sm:$0xf]
    %v2042 = vld [vmem:[#allocation7 + $0x48] sm:$0xff]
    %v2043 = vld [vmem:[#allocation7 + $0x50] sm:$0xf]
    %v2044 = vld [vmem:[#allocation7 + $0x54] sm:$0xff]
    %v2045 = vld [vmem:[#allocation7 + $0x5c] sm:$0xf]
    %v2046 = vld [vmem:[#allocation7 + $0x60] sm:$0xff]
    %v2047 = vld [vmem:[#allocation7 + $0x68] sm:$0xf]
    %v2048 = vld [vmem:[#allocation7 + $0x6c] sm:$0xff]
    %v2049 = vld [vmem:[#allocation7 + $0x74] sm:$0xf]
    %v2050 = vld [vmem:[#allocation7 + $0x78] sm:$0xff]
    %v2051 = vld [vmem:[#allocation7 + $0x80] sm:$0xf]
    %v2052 = vld [vmem:[#allocation7 + $0x84] sm:$0xff]
    %v2053 = vld [vmem:[#allocation7 + $0x8c] sm:$0xf]
    %v2054 = vld [vmem:[#allocation7 + $0x90] sm:$0xff]
    %v2055 = vld [vmem:[#allocation7 + $0x98] sm:$0xf]
    %v2056 = vld [vmem:[#allocation7 + $0x9c] sm:$0xff]
    %v2057 = vld [vmem:[#allocation7 + $0xa4] sm:$0xf]
    %v2058 = vld [vmem:[#allocation7 + $0xa8] sm:$0xff]
    %v2059 = vld [vmem:[#allocation7 + $0xb0] sm:$0xf]
    %v2060 = vld [vmem:[#allocation7 + $0xb4] sm:$0xff]
    %v2061 = vld [vmem:[#allocation7 + $0xbc] sm:$0xf]
    %v2062 = vld [vmem:[#allocation7 + $0xc0] sm:$0xff]
    %v2063 = vld [vmem:[#allocation7 + $0xc8] sm:$0xf]
    %v2064 = vld [vmem:[#allocation7 + $0xcc] sm:$0xff]
    %v2065 = vld [vmem:[#allocation7 + $0xd4] sm:$0xf]
    %v2066 = vld [vmem:[#allocation7 + $0xd8] sm:$0xff]
    %v2067 = vld [vmem:[#allocation7 + $0xe0] sm:$0xf]
    %v2068 = vld [vmem:[#allocation7 + $0xe4] sm:$0xff]
    %v2069 = vld [vmem:[#allocation7 + $0xec] sm:$0xf]
    %v2070 = vld [vmem:[#allocation7 + $0xf0] sm:$0xff]
    %v2071 = vld [vmem:[#allocation7 + $0xf8] sm:$0xf]
    %v2072 = vld [vmem:[#allocation7 + $0xfc] sm:$0xff]
    %v2073 = vld [vmem:[#allocation7 + $0x104] sm:$0xf]
    %v2074 = vld [vmem:[#allocation7 + $0x108] sm:$0xff]
    %v2075 = vld [vmem:[#allocation7 + $0x110] sm:$0xf]
    %v2076 = vld [vmem:[#allocation7 + $0x114] sm:$0xff]
    %v2077 = vld [vmem:[#allocation7 + $0x11c] sm:$0xf]
    %v2078 = vld [vmem:[#allocation7 + $0x120] sm:$0xff]
    %v2079 = vld [vmem:[#allocation7 + $0x128] sm:$0xf]
    %v2080 = vld [vmem:[#allocation7 + $0x12c] sm:$0xff]
    %v2081 = vld [vmem:[#allocation7 + $0x134] sm:$0xf]
    %v2082 = vld [vmem:[#allocation7 + $0x138] sm:$0xff]
    %v2083 = vld [vmem:[#allocation7 + $0x140] sm:$0xf]
    %v2084 = vld [vmem:[#allocation7 + $0x144] sm:$0xff]
    %v2085 = vld [vmem:[#allocation7 + $0x14c] sm:$0xf]
    %v2086 = vld [vmem:[#allocation7 + $0x150] sm:$0xff]
    %v2087 = vld [vmem:[#allocation7 + $0x158] sm:$0xf]
    %v2088 = vld [vmem:[#allocation7 + $0x15c] sm:$0xff]
    %v2089 = vld [vmem:[#allocation7 + $0x164] sm:$0xf]
    %v2090 = vld [vmem:[#allocation7 + $0x168] sm:$0xff]
    %v2091 = vld [vmem:[#allocation7 + $0x170] sm:$0xf]
    %v2092 = vld [vmem:[#allocation7 + $0x174] sm:$0xff]
    %v2093 = vld [vmem:[#allocation7 + $0x17c] sm:$0xf]
    %v2094 = vld [vmem:[#allocation7 + $0x180] sm:$0xff]
    %v2095 = vld [vmem:[#allocation7 + $0x188] sm:$0xf]
    %v2096 = vld [vmem:[#allocation7 + $0x18c] sm:$0xff]
    %v2097 = vld [vmem:[#allocation7 + $0x194] sm:$0xf]
    %v2098 = vld [vmem:[#allocation7 + $0x198] sm:$0xff]
    %v2099 = vld [vmem:[#allocation7 + $0x1a0] sm:$0xf]
    %v2100 = vld [vmem:[#allocation7 + $0x1a4] sm:$0xff]
    %v2101 = vld [vmem:[#allocation7 + $0x1ac] sm:$0xf]
    %v2102 = vld [vmem:[#allocation7 + $0x1b0] sm:$0xff]
    %v2103 = vld [vmem:[#allocation7 + $0x1b8] sm:$0xf]
    %v2104 = vld [vmem:[#allocation7 + $0x1bc] sm:$0xff]
    %v2105 = vld [vmem:[#allocation7 + $0x1c4] sm:$0xf]
    %v2106 = vld [vmem:[#allocation7 + $0x1c8] sm:$0xff]
    %v2107 = vld [vmem:[#allocation7 + $0x1d0] sm:$0xf]
    %v2108 = vld [vmem:[#allocation7 + $0x1d4] sm:$0xff]
    %v2109 = vld [vmem:[#allocation7 + $0x1dc] sm:$0xf]
    %v2110 = vld [vmem:[#allocation7 + $0x1e0] sm:$0xff]
    %v2111 = vld [vmem:[#allocation7 + $0x1e8] sm:$0xf]
    %v2112 = vld [vmem:[#allocation7 + $0x1ec] sm:$0xff]
    %v2113 = vld [vmem:[#allocation7 + $0x1f4] sm:$0xf]
    %v2114 = vld [vmem:[#allocation7 + $0x1f8] sm:$0xff]
    %v2115 = vld [vmem:[#allocation7 + $0x200] sm:$0xf]
    %v2116 = vld [vmem:[#allocation7 + $0x204] sm:$0xff]
    %v2117 = vld [vmem:[#allocation7 + $0x20c] sm:$0xf]
    %v2118 = vld [vmem:[#allocation7 + $0x210] sm:$0xff]
    %v2119 = vld [vmem:[#allocation7 + $0x218] sm:$0xf]
    %v2120 = vld [vmem:[#allocation7 + $0x21c] sm:$0xff]
    %v2121 = vld [vmem:[#allocation7 + $0x224] sm:$0xf]
    %v2122 = vld [vmem:[#allocation7 + $0x228] sm:$0xff]
    %v2123 = vld [vmem:[#allocation7 + $0x230] sm:$0xf]
    %v2124 = vld [vmem:[#allocation7 + $0x234] sm:$0xff]
    %v2125 = vld [vmem:[#allocation7 + $0x23c] sm:$0xf]
    %v2126 = vld [vmem:[#allocation7 + $0x240] sm:$0xff]
    %v2127 = vld [vmem:[#allocation7 + $0x248] sm:$0xf]
    %v2128 = vld [vmem:[#allocation7 + $0x24c] sm:$0xff]
    %v2129 = vld [vmem:[#allocation7 + $0x254] sm:$0xf]
    %v2130 = vld [vmem:[#allocation7 + $0x258] sm:$0xff]
    %v2131 = vld [vmem:[#allocation7 + $0x260] sm:$0xf]
    %v2132 = vld [vmem:[#allocation7 + $0x264] sm:$0xff]
    %v2133 = vld [vmem:[#allocation7 + $0x26c] sm:$0xf]
    %v2134 = vld [vmem:[#allocation2] sm:$0xf0]
    %v2135 = vld [vmem:[#allocation2 + $0x8] sm:$0xf0]
    %v2136 = vld [vmem:[#allocation2 + $0x10] sm:$0xf0]
    %v2137 = vld [vmem:[#allocation2 + $0x18] sm:$0xf0]
    %v2138 = vld [vmem:[#allocation2 + $0x180] sm:$0xf]
    %v2139 = vld [vmem:[#allocation2 + $0x188] sm:$0xf]
    %v2140 = vld [vmem:[#allocation2 + $0x190] sm:$0xf]
    %v2141 = vld [vmem:[#allocation2 + $0x198] sm:$0xf]
    %s2142 = scalar_lea.vmem [#allocation7], 624
    %v2143 = vld [vmem:[%s2142] sm:$0xff]
    %v2144 = vld [vmem:[%s2142 + $0x8] sm:$0xf]
    %v2145 = vld [vmem:[%s2142 + $0xc] sm:$0xff]
    %v2146 = vld [vmem:[%s2142 + $0x14] sm:$0xf]
    %v2147 = vld [vmem:[%s2142 + $0x18] sm:$0xff]
    %v2148 = vld [vmem:[%s2142 + $0x20] sm:$0xf]
    %v2149 = vld [vmem:[%s2142 + $0x24] sm:$0xff]
    %v2150 = vld [vmem:[%s2142 + $0x2c] sm:$0xf]
    %v2151 = vld [vmem:[%s2142 + $0x30] sm:$0xff]
    %v2152 = vld [vmem:[%s2142 + $0x38] sm:$0xf]
    %v2153 = vld [vmem:[%s2142 + $0x3c] sm:$0xff]
    %v2154 = vld [vmem:[%s2142 + $0x44] sm:$0xf]
    %v2155 = vld [vmem:[%s2142 + $0x48] sm:$0xff]
    %v2156 = vld [vmem:[%s2142 + $0x50] sm:$0xf]
    %v2157 = vld [vmem:[%s2142 + $0x54] sm:$0xff]
    %v2158 = vld [vmem:[%s2142 + $0x5c] sm:$0xf]
    %v2159 = vld [vmem:[%s2142 + $0x60] sm:$0xff]
    %v2160 = vld [vmem:[%s2142 + $0x68] sm:$0xf]
    %v2161 = vld [vmem:[%s2142 + $0x6c] sm:$0xff]
    %v2162 = vld [vmem:[%s2142 + $0x74] sm:$0xf]
    %v2163 = vld [vmem:[%s2142 + $0x78] sm:$0xff]
    %v2164 = vld [vmem:[%s2142 + $0x80] sm:$0xf]
    %v2165 = vld [vmem:[%s2142 + $0x84] sm:$0xff]
    %v2166 = vld [vmem:[%s2142 + $0x8c] sm:$0xf]
    %v2167 = vld [vmem:[%s2142 + $0x90] sm:$0xff]
    %v2168 = vld [vmem:[%s2142 + $0x98] sm:$0xf]
    %v2169 = vld [vmem:[%s2142 + $0x9c] sm:$0xff]
    %v2170 = vld [vmem:[%s2142 + $0xa4] sm:$0xf]
    %v2171 = vld [vmem:[%s2142 + $0xa8] sm:$0xff]
    %v2172 = vld [vmem:[%s2142 + $0xb0] sm:$0xf]
    %v2173 = vld [vmem:[%s2142 + $0xb4] sm:$0xff]
    %v2174 = vld [vmem:[%s2142 + $0xbc] sm:$0xf]
    %v2175 = vld [vmem:[%s2142 + $0xc0] sm:$0xff]
    %v2176 = vld [vmem:[%s2142 + $0xc8] sm:$0xf]
    %v2177 = vld [vmem:[%s2142 + $0xcc] sm:$0xff]
    %v2178 = vld [vmem:[%s2142 + $0xd4] sm:$0xf]
    %v2179 = vld [vmem:[%s2142 + $0xd8] sm:$0xff]
    %v2180 = vld [vmem:[%s2142 + $0xe0] sm:$0xf]
    %v2181 = vld [vmem:[%s2142 + $0xe4] sm:$0xff]
    %v2182 = vld [vmem:[%s2142 + $0xec] sm:$0xf]
    %v2183 = vld [vmem:[%s2142 + $0xf0] sm:$0xff]
    %v2184 = vld [vmem:[%s2142 + $0xf8] sm:$0xf]
    %v2185 = vld [vmem:[%s2142 + $0xfc] sm:$0xff]
    %v2186 = vld [vmem:[%s2142 + $0x104] sm:$0xf]
    %v2187 = vld [vmem:[%s2142 + $0x108] sm:$0xff]
    %v2188 = vld [vmem:[%s2142 + $0x110] sm:$0xf]
    %v2189 = vld [vmem:[%s2142 + $0x114] sm:$0xff]
    %v2190 = vld [vmem:[%s2142 + $0x11c] sm:$0xf]
    %v2191 = vld [vmem:[%s2142 + $0x120] sm:$0xff]
    %v2192 = vld [vmem:[%s2142 + $0x128] sm:$0xf]
    %v2193 = vld [vmem:[%s2142 + $0x12c] sm:$0xff]
    %v2194 = vld [vmem:[%s2142 + $0x134] sm:$0xf]
    %v2195 = vld [vmem:[%s2142 + $0x138] sm:$0xff]
    %v2196 = vld [vmem:[%s2142 + $0x140] sm:$0xf]
    %v2197 = vld [vmem:[%s2142 + $0x144] sm:$0xff]
    %v2198 = vld [vmem:[%s2142 + $0x14c] sm:$0xf]
    %v2199 = vld [vmem:[%s2142 + $0x150] sm:$0xff]
    %v2200 = vld [vmem:[%s2142 + $0x158] sm:$0xf]
    %v2201 = vld [vmem:[%s2142 + $0x15c] sm:$0xff]
    %v2202 = vld [vmem:[%s2142 + $0x164] sm:$0xf]
    %v2203 = vld [vmem:[%s2142 + $0x168] sm:$0xff]
    %v2204 = vld [vmem:[%s2142 + $0x170] sm:$0xf]
    %v2205 = vld [vmem:[%s2142 + $0x174] sm:$0xff]
    %v2206 = vld [vmem:[%s2142 + $0x17c] sm:$0xf]
    %v2207 = vld [vmem:[%s2142 + $0x180] sm:$0xff]
    %v2208 = vld [vmem:[%s2142 + $0x188] sm:$0xf]
    %v2209 = vld [vmem:[%s2142 + $0x18c] sm:$0xff]
    %v2210 = vld [vmem:[%s2142 + $0x194] sm:$0xf]
    %v2211 = vld [vmem:[%s2142 + $0x198] sm:$0xff]
    %v2212 = vld [vmem:[%s2142 + $0x1a0] sm:$0xf]
    %v2213 = vld [vmem:[%s2142 + $0x1a4] sm:$0xff]
    %v2214 = vld [vmem:[%s2142 + $0x1ac] sm:$0xf]
    %v2215 = vld [vmem:[%s2142 + $0x1b0] sm:$0xff]
    %v2216 = vld [vmem:[%s2142 + $0x1b8] sm:$0xf]
    %v2217 = vld [vmem:[%s2142 + $0x1bc] sm:$0xff]
    %v2218 = vld [vmem:[%s2142 + $0x1c4] sm:$0xf]
    %v2219 = vld [vmem:[%s2142 + $0x1c8] sm:$0xff]
    %v2220 = vld [vmem:[%s2142 + $0x1d0] sm:$0xf]
    %v2221 = vld [vmem:[%s2142 + $0x1d4] sm:$0xff]
    %v2222 = vld [vmem:[%s2142 + $0x1dc] sm:$0xf]
    %v2223 = vld [vmem:[%s2142 + $0x1e0] sm:$0xff]
    %v2224 = vld [vmem:[%s2142 + $0x1e8] sm:$0xf]
    %v2225 = vld [vmem:[%s2142 + $0x1ec] sm:$0xff]
    %v2226 = vld [vmem:[%s2142 + $0x1f4] sm:$0xf]
    %v2227 = vld [vmem:[%s2142 + $0x1f8] sm:$0xff]
    %v2228 = vld [vmem:[%s2142 + $0x200] sm:$0xf]
    %v2229 = vld [vmem:[%s2142 + $0x204] sm:$0xff]
    %v2230 = vld [vmem:[%s2142 + $0x20c] sm:$0xf]
    %v2231 = vld [vmem:[%s2142 + $0x210] sm:$0xff]
    %v2232 = vld [vmem:[%s2142 + $0x218] sm:$0xf]
    %v2233 = vld [vmem:[%s2142 + $0x21c] sm:$0xff]
    %v2234 = vld [vmem:[%s2142 + $0x224] sm:$0xf]
    %v2235 = vld [vmem:[%s2142 + $0x228] sm:$0xff]
    %v2236 = vld [vmem:[%s2142 + $0x230] sm:$0xf]
    %v2237 = vld [vmem:[%s2142 + $0x234] sm:$0xff]
    %v2238 = vld [vmem:[%s2142 + $0x23c] sm:$0xf]
    %v2239 = vld [vmem:[%s2142 + $0x240] sm:$0xff]
    %v2240 = vld [vmem:[%s2142 + $0x248] sm:$0xf]
    %v2241 = vld [vmem:[%s2142 + $0x24c] sm:$0xff]
    %v2242 = vld [vmem:[%s2142 + $0x254] sm:$0xf]
    %v2243 = vld [vmem:[%s2142 + $0x258] sm:$0xff]
    %v2244 = vld [vmem:[%s2142 + $0x260] sm:$0xf]
    %v2245 = vld [vmem:[%s2142 + $0x264] sm:$0xff]
    %v2246 = vld [vmem:[%s2142 + $0x26c] sm:$0xf]
    %vm2299 = vcmask 1043456
    %v2300 = vrot.slane %v2134, 4
    %v2301 = vrot.slane %v1986, 4
    %v2302 = vsel %vm2299, %v2300, %v2301
    %v2303 = vrot.slane %v2135, 4
    %v2304 = vrot.slane %v1987, 4
    %v2305 = vsel %vm2299, %v2303, %v2304
    %v2306 = vrot.slane %v2136, 4
    %v2307 = vrot.slane %v1988, 4
    %v2308 = vsel %vm2299, %v2306, %v2307
    %v2309 = vrot.slane %v2137, 4
    %v2310 = vrot.slane %v1989, 4
    %v2311 = vsel %vm2299, %v2309, %v2310
    %v2312 = vrot.slane %v1990, 4
    %v2313 = vsel %vm2299, %v2301, %v2312
    %v2314 = vrot.slane %v1991, 4
    %v2315 = vsel %vm2299, %v2304, %v2314
    %v2316 = vrot.slane %v1992, 4
    %v2317 = vsel %vm2299, %v2307, %v2316
    %v2318 = vrot.slane %v1993, 4
    %v2319 = vsel %vm2299, %v2310, %v2318
    %v2320 = vrot.slane %v1994, 4
    %v2321 = vsel %vm2299, %v2312, %v2320
    %v2322 = vrot.slane %v1995, 4
    %v2323 = vsel %vm2299, %v2314, %v2322
    %v2324 = vrot.slane %v1996, 4
    %v2325 = vsel %vm2299, %v2316, %v2324
    %v2326 = vrot.slane %v1997, 4
    %v2327 = vsel %vm2299, %v2318, %v2326
    %v2328 = vrot.slane %v1998, 4
    %v2329 = vsel %vm2299, %v2320, %v2328
    %v2330 = vrot.slane %v1999, 4
    %v2331 = vsel %vm2299, %v2322, %v2330
    %v2332 = vrot.slane %v2000, 4
    %v2333 = vsel %vm2299, %v2324, %v2332
    %v2334 = vrot.slane %v2001, 4
    %v2335 = vsel %vm2299, %v2326, %v2334
    %v2336 = vrot.slane %v2002, 4
    %v2337 = vsel %vm2299, %v2328, %v2336
    %v2338 = vrot.slane %v2003, 4
    %v2339 = vsel %vm2299, %v2330, %v2338
    %v2340 = vrot.slane %v2004, 4
    %v2341 = vsel %vm2299, %v2332, %v2340
    %v2342 = vrot.slane %v2005, 4
    %v2343 = vsel %vm2299, %v2334, %v2342
    %v2344 = vrot.slane %v2006, 4
    %v2345 = vsel %vm2299, %v2336, %v2344
    %v2346 = vrot.slane %v2007, 4
    %v2347 = vsel %vm2299, %v2338, %v2346
    %v2348 = vrot.slane %v2008, 4
    %v2349 = vsel %vm2299, %v2340, %v2348
    %v2350 = vrot.slane %v2009, 4
    %v2351 = vsel %vm2299, %v2342, %v2350
    %v2352 = vrot.slane %v2010, 4
    %v2353 = vsel %vm2299, %v2344, %v2352
    %v2354 = vrot.slane %v2011, 4
    %v2355 = vsel %vm2299, %v2346, %v2354
    %v2356 = vrot.slane %v2012, 4
    %v2357 = vsel %vm2299, %v2348, %v2356
    %v2358 = vrot.slane %v2013, 4
    %v2359 = vsel %vm2299, %v2350, %v2358
    %v2360 = vrot.slane %v2014, 4
    %v2361 = vsel %vm2299, %v2352, %v2360
    %v2362 = vrot.slane %v2015, 4
    %v2363 = vsel %vm2299, %v2354, %v2362
    %v2364 = vrot.slane %v2016, 4
    %v2365 = vsel %vm2299, %v2356, %v2364
    %v2366 = vrot.slane %v2017, 4
    %v2367 = vsel %vm2299, %v2358, %v2366
    %v2368 = vrot.slane %v2018, 4
    %v2369 = vsel %vm2299, %v2360, %v2368
    %v2370 = vrot.slane %v2019, 4
    %v2371 = vsel %vm2299, %v2362, %v2370
    %v2372 = vrot.slane %v2020, 4
    %v2373 = vsel %vm2299, %v2364, %v2372
    %v2374 = vrot.slane %v2021, 4
    %v2375 = vsel %vm2299, %v2366, %v2374
    %v2376 = vrot.slane %v2022, 4
    %v2377 = vsel %vm2299, %v2368, %v2376
    %v2378 = vrot.slane %v2023, 4
    %v2379 = vsel %vm2299, %v2370, %v2378
    %v2380 = vrot.slane %v2024, 4
    %v2381 = vsel %vm2299, %v2372, %v2380
    %v2382 = vrot.slane %v2025, 4
    %v2383 = vsel %vm2299, %v2374, %v2382
    %v2384 = vrot.slane %v2026, 4
    %v2385 = vsel %vm2299, %v2376, %v2384
    %v2386 = vrot.slane %v2027, 4
    %v2387 = vsel %vm2299, %v2378, %v2386
    %v2388 = vrot.slane %v2028, 4
    %v2389 = vsel %vm2299, %v2380, %v2388
    %v2390 = vrot.slane %v2029, 4
    %v2391 = vsel %vm2299, %v2382, %v2390
    %v2392 = vrot.slane %v2138, 4
    %v2393 = vsel %vm2299, %v2384, %v2392
    %v2394 = vrot.slane %v2139, 4
    %v2395 = vsel %vm2299, %v2386, %v2394
    %v2396 = vrot.slane %v2140, 4
    %v2397 = vsel %vm2299, %v2388, %v2396
    %v2398 = vrot.slane %v2141, 4
    %v2399 = vsel %vm2299, %v2390, %v2398
    %v2540 = vunpack.c.l.b16 %v2143
    %v2541 = vunpack.c.h.b16 %v2143
    %v2542 = vunpack.c.l.b16 %v2144
    %v2543 = vunpack.c.l.b16 %v2145
    %v2544 = vunpack.c.h.b16 %v2145
    %v2545 = vunpack.c.l.b16 %v2146
    %v2546 = vunpack.c.l.b16 %v2147
    %v2547 = vunpack.c.h.b16 %v2147
    %v2548 = vunpack.c.l.b16 %v2148
    %v2549 = vunpack.c.l.b16 %v2149
    %v2550 = vunpack.c.h.b16 %v2149
    %v2551 = vunpack.c.l.b16 %v2150
    %v2552 = vunpack.c.l.b16 %v2151
    %v2553 = vunpack.c.h.b16 %v2151
    %v2554 = vunpack.c.l.b16 %v2152
    %v2555 = vunpack.c.l.b16 %v2153
    %v2556 = vunpack.c.h.b16 %v2153
    %v2557 = vunpack.c.l.b16 %v2154
    %v2558 = vunpack.c.l.b16 %v2155
    %v2559 = vunpack.c.h.b16 %v2155
    %v2560 = vunpack.c.l.b16 %v2156
    %v2561 = vunpack.c.l.b16 %v2157
    %v2562 = vunpack.c.h.b16 %v2157
    %v2563 = vunpack.c.l.b16 %v2158
    %v2564 = vunpack.c.l.b16 %v2159
    %v2565 = vunpack.c.h.b16 %v2159
    %v2566 = vunpack.c.l.b16 %v2160
    %v2567 = vunpack.c.l.b16 %v2161
    %v2568 = vunpack.c.h.b16 %v2161
    %v2569 = vunpack.c.l.b16 %v2162
    %v2570 = vunpack.c.l.b16 %v2163
    %v2571 = vunpack.c.h.b16 %v2163
    %v2572 = vunpack.c.l.b16 %v2164
    %v2573 = vunpack.c.l.b16 %v2165
    %v2574 = vunpack.c.h.b16 %v2165
    %v2575 = vunpack.c.l.b16 %v2166
    %v2576 = vunpack.c.l.b16 %v2167
    %v2577 = vunpack.c.h.b16 %v2167
    %v2578 = vunpack.c.l.b16 %v2168
    %v2579 = vunpack.c.l.b16 %v2169
    %v2580 = vunpack.c.h.b16 %v2169
    %v2581 = vunpack.c.l.b16 %v2170
    %v2582 = vunpack.c.l.b16 %v2171
    %v2583 = vunpack.c.h.b16 %v2171
    %v2584 = vunpack.c.l.b16 %v2172
    %v2585 = vunpack.c.l.b16 %v2173
    %v2586 = vunpack.c.h.b16 %v2173
    %v2587 = vunpack.c.l.b16 %v2174
    %v2588 = vunpack.c.l.b16 %v2175
    %v2589 = vunpack.c.h.b16 %v2175
    %v2590 = vunpack.c.l.b16 %v2176
    %v2591 = vunpack.c.l.b16 %v2177
    %v2592 = vunpack.c.h.b16 %v2177
    %v2593 = vunpack.c.l.b16 %v2178
    %v2594 = vunpack.c.l.b16 %v2179
    %v2595 = vunpack.c.h.b16 %v2179
    %v2596 = vunpack.c.l.b16 %v2180
    %v2597 = vunpack.c.l.b16 %v2181
    %v2598 = vunpack.c.h.b16 %v2181
    %v2599 = vunpack.c.l.b16 %v2182
    %v2600 = vunpack.c.l.b16 %v2183
    %v2601 = vunpack.c.h.b16 %v2183
    %v2602 = vunpack.c.l.b16 %v2184
    %v2603 = vunpack.c.l.b16 %v2185
    %v2604 = vunpack.c.h.b16 %v2185
    %v2605 = vunpack.c.l.b16 %v2186
    %v2606 = vunpack.c.l.b16 %v2187
    %v2607 = vunpack.c.h.b16 %v2187
    %v2608 = vunpack.c.l.b16 %v2188
    %v2609 = vunpack.c.l.b16 %v2189
    %v2610 = vunpack.c.h.b16 %v2189
    %v2611 = vunpack.c.l.b16 %v2190
    %v2612 = vunpack.c.l.b16 %v2191
    %v2613 = vunpack.c.h.b16 %v2191
    %v2614 = vunpack.c.l.b16 %v2192
    %v2615 = vunpack.c.l.b16 %v2193
    %v2616 = vunpack.c.h.b16 %v2193
    %v2617 = vunpack.c.l.b16 %v2194
    %v2618 = vunpack.c.l.b16 %v2195
    %v2619 = vunpack.c.h.b16 %v2195
    %v2620 = vunpack.c.l.b16 %v2196
    %v2621 = vunpack.c.l.b16 %v2197
    %v2622 = vunpack.c.h.b16 %v2197
    %v2623 = vunpack.c.l.b16 %v2198
    %v2624 = vunpack.c.l.b16 %v2199
    %v2625 = vunpack.c.h.b16 %v2199
    %v2626 = vunpack.c.l.b16 %v2200
    %v2627 = vunpack.c.l.b16 %v2201
    %v2628 = vunpack.c.h.b16 %v2201
    %v2629 = vunpack.c.l.b16 %v2202
    %v2630 = vunpack.c.l.b16 %v2203
    %v2631 = vunpack.c.h.b16 %v2203
    %v2632 = vunpack.c.l.b16 %v2204
    %v2633 = vunpack.c.l.b16 %v2205
    %v2634 = vunpack.c.h.b16 %v2205
    %v2635 = vunpack.c.l.b16 %v2206
    %v2636 = vunpack.c.l.b16 %v2207
    %v2637 = vunpack.c.h.b16 %v2207
    %v2638 = vunpack.c.l.b16 %v2208
    %v2639 = vunpack.c.l.b16 %v2209
    %v2640 = vunpack.c.h.b16 %v2209
    %v2641 = vunpack.c.l.b16 %v2210
    %v2642 = vunpack.c.l.b16 %v2211
    %v2643 = vunpack.c.h.b16 %v2211
    %v2644 = vunpack.c.l.b16 %v2212
    %v2645 = vunpack.c.l.b16 %v2213
    %v2646 = vunpack.c.h.b16 %v2213
    %v2647 = vunpack.c.l.b16 %v2214
    %v2648 = vunpack.c.l.b16 %v2215
    %v2649 = vunpack.c.h.b16 %v2215
    %v2650 = vunpack.c.l.b16 %v2216
    %v2651 = vunpack.c.l.b16 %v2217
    %v2652 = vunpack.c.h.b16 %v2217
    %v2653 = vunpack.c.l.b16 %v2218
    %v2654 = vunpack.c.l.b16 %v2219
    %v2655 = vunpack.c.h.b16 %v2219
    %v2656 = vunpack.c.l.b16 %v2220
    %v2657 = vunpack.c.l.b16 %v2221
    %v2658 = vunpack.c.h.b16 %v2221
    %v2659 = vunpack.c.l.b16 %v2222
    %v2660 = vunpack.c.l.b16 %v2223
    %v2661 = vunpack.c.h.b16 %v2223
    %v2662 = vunpack.c.l.b16 %v2224
    %v2663 = vunpack.c.l.b16 %v2225
    %v2664 = vunpack.c.h.b16 %v2225
    %v2665 = vunpack.c.l.b16 %v2226
    %v2666 = vunpack.c.l.b16 %v2227
    %v2667 = vunpack.c.h.b16 %v2227
    %v2668 = vunpack.c.l.b16 %v2228
    %v2669 = vunpack.c.l.b16 %v2229
    %v2670 = vunpack.c.h.b16 %v2229
    %v2671 = vunpack.c.l.b16 %v2230
    %v2672 = vunpack.c.l.b16 %v2231
    %v2673 = vunpack.c.h.b16 %v2231
    %v2674 = vunpack.c.l.b16 %v2232
    %v2675 = vunpack.c.l.b16 %v2233
    %v2676 = vunpack.c.h.b16 %v2233
    %v2677 = vunpack.c.l.b16 %v2234
    %v2678 = vunpack.c.l.b16 %v2235
    %v2679 = vunpack.c.h.b16 %v2235
    %v2680 = vunpack.c.l.b16 %v2236
    %v2681 = vunpack.c.l.b16 %v2237
    %v2682 = vunpack.c.h.b16 %v2237
    %v2683 = vunpack.c.l.b16 %v2238
    %v2684 = vunpack.c.l.b16 %v2239
    %v2685 = vunpack.c.h.b16 %v2239
    %v2686 = vunpack.c.l.b16 %v2240
    %v2687 = vunpack.c.l.b16 %v2241
    %v2688 = vunpack.c.h.b16 %v2241
    %v2689 = vunpack.c.l.b16 %v2242
    %v2690 = vunpack.c.l.b16 %v2243
    %v2691 = vunpack.c.h.b16 %v2243
    %v2692 = vunpack.c.l.b16 %v2244
    %v2693 = vunpack.c.l.b16 %v2245
    %v2694 = vunpack.c.h.b16 %v2245
    %v2695 = vunpack.c.l.b16 %v2246
    %v2696 = vpack.c.b16 %v2543, %v2540
    %v2697 = vpack.c.b16 %v2544, %v2541
    %v2698 = vpack.c.b16 %v2545, %v2542
    %v2699 = vpack.c.b16 %v2549, %v2546
    %v2700 = vpack.c.b16 %v2550, %v2547
    %v2701 = vpack.c.b16 %v2551, %v2548
    %v2702 = vpack.c.b16 %v2555, %v2552
    %v2703 = vpack.c.b16 %v2556, %v2553
    %v2704 = vpack.c.b16 %v2557, %v2554
    %v2705 = vpack.c.b16 %v2561, %v2558
    %v2706 = vpack.c.b16 %v2562, %v2559
    %v2707 = vpack.c.b16 %v2563, %v2560
    %v2708 = vpack.c.b16 %v2567, %v2564
    %v2709 = vpack.c.b16 %v2568, %v2565
    %v2710 = vpack.c.b16 %v2569, %v2566
    %v2711 = vpack.c.b16 %v2573, %v2570
    %v2712 = vpack.c.b16 %v2574, %v2571
    %v2713 = vpack.c.b16 %v2575, %v2572
    %v2714 = vpack.c.b16 %v2579, %v2576
    %v2715 = vpack.c.b16 %v2580, %v2577
    %v2716 = vpack.c.b16 %v2581, %v2578
    %v2717 = vpack.c.b16 %v2585, %v2582
    %v2718 = vpack.c.b16 %v2586, %v2583
    %v2719 = vpack.c.b16 %v2587, %v2584
    %v2720 = vpack.c.b16 %v2591, %v2588
    %v2721 = vpack.c.b16 %v2592, %v2589
    %v2722 = vpack.c.b16 %v2593, %v2590
    %v2723 = vpack.c.b16 %v2597, %v2594
    %v2724 = vpack.c.b16 %v2598, %v2595
    %v2725 = vpack.c.b16 %v2599, %v2596
    %v2726 = vpack.c.b16 %v2603, %v2600
    %v2727 = vpack.c.b16 %v2604, %v2601
    %v2728 = vpack.c.b16 %v2605, %v2602
    %v2729 = vpack.c.b16 %v2609, %v2606
    %v2730 = vpack.c.b16 %v2610, %v2607
    %v2731 = vpack.c.b16 %v2611, %v2608
    %v2732 = vpack.c.b16 %v2615, %v2612
    %v2733 = vpack.c.b16 %v2616, %v2613
    %v2734 = vpack.c.b16 %v2617, %v2614
    %v2735 = vpack.c.b16 %v2621, %v2618
    %v2736 = vpack.c.b16 %v2622, %v2619
    %v2737 = vpack.c.b16 %v2623, %v2620
    %v2738 = vpack.c.b16 %v2627, %v2624
    %v2739 = vpack.c.b16 %v2628, %v2625
    %v2740 = vpack.c.b16 %v2629, %v2626
    %v2741 = vpack.c.b16 %v2633, %v2630
    %v2742 = vpack.c.b16 %v2634, %v2631
    %v2743 = vpack.c.b16 %v2635, %v2632
    %v2744 = vpack.c.b16 %v2639, %v2636
    %v2745 = vpack.c.b16 %v2640, %v2637
    %v2746 = vpack.c.b16 %v2641, %v2638
    %v2747 = vpack.c.b16 %v2645, %v2642
    %v2748 = vpack.c.b16 %v2646, %v2643
    %v2749 = vpack.c.b16 %v2647, %v2644
    %v2750 = vpack.c.b16 %v2651, %v2648
    %v2751 = vpack.c.b16 %v2652, %v2649
    %v2752 = vpack.c.b16 %v2653, %v2650
    %v2753 = vpack.c.b16 %v2657, %v2654
    %v2754 = vpack.c.b16 %v2658, %v2655
    %v2755 = vpack.c.b16 %v2659, %v2656
    %v2756 = vpack.c.b16 %v2663, %v2660
    %v2757 = vpack.c.b16 %v2664, %v2661
    %v2758 = vpack.c.b16 %v2665, %v2662
    %v2759 = vpack.c.b16 %v2669, %v2666
    %v2760 = vpack.c.b16 %v2670, %v2667
    %v2761 = vpack.c.b16 %v2671, %v2668
    %v2762 = vpack.c.b16 %v2675, %v2672
    %v2763 = vpack.c.b16 %v2676, %v2673
    %v2764 = vpack.c.b16 %v2677, %v2674
    %v2765 = vpack.c.b16 %v2681, %v2678
    %v2766 = vpack.c.b16 %v2682, %v2679
    %v2767 = vpack.c.b16 %v2683, %v2680
    %v2768 = vpack.c.b16 %v2687, %v2684
    %v2769 = vpack.c.b16 %v2688, %v2685
    %v2770 = vpack.c.b16 %v2689, %v2686
    %v2771 = vpack.c.b16 %v2693, %v2690
    %v2772 = vpack.c.b16 %v2694, %v2691
    %v2773 = vpack.c.b16 %v2695, %v2692
    %v2853 = vsel %vm1932, %v2311, 0
    %v2856 = vsel %vm1932, %v2319, 0
    %v2859 = vsel %vm1932, %v2327, 0
    %v2862 = vsel %vm1932, %v2335, 0
    %v2865 = vsel %vm1932, %v2343, 0
    %v2868 = vsel %vm1932, %v2351, 0
    %v2871 = vsel %vm1932, %v2359, 0
    %v2874 = vsel %vm1932, %v2367, 0
    %v2877 = vsel %vm1932, %v2375, 0
    %v2880 = vsel %vm1932, %v2383, 0
    %v2883 = vsel %vm1932, %v2391, 0
    %v2886 = vsel %vm1932, %v2399, 0
    %2888 = vmatprep.subr.bf16.mxu0 %v2697
    %2889 = vmatpush1.bf16.msra.mxu0 %v2696
    %2890 = vmatprep.subr.bf16.mxu0 %v2700
    %2891 = vmatpush1.bf16.msra.mxu0 %v2699
    %2892 = vmatprep.subr.bf16.mxu0 %v2703
    %2893 = vmatpush1.bf16.msra.mxu0 %v2702
    %2894 = vmatprep.subr.bf16.mxu0 %v2706
    %2895 = vmatpush1.bf16.msra.mxu0 %v2705
    %2896 = vmatprep.subr.bf16.mxu0 %v2709
    %2897 = vmatpush1.bf16.msra.mxu0 %v2708
    %2898 = vmatprep.subr.bf16.mxu0 %v2712
    %2899 = vmatpush1.bf16.msra.mxu0 %v2711
    %2900 = vmatprep.subr.bf16.mxu0 %v2715
    %2901 = vmatpush1.bf16.msra.mxu0 %v2714
    %2902 = vmatprep.subr.bf16.mxu0 %v2718
    %2903 = vmatpush1.bf16.msra.mxu0 %v2717
    %2904 = vmatprep.subr.bf16.mxu0 %v2721
    %2905 = vmatpush1.bf16.msra.mxu0 %v2720
    %2906 = vmatprep.subr.bf16.mxu0 %v2724
    %2907 = vmatpush1.bf16.msra.mxu0 %v2723
    %2908 = vmatprep.subr.bf16.mxu0 %v2727
    %2909 = vmatpush1.bf16.msra.mxu0 %v2726
    %2910 = vmatprep.subr.bf16.mxu0 %v2730
    %2911 = vmatpush1.bf16.msra.mxu0 %v2729
    %2912 = vmatprep.subr.bf16.mxu0 %v2733
    %2913 = vmatpush1.bf16.msra.mxu0 %v2732
    %2914 = vmatprep.subr.bf16.mxu0 %v2736
    %2915 = vmatpush1.bf16.msra.mxu0 %v2735
    %2916 = vmatprep.subr.bf16.mxu0 %v2739
    %2917 = vmatpush1.bf16.msra.mxu0 %v2738
    %2918 = vmatprep.subr.bf16.mxu0 %v2742
    %2919 = vmatpush1.bf16.msra.mxu0 %v2741
    %2920 = vmatprep.mubr.bf16.mxu0 %v2305
    %2921 = vmatmul.mubr.bf16.gmra.mrb[0].mxu0 %v2302
    %v2922 = vpop.f32.mrb[0].mxu0
    %v2923 = vadd.f32 0.0, %v2922
    %v2924 = vpop.f32.mrb[0].mxu0
    %v2925 = vadd.f32 0.0, %v2924
    %v2926 = vpop.f32.mrb[0].mxu0
    %v2927 = vadd.f32 0.0, %v2926
    %v2928 = vpop.f32.mrb[0].mxu0
    %v2929 = vadd.f32 0.0, %v2928
    %2930 = vmatprep.mubr.bf16.mxu0 %v2315
    %2931 = vmatmul.mubr.bf16.gmra.mrb[0].mxu0 %v2313
    %v2932 = vpop.f32.mrb[0].mxu0
    %v2933 = vadd.f32 0.0, %v2932
    %v2934 = vpop.f32.mrb[0].mxu0
    %v2935 = vadd.f32 0.0, %v2934
    %v2936 = vpop.f32.mrb[0].mxu0
    %v2937 = vadd.f32 0.0, %v2936
    %v2938 = vpop.f32.mrb[0].mxu0
    %v2939 = vadd.f32 0.0, %v2938
    %2940 = vmatprep.mubr.bf16.mxu0 %v2323
    %2941 = vmatmul.mubr.bf16.gmra.mrb[0].mxu0 %v2321
    %v2942 = vpop.f32.mrb[0].mxu0
    %v2943 = vadd.f32 0.0, %v2942
    %v2944 = vpop.f32.mrb[0].mxu0
    %v2945 = vadd.f32 0.0, %v2944
    %v2946 = vpop.f32.mrb[0].mxu0
    %v2947 = vadd.f32 0.0, %v2946
    %v2948 = vpop.f32.mrb[0].mxu0
    %v2949 = vadd.f32 0.0, %v2948
    %2950 = vmatprep.mubr.bf16.mxu0 %v2331
    %2951 = vmatmul.mubr.bf16.gmra.mrb[0].mxu0 %v2329
    %v2952 = vpop.f32.mrb[0].mxu0
    %v2953 = vadd.f32 0.0, %v2952
    %v2954 = vpop.f32.mrb[0].mxu0
    %v2955 = vadd.f32 0.0, %v2954
    %v2956 = vpop.f32.mrb[0].mxu0
    %v2957 = vadd.f32 0.0, %v2956
    %v2958 = vpop.f32.mrb[0].mxu0
    %v2959 = vadd.f32 0.0, %v2958
    %2960 = vmatprep.mubr.bf16.mxu0 %v2339
    %2961 = vmatmul.mubr.bf16.gmra.mrb[0].mxu0 %v2337
    %v2962 = vpop.f32.mrb[0].mxu0
    %v2963 = vadd.f32 0.0, %v2962
    %v2964 = vpop.f32.mrb[0].mxu0
    %v2965 = vadd.f32 0.0, %v2964
    %v2966 = vpop.f32.mrb[0].mxu0
    %v2967 = vadd.f32 0.0, %v2966
    %v2968 = vpop.f32.mrb[0].mxu0
    %v2969 = vadd.f32 0.0, %v2968
    %2970 = vmatprep.mubr.bf16.mxu0 %v2347
    %2971 = vmatmul.mubr.bf16.gmra.mrb[0].mxu0 %v2345
    %v2972 = vpop.f32.mrb[0].mxu0
    %v2973 = vadd.f32 0.0, %v2972
    %v2974 = vpop.f32.mrb[0].mxu0
    %v2975 = vadd.f32 0.0, %v2974
    %v2976 = vpop.f32.mrb[0].mxu0
    %v2977 = vadd.f32 0.0, %v2976
    %v2978 = vpop.f32.mrb[0].mxu0
    %v2979 = vadd.f32 0.0, %v2978
    %2980 = vmatprep.mubr.bf16.mxu0 %v2355
    %2981 = vmatmul.mubr.bf16.gmra.mrb[0].mxu0 %v2353
    %v2982 = vpop.f32.mrb[0].mxu0
    %v2983 = vadd.f32 0.0, %v2982
    %v2984 = vpop.f32.mrb[0].mxu0
    %v2985 = vadd.f32 0.0, %v2984
    %v2986 = vpop.f32.mrb[0].mxu0
    %v2987 = vadd.f32 0.0, %v2986
    %v2988 = vpop.f32.mrb[0].mxu0
    %v2989 = vadd.f32 0.0, %v2988
    %2990 = vmatprep.mubr.bf16.mxu0 %v2363
    %2991 = vmatmul.mubr.bf16.gmra.mrb[0].mxu0 %v2361
    %v2992 = vpop.f32.mrb[0].mxu0
    %v2993 = vadd.f32 0.0, %v2992
    %v2994 = vpop.f32.mrb[0].mxu0
    %v2995 = vadd.f32 0.0, %v2994
    %v2996 = vpop.f32.mrb[0].mxu0
    %v2997 = vadd.f32 0.0, %v2996
    %v2998 = vpop.f32.mrb[0].mxu0
    %v2999 = vadd.f32 0.0, %v2998
    %3000 = vmatprep.mubr.bf16.mxu0 %v2371
    %3001 = vmatmul.mubr.bf16.gmra.mrb[0].mxu0 %v2369
    %v3002 = vpop.f32.mrb[0].mxu0
    %v3003 = vadd.f32 0.0, %v3002
    %v3004 = vpop.f32.mrb[0].mxu0
    %v3005 = vadd.f32 0.0, %v3004
    %v3006 = vpop.f32.mrb[0].mxu0
    %v3007 = vadd.f32 0.0, %v3006
    %v3008 = vpop.f32.mrb[0].mxu0
    %v3009 = vadd.f32 0.0, %v3008
    %3010 = vmatprep.mubr.bf16.mxu0 %v2379
    %3011 = vmatmul.mubr.bf16.gmra.mrb[0].mxu0 %v2377
    %v3012 = vpop.f32.mrb[0].mxu0
    %v3013 = vadd.f32 0.0, %v3012
    %v3014 = vpop.f32.mrb[0].mxu0
    %v3015 = vadd.f32 0.0, %v3014
    %v3016 = vpop.f32.mrb[0].mxu0
    %v3017 = vadd.f32 0.0, %v3016
    %v3018 = vpop.f32.mrb[0].mxu0
    %v3019 = vadd.f32 0.0, %v3018
    %3020 = vmatprep.mubr.bf16.mxu0 %v2387
    %3021 = vmatmul.mubr.bf16.gmra.mrb[0].mxu0 %v2385
    %v3022 = vpop.f32.mrb[0].mxu0
    %v3023 = vadd.f32 0.0, %v3022
    %v3024 = vpop.f32.mrb[0].mxu0
    %v3025 = vadd.f32 0.0, %v3024
    %v3026 = vpop.f32.mrb[0].mxu0
    %v3027 = vadd.f32 0.0, %v3026
    %v3028 = vpop.f32.mrb[0].mxu0
    %v3029 = vadd.f32 0.0, %v3028
    %3030 = vmatprep.mubr.bf16.mxu0 %v2395
    %3031 = vmatmul.mubr.bf16.gmra.mrb[0].mxu0 %v2393
    %v3032 = vpop.f32.mrb[0].mxu0
    %v3033 = vadd.f32 0.0, %v3032
    %v3034 = vpop.f32.mrb[0].mxu0
    %v3035 = vadd.f32 0.0, %v3034
    %v3036 = vpop.f32.mrb[0].mxu0
    %v3037 = vadd.f32 0.0, %v3036
    %v3038 = vpop.f32.mrb[0].mxu0
    %v3039 = vadd.f32 0.0, %v3038
    %3040 = vdwg.mxu0
    %3041 = vmatprep.subr.bf16.mxu0 %v2745
    %3042 = vmatpush1.bf16.msra.mxu0 %v2744
    %3043 = vmatprep.subr.bf16.mxu0 %v2748
    %3044 = vmatpush1.bf16.msra.mxu0 %v2747
    %3045 = vmatprep.subr.bf16.mxu0 %v2751
    %3046 = vmatpush1.bf16.msra.mxu0 %v2750
    %3047 = vmatprep.subr.bf16.mxu0 %v2754
    %3048 = vmatpush1.bf16.msra.mxu0 %v2753
    %3049 = vmatprep.subr.bf16.mxu0 %v2757
    %3050 = vmatpush1.bf16.msra.mxu0 %v2756
    %3051 = vmatprep.subr.bf16.mxu0 %v2760
    %3052 = vmatpush1.bf16.msra.mxu0 %v2759
    %3053 = vmatprep.subr.bf16.mxu0 %v2763
    %3054 = vmatpush1.bf16.msra.mxu0 %v2762
    %3055 = vmatprep.subr.bf16.mxu0 %v2766
    %3056 = vmatpush1.bf16.msra.mxu0 %v2765
    %3057 = vmatprep.subr.bf16.mxu0 %v2769
    %3058 = vmatpush1.bf16.msra.mxu0 %v2768
    %3059 = vmatprep.subr.bf16.mxu0 %v2772
    %3060 = vmatpush1.bf16.msra.mxu0 %v2771
    %3061 = vmatprep.subr.bf16.mxu0 0
    %3062 = vmatpush1.bf16.msra.mxu0 0
    %3063 = vmatprep.subr.bf16.mxu0 0
    %3064 = vmatpush1.bf16.msra.mxu0 0
    %3065 = vmatprep.subr.bf16.mxu0 0
    %3066 = vmatpush1.bf16.msra.mxu0 0
    %3067 = vmatprep.subr.bf16.mxu0 0
    %3068 = vmatpush1.bf16.msra.mxu0 0
    %3069 = vmatprep.subr.bf16.mxu0 0
    %3070 = vmatpush1.bf16.msra.mxu0 0
    %3071 = vmatprep.subr.bf16.mxu0 0
    %3072 = vmatpush1.bf16.msra.mxu0 0
    %3073 = vmatprep.mubr.bf16.mxu0 %v2853
    %3074 = vmatmul.mubr.bf16.gmra.mrb[0].mxu0 %v2308
    %v3075 = vpop.f32.mrb[0].mxu0
    %v3076 = vadd.f32 %v2923, %v3075
    %v3077 = vpop.f32.mrb[0].mxu0
    %v3078 = vadd.f32 %v2925, %v3077
    %v3079 = vpop.f32.mrb[0].mxu0
    %v3080 = vadd.f32 %v2927, %v3079
    %v3081 = vpop.f32.mrb[0].mxu0
    %v3082 = vadd.f32 %v2929, %v3081
    %3083 = vmatprep.mubr.bf16.mxu0 %v2856
    %3084 = vmatmul.mubr.bf16.gmra.mrb[0].mxu0 %v2317
    %v3085 = vpop.f32.mrb[0].mxu0
    %v3086 = vadd.f32 %v2933, %v3085
    %v3087 = vpop.f32.mrb[0].mxu0
    %v3088 = vadd.f32 %v2935, %v3087
    %v3089 = vpop.f32.mrb[0].mxu0
    %v3090 = vadd.f32 %v2937, %v3089
    %v3091 = vpop.f32.mrb[0].mxu0
    %v3092 = vadd.f32 %v2939, %v3091
    %3093 = vmatprep.mubr.bf16.mxu0 %v2859
    %3094 = vmatmul.mubr.bf16.gmra.mrb[0].mxu0 %v2325
    %v3095 = vpop.f32.mrb[0].mxu0
    %v3096 = vadd.f32 %v2943, %v3095
    %v3097 = vpop.f32.mrb[0].mxu0
    %v3098 = vadd.f32 %v2945, %v3097
    %v3099 = vpop.f32.mrb[0].mxu0
    %v3100 = vadd.f32 %v2947, %v3099
    %v3101 = vpop.f32.mrb[0].mxu0
    %v3102 = vadd.f32 %v2949, %v3101
    %3103 = vmatprep.mubr.bf16.mxu0 %v2862
    %3104 = vmatmul.mubr.bf16.gmra.mrb[0].mxu0 %v2333
    %v3105 = vpop.f32.mrb[0].mxu0
    %v3106 = vadd.f32 %v2953, %v3105
    %v3107 = vpop.f32.mrb[0].mxu0
    %v3108 = vadd.f32 %v2955, %v3107
    %v3109 = vpop.f32.mrb[0].mxu0
    %v3110 = vadd.f32 %v2957, %v3109
    %v3111 = vpop.f32.mrb[0].mxu0
    %v3112 = vadd.f32 %v2959, %v3111
    %3113 = vmatprep.mubr.bf16.mxu0 %v2865
    %3114 = vmatmul.mubr.bf16.gmra.mrb[0].mxu0 %v2341
    %v3115 = vpop.f32.mrb[0].mxu0
    %v3116 = vadd.f32 %v2963, %v3115
    %v3117 = vpop.f32.mrb[0].mxu0
    %v3118 = vadd.f32 %v2965, %v3117
    %v3119 = vpop.f32.mrb[0].mxu0
    %v3120 = vadd.f32 %v2967, %v3119
    %v3121 = vpop.f32.mrb[0].mxu0
    %v3122 = vadd.f32 %v2969, %v3121
    %3123 = vmatprep.mubr.bf16.mxu0 %v2868
    %3124 = vmatmul.mubr.bf16.gmra.mrb[0].mxu0 %v2349
    %v3125 = vpop.f32.mrb[0].mxu0
    %v3126 = vadd.f32 %v2973, %v3125
    %v3127 = vpop.f32.mrb[0].mxu0
    %v3128 = vadd.f32 %v2975, %v3127
    %v3129 = vpop.f32.mrb[0].mxu0
    %v3130 = vadd.f32 %v2977, %v3129
    %v3131 = vpop.f32.mrb[0].mxu0
    %v3132 = vadd.f32 %v2979, %v3131
    %3133 = vmatprep.mubr.bf16.mxu0 %v2871
    %3134 = vmatmul.mubr.bf16.gmra.mrb[0].mxu0 %v2357
    %v3135 = vpop.f32.mrb[0].mxu0
    %v3136 = vadd.f32 %v2983, %v3135
    %v3137 = vpop.f32.mrb[0].mxu0
    %v3138 = vadd.f32 %v2985, %v3137
    %v3139 = vpop.f32.mrb[0].mxu0
    %v3140 = vadd.f32 %v2987, %v3139
    %v3141 = vpop.f32.mrb[0].mxu0
    %v3142 = vadd.f32 %v2989, %v3141
    %3143 = vmatprep.mubr.bf16.mxu0 %v2874
    %3144 = vmatmul.mubr.bf16.gmra.mrb[0].mxu0 %v2365
    %v3145 = vpop.f32.mrb[0].mxu0
    %v3146 = vadd.f32 %v2993, %v3145
    %v3147 = vpop.f32.mrb[0].mxu0
    %v3148 = vadd.f32 %v2995, %v3147
    %v3149 = vpop.f32.mrb[0].mxu0
    %v3150 = vadd.f32 %v2997, %v3149
    %v3151 = vpop.f32.mrb[0].mxu0
    %v3152 = vadd.f32 %v2999, %v3151
    %3153 = vmatprep.mubr.bf16.mxu0 %v2877
    %3154 = vmatmul.mubr.bf16.gmra.mrb[0].mxu0 %v2373
    %v3155 = vpop.f32.mrb[0].mxu0
    %v3156 = vadd.f32 %v3003, %v3155
    %v3157 = vpop.f32.mrb[0].mxu0
    %v3158 = vadd.f32 %v3005, %v3157
    %v3159 = vpop.f32.mrb[0].mxu0
    %v3160 = vadd.f32 %v3007, %v3159
    %v3161 = vpop.f32.mrb[0].mxu0
    %v3162 = vadd.f32 %v3009, %v3161
    %3163 = vmatprep.mubr.bf16.mxu0 %v2880
    %3164 = vmatmul.mubr.bf16.gmra.mrb[0].mxu0 %v2381
    %v3165 = vpop.f32.mrb[0].mxu0
    %v3166 = vadd.f32 %v3013, %v3165
    %v3167 = vpop.f32.mrb[0].mxu0
    %v3168 = vadd.f32 %v3015, %v3167
    %v3169 = vpop.f32.mrb[0].mxu0
    %v3170 = vadd.f32 %v3017, %v3169
    %v3171 = vpop.f32.mrb[0].mxu0
    %v3172 = vadd.f32 %v3019, %v3171
    %3173 = vmatprep.mubr.bf16.mxu0 %v2883
    %3174 = vmatmul.mubr.bf16.gmra.mrb[0].mxu0 %v2389
    %v3175 = vpop.f32.mrb[0].mxu0
    %v3176 = vadd.f32 %v3023, %v3175
    %v3177 = vpop.f32.mrb[0].mxu0
    %v3178 = vadd.f32 %v3025, %v3177
    %v3179 = vpop.f32.mrb[0].mxu0
    %v3180 = vadd.f32 %v3027, %v3179
    %v3181 = vpop.f32.mrb[0].mxu0
    %v3182 = vadd.f32 %v3029, %v3181
    %3183 = vmatprep.mubr.bf16.mxu0 %v2886
    %3184 = vmatmul.mubr.bf16.gmra.mrb[0].mxu0 %v2397
    %v3185 = vpop.f32.mrb[0].mxu0
    %v3186 = vadd.f32 %v3033, %v3185
    %v3187 = vpop.f32.mrb[0].mxu0
    %v3188 = vadd.f32 %v3035, %v3187
    %v3189 = vpop.f32.mrb[0].mxu0
    %v3190 = vadd.f32 %v3037, %v3189
    %v3191 = vpop.f32.mrb[0].mxu0
    %v3192 = vadd.f32 %v3039, %v3191
    %3193 = vdwg.mxu0
    %3194 = vmatprep.subr.bf16.mxu0 0
    %3195 = vmatpush1.bf16.msra.mxu0 %v2698
    %3196 = vmatprep.subr.bf16.mxu0 0
    %3197 = vmatpush1.bf16.msra.mxu0 %v2701
    %3198 = vmatprep.subr.bf16.mxu0 0
    %3199 = vmatpush1.bf16.msra.mxu0 %v2704
    %3200 = vmatprep.subr.bf16.mxu0 0
    %3201 = vmatpush1.bf16.msra.mxu0 %v2707
    %3202 = vmatprep.subr.bf16.mxu0 0
    %3203 = vmatpush1.bf16.msra.mxu0 %v2710
    %3204 = vmatprep.subr.bf16.mxu0 0
    %3205 = vmatpush1.bf16.msra.mxu0 %v2713
    %3206 = vmatprep.subr.bf16.mxu0 0
    %3207 = vmatpush1.bf16.msra.mxu0 %v2716
    %3208 = vmatprep.subr.bf16.mxu0 0
    %3209 = vmatpush1.bf16.msra.mxu0 %v2719
    %3210 = vmatprep.subr.bf16.mxu0 0
    %3211 = vmatpush1.bf16.msra.mxu0 %v2722
    %3212 = vmatprep.subr.bf16.mxu0 0
    %3213 = vmatpush1.bf16.msra.mxu0 %v2725
    %3214 = vmatprep.subr.bf16.mxu0 0
    %3215 = vmatpush1.bf16.msra.mxu0 %v2728
    %3216 = vmatprep.subr.bf16.mxu0 0
    %3217 = vmatpush1.bf16.msra.mxu0 %v2731
    %3218 = vmatprep.subr.bf16.mxu0 0
    %3219 = vmatpush1.bf16.msra.mxu0 %v2734
    %3220 = vmatprep.subr.bf16.mxu0 0
    %3221 = vmatpush1.bf16.msra.mxu0 %v2737
    %3222 = vmatprep.subr.bf16.mxu0 0
    %3223 = vmatpush1.bf16.msra.mxu0 %v2740
    %3224 = vmatprep.subr.bf16.mxu0 0
    %3225 = vmatpush1.bf16.msra.mxu0 %v2743
    %3226 = vmatprep.mubr.bf16.mxu0 %v2305
    %3227 = vmatmul.mubr.bf16.gmra.mrb[0].mxu0 %v2302
    %v3228 = vpop.f32.mrb[0].mxu0
    %v3229 = vadd.f32 0.0, %v3228
    %v3230 = vpop.f32.mrb[0].mxu0
    %v3231 = vpop.f32.mrb[0].mxu0
    %v3232 = vadd.f32 0.0, %v3231
    %v3233 = vpop.f32.mrb[0].mxu0
    %3234 = vmatprep.mubr.bf16.mxu0 %v2315
    %3235 = vmatmul.mubr.bf16.gmra.mrb[0].mxu0 %v2313
    %v3236 = vpop.f32.mrb[0].mxu0
    %v3237 = vadd.f32 0.0, %v3236
    %v3238 = vpop.f32.mrb[0].mxu0
    %v3239 = vpop.f32.mrb[0].mxu0
    %v3240 = vadd.f32 0.0, %v3239
    %v3241 = vpop.f32.mrb[0].mxu0
    %3242 = vmatprep.mubr.bf16.mxu0 %v2323
    %3243 = vmatmul.mubr.bf16.gmra.mrb[0].mxu0 %v2321
    %v3244 = vpop.f32.mrb[0].mxu0
    %v3245 = vadd.f32 0.0, %v3244
    %v3246 = vpop.f32.mrb[0].mxu0
    %v3247 = vpop.f32.mrb[0].mxu0
    %v3248 = vadd.f32 0.0, %v3247
    %v3249 = vpop.f32.mrb[0].mxu0
    %3250 = vmatprep.mubr.bf16.mxu0 %v2331
    %3251 = vmatmul.mubr.bf16.gmra.mrb[0].mxu0 %v2329
    %v3252 = vpop.f32.mrb[0].mxu0
    %v3253 = vadd.f32 0.0, %v3252
    %v3254 = vpop.f32.mrb[0].mxu0
    %v3255 = vpop.f32.mrb[0].mxu0
    %v3256 = vadd.f32 0.0, %v3255
    %v3257 = vpop.f32.mrb[0].mxu0
    %3258 = vmatprep.mubr.bf16.mxu0 %v2339
    %3259 = vmatmul.mubr.bf16.gmra.mrb[0].mxu0 %v2337
    %v3260 = vpop.f32.mrb[0].mxu0
    %v3261 = vadd.f32 0.0, %v3260
    %v3262 = vpop.f32.mrb[0].mxu0
    %v3263 = vpop.f32.mrb[0].mxu0
    %v3264 = vadd.f32 0.0, %v3263
    %v3265 = vpop.f32.mrb[0].mxu0
    %3266 = vmatprep.mubr.bf16.mxu0 %v2347
    %3267 = vmatmul.mubr.bf16.gmra.mrb[0].mxu0 %v2345
    %v3268 = vpop.f32.mrb[0].mxu0
    %v3269 = vadd.f32 0.0, %v3268
    %v3270 = vpop.f32.mrb[0].mxu0
    %v3271 = vpop.f32.mrb[0].mxu0
    %v3272 = vadd.f32 0.0, %v3271
    %v3273 = vpop.f32.mrb[0].mxu0
    %3274 = vmatprep.mubr.bf16.mxu0 %v2355
    %3275 = vmatmul.mubr.bf16.gmra.mrb[0].mxu0 %v2353
    %v3276 = vpop.f32.mrb[0].mxu0
    %v3277 = vadd.f32 0.0, %v3276
    %v3278 = vpop.f32.mrb[0].mxu0
    %v3279 = vpop.f32.mrb[0].mxu0
    %v3280 = vadd.f32 0.0, %v3279
    %v3281 = vpop.f32.mrb[0].mxu0
    %3282 = vmatprep.mubr.bf16.mxu0 %v2363
    %3283 = vmatmul.mubr.bf16.gmra.mrb[0].mxu0 %v2361
    %v3284 = vpop.f32.mrb[0].mxu0
    %v3285 = vadd.f32 0.0, %v3284
    %v3286 = vpop.f32.mrb[0].mxu0
    %v3287 = vpop.f32.mrb[0].mxu0
    %v3288 = vadd.f32 0.0, %v3287
    %v3289 = vpop.f32.mrb[0].mxu0
    %3290 = vmatprep.mubr.bf16.mxu0 %v2371
    %3291 = vmatmul.mubr.bf16.gmra.mrb[0].mxu0 %v2369
    %v3292 = vpop.f32.mrb[0].mxu0
    %v3293 = vadd.f32 0.0, %v3292
    %v3294 = vpop.f32.mrb[0].mxu0
    %v3295 = vpop.f32.mrb[0].mxu0
    %v3296 = vadd.f32 0.0, %v3295
    %v3297 = vpop.f32.mrb[0].mxu0
    %3298 = vmatprep.mubr.bf16.mxu0 %v2379
    %3299 = vmatmul.mubr.bf16.gmra.mrb[0].mxu0 %v2377
    %v3300 = vpop.f32.mrb[0].mxu0
    %v3301 = vadd.f32 0.0, %v3300
    %v3302 = vpop.f32.mrb[0].mxu0
    %v3303 = vpop.f32.mrb[0].mxu0
    %v3304 = vadd.f32 0.0, %v3303
    %v3305 = vpop.f32.mrb[0].mxu0
    %3306 = vmatprep.mubr.bf16.mxu0 %v2387
    %3307 = vmatmul.mubr.bf16.gmra.mrb[0].mxu0 %v2385
    %v3308 = vpop.f32.mrb[0].mxu0
    %v3309 = vadd.f32 0.0, %v3308
    %v3310 = vpop.f32.mrb[0].mxu0
    %v3311 = vpop.f32.mrb[0].mxu0
    %v3312 = vadd.f32 0.0, %v3311
    %v3313 = vpop.f32.mrb[0].mxu0
    %3314 = vmatprep.mubr.bf16.mxu0 %v2395
    %3315 = vmatmul.mubr.bf16.gmra.mrb[0].mxu0 %v2393
    %v3316 = vpop.f32.mrb[0].mxu0
    %v3317 = vadd.f32 0.0, %v3316
    %v3318 = vpop.f32.mrb[0].mxu0
    %v3319 = vpop.f32.mrb[0].mxu0
    %v3320 = vadd.f32 0.0, %v3319
    %v3321 = vpop.f32.mrb[0].mxu0
    %3322 = vdwg.mxu0
    %3323 = vmatprep.subr.bf16.mxu0 0
    %3324 = vmatpush1.bf16.msra.mxu0 %v2746
    %3325 = vmatprep.subr.bf16.mxu0 0
    %3326 = vmatpush1.bf16.msra.mxu0 %v2749
    %3327 = vmatprep.subr.bf16.mxu0 0
    %3328 = vmatpush1.bf16.msra.mxu0 %v2752
    %3329 = vmatprep.subr.bf16.mxu0 0
    %3330 = vmatpush1.bf16.msra.mxu0 %v2755
    %3331 = vmatprep.subr.bf16.mxu0 0
    %3332 = vmatpush1.bf16.msra.mxu0 %v2758
    %3333 = vmatprep.subr.bf16.mxu0 0
    %3334 = vmatpush1.bf16.msra.mxu0 %v2761
    %3335 = vmatprep.subr.bf16.mxu0 0
    %3336 = vmatpush1.bf16.msra.mxu0 %v2764
    %3337 = vmatprep.subr.bf16.mxu0 0
    %3338 = vmatpush1.bf16.msra.mxu0 %v2767
    %3339 = vmatprep.subr.bf16.mxu0 0
    %3340 = vmatpush1.bf16.msra.mxu0 %v2770
    %3341 = vmatprep.subr.bf16.mxu0 0
    %3342 = vmatpush1.bf16.msra.mxu0 %v2773
    %3343 = vmatprep.subr.bf16.mxu0 0
    %3344 = vmatpush1.bf16.msra.mxu0 0
    %3345 = vmatprep.subr.bf16.mxu0 0
    %3346 = vmatpush1.bf16.msra.mxu0 0
    %3347 = vmatprep.subr.bf16.mxu0 0
    %3348 = vmatpush1.bf16.msra.mxu0 0
    %3349 = vmatprep.subr.bf16.mxu0 0
    %3350 = vmatpush1.bf16.msra.mxu0 0
    %3351 = vmatprep.subr.bf16.mxu0 0
    %3352 = vmatpush1.bf16.msra.mxu0 0
    %3353 = vmatprep.subr.bf16.mxu0 0
    %3354 = vmatpush1.bf16.msra.mxu0 0
    %3355 = vmatprep.mubr.bf16.mxu0 %v2853
    %3356 = vmatmul.mubr.bf16.gmra.mrb[0].mxu0 %v2308
    %v3357 = vpop.f32.mrb[0].mxu0
    %v3358 = vadd.f32 %v3229, %v3357
    %v3359 = vpop.f32.mrb[0].mxu0
    %v3360 = vpop.f32.mrb[0].mxu0
    %v3361 = vadd.f32 %v3232, %v3360
    %v3362 = vpop.f32.mrb[0].mxu0
    %3363 = vmatprep.mubr.bf16.mxu0 %v2856
    %3364 = vmatmul.mubr.bf16.gmra.mrb[0].mxu0 %v2317
    %v3365 = vpop.f32.mrb[0].mxu0
    %v3366 = vadd.f32 %v3237, %v3365
    %v3367 = vpop.f32.mrb[0].mxu0
    %v3368 = vpop.f32.mrb[0].mxu0
    %v3369 = vadd.f32 %v3240, %v3368
    %v3370 = vpop.f32.mrb[0].mxu0
    %3371 = vmatprep.mubr.bf16.mxu0 %v2859
    %3372 = vmatmul.mubr.bf16.gmra.mrb[0].mxu0 %v2325
    %v3373 = vpop.f32.mrb[0].mxu0
    %v3374 = vadd.f32 %v3245, %v3373
    %v3375 = vpop.f32.mrb[0].mxu0
    %v3376 = vpop.f32.mrb[0].mxu0
    %v3377 = vadd.f32 %v3248, %v3376
    %v3378 = vpop.f32.mrb[0].mxu0
    %3379 = vmatprep.mubr.bf16.mxu0 %v2862
    %3380 = vmatmul.mubr.bf16.gmra.mrb[0].mxu0 %v2333
    %v3381 = vpop.f32.mrb[0].mxu0
    %v3382 = vadd.f32 %v3253, %v3381
    %v3383 = vpop.f32.mrb[0].mxu0
    %v3384 = vpop.f32.mrb[0].mxu0
    %v3385 = vadd.f32 %v3256, %v3384
    %v3386 = vpop.f32.mrb[0].mxu0
    %3387 = vmatprep.mubr.bf16.mxu0 %v2865
    %3388 = vmatmul.mubr.bf16.gmra.mrb[0].mxu0 %v2341
    %v3389 = vpop.f32.mrb[0].mxu0
    %v3390 = vadd.f32 %v3261, %v3389
    %v3391 = vpop.f32.mrb[0].mxu0
    %v3392 = vpop.f32.mrb[0].mxu0
    %v3393 = vadd.f32 %v3264, %v3392
    %v3394 = vpop.f32.mrb[0].mxu0
    %3395 = vmatprep.mubr.bf16.mxu0 %v2868
    %3396 = vmatmul.mubr.bf16.gmra.mrb[0].mxu0 %v2349
    %v3397 = vpop.f32.mrb[0].mxu0
    %v3398 = vadd.f32 %v3269, %v3397
    %v3399 = vpop.f32.mrb[0].mxu0
    %v3400 = vpop.f32.mrb[0].mxu0
    %v3401 = vadd.f32 %v3272, %v3400
    %v3402 = vpop.f32.mrb[0].mxu0
    %3403 = vmatprep.mubr.bf16.mxu0 %v2871
    %3404 = vmatmul.mubr.bf16.gmra.mrb[0].mxu0 %v2357
    %v3405 = vpop.f32.mrb[0].mxu0
    %v3406 = vadd.f32 %v3277, %v3405
    %v3407 = vpop.f32.mrb[0].mxu0
    %v3408 = vpop.f32.mrb[0].mxu0
    %v3409 = vadd.f32 %v3280, %v3408
    %v3410 = vpop.f32.mrb[0].mxu0
    %3411 = vmatprep.mubr.bf16.mxu0 %v2874
    %3412 = vmatmul.mubr.bf16.gmra.mrb[0].mxu0 %v2365
    %v3413 = vpop.f32.mrb[0].mxu0
    %v3414 = vadd.f32 %v3285, %v3413
    %v3415 = vpop.f32.mrb[0].mxu0
    %v3416 = vpop.f32.mrb[0].mxu0
    %v3417 = vadd.f32 %v3288, %v3416
    %v3418 = vpop.f32.mrb[0].mxu0
    %3419 = vmatprep.mubr.bf16.mxu0 %v2877
    %3420 = vmatmul.mubr.bf16.gmra.mrb[0].mxu0 %v2373
    %v3421 = vpop.f32.mrb[0].mxu0
    %v3422 = vadd.f32 %v3293, %v3421
    %v3423 = vpop.f32.mrb[0].mxu0
    %v3424 = vpop.f32.mrb[0].mxu0
    %v3425 = vadd.f32 %v3296, %v3424
    %v3426 = vpop.f32.mrb[0].mxu0
    %3427 = vmatprep.mubr.bf16.mxu0 %v2880
    %3428 = vmatmul.mubr.bf16.gmra.mrb[0].mxu0 %v2381
    %v3429 = vpop.f32.mrb[0].mxu0
    %v3430 = vadd.f32 %v3301, %v3429
    %v3431 = vpop.f32.mrb[0].mxu0
    %v3432 = vpop.f32.mrb[0].mxu0
    %v3433 = vadd.f32 %v3304, %v3432
    %v3434 = vpop.f32.mrb[0].mxu0
    %3435 = vmatprep.mubr.bf16.mxu0 %v2883
    %3436 = vmatmul.mubr.bf16.gmra.mrb[0].mxu0 %v2389
    %v3437 = vpop.f32.mrb[0].mxu0
    %v3438 = vadd.f32 %v3309, %v3437
    %v3439 = vpop.f32.mrb[0].mxu0
    %v3440 = vpop.f32.mrb[0].mxu0
    %v3441 = vadd.f32 %v3312, %v3440
    %v3442 = vpop.f32.mrb[0].mxu0
    %3443 = vmatprep.mubr.bf16.mxu0 %v2886
    %3444 = vmatmul.mubr.bf16.gmra.mrb[0].mxu0 %v2397
    %v3445 = vpop.f32.mrb[0].mxu0
    %v3446 = vadd.f32 %v3317, %v3445
    %v3447 = vpop.f32.mrb[0].mxu0
    %v3448 = vpop.f32.mrb[0].mxu0
    %v3449 = vadd.f32 %v3320, %v3448
    %v3450 = vpop.f32.mrb[0].mxu0
    %3451 = vdwg.mxu0
    %v3556 = vunpack.c.l.b16 %v2030
    %v3557 = vunpack.c.h.b16 %v2030
    %v3558 = vunpack.c.l.b16 %v2031
    %v3559 = vunpack.c.l.b16 %v2032
    %v3560 = vunpack.c.h.b16 %v2032
    %v3561 = vunpack.c.l.b16 %v2033
    %v3562 = vunpack.c.l.b16 %v2034
    %v3563 = vunpack.c.h.b16 %v2034
    %v3564 = vunpack.c.l.b16 %v2035
    %v3565 = vunpack.c.l.b16 %v2036
    %v3566 = vunpack.c.h.b16 %v2036
    %v3567 = vunpack.c.l.b16 %v2037
    %v3568 = vunpack.c.l.b16 %v2038
    %v3569 = vunpack.c.h.b16 %v2038
    %v3570 = vunpack.c.l.b16 %v2039
    %v3571 = vunpack.c.l.b16 %v2040
    %v3572 = vunpack.c.h.b16 %v2040
    %v3573 = vunpack.c.l.b16 %v2041
    %v3574 = vunpack.c.l.b16 %v2042
    %v3575 = vunpack.c.h.b16 %v2042
    %v3576 = vunpack.c.l.b16 %v2043
    %v3577 = vunpack.c.l.b16 %v2044
    %v3578 = vunpack.c.h.b16 %v2044
    %v3579 = vunpack.c.l.b16 %v2045
    %v3580 = vunpack.c.l.b16 %v2046
    %v3581 = vunpack.c.h.b16 %v2046
    %v3582 = vunpack.c.l.b16 %v2047
    %v3583 = vunpack.c.l.b16 %v2048
    %v3584 = vunpack.c.h.b16 %v2048
    %v3585 = vunpack.c.l.b16 %v2049
    %v3586 = vunpack.c.l.b16 %v2050
    %v3587 = vunpack.c.h.b16 %v2050
    %v3588 = vunpack.c.l.b16 %v2051
    %v3589 = vunpack.c.l.b16 %v2052
    %v3590 = vunpack.c.h.b16 %v2052
    %v3591 = vunpack.c.l.b16 %v2053
    %v3592 = vunpack.c.l.b16 %v2054
    %v3593 = vunpack.c.h.b16 %v2054
    %v3594 = vunpack.c.l.b16 %v2055
    %v3595 = vunpack.c.l.b16 %v2056
    %v3596 = vunpack.c.h.b16 %v2056
    %v3597 = vunpack.c.l.b16 %v2057
    %v3598 = vunpack.c.l.b16 %v2058
    %v3599 = vunpack.c.h.b16 %v2058
    %v3600 = vunpack.c.l.b16 %v2059
    %v3601 = vunpack.c.l.b16 %v2060
    %v3602 = vunpack.c.h.b16 %v2060
    %v3603 = vunpack.c.l.b16 %v2061
    %v3604 = vunpack.c.l.b16 %v2062
    %v3605 = vunpack.c.h.b16 %v2062
    %v3606 = vunpack.c.l.b16 %v2063
    %v3607 = vunpack.c.l.b16 %v2064
    %v3608 = vunpack.c.h.b16 %v2064
    %v3609 = vunpack.c.l.b16 %v2065
    %v3610 = vunpack.c.l.b16 %v2066
    %v3611 = vunpack.c.h.b16 %v2066
    %v3612 = vunpack.c.l.b16 %v2067
    %v3613 = vunpack.c.l.b16 %v2068
    %v3614 = vunpack.c.h.b16 %v2068
    %v3615 = vunpack.c.l.b16 %v2069
    %v3616 = vunpack.c.l.b16 %v2070
    %v3617 = vunpack.c.h.b16 %v2070
    %v3618 = vunpack.c.l.b16 %v2071
    %v3619 = vunpack.c.l.b16 %v2072
    %v3620 = vunpack.c.h.b16 %v2072
    %v3621 = vunpack.c.l.b16 %v2073
    %v3622 = vunpack.c.l.b16 %v2074
    %v3623 = vunpack.c.h.b16 %v2074
    %v3624 = vunpack.c.l.b16 %v2075
    %v3625 = vunpack.c.l.b16 %v2076
    %v3626 = vunpack.c.h.b16 %v2076
    %v3627 = vunpack.c.l.b16 %v2077
    %v3628 = vunpack.c.l.b16 %v2078
    %v3629 = vunpack.c.h.b16 %v2078
    %v3630 = vunpack.c.l.b16 %v2079
    %v3631 = vunpack.c.l.b16 %v2080
    %v3632 = vunpack.c.h.b16 %v2080
    %v3633 = vunpack.c.l.b16 %v2081
    %v3634 = vunpack.c.l.b16 %v2082
    %v3635 = vunpack.c.h.b16 %v2082
    %v3636 = vunpack.c.l.b16 %v2083
    %v3637 = vunpack.c.l.b16 %v2084
    %v3638 = vunpack.c.h.b16 %v2084
    %v3639 = vunpack.c.l.b16 %v2085
    %v3640 = vunpack.c.l.b16 %v2086
    %v3641 = vunpack.c.h.b16 %v2086
    %v3642 = vunpack.c.l.b16 %v2087
    %v3643 = vunpack.c.l.b16 %v2088
    %v3644 = vunpack.c.h.b16 %v2088
    %v3645 = vunpack.c.l.b16 %v2089
    %v3646 = vunpack.c.l.b16 %v2090
    %v3647 = vunpack.c.h.b16 %v2090
    %v3648 = vunpack.c.l.b16 %v2091
    %v3649 = vunpack.c.l.b16 %v2092
    %v3650 = vunpack.c.h.b16 %v2092
    %v3651 = vunpack.c.l.b16 %v2093
    %v3652 = vunpack.c.l.b16 %v2094
    %v3653 = vunpack.c.h.b16 %v2094
    %v3654 = vunpack.c.l.b16 %v2095
    %v3655 = vunpack.c.l.b16 %v2096
    %v3656 = vunpack.c.h.b16 %v2096
    %v3657 = vunpack.c.l.b16 %v2097
    %v3658 = vunpack.c.l.b16 %v2098
    %v3659 = vunpack.c.h.b16 %v2098
    %v3660 = vunpack.c.l.b16 %v2099
    %v3661 = vunpack.c.l.b16 %v2100
    %v3662 = vunpack.c.h.b16 %v2100
    %v3663 = vunpack.c.l.b16 %v2101
    %v3664 = vunpack.c.l.b16 %v2102
    %v3665 = vunpack.c.h.b16 %v2102
    %v3666 = vunpack.c.l.b16 %v2103
    %v3667 = vunpack.c.l.b16 %v2104
    %v3668 = vunpack.c.h.b16 %v2104
    %v3669 = vunpack.c.l.b16 %v2105
    %v3670 = vunpack.c.l.b16 %v2106
    %v3671 = vunpack.c.h.b16 %v2106
    %v3672 = vunpack.c.l.b16 %v2107
    %v3673 = vunpack.c.l.b16 %v2108
    %v3674 = vunpack.c.h.b16 %v2108
    %v3675 = vunpack.c.l.b16 %v2109
    %v3676 = vunpack.c.l.b16 %v2110
    %v3677 = vunpack.c.h.b16 %v2110
    %v3678 = vunpack.c.l.b16 %v2111
    %v3679 = vunpack.c.l.b16 %v2112
    %v3680 = vunpack.c.h.b16 %v2112
    %v3681 = vunpack.c.l.b16 %v2113
    %v3682 = vunpack.c.l.b16 %v2114
    %v3683 = vunpack.c.h.b16 %v2114
    %v3684 = vunpack.c.l.b16 %v2115
    %v3685 = vunpack.c.l.b16 %v2116
    %v3686 = vunpack.c.h.b16 %v2116
    %v3687 = vunpack.c.l.b16 %v2117
    %v3688 = vunpack.c.l.b16 %v2118
    %v3689 = vunpack.c.h.b16 %v2118
    %v3690 = vunpack.c.l.b16 %v2119
    %v3691 = vunpack.c.l.b16 %v2120
    %v3692 = vunpack.c.h.b16 %v2120
    %v3693 = vunpack.c.l.b16 %v2121
    %v3694 = vunpack.c.l.b16 %v2122
    %v3695 = vunpack.c.h.b16 %v2122
    %v3696 = vunpack.c.l.b16 %v2123
    %v3697 = vunpack.c.l.b16 %v2124
    %v3698 = vunpack.c.h.b16 %v2124
    %v3699 = vunpack.c.l.b16 %v2125
    %v3700 = vunpack.c.l.b16 %v2126
    %v3701 = vunpack.c.h.b16 %v2126
    %v3702 = vunpack.c.l.b16 %v2127
    %v3703 = vunpack.c.l.b16 %v2128
    %v3704 = vunpack.c.h.b16 %v2128
    %v3705 = vunpack.c.l.b16 %v2129
    %v3706 = vunpack.c.l.b16 %v2130
    %v3707 = vunpack.c.h.b16 %v2130
    %v3708 = vunpack.c.l.b16 %v2131
    %v3709 = vunpack.c.l.b16 %v2132
    %v3710 = vunpack.c.h.b16 %v2132
    %v3711 = vunpack.c.l.b16 %v2133
    %v3712 = vpack.c.b16 %v3559, %v3556
    %v3713 = vpack.c.b16 %v3560, %v3557
    %v3714 = vpack.c.b16 %v3561, %v3558
    %v3715 = vpack.c.b16 %v3565, %v3562
    %v3716 = vpack.c.b16 %v3566, %v3563
    %v3717 = vpack.c.b16 %v3567, %v3564
    %v3718 = vpack.c.b16 %v3571, %v3568
    %v3719 = vpack.c.b16 %v3572, %v3569
    %v3720 = vpack.c.b16 %v3573, %v3570
    %v3721 = vpack.c.b16 %v3577, %v3574
    %v3722 = vpack.c.b16 %v3578, %v3575
    %v3723 = vpack.c.b16 %v3579, %v3576
    %v3724 = vpack.c.b16 %v3583, %v3580
    %v3725 = vpack.c.b16 %v3584, %v3581
    %v3726 = vpack.c.b16 %v3585, %v3582
    %v3727 = vpack.c.b16 %v3589, %v3586
    %v3728 = vpack.c.b16 %v3590, %v3587
    %v3729 = vpack.c.b16 %v3591, %v3588
    %v3730 = vpack.c.b16 %v3595, %v3592
    %v3731 = vpack.c.b16 %v3596, %v3593
    %v3732 = vpack.c.b16 %v3597, %v3594
    %v3733 = vpack.c.b16 %v3601, %v3598
    %v3734 = vpack.c.b16 %v3602, %v3599
    %v3735 = vpack.c.b16 %v3603, %v3600
    %v3736 = vpack.c.b16 %v3607, %v3604
    %v3737 = vpack.c.b16 %v3608, %v3605
    %v3738 = vpack.c.b16 %v3609, %v3606
    %v3739 = vpack.c.b16 %v3613, %v3610
    %v3740 = vpack.c.b16 %v3614, %v3611
    %v3741 = vpack.c.b16 %v3615, %v3612
    %v3742 = vpack.c.b16 %v3619, %v3616
    %v3743 = vpack.c.b16 %v3620, %v3617
    %v3744 = vpack.c.b16 %v3621, %v3618
    %v3745 = vpack.c.b16 %v3625, %v3622
    %v3746 = vpack.c.b16 %v3626, %v3623
    %v3747 = vpack.c.b16 %v3627, %v3624
    %v3748 = vpack.c.b16 %v3631, %v3628
    %v3749 = vpack.c.b16 %v3632, %v3629
    %v3750 = vpack.c.b16 %v3633, %v3630
    %v3751 = vpack.c.b16 %v3637, %v3634
    %v3752 = vpack.c.b16 %v3638, %v3635
    %v3753 = vpack.c.b16 %v3639, %v3636
    %v3754 = vpack.c.b16 %v3643, %v3640
    %v3755 = vpack.c.b16 %v3644, %v3641
    %v3756 = vpack.c.b16 %v3645, %v3642
    %v3757 = vpack.c.b16 %v3649, %v3646
    %v3758 = vpack.c.b16 %v3650, %v3647
    %v3759 = vpack.c.b16 %v3651, %v3648
    %v3760 = vpack.c.b16 %v3655, %v3652
    %v3761 = vpack.c.b16 %v3656, %v3653
    %v3762 = vpack.c.b16 %v3657, %v3654
    %v3763 = vpack.c.b16 %v3661, %v3658
    %v3764 = vpack.c.b16 %v3662, %v3659
    %v3765 = vpack.c.b16 %v3663, %v3660
    %v3766 = vpack.c.b16 %v3667, %v3664
    %v3767 = vpack.c.b16 %v3668, %v3665
    %v3768 = vpack.c.b16 %v3669, %v3666
    %v3769 = vpack.c.b16 %v3673, %v3670
    %v3770 = vpack.c.b16 %v3674, %v3671
    %v3771 = vpack.c.b16 %v3675, %v3672
    %v3772 = vpack.c.b16 %v3679, %v3676
    %v3773 = vpack.c.b16 %v3680, %v3677
    %v3774 = vpack.c.b16 %v3681, %v3678
    %v3775 = vpack.c.b16 %v3685, %v3682
    %v3776 = vpack.c.b16 %v3686, %v3683
    %v3777 = vpack.c.b16 %v3687, %v3684
    %v3778 = vpack.c.b16 %v3691, %v3688
    %v3779 = vpack.c.b16 %v3692, %v3689
    %v3780 = vpack.c.b16 %v3693, %v3690
    %v3781 = vpack.c.b16 %v3697, %v3694
    %v3782 = vpack.c.b16 %v3698, %v3695
    %v3783 = vpack.c.b16 %v3699, %v3696
    %v3784 = vpack.c.b16 %v3703, %v3700
    %v3785 = vpack.c.b16 %v3704, %v3701
    %v3786 = vpack.c.b16 %v3705, %v3702
    %v3787 = vpack.c.b16 %v3709, %v3706
    %v3788 = vpack.c.b16 %v3710, %v3707
    %v3789 = vpack.c.b16 %v3711, %v3708
    %v3869 = vsel %vm1932, %v1985, 0
    %v3872 = vsel %vm1932, %v1989, 0
    %v3875 = vsel %vm1932, %v1993, 0
    %v3878 = vsel %vm1932, %v1997, 0
    %v3881 = vsel %vm1932, %v2001, 0
    %v3884 = vsel %vm1932, %v2005, 0
    %v3887 = vsel %vm1932, %v2009, 0
    %v3890 = vsel %vm1932, %v2013, 0
    %v3893 = vsel %vm1932, %v2017, 0
    %v3896 = vsel %vm1932, %v2021, 0
    %v3899 = vsel %vm1932, %v2025, 0
    %v3902 = vsel %vm1932, %v2029, 0
    %3904 = vmatprep.subr.bf16.mxu0 %v3713
    %3905 = vmatpush1.bf16.msra.mxu0 %v3712
    %3906 = vmatprep.subr.bf16.mxu0 %v3716
    %3907 = vmatpush1.bf16.msra.mxu0 %v3715
    %3908 = vmatprep.subr.bf16.mxu0 %v3719
    %3909 = vmatpush1.bf16.msra.mxu0 %v3718
    %3910 = vmatprep.subr.bf16.mxu0 %v3722
    %3911 = vmatpush1.bf16.msra.mxu0 %v3721
    %3912 = vmatprep.subr.bf16.mxu0 %v3725
    %3913 = vmatpush1.bf16.msra.mxu0 %v3724
    %3914 = vmatprep.subr.bf16.mxu0 %v3728
    %3915 = vmatpush1.bf16.msra.mxu0 %v3727
    %3916 = vmatprep.subr.bf16.mxu0 %v3731
    %3917 = vmatpush1.bf16.msra.mxu0 %v3730
    %3918 = vmatprep.subr.bf16.mxu0 %v3734
    %3919 = vmatpush1.bf16.msra.mxu0 %v3733
    %3920 = vmatprep.subr.bf16.mxu0 %v3737
    %3921 = vmatpush1.bf16.msra.mxu0 %v3736
    %3922 = vmatprep.subr.bf16.mxu0 %v3740
    %3923 = vmatpush1.bf16.msra.mxu0 %v3739
    %3924 = vmatprep.subr.bf16.mxu0 %v3743
    %3925 = vmatpush1.bf16.msra.mxu0 %v3742
    %3926 = vmatprep.subr.bf16.mxu0 %v3746
    %3927 = vmatpush1.bf16.msra.mxu0 %v3745
    %3928 = vmatprep.subr.bf16.mxu0 %v3749
    %3929 = vmatpush1.bf16.msra.mxu0 %v3748
    %3930 = vmatprep.subr.bf16.mxu0 %v3752
    %3931 = vmatpush1.bf16.msra.mxu0 %v3751
    %3932 = vmatprep.subr.bf16.mxu0 %v3755
    %3933 = vmatpush1.bf16.msra.mxu0 %v3754
    %3934 = vmatprep.subr.bf16.mxu0 %v3758
    %3935 = vmatpush1.bf16.msra.mxu0 %v3757
    %3936 = vmatprep.mubr.bf16.mxu0 %v1983
    %3937 = vmatmul.mubr.bf16.gmra.mrb[0].mxu0 %v1982
    %v3938 = vpop.f32.mrb[0].mxu0
    %v3939 = vadd.f32 %v3076, %v3938
    %v3940 = vpop.f32.mrb[0].mxu0
    %v3941 = vadd.f32 %v3078, %v3940
    %v3942 = vpop.f32.mrb[0].mxu0
    %v3943 = vadd.f32 %v3080, %v3942
    %v3944 = vpop.f32.mrb[0].mxu0
    %v3945 = vadd.f32 %v3082, %v3944
    %3946 = vmatprep.mubr.bf16.mxu0 %v1987
    %3947 = vmatmul.mubr.bf16.gmra.mrb[0].mxu0 %v1986
    %v3948 = vpop.f32.mrb[0].mxu0
    %v3949 = vadd.f32 %v3086, %v3948
    %v3950 = vpop.f32.mrb[0].mxu0
    %v3951 = vadd.f32 %v3088, %v3950
    %v3952 = vpop.f32.mrb[0].mxu0
    %v3953 = vadd.f32 %v3090, %v3952
    %v3954 = vpop.f32.mrb[0].mxu0
    %v3955 = vadd.f32 %v3092, %v3954
    %3956 = vmatprep.mubr.bf16.mxu0 %v1991
    %3957 = vmatmul.mubr.bf16.gmra.mrb[0].mxu0 %v1990
    %v3958 = vpop.f32.mrb[0].mxu0
    %v3959 = vadd.f32 %v3096, %v3958
    %v3960 = vpop.f32.mrb[0].mxu0
    %v3961 = vadd.f32 %v3098, %v3960
    %v3962 = vpop.f32.mrb[0].mxu0
    %v3963 = vadd.f32 %v3100, %v3962
    %v3964 = vpop.f32.mrb[0].mxu0
    %v3965 = vadd.f32 %v3102, %v3964
    %3966 = vmatprep.mubr.bf16.mxu0 %v1995
    %3967 = vmatmul.mubr.bf16.gmra.mrb[0].mxu0 %v1994
    %v3968 = vpop.f32.mrb[0].mxu0
    %v3969 = vadd.f32 %v3106, %v3968
    %v3970 = vpop.f32.mrb[0].mxu0
    %v3971 = vadd.f32 %v3108, %v3970
    %v3972 = vpop.f32.mrb[0].mxu0
    %v3973 = vadd.f32 %v3110, %v3972
    %v3974 = vpop.f32.mrb[0].mxu0
    %v3975 = vadd.f32 %v3112, %v3974
    %3976 = vmatprep.mubr.bf16.mxu0 %v1999
    %3977 = vmatmul.mubr.bf16.gmra.mrb[0].mxu0 %v1998
    %v3978 = vpop.f32.mrb[0].mxu0
    %v3979 = vadd.f32 %v3116, %v3978
    %v3980 = vpop.f32.mrb[0].mxu0
    %v3981 = vadd.f32 %v3118, %v3980
    %v3982 = vpop.f32.mrb[0].mxu0
    %v3983 = vadd.f32 %v3120, %v3982
    %v3984 = vpop.f32.mrb[0].mxu0
    %v3985 = vadd.f32 %v3122, %v3984
    %3986 = vmatprep.mubr.bf16.mxu0 %v2003
    %3987 = vmatmul.mubr.bf16.gmra.mrb[0].mxu0 %v2002
    %v3988 = vpop.f32.mrb[0].mxu0
    %v3989 = vadd.f32 %v3126, %v3988
    %v3990 = vpop.f32.mrb[0].mxu0
    %v3991 = vadd.f32 %v3128, %v3990
    %v3992 = vpop.f32.mrb[0].mxu0
    %v3993 = vadd.f32 %v3130, %v3992
    %v3994 = vpop.f32.mrb[0].mxu0
    %v3995 = vadd.f32 %v3132, %v3994
    %3996 = vmatprep.mubr.bf16.mxu0 %v2007
    %3997 = vmatmul.mubr.bf16.gmra.mrb[0].mxu0 %v2006
    %v3998 = vpop.f32.mrb[0].mxu0
    %v3999 = vadd.f32 %v3136, %v3998
    %v4000 = vpop.f32.mrb[0].mxu0
    %v4001 = vadd.f32 %v3138, %v4000
    %v4002 = vpop.f32.mrb[0].mxu0
    %v4003 = vadd.f32 %v3140, %v4002
    %v4004 = vpop.f32.mrb[0].mxu0
    %v4005 = vadd.f32 %v3142, %v4004
    %4006 = vmatprep.mubr.bf16.mxu0 %v2011
    %4007 = vmatmul.mubr.bf16.gmra.mrb[0].mxu0 %v2010
    %v4008 = vpop.f32.mrb[0].mxu0
    %v4009 = vadd.f32 %v3146, %v4008
    %v4010 = vpop.f32.mrb[0].mxu0
    %v4011 = vadd.f32 %v3148, %v4010
    %v4012 = vpop.f32.mrb[0].mxu0
    %v4013 = vadd.f32 %v3150, %v4012
    %v4014 = vpop.f32.mrb[0].mxu0
    %v4015 = vadd.f32 %v3152, %v4014
    %4016 = vmatprep.mubr.bf16.mxu0 %v2015
    %4017 = vmatmul.mubr.bf16.gmra.mrb[0].mxu0 %v2014
    %v4018 = vpop.f32.mrb[0].mxu0
    %v4019 = vadd.f32 %v3156, %v4018
    %v4020 = vpop.f32.mrb[0].mxu0
    %v4021 = vadd.f32 %v3158, %v4020
    %v4022 = vpop.f32.mrb[0].mxu0
    %v4023 = vadd.f32 %v3160, %v4022
    %v4024 = vpop.f32.mrb[0].mxu0
    %v4025 = vadd.f32 %v3162, %v4024
    %4026 = vmatprep.mubr.bf16.mxu0 %v2019
    %4027 = vmatmul.mubr.bf16.gmra.mrb[0].mxu0 %v2018
    %v4028 = vpop.f32.mrb[0].mxu0
    %v4029 = vadd.f32 %v3166, %v4028
    %v4030 = vpop.f32.mrb[0].mxu0
    %v4031 = vadd.f32 %v3168, %v4030
    %v4032 = vpop.f32.mrb[0].mxu0
    %v4033 = vadd.f32 %v3170, %v4032
    %v4034 = vpop.f32.mrb[0].mxu0
    %v4035 = vadd.f32 %v3172, %v4034
    %4036 = vmatprep.mubr.bf16.mxu0 %v2023
    %4037 = vmatmul.mubr.bf16.gmra.mrb[0].mxu0 %v2022
    %v4038 = vpop.f32.mrb[0].mxu0
    %v4039 = vadd.f32 %v3176, %v4038
    %v4040 = vpop.f32.mrb[0].mxu0
    %v4041 = vadd.f32 %v3178, %v4040
    %v4042 = vpop.f32.mrb[0].mxu0
    %v4043 = vadd.f32 %v3180, %v4042
    %v4044 = vpop.f32.mrb[0].mxu0
    %v4045 = vadd.f32 %v3182, %v4044
    %4046 = vmatprep.mubr.bf16.mxu0 %v2027
    %4047 = vmatmul.mubr.bf16.gmra.mrb[0].mxu0 %v2026
    %v4048 = vpop.f32.mrb[0].mxu0
    %v4049 = vadd.f32 %v3186, %v4048
    %v4050 = vpop.f32.mrb[0].mxu0
    %v4051 = vadd.f32 %v3188, %v4050
    %v4052 = vpop.f32.mrb[0].mxu0
    %v4053 = vadd.f32 %v3190, %v4052
    %v4054 = vpop.f32.mrb[0].mxu0
    %v4055 = vadd.f32 %v3192, %v4054
    %4056 = vdwg.mxu0
    %4057 = vmatprep.subr.bf16.mxu0 %v3761
    %4058 = vmatpush1.bf16.msra.mxu0 %v3760
    %4059 = vmatprep.subr.bf16.mxu0 %v3764
    %4060 = vmatpush1.bf16.msra.mxu0 %v3763
    %4061 = vmatprep.subr.bf16.mxu0 %v3767
    %4062 = vmatpush1.bf16.msra.mxu0 %v3766
    %4063 = vmatprep.subr.bf16.mxu0 %v3770
    %4064 = vmatpush1.bf16.msra.mxu0 %v3769
    %4065 = vmatprep.subr.bf16.mxu0 %v3773
    %4066 = vmatpush1.bf16.msra.mxu0 %v3772
    %4067 = vmatprep.subr.bf16.mxu0 %v3776
    %4068 = vmatpush1.bf16.msra.mxu0 %v3775
    %4069 = vmatprep.subr.bf16.mxu0 %v3779
    %4070 = vmatpush1.bf16.msra.mxu0 %v3778
    %4071 = vmatprep.subr.bf16.mxu0 %v3782
    %4072 = vmatpush1.bf16.msra.mxu0 %v3781
    %4073 = vmatprep.subr.bf16.mxu0 %v3785
    %4074 = vmatpush1.bf16.msra.mxu0 %v3784
    %4075 = vmatprep.subr.bf16.mxu0 %v3788
    %4076 = vmatpush1.bf16.msra.mxu0 %v3787
    %4077 = vmatprep.subr.bf16.mxu0 0
    %4078 = vmatpush1.bf16.msra.mxu0 0
    %4079 = vmatprep.subr.bf16.mxu0 0
    %4080 = vmatpush1.bf16.msra.mxu0 0
    %4081 = vmatprep.subr.bf16.mxu0 0
    %4082 = vmatpush1.bf16.msra.mxu0 0
    %4083 = vmatprep.subr.bf16.mxu0 0
    %4084 = vmatpush1.bf16.msra.mxu0 0
    %4085 = vmatprep.subr.bf16.mxu0 0
    %4086 = vmatpush1.bf16.msra.mxu0 0
    %4087 = vmatprep.subr.bf16.mxu0 0
    %4088 = vmatpush1.bf16.msra.mxu0 0
    %4089 = vmatprep.mubr.bf16.mxu0 %v3869
    %4090 = vmatmul.mubr.bf16.gmra.mrb[0].mxu0 %v1984
    %v4091 = vpop.f32.mrb[0].mxu0
    %v4092 = vadd.f32 %v3939, %v4091
    %v4093 = vpop.f32.mrb[0].mxu0
    %v4094 = vadd.f32 %v3941, %v4093
    %v4095 = vpop.f32.mrb[0].mxu0
    %v4096 = vadd.f32 %v3943, %v4095
    %v4097 = vpop.f32.mrb[0].mxu0
    %v4098 = vadd.f32 %v3945, %v4097
    %4099 = vmatprep.mubr.bf16.mxu0 %v3872
    %4100 = vmatmul.mubr.bf16.gmra.mrb[0].mxu0 %v1988
    %v4101 = vpop.f32.mrb[0].mxu0
    %v4102 = vadd.f32 %v3949, %v4101
    %v4103 = vpop.f32.mrb[0].mxu0
    %v4104 = vadd.f32 %v3951, %v4103
    %v4105 = vpop.f32.mrb[0].mxu0
    %v4106 = vadd.f32 %v3953, %v4105
    %v4107 = vpop.f32.mrb[0].mxu0
    %v4108 = vadd.f32 %v3955, %v4107
    %4109 = vmatprep.mubr.bf16.mxu0 %v3875
    %4110 = vmatmul.mubr.bf16.gmra.mrb[0].mxu0 %v1992
    %v4111 = vpop.f32.mrb[0].mxu0
    %v4112 = vadd.f32 %v3959, %v4111
    %v4113 = vpop.f32.mrb[0].mxu0
    %v4114 = vadd.f32 %v3961, %v4113
    %v4115 = vpop.f32.mrb[0].mxu0
    %v4116 = vadd.f32 %v3963, %v4115
    %v4117 = vpop.f32.mrb[0].mxu0
    %v4118 = vadd.f32 %v3965, %v4117
    %4119 = vmatprep.mubr.bf16.mxu0 %v3878
    %4120 = vmatmul.mubr.bf16.gmra.mrb[0].mxu0 %v1996
    %v4121 = vpop.f32.mrb[0].mxu0
    %v4122 = vadd.f32 %v3969, %v4121
    %v4123 = vpop.f32.mrb[0].mxu0
    %v4124 = vadd.f32 %v3971, %v4123
    %v4125 = vpop.f32.mrb[0].mxu0
    %v4126 = vadd.f32 %v3973, %v4125
    %v4127 = vpop.f32.mrb[0].mxu0
    %v4128 = vadd.f32 %v3975, %v4127
    %4129 = vmatprep.mubr.bf16.mxu0 %v3881
    %4130 = vmatmul.mubr.bf16.gmra.mrb[0].mxu0 %v2000
    %v4131 = vpop.f32.mrb[0].mxu0
    %v4132 = vadd.f32 %v3979, %v4131
    %v4133 = vpop.f32.mrb[0].mxu0
    %v4134 = vadd.f32 %v3981, %v4133
    %v4135 = vpop.f32.mrb[0].mxu0
    %v4136 = vadd.f32 %v3983, %v4135
    %v4137 = vpop.f32.mrb[0].mxu0
    %v4138 = vadd.f32 %v3985, %v4137
    %4139 = vmatprep.mubr.bf16.mxu0 %v3884
    %4140 = vmatmul.mubr.bf16.gmra.mrb[0].mxu0 %v2004
    %v4141 = vpop.f32.mrb[0].mxu0
    %v4142 = vadd.f32 %v3989, %v4141
    %v4143 = vpop.f32.mrb[0].mxu0
    %v4144 = vadd.f32 %v3991, %v4143
    %v4145 = vpop.f32.mrb[0].mxu0
    %v4146 = vadd.f32 %v3993, %v4145
    %v4147 = vpop.f32.mrb[0].mxu0
    %v4148 = vadd.f32 %v3995, %v4147
    %4149 = vmatprep.mubr.bf16.mxu0 %v3887
    %4150 = vmatmul.mubr.bf16.gmra.mrb[0].mxu0 %v2008
    %v4151 = vpop.f32.mrb[0].mxu0
    %v4152 = vadd.f32 %v3999, %v4151
    %v4153 = vpop.f32.mrb[0].mxu0
    %v4154 = vadd.f32 %v4001, %v4153
    %v4155 = vpop.f32.mrb[0].mxu0
    %v4156 = vadd.f32 %v4003, %v4155
    %v4157 = vpop.f32.mrb[0].mxu0
    %v4158 = vadd.f32 %v4005, %v4157
    %4159 = vmatprep.mubr.bf16.mxu0 %v3890
    %4160 = vmatmul.mubr.bf16.gmra.mrb[0].mxu0 %v2012
    %v4161 = vpop.f32.mrb[0].mxu0
    %v4162 = vadd.f32 %v4009, %v4161
    %v4163 = vpop.f32.mrb[0].mxu0
    %v4164 = vadd.f32 %v4011, %v4163
    %v4165 = vpop.f32.mrb[0].mxu0
    %v4166 = vadd.f32 %v4013, %v4165
    %v4167 = vpop.f32.mrb[0].mxu0
    %v4168 = vadd.f32 %v4015, %v4167
    %4169 = vmatprep.mubr.bf16.mxu0 %v3893
    %4170 = vmatmul.mubr.bf16.gmra.mrb[0].mxu0 %v2016
    %v4171 = vpop.f32.mrb[0].mxu0
    %v4172 = vadd.f32 %v4019, %v4171
    %v4173 = vpop.f32.mrb[0].mxu0
    %v4174 = vadd.f32 %v4021, %v4173
    %v4175 = vpop.f32.mrb[0].mxu0
    %v4176 = vadd.f32 %v4023, %v4175
    %v4177 = vpop.f32.mrb[0].mxu0
    %v4178 = vadd.f32 %v4025, %v4177
    %4179 = vmatprep.mubr.bf16.mxu0 %v3896
    %4180 = vmatmul.mubr.bf16.gmra.mrb[0].mxu0 %v2020
    %v4181 = vpop.f32.mrb[0].mxu0
    %v4182 = vadd.f32 %v4029, %v4181
    %v4183 = vpop.f32.mrb[0].mxu0
    %v4184 = vadd.f32 %v4031, %v4183
    %v4185 = vpop.f32.mrb[0].mxu0
    %v4186 = vadd.f32 %v4033, %v4185
    %v4187 = vpop.f32.mrb[0].mxu0
    %v4188 = vadd.f32 %v4035, %v4187
    %4189 = vmatprep.mubr.bf16.mxu0 %v3899
    %4190 = vmatmul.mubr.bf16.gmra.mrb[0].mxu0 %v2024
    %v4191 = vpop.f32.mrb[0].mxu0
    %v4192 = vadd.f32 %v4039, %v4191
    %v4193 = vpop.f32.mrb[0].mxu0
    %v4194 = vadd.f32 %v4041, %v4193
    %v4195 = vpop.f32.mrb[0].mxu0
    %v4196 = vadd.f32 %v4043, %v4195
    %v4197 = vpop.f32.mrb[0].mxu0
    %v4198 = vadd.f32 %v4045, %v4197
    %4199 = vmatprep.mubr.bf16.mxu0 %v3902
    %4200 = vmatmul.mubr.bf16.gmra.mrb[0].mxu0 %v2028
    %v4201 = vpop.f32.mrb[0].mxu0
    %v4202 = vadd.f32 %v4049, %v4201
    %v4203 = vpop.f32.mrb[0].mxu0
    %v4204 = vadd.f32 %v4051, %v4203
    %v4205 = vpop.f32.mrb[0].mxu0
    %v4206 = vadd.f32 %v4053, %v4205
    %v4207 = vpop.f32.mrb[0].mxu0
    %v4208 = vadd.f32 %v4055, %v4207
    %4209 = vdwg.mxu0
    %4210 = vmatprep.subr.bf16.mxu0 0
    %4211 = vmatpush1.bf16.msra.mxu0 %v3714
    %4212 = vmatprep.subr.bf16.mxu0 0
    %4213 = vmatpush1.bf16.msra.mxu0 %v3717
    %4214 = vmatprep.subr.bf16.mxu0 0
    %4215 = vmatpush1.bf16.msra.mxu0 %v3720
    %4216 = vmatprep.subr.bf16.mxu0 0
    %4217 = vmatpush1.bf16.msra.mxu0 %v3723
    %4218 = vmatprep.subr.bf16.mxu0 0
    %4219 = vmatpush1.bf16.msra.mxu0 %v3726
    %4220 = vmatprep.subr.bf16.mxu0 0
    %4221 = vmatpush1.bf16.msra.mxu0 %v3729
    %4222 = vmatprep.subr.bf16.mxu0 0
    %4223 = vmatpush1.bf16.msra.mxu0 %v3732
    %4224 = vmatprep.subr.bf16.mxu0 0
    %4225 = vmatpush1.bf16.msra.mxu0 %v3735
    %4226 = vmatprep.subr.bf16.mxu0 0
    %4227 = vmatpush1.bf16.msra.mxu0 %v3738
    %4228 = vmatprep.subr.bf16.mxu0 0
    %4229 = vmatpush1.bf16.msra.mxu0 %v3741
    %4230 = vmatprep.subr.bf16.mxu0 0
    %4231 = vmatpush1.bf16.msra.mxu0 %v3744
    %4232 = vmatprep.subr.bf16.mxu0 0
    %4233 = vmatpush1.bf16.msra.mxu0 %v3747
    %4234 = vmatprep.subr.bf16.mxu0 0
    %4235 = vmatpush1.bf16.msra.mxu0 %v3750
    %4236 = vmatprep.subr.bf16.mxu0 0
    %4237 = vmatpush1.bf16.msra.mxu0 %v3753
    %4238 = vmatprep.subr.bf16.mxu0 0
    %4239 = vmatpush1.bf16.msra.mxu0 %v3756
    %4240 = vmatprep.subr.bf16.mxu0 0
    %4241 = vmatpush1.bf16.msra.mxu0 %v3759
    %4242 = vmatprep.mubr.bf16.mxu0 %v1983
    %4243 = vmatmul.mubr.bf16.gmra.mrb[0].mxu0 %v1982
    %v4244 = vpop.f32.mrb[0].mxu0
    %v4245 = vadd.f32 %v3358, %v4244
    %v4246 = vpop.f32.mrb[0].mxu0
    %v4247 = vpop.f32.mrb[0].mxu0
    %v4248 = vadd.f32 %v3361, %v4247
    %v4249 = vpop.f32.mrb[0].mxu0
    %4250 = vmatprep.mubr.bf16.mxu0 %v1987
    %4251 = vmatmul.mubr.bf16.gmra.mrb[0].mxu0 %v1986
    %v4252 = vpop.f32.mrb[0].mxu0
    %v4253 = vadd.f32 %v3366, %v4252
    %v4254 = vpop.f32.mrb[0].mxu0
    %v4255 = vpop.f32.mrb[0].mxu0
    %v4256 = vadd.f32 %v3369, %v4255
    %v4257 = vpop.f32.mrb[0].mxu0
    %4258 = vmatprep.mubr.bf16.mxu0 %v1991
    %4259 = vmatmul.mubr.bf16.gmra.mrb[0].mxu0 %v1990
    %v4260 = vpop.f32.mrb[0].mxu0
    %v4261 = vadd.f32 %v3374, %v4260
    %v4262 = vpop.f32.mrb[0].mxu0
    %v4263 = vpop.f32.mrb[0].mxu0
    %v4264 = vadd.f32 %v3377, %v4263
    %v4265 = vpop.f32.mrb[0].mxu0
    %4266 = vmatprep.mubr.bf16.mxu0 %v1995
    %4267 = vmatmul.mubr.bf16.gmra.mrb[0].mxu0 %v1994
    %v4268 = vpop.f32.mrb[0].mxu0
    %v4269 = vadd.f32 %v3382, %v4268
    %v4270 = vpop.f32.mrb[0].mxu0
    %v4271 = vpop.f32.mrb[0].mxu0
    %v4272 = vadd.f32 %v3385, %v4271
    %v4273 = vpop.f32.mrb[0].mxu0
    %4274 = vmatprep.mubr.bf16.mxu0 %v1999
    %4275 = vmatmul.mubr.bf16.gmra.mrb[0].mxu0 %v1998
    %v4276 = vpop.f32.mrb[0].mxu0
    %v4277 = vadd.f32 %v3390, %v4276
    %v4278 = vpop.f32.mrb[0].mxu0
    %v4279 = vpop.f32.mrb[0].mxu0
    %v4280 = vadd.f32 %v3393, %v4279
    %v4281 = vpop.f32.mrb[0].mxu0
    %4282 = vmatprep.mubr.bf16.mxu0 %v2003
    %4283 = vmatmul.mubr.bf16.gmra.mrb[0].mxu0 %v2002
    %v4284 = vpop.f32.mrb[0].mxu0
    %v4285 = vadd.f32 %v3398, %v4284
    %v4286 = vpop.f32.mrb[0].mxu0
    %v4287 = vpop.f32.mrb[0].mxu0
    %v4288 = vadd.f32 %v3401, %v4287
    %v4289 = vpop.f32.mrb[0].mxu0
    %4290 = vmatprep.mubr.bf16.mxu0 %v2007
    %4291 = vmatmul.mubr.bf16.gmra.mrb[0].mxu0 %v2006
    %v4292 = vpop.f32.mrb[0].mxu0
    %v4293 = vadd.f32 %v3406, %v4292
    %v4294 = vpop.f32.mrb[0].mxu0
    %v4295 = vpop.f32.mrb[0].mxu0
    %v4296 = vadd.f32 %v3409, %v4295
    %v4297 = vpop.f32.mrb[0].mxu0
    %4298 = vmatprep.mubr.bf16.mxu0 %v2011
    %4299 = vmatmul.mubr.bf16.gmra.mrb[0].mxu0 %v2010
    %v4300 = vpop.f32.mrb[0].mxu0
    %v4301 = vadd.f32 %v3414, %v4300
    %v4302 = vpop.f32.mrb[0].mxu0
    %v4303 = vpop.f32.mrb[0].mxu0
    %v4304 = vadd.f32 %v3417, %v4303
    %v4305 = vpop.f32.mrb[0].mxu0
    %4306 = vmatprep.mubr.bf16.mxu0 %v2015
    %4307 = vmatmul.mubr.bf16.gmra.mrb[0].mxu0 %v2014
    %v4308 = vpop.f32.mrb[0].mxu0
    %v4309 = vadd.f32 %v3422, %v4308
    %v4310 = vpop.f32.mrb[0].mxu0
    %v4311 = vpop.f32.mrb[0].mxu0
    %v4312 = vadd.f32 %v3425, %v4311
    %v4313 = vpop.f32.mrb[0].mxu0
    %4314 = vmatprep.mubr.bf16.mxu0 %v2019
    %4315 = vmatmul.mubr.bf16.gmra.mrb[0].mxu0 %v2018
    %v4316 = vpop.f32.mrb[0].mxu0
    %v4317 = vadd.f32 %v3430, %v4316
    %v4318 = vpop.f32.mrb[0].mxu0
    %v4319 = vpop.f32.mrb[0].mxu0
    %v4320 = vadd.f32 %v3433, %v4319
    %v4321 = vpop.f32.mrb[0].mxu0
    %4322 = vmatprep.mubr.bf16.mxu0 %v2023
    %4323 = vmatmul.mubr.bf16.gmra.mrb[0].mxu0 %v2022
    %v4324 = vpop.f32.mrb[0].mxu0
    %v4325 = vadd.f32 %v3438, %v4324
    %v4326 = vpop.f32.mrb[0].mxu0
    %v4327 = vpop.f32.mrb[0].mxu0
    %v4328 = vadd.f32 %v3441, %v4327
    %v4329 = vpop.f32.mrb[0].mxu0
    %4330 = vmatprep.mubr.bf16.mxu0 %v2027
    %4331 = vmatmul.mubr.bf16.gmra.mrb[0].mxu0 %v2026
    %v4332 = vpop.f32.mrb[0].mxu0
    %v4333 = vadd.f32 %v3446, %v4332
    %v4334 = vpop.f32.mrb[0].mxu0
    %v4335 = vpop.f32.mrb[0].mxu0
    %v4336 = vadd.f32 %v3449, %v4335
    %v4337 = vpop.f32.mrb[0].mxu0
    %4338 = vdwg.mxu0
    %4339 = vmatprep.subr.bf16.mxu0 0
    %4340 = vmatpush1.bf16.msra.mxu0 %v3762
    %4341 = vmatprep.subr.bf16.mxu0 0
    %4342 = vmatpush1.bf16.msra.mxu0 %v3765
    %4343 = vmatprep.subr.bf16.mxu0 0
    %4344 = vmatpush1.bf16.msra.mxu0 %v3768
    %4345 = vmatprep.subr.bf16.mxu0 0
    %4346 = vmatpush1.bf16.msra.mxu0 %v3771
    %4347 = vmatprep.subr.bf16.mxu0 0
    %4348 = vmatpush1.bf16.msra.mxu0 %v3774
    %4349 = vmatprep.subr.bf16.mxu0 0
    %4350 = vmatpush1.bf16.msra.mxu0 %v3777
    %4351 = vmatprep.subr.bf16.mxu0 0
    %4352 = vmatpush1.bf16.msra.mxu0 %v3780
    %4353 = vmatprep.subr.bf16.mxu0 0
    %4354 = vmatpush1.bf16.msra.mxu0 %v3783
    %4355 = vmatprep.subr.bf16.mxu0 0
    %4356 = vmatpush1.bf16.msra.mxu0 %v3786
    %4357 = vmatprep.subr.bf16.mxu0 0
    %4358 = vmatpush1.bf16.msra.mxu0 %v3789
    %4359 = vmatprep.subr.bf16.mxu0 0
    %4360 = vmatpush1.bf16.msra.mxu0 0
    %4361 = vmatprep.subr.bf16.mxu0 0
    %4362 = vmatpush1.bf16.msra.mxu0 0
    %4363 = vmatprep.subr.bf16.mxu0 0
    %4364 = vmatpush1.bf16.msra.mxu0 0
    %4365 = vmatprep.subr.bf16.mxu0 0
    %4366 = vmatpush1.bf16.msra.mxu0 0
    %4367 = vmatprep.subr.bf16.mxu0 0
    %4368 = vmatpush1.bf16.msra.mxu0 0
    %4369 = vmatprep.subr.bf16.mxu0 0
    %4370 = vmatpush1.bf16.msra.mxu0 0
    %4371 = vmatprep.mubr.bf16.mxu0 %v3869
    %4372 = vmatmul.mubr.bf16.gmra.mrb[0].mxu0 %v1984
    %v4373 = vpop.f32.mrb[0].mxu0
    %v4374 = vadd.f32 %v4245, %v4373
    %v4375 = vpop.f32.mrb[0].mxu0
    %v4376 = vpop.f32.mrb[0].mxu0
    %v4377 = vadd.f32 %v4248, %v4376
    %v4378 = vpop.f32.mrb[0].mxu0
    %4379 = vmatprep.mubr.bf16.mxu0 %v3872
    %4380 = vmatmul.mubr.bf16.gmra.mrb[0].mxu0 %v1988
    %v4381 = vpop.f32.mrb[0].mxu0
    %v4382 = vadd.f32 %v4253, %v4381
    %v4383 = vpop.f32.mrb[0].mxu0
    %v4384 = vpop.f32.mrb[0].mxu0
    %v4385 = vadd.f32 %v4256, %v4384
    %v4386 = vpop.f32.mrb[0].mxu0
    %4387 = vmatprep.mubr.bf16.mxu0 %v3875
    %4388 = vmatmul.mubr.bf16.gmra.mrb[0].mxu0 %v1992
    %v4389 = vpop.f32.mrb[0].mxu0
    %v4390 = vadd.f32 %v4261, %v4389
    %v4391 = vpop.f32.mrb[0].mxu0
    %v4392 = vpop.f32.mrb[0].mxu0
    %v4393 = vadd.f32 %v4264, %v4392
    %v4394 = vpop.f32.mrb[0].mxu0
    %4395 = vmatprep.mubr.bf16.mxu0 %v3878
    %4396 = vmatmul.mubr.bf16.gmra.mrb[0].mxu0 %v1996
    %v4397 = vpop.f32.mrb[0].mxu0
    %v4398 = vadd.f32 %v4269, %v4397
    %v4399 = vpop.f32.mrb[0].mxu0
    %v4400 = vpop.f32.mrb[0].mxu0
    %v4401 = vadd.f32 %v4272, %v4400
    %v4402 = vpop.f32.mrb[0].mxu0
    %4403 = vmatprep.mubr.bf16.mxu0 %v3881
    %4404 = vmatmul.mubr.bf16.gmra.mrb[0].mxu0 %v2000
    %v4405 = vpop.f32.mrb[0].mxu0
    %v4406 = vadd.f32 %v4277, %v4405
    %v4407 = vpop.f32.mrb[0].mxu0
    %v4408 = vpop.f32.mrb[0].mxu0
    %v4409 = vadd.f32 %v4280, %v4408
    %v4410 = vpop.f32.mrb[0].mxu0
    %4411 = vmatprep.mubr.bf16.mxu0 %v3884
    %4412 = vmatmul.mubr.bf16.gmra.mrb[0].mxu0 %v2004
    %v4413 = vpop.f32.mrb[0].mxu0
    %v4414 = vadd.f32 %v4285, %v4413
    %v4415 = vpop.f32.mrb[0].mxu0
    %v4416 = vpop.f32.mrb[0].mxu0
    %v4417 = vadd.f32 %v4288, %v4416
    %v4418 = vpop.f32.mrb[0].mxu0
    %4419 = vmatprep.mubr.bf16.mxu0 %v3887
    %4420 = vmatmul.mubr.bf16.gmra.mrb[0].mxu0 %v2008
    %v4421 = vpop.f32.mrb[0].mxu0
    %v4422 = vadd.f32 %v4293, %v4421
    %v4423 = vpop.f32.mrb[0].mxu0
    %v4424 = vpop.f32.mrb[0].mxu0
    %v4425 = vadd.f32 %v4296, %v4424
    %v4426 = vpop.f32.mrb[0].mxu0
    %4427 = vmatprep.mubr.bf16.mxu0 %v3890
    %4428 = vmatmul.mubr.bf16.gmra.mrb[0].mxu0 %v2012
    %v4429 = vpop.f32.mrb[0].mxu0
    %v4430 = vadd.f32 %v4301, %v4429
    %v4431 = vpop.f32.mrb[0].mxu0
    %v4432 = vpop.f32.mrb[0].mxu0
    %v4433 = vadd.f32 %v4304, %v4432
    %v4434 = vpop.f32.mrb[0].mxu0
    %4435 = vmatprep.mubr.bf16.mxu0 %v3893
    %4436 = vmatmul.mubr.bf16.gmra.mrb[0].mxu0 %v2016
    %v4437 = vpop.f32.mrb[0].mxu0
    %v4438 = vadd.f32 %v4309, %v4437
    %v4439 = vpop.f32.mrb[0].mxu0
    %v4440 = vpop.f32.mrb[0].mxu0
    %v4441 = vadd.f32 %v4312, %v4440
    %v4442 = vpop.f32.mrb[0].mxu0
    %4443 = vmatprep.mubr.bf16.mxu0 %v3896
    %4444 = vmatmul.mubr.bf16.gmra.mrb[0].mxu0 %v2020
    %v4445 = vpop.f32.mrb[0].mxu0
    %v4446 = vadd.f32 %v4317, %v4445
    %v4447 = vpop.f32.mrb[0].mxu0
    %v4448 = vpop.f32.mrb[0].mxu0
    %v4449 = vadd.f32 %v4320, %v4448
    %v4450 = vpop.f32.mrb[0].mxu0
    %4451 = vmatprep.mubr.bf16.mxu0 %v3899
    %4452 = vmatmul.mubr.bf16.gmra.mrb[0].mxu0 %v2024
    %v4453 = vpop.f32.mrb[0].mxu0
    %v4454 = vadd.f32 %v4325, %v4453
    %v4455 = vpop.f32.mrb[0].mxu0
    %v4456 = vpop.f32.mrb[0].mxu0
    %v4457 = vadd.f32 %v4328, %v4456
    %v4458 = vpop.f32.mrb[0].mxu0
    %4459 = vmatprep.mubr.bf16.mxu0 %v3902
    %4460 = vmatmul.mubr.bf16.gmra.mrb[0].mxu0 %v2028
    %v4461 = vpop.f32.mrb[0].mxu0
    %v4462 = vadd.f32 %v4333, %v4461
    %v4463 = vpop.f32.mrb[0].mxu0
    %v4464 = vpop.f32.mrb[0].mxu0
    %v4465 = vadd.f32 %v4336, %v4464
    %v4466 = vpop.f32.mrb[0].mxu0
    %4467 = vdwg.mxu0
    %v4468 = vld [vmem:[#allocation2 + $0x180] sm:$0xff]
    %v4469 = vld [vmem:[#allocation2 + $0x188] sm:$0xff]
    %v4470 = vld [vmem:[#allocation2 + $0x190] sm:$0xff]
    %v4471 = vld [vmem:[#allocation2 + $0x198] sm:$0xff]
    %s4472 = scalar_lea.vmem [#allocation7], 1248
    %v4473 = vld [vmem:[%s4472] sm:$0xff]
    %v4474 = vld [vmem:[%s4472 + $0x8] sm:$0xf]
    %v4475 = vld [vmem:[%s4472 + $0xc] sm:$0xff]
    %v4476 = vld [vmem:[%s4472 + $0x14] sm:$0xf]
    %v4477 = vld [vmem:[%s4472 + $0x18] sm:$0xff]
    %v4478 = vld [vmem:[%s4472 + $0x20] sm:$0xf]
    %v4479 = vld [vmem:[%s4472 + $0x24] sm:$0xff]
    %v4480 = vld [vmem:[%s4472 + $0x2c] sm:$0xf]
    %v4481 = vld [vmem:[%s4472 + $0x30] sm:$0xff]
    %v4482 = vld [vmem:[%s4472 + $0x38] sm:$0xf]
    %v4483 = vld [vmem:[%s4472 + $0x3c] sm:$0xff]
    %v4484 = vld [vmem:[%s4472 + $0x44] sm:$0xf]
    %v4485 = vld [vmem:[%s4472 + $0x48] sm:$0xff]
    %v4486 = vld [vmem:[%s4472 + $0x50] sm:$0xf]
    %v4487 = vld [vmem:[%s4472 + $0x54] sm:$0xff]
    %v4488 = vld [vmem:[%s4472 + $0x5c] sm:$0xf]
    %v4489 = vld [vmem:[%s4472 + $0x60] sm:$0xff]
    %v4490 = vld [vmem:[%s4472 + $0x68] sm:$0xf]
    %v4491 = vld [vmem:[%s4472 + $0x6c] sm:$0xff]
    %v4492 = vld [vmem:[%s4472 + $0x74] sm:$0xf]
    %v4493 = vld [vmem:[%s4472 + $0x78] sm:$0xff]
    %v4494 = vld [vmem:[%s4472 + $0x80] sm:$0xf]
    %v4495 = vld [vmem:[%s4472 + $0x84] sm:$0xff]
    %v4496 = vld [vmem:[%s4472 + $0x8c] sm:$0xf]
    %v4497 = vld [vmem:[%s4472 + $0x90] sm:$0xff]
    %v4498 = vld [vmem:[%s4472 + $0x98] sm:$0xf]
    %v4499 = vld [vmem:[%s4472 + $0x9c] sm:$0xff]
    %v4500 = vld [vmem:[%s4472 + $0xa4] sm:$0xf]
    %v4501 = vld [vmem:[%s4472 + $0xa8] sm:$0xff]
    %v4502 = vld [vmem:[%s4472 + $0xb0] sm:$0xf]
    %v4503 = vld [vmem:[%s4472 + $0xb4] sm:$0xff]
    %v4504 = vld [vmem:[%s4472 + $0xbc] sm:$0xf]
    %v4505 = vld [vmem:[%s4472 + $0xc0] sm:$0xff]
    %v4506 = vld [vmem:[%s4472 + $0xc8] sm:$0xf]
    %v4507 = vld [vmem:[%s4472 + $0xcc] sm:$0xff]
    %v4508 = vld [vmem:[%s4472 + $0xd4] sm:$0xf]
    %v4509 = vld [vmem:[%s4472 + $0xd8] sm:$0xff]
    %v4510 = vld [vmem:[%s4472 + $0xe0] sm:$0xf]
    %v4511 = vld [vmem:[%s4472 + $0xe4] sm:$0xff]
    %v4512 = vld [vmem:[%s4472 + $0xec] sm:$0xf]
    %v4513 = vld [vmem:[%s4472 + $0xf0] sm:$0xff]
    %v4514 = vld [vmem:[%s4472 + $0xf8] sm:$0xf]
    %v4515 = vld [vmem:[%s4472 + $0xfc] sm:$0xff]
    %v4516 = vld [vmem:[%s4472 + $0x104] sm:$0xf]
    %v4517 = vld [vmem:[%s4472 + $0x108] sm:$0xff]
    %v4518 = vld [vmem:[%s4472 + $0x110] sm:$0xf]
    %v4519 = vld [vmem:[%s4472 + $0x114] sm:$0xff]
    %v4520 = vld [vmem:[%s4472 + $0x11c] sm:$0xf]
    %v4521 = vld [vmem:[%s4472 + $0x120] sm:$0xff]
    %v4522 = vld [vmem:[%s4472 + $0x128] sm:$0xf]
    %v4523 = vld [vmem:[%s4472 + $0x12c] sm:$0xff]
    %v4524 = vld [vmem:[%s4472 + $0x134] sm:$0xf]
    %v4525 = vld [vmem:[%s4472 + $0x138] sm:$0xff]
    %v4526 = vld [vmem:[%s4472 + $0x140] sm:$0xf]
    %v4527 = vld [vmem:[%s4472 + $0x144] sm:$0xff]
    %v4528 = vld [vmem:[%s4472 + $0x14c] sm:$0xf]
    %v4529 = vld [vmem:[%s4472 + $0x150] sm:$0xff]
    %v4530 = vld [vmem:[%s4472 + $0x158] sm:$0xf]
    %v4531 = vld [vmem:[%s4472 + $0x15c] sm:$0xff]
    %v4532 = vld [vmem:[%s4472 + $0x164] sm:$0xf]
    %v4533 = vld [vmem:[%s4472 + $0x168] sm:$0xff]
    %v4534 = vld [vmem:[%s4472 + $0x170] sm:$0xf]
    %v4535 = vld [vmem:[%s4472 + $0x174] sm:$0xff]
    %v4536 = vld [vmem:[%s4472 + $0x17c] sm:$0xf]
    %v4537 = vld [vmem:[%s4472 + $0x180] sm:$0xff]
    %v4538 = vld [vmem:[%s4472 + $0x188] sm:$0xf]
    %v4539 = vld [vmem:[%s4472 + $0x18c] sm:$0xff]
    %v4540 = vld [vmem:[%s4472 + $0x194] sm:$0xf]
    %v4541 = vld [vmem:[%s4472 + $0x198] sm:$0xff]
    %v4542 = vld [vmem:[%s4472 + $0x1a0] sm:$0xf]
    %v4543 = vld [vmem:[%s4472 + $0x1a4] sm:$0xff]
    %v4544 = vld [vmem:[%s4472 + $0x1ac] sm:$0xf]
    %v4545 = vld [vmem:[%s4472 + $0x1b0] sm:$0xff]
    %v4546 = vld [vmem:[%s4472 + $0x1b8] sm:$0xf]
    %v4547 = vld [vmem:[%s4472 + $0x1bc] sm:$0xff]
    %v4548 = vld [vmem:[%s4472 + $0x1c4] sm:$0xf]
    %v4549 = vld [vmem:[%s4472 + $0x1c8] sm:$0xff]
    %v4550 = vld [vmem:[%s4472 + $0x1d0] sm:$0xf]
    %v4551 = vld [vmem:[%s4472 + $0x1d4] sm:$0xff]
    %v4552 = vld [vmem:[%s4472 + $0x1dc] sm:$0xf]
    %v4553 = vld [vmem:[%s4472 + $0x1e0] sm:$0xff]
    %v4554 = vld [vmem:[%s4472 + $0x1e8] sm:$0xf]
    %v4555 = vld [vmem:[%s4472 + $0x1ec] sm:$0xff]
    %v4556 = vld [vmem:[%s4472 + $0x1f4] sm:$0xf]
    %v4557 = vld [vmem:[%s4472 + $0x1f8] sm:$0xff]
    %v4558 = vld [vmem:[%s4472 + $0x200] sm:$0xf]
    %v4559 = vld [vmem:[%s4472 + $0x204] sm:$0xff]
    %v4560 = vld [vmem:[%s4472 + $0x20c] sm:$0xf]
    %v4561 = vld [vmem:[%s4472 + $0x210] sm:$0xff]
    %v4562 = vld [vmem:[%s4472 + $0x218] sm:$0xf]
    %v4563 = vld [vmem:[%s4472 + $0x21c] sm:$0xff]
    %v4564 = vld [vmem:[%s4472 + $0x224] sm:$0xf]
    %v4565 = vld [vmem:[%s4472 + $0x228] sm:$0xff]
    %v4566 = vld [vmem:[%s4472 + $0x230] sm:$0xf]
    %v4567 = vld [vmem:[%s4472 + $0x234] sm:$0xff]
    %v4568 = vld [vmem:[%s4472 + $0x23c] sm:$0xf]
    %v4569 = vld [vmem:[%s4472 + $0x240] sm:$0xff]
    %v4570 = vld [vmem:[%s4472 + $0x248] sm:$0xf]
    %v4571 = vld [vmem:[%s4472 + $0x24c] sm:$0xff]
    %v4572 = vld [vmem:[%s4472 + $0x254] sm:$0xf]
    %v4573 = vld [vmem:[%s4472 + $0x258] sm:$0xff]
    %v4574 = vld [vmem:[%s4472 + $0x260] sm:$0xf]
    %v4575 = vld [vmem:[%s4472 + $0x264] sm:$0xff]
    %v4576 = vld [vmem:[%s4472 + $0x26c] sm:$0xf]
    %v4681 = vunpack.c.l.b16 %v4473
    %v4682 = vunpack.c.h.b16 %v4473
    %v4683 = vunpack.c.l.b16 %v4474
    %v4684 = vunpack.c.l.b16 %v4475
    %v4685 = vunpack.c.h.b16 %v4475
    %v4686 = vunpack.c.l.b16 %v4476
    %v4687 = vunpack.c.l.b16 %v4477
    %v4688 = vunpack.c.h.b16 %v4477
    %v4689 = vunpack.c.l.b16 %v4478
    %v4690 = vunpack.c.l.b16 %v4479
    %v4691 = vunpack.c.h.b16 %v4479
    %v4692 = vunpack.c.l.b16 %v4480
    %v4693 = vunpack.c.l.b16 %v4481
    %v4694 = vunpack.c.h.b16 %v4481
    %v4695 = vunpack.c.l.b16 %v4482
    %v4696 = vunpack.c.l.b16 %v4483
    %v4697 = vunpack.c.h.b16 %v4483
    %v4698 = vunpack.c.l.b16 %v4484
    %v4699 = vunpack.c.l.b16 %v4485
    %v4700 = vunpack.c.h.b16 %v4485
    %v4701 = vunpack.c.l.b16 %v4486
    %v4702 = vunpack.c.l.b16 %v4487
    %v4703 = vunpack.c.h.b16 %v4487
    %v4704 = vunpack.c.l.b16 %v4488
    %v4705 = vunpack.c.l.b16 %v4489
    %v4706 = vunpack.c.h.b16 %v4489
    %v4707 = vunpack.c.l.b16 %v4490
    %v4708 = vunpack.c.l.b16 %v4491
    %v4709 = vunpack.c.h.b16 %v4491
    %v4710 = vunpack.c.l.b16 %v4492
    %v4711 = vunpack.c.l.b16 %v4493
    %v4712 = vunpack.c.h.b16 %v4493
    %v4713 = vunpack.c.l.b16 %v4494
    %v4714 = vunpack.c.l.b16 %v4495
    %v4715 = vunpack.c.h.b16 %v4495
    %v4716 = vunpack.c.l.b16 %v4496
    %v4717 = vunpack.c.l.b16 %v4497
    %v4718 = vunpack.c.h.b16 %v4497
    %v4719 = vunpack.c.l.b16 %v4498
    %v4720 = vunpack.c.l.b16 %v4499
    %v4721 = vunpack.c.h.b16 %v4499
    %v4722 = vunpack.c.l.b16 %v4500
    %v4723 = vunpack.c.l.b16 %v4501
    %v4724 = vunpack.c.h.b16 %v4501
    %v4725 = vunpack.c.l.b16 %v4502
    %v4726 = vunpack.c.l.b16 %v4503
    %v4727 = vunpack.c.h.b16 %v4503
    %v4728 = vunpack.c.l.b16 %v4504
    %v4729 = vunpack.c.l.b16 %v4505
    %v4730 = vunpack.c.h.b16 %v4505
    %v4731 = vunpack.c.l.b16 %v4506
    %v4732 = vunpack.c.l.b16 %v4507
    %v4733 = vunpack.c.h.b16 %v4507
    %v4734 = vunpack.c.l.b16 %v4508
    %v4735 = vunpack.c.l.b16 %v4509
    %v4736 = vunpack.c.h.b16 %v4509
    %v4737 = vunpack.c.l.b16 %v4510
    %v4738 = vunpack.c.l.b16 %v4511
    %v4739 = vunpack.c.h.b16 %v4511
    %v4740 = vunpack.c.l.b16 %v4512
    %v4741 = vunpack.c.l.b16 %v4513
    %v4742 = vunpack.c.h.b16 %v4513
    %v4743 = vunpack.c.l.b16 %v4514
    %v4744 = vunpack.c.l.b16 %v4515
    %v4745 = vunpack.c.h.b16 %v4515
    %v4746 = vunpack.c.l.b16 %v4516
    %v4747 = vunpack.c.l.b16 %v4517
    %v4748 = vunpack.c.h.b16 %v4517
    %v4749 = vunpack.c.l.b16 %v4518
    %v4750 = vunpack.c.l.b16 %v4519
    %v4751 = vunpack.c.h.b16 %v4519
    %v4752 = vunpack.c.l.b16 %v4520
    %v4753 = vunpack.c.l.b16 %v4521
    %v4754 = vunpack.c.h.b16 %v4521
    %v4755 = vunpack.c.l.b16 %v4522
    %v4756 = vunpack.c.l.b16 %v4523
    %v4757 = vunpack.c.h.b16 %v4523
    %v4758 = vunpack.c.l.b16 %v4524
    %v4759 = vunpack.c.l.b16 %v4525
    %v4760 = vunpack.c.h.b16 %v4525
    %v4761 = vunpack.c.l.b16 %v4526
    %v4762 = vunpack.c.l.b16 %v4527
    %v4763 = vunpack.c.h.b16 %v4527
    %v4764 = vunpack.c.l.b16 %v4528
    %v4765 = vunpack.c.l.b16 %v4529
    %v4766 = vunpack.c.h.b16 %v4529
    %v4767 = vunpack.c.l.b16 %v4530
    %v4768 = vunpack.c.l.b16 %v4531
    %v4769 = vunpack.c.h.b16 %v4531
    %v4770 = vunpack.c.l.b16 %v4532
    %v4771 = vunpack.c.l.b16 %v4533
    %v4772 = vunpack.c.h.b16 %v4533
    %v4773 = vunpack.c.l.b16 %v4534
    %v4774 = vunpack.c.l.b16 %v4535
    %v4775 = vunpack.c.h.b16 %v4535
    %v4776 = vunpack.c.l.b16 %v4536
    %v4777 = vunpack.c.l.b16 %v4537
    %v4778 = vunpack.c.h.b16 %v4537
    %v4779 = vunpack.c.l.b16 %v4538
    %v4780 = vunpack.c.l.b16 %v4539
    %v4781 = vunpack.c.h.b16 %v4539
    %v4782 = vunpack.c.l.b16 %v4540
    %v4783 = vunpack.c.l.b16 %v4541
    %v4784 = vunpack.c.h.b16 %v4541
    %v4785 = vunpack.c.l.b16 %v4542
    %v4786 = vunpack.c.l.b16 %v4543
    %v4787 = vunpack.c.h.b16 %v4543
    %v4788 = vunpack.c.l.b16 %v4544
    %v4789 = vunpack.c.l.b16 %v4545
    %v4790 = vunpack.c.h.b16 %v4545
    %v4791 = vunpack.c.l.b16 %v4546
    %v4792 = vunpack.c.l.b16 %v4547
    %v4793 = vunpack.c.h.b16 %v4547
    %v4794 = vunpack.c.l.b16 %v4548
    %v4795 = vunpack.c.l.b16 %v4549
    %v4796 = vunpack.c.h.b16 %v4549
    %v4797 = vunpack.c.l.b16 %v4550
    %v4798 = vunpack.c.l.b16 %v4551
    %v4799 = vunpack.c.h.b16 %v4551
    %v4800 = vunpack.c.l.b16 %v4552
    %v4801 = vunpack.c.l.b16 %v4553
    %v4802 = vunpack.c.h.b16 %v4553
    %v4803 = vunpack.c.l.b16 %v4554
    %v4804 = vunpack.c.l.b16 %v4555
    %v4805 = vunpack.c.h.b16 %v4555
    %v4806 = vunpack.c.l.b16 %v4556
    %v4807 = vunpack.c.l.b16 %v4557
    %v4808 = vunpack.c.h.b16 %v4557
    %v4809 = vunpack.c.l.b16 %v4558
    %v4810 = vunpack.c.l.b16 %v4559
    %v4811 = vunpack.c.h.b16 %v4559
    %v4812 = vunpack.c.l.b16 %v4560
    %v4813 = vunpack.c.l.b16 %v4561
    %v4814 = vunpack.c.h.b16 %v4561
    %v4815 = vunpack.c.l.b16 %v4562
    %v4816 = vunpack.c.l.b16 %v4563
    %v4817 = vunpack.c.h.b16 %v4563
    %v4818 = vunpack.c.l.b16 %v4564
    %v4819 = vunpack.c.l.b16 %v4565
    %v4820 = vunpack.c.h.b16 %v4565
    %v4821 = vunpack.c.l.b16 %v4566
    %v4822 = vunpack.c.l.b16 %v4567
    %v4823 = vunpack.c.h.b16 %v4567
    %v4824 = vunpack.c.l.b16 %v4568
    %v4825 = vunpack.c.l.b16 %v4569
    %v4826 = vunpack.c.h.b16 %v4569
    %v4827 = vunpack.c.l.b16 %v4570
    %v4828 = vunpack.c.l.b16 %v4571
    %v4829 = vunpack.c.h.b16 %v4571
    %v4830 = vunpack.c.l.b16 %v4572
    %v4831 = vunpack.c.l.b16 %v4573
    %v4832 = vunpack.c.h.b16 %v4573
    %v4833 = vunpack.c.l.b16 %v4574
    %v4834 = vunpack.c.l.b16 %v4575
    %v4835 = vunpack.c.h.b16 %v4575
    %v4836 = vunpack.c.l.b16 %v4576
    %v4837 = vpack.c.b16 %v4684, %v4681
    %v4838 = vpack.c.b16 %v4685, %v4682
    %v4839 = vpack.c.b16 %v4686, %v4683
    %v4840 = vpack.c.b16 %v4690, %v4687
    %v4841 = vpack.c.b16 %v4691, %v4688
    %v4842 = vpack.c.b16 %v4692, %v4689
    %v4843 = vpack.c.b16 %v4696, %v4693
    %v4844 = vpack.c.b16 %v4697, %v4694
    %v4845 = vpack.c.b16 %v4698, %v4695
    %v4846 = vpack.c.b16 %v4702, %v4699
    %v4847 = vpack.c.b16 %v4703, %v4700
    %v4848 = vpack.c.b16 %v4704, %v4701
    %v4849 = vpack.c.b16 %v4708, %v4705
    %v4850 = vpack.c.b16 %v4709, %v4706
    %v4851 = vpack.c.b16 %v4710, %v4707
    %v4852 = vpack.c.b16 %v4714, %v4711
    %v4853 = vpack.c.b16 %v4715, %v4712
    %v4854 = vpack.c.b16 %v4716, %v4713
    %v4855 = vpack.c.b16 %v4720, %v4717
    %v4856 = vpack.c.b16 %v4721, %v4718
    %v4857 = vpack.c.b16 %v4722, %v4719
    %v4858 = vpack.c.b16 %v4726, %v4723
    %v4859 = vpack.c.b16 %v4727, %v4724
    %v4860 = vpack.c.b16 %v4728, %v4725
    %v4861 = vpack.c.b16 %v4732, %v4729
    %v4862 = vpack.c.b16 %v4733, %v4730
    %v4863 = vpack.c.b16 %v4734, %v4731
    %v4864 = vpack.c.b16 %v4738, %v4735
    %v4865 = vpack.c.b16 %v4739, %v4736
    %v4866 = vpack.c.b16 %v4740, %v4737
    %v4867 = vpack.c.b16 %v4744, %v4741
    %v4868 = vpack.c.b16 %v4745, %v4742
    %v4869 = vpack.c.b16 %v4746, %v4743
    %v4870 = vpack.c.b16 %v4750, %v4747
    %v4871 = vpack.c.b16 %v4751, %v4748
    %v4872 = vpack.c.b16 %v4752, %v4749
    %v4873 = vpack.c.b16 %v4756, %v4753
    %v4874 = vpack.c.b16 %v4757, %v4754
    %v4875 = vpack.c.b16 %v4758, %v4755
    %v4876 = vpack.c.b16 %v4762, %v4759
    %v4877 = vpack.c.b16 %v4763, %v4760
    %v4878 = vpack.c.b16 %v4764, %v4761
    %v4879 = vpack.c.b16 %v4768, %v4765
    %v4880 = vpack.c.b16 %v4769, %v4766
    %v4881 = vpack.c.b16 %v4770, %v4767
    %v4882 = vpack.c.b16 %v4774, %v4771
    %v4883 = vpack.c.b16 %v4775, %v4772
    %v4884 = vpack.c.b16 %v4776, %v4773
    %v4885 = vpack.c.b16 %v4780, %v4777
    %v4886 = vpack.c.b16 %v4781, %v4778
    %v4887 = vpack.c.b16 %v4782, %v4779
    %v4888 = vpack.c.b16 %v4786, %v4783
    %v4889 = vpack.c.b16 %v4787, %v4784
    %v4890 = vpack.c.b16 %v4788, %v4785
    %v4891 = vpack.c.b16 %v4792, %v4789
    %v4892 = vpack.c.b16 %v4793, %v4790
    %v4893 = vpack.c.b16 %v4794, %v4791
    %v4894 = vpack.c.b16 %v4798, %v4795
    %v4895 = vpack.c.b16 %v4799, %v4796
    %v4896 = vpack.c.b16 %v4800, %v4797
    %v4897 = vpack.c.b16 %v4804, %v4801
    %v4898 = vpack.c.b16 %v4805, %v4802
    %v4899 = vpack.c.b16 %v4806, %v4803
    %v4900 = vpack.c.b16 %v4810, %v4807
    %v4901 = vpack.c.b16 %v4811, %v4808
    %v4902 = vpack.c.b16 %v4812, %v4809
    %v4903 = vpack.c.b16 %v4816, %v4813
    %v4904 = vpack.c.b16 %v4817, %v4814
    %v4905 = vpack.c.b16 %v4818, %v4815
    %v4906 = vpack.c.b16 %v4822, %v4819
    %v4907 = vpack.c.b16 %v4823, %v4820
    %v4908 = vpack.c.b16 %v4824, %v4821
    %v4909 = vpack.c.b16 %v4828, %v4825
    %v4910 = vpack.c.b16 %v4829, %v4826
    %v4911 = vpack.c.b16 %v4830, %v4827
    %v4912 = vpack.c.b16 %v4834, %v4831
    %v4913 = vpack.c.b16 %v4835, %v4832
    %v4914 = vpack.c.b16 %v4836, %v4833
    %v4994 = vsel %vm1932, %v4471, 0
    %4996 = vmatprep.subr.bf16.mxu0 %v4838
    %4997 = vmatpush1.bf16.msra.mxu0 %v4837
    %4998 = vmatprep.subr.bf16.mxu0 %v4841
    %4999 = vmatpush1.bf16.msra.mxu0 %v4840
    %5000 = vmatprep.subr.bf16.mxu0 %v4844
    %5001 = vmatpush1.bf16.msra.mxu0 %v4843
    %5002 = vmatprep.subr.bf16.mxu0 %v4847
    %5003 = vmatpush1.bf16.msra.mxu0 %v4846
    %5004 = vmatprep.subr.bf16.mxu0 %v4850
    %5005 = vmatpush1.bf16.msra.mxu0 %v4849
    %5006 = vmatprep.subr.bf16.mxu0 %v4853
    %5007 = vmatpush1.bf16.msra.mxu0 %v4852
    %5008 = vmatprep.subr.bf16.mxu0 %v4856
    %5009 = vmatpush1.bf16.msra.mxu0 %v4855
    %5010 = vmatprep.subr.bf16.mxu0 %v4859
    %5011 = vmatpush1.bf16.msra.mxu0 %v4858
    %5012 = vmatprep.subr.bf16.mxu0 %v4862
    %5013 = vmatpush1.bf16.msra.mxu0 %v4861
    %5014 = vmatprep.subr.bf16.mxu0 %v4865
    %5015 = vmatpush1.bf16.msra.mxu0 %v4864
    %5016 = vmatprep.subr.bf16.mxu0 %v4868
    %5017 = vmatpush1.bf16.msra.mxu0 %v4867
    %5018 = vmatprep.subr.bf16.mxu0 %v4871
    %5019 = vmatpush1.bf16.msra.mxu0 %v4870
    %5020 = vmatprep.subr.bf16.mxu0 %v4874
    %5021 = vmatpush1.bf16.msra.mxu0 %v4873
    %5022 = vmatprep.subr.bf16.mxu0 %v4877
    %5023 = vmatpush1.bf16.msra.mxu0 %v4876
    %5024 = vmatprep.subr.bf16.mxu0 %v4880
    %5025 = vmatpush1.bf16.msra.mxu0 %v4879
    %5026 = vmatprep.subr.bf16.mxu0 %v4883
    %5027 = vmatpush1.bf16.msra.mxu0 %v4882
    %5028 = vmatprep.mubr.bf16.mxu0 %v1987
    %5029 = vmatmul.mubr.bf16.gmra.mrb[0].mxu0 %v1986
    %v5030 = vpop.f32.mrb[0].mxu0
    %v5031 = vadd.f32 0.0, %v5030
    %v5032 = vpop.f32.mrb[0].mxu0
    %v5033 = vadd.f32 0.0, %v5032
    %v5034 = vpop.f32.mrb[0].mxu0
    %v5035 = vadd.f32 0.0, %v5034
    %v5036 = vpop.f32.mrb[0].mxu0
    %v5037 = vadd.f32 0.0, %v5036
    %5038 = vmatprep.mubr.bf16.mxu0 %v1991
    %5039 = vmatmul.mubr.bf16.gmra.mrb[0].mxu0 %v1990
    %v5040 = vpop.f32.mrb[0].mxu0
    %v5041 = vadd.f32 0.0, %v5040
    %v5042 = vpop.f32.mrb[0].mxu0
    %v5043 = vadd.f32 0.0, %v5042
    %v5044 = vpop.f32.mrb[0].mxu0
    %v5045 = vadd.f32 0.0, %v5044
    %v5046 = vpop.f32.mrb[0].mxu0
    %v5047 = vadd.f32 0.0, %v5046
    %5048 = vmatprep.mubr.bf16.mxu0 %v1995
    %5049 = vmatmul.mubr.bf16.gmra.mrb[0].mxu0 %v1994
    %v5050 = vpop.f32.mrb[0].mxu0
    %v5051 = vadd.f32 0.0, %v5050
    %v5052 = vpop.f32.mrb[0].mxu0
    %v5053 = vadd.f32 0.0, %v5052
    %v5054 = vpop.f32.mrb[0].mxu0
    %v5055 = vadd.f32 0.0, %v5054
    %v5056 = vpop.f32.mrb[0].mxu0
    %v5057 = vadd.f32 0.0, %v5056
    %5058 = vmatprep.mubr.bf16.mxu0 %v1999
    %5059 = vmatmul.mubr.bf16.gmra.mrb[0].mxu0 %v1998
    %v5060 = vpop.f32.mrb[0].mxu0
    %v5061 = vadd.f32 0.0, %v5060
    %v5062 = vpop.f32.mrb[0].mxu0
    %v5063 = vadd.f32 0.0, %v5062
    %v5064 = vpop.f32.mrb[0].mxu0
    %v5065 = vadd.f32 0.0, %v5064
    %v5066 = vpop.f32.mrb[0].mxu0
    %v5067 = vadd.f32 0.0, %v5066
    %5068 = vmatprep.mubr.bf16.mxu0 %v2003
    %5069 = vmatmul.mubr.bf16.gmra.mrb[0].mxu0 %v2002
    %v5070 = vpop.f32.mrb[0].mxu0
    %v5071 = vadd.f32 0.0, %v5070
    %v5072 = vpop.f32.mrb[0].mxu0
    %v5073 = vadd.f32 0.0, %v5072
    %v5074 = vpop.f32.mrb[0].mxu0
    %v5075 = vadd.f32 0.0, %v5074
    %v5076 = vpop.f32.mrb[0].mxu0
    %v5077 = vadd.f32 0.0, %v5076
    %5078 = vmatprep.mubr.bf16.mxu0 %v2007
    %5079 = vmatmul.mubr.bf16.gmra.mrb[0].mxu0 %v2006
    %v5080 = vpop.f32.mrb[0].mxu0
    %v5081 = vadd.f32 0.0, %v5080
    %v5082 = vpop.f32.mrb[0].mxu0
    %v5083 = vadd.f32 0.0, %v5082
    %v5084 = vpop.f32.mrb[0].mxu0
    %v5085 = vadd.f32 0.0, %v5084
    %v5086 = vpop.f32.mrb[0].mxu0
    %v5087 = vadd.f32 0.0, %v5086
    %5088 = vmatprep.mubr.bf16.mxu0 %v2011
    %5089 = vmatmul.mubr.bf16.gmra.mrb[0].mxu0 %v2010
    %v5090 = vpop.f32.mrb[0].mxu0
    %v5091 = vadd.f32 0.0, %v5090
    %v5092 = vpop.f32.mrb[0].mxu0
    %v5093 = vadd.f32 0.0, %v5092
    %v5094 = vpop.f32.mrb[0].mxu0
    %v5095 = vadd.f32 0.0, %v5094
    %v5096 = vpop.f32.mrb[0].mxu0
    %v5097 = vadd.f32 0.0, %v5096
    %5098 = vmatprep.mubr.bf16.mxu0 %v2015
    %5099 = vmatmul.mubr.bf16.gmra.mrb[0].mxu0 %v2014
    %v5100 = vpop.f32.mrb[0].mxu0
    %v5101 = vadd.f32 0.0, %v5100
    %v5102 = vpop.f32.mrb[0].mxu0
    %v5103 = vadd.f32 0.0, %v5102
    %v5104 = vpop.f32.mrb[0].mxu0
    %v5105 = vadd.f32 0.0, %v5104
    %v5106 = vpop.f32.mrb[0].mxu0
    %v5107 = vadd.f32 0.0, %v5106
    %5108 = vmatprep.mubr.bf16.mxu0 %v2019
    %5109 = vmatmul.mubr.bf16.gmra.mrb[0].mxu0 %v2018
    %v5110 = vpop.f32.mrb[0].mxu0
    %v5111 = vadd.f32 0.0, %v5110
    %v5112 = vpop.f32.mrb[0].mxu0
    %v5113 = vadd.f32 0.0, %v5112
    %v5114 = vpop.f32.mrb[0].mxu0
    %v5115 = vadd.f32 0.0, %v5114
    %v5116 = vpop.f32.mrb[0].mxu0
    %v5117 = vadd.f32 0.0, %v5116
    %5118 = vmatprep.mubr.bf16.mxu0 %v2023
    %5119 = vmatmul.mubr.bf16.gmra.mrb[0].mxu0 %v2022
    %v5120 = vpop.f32.mrb[0].mxu0
    %v5121 = vadd.f32 0.0, %v5120
    %v5122 = vpop.f32.mrb[0].mxu0
    %v5123 = vadd.f32 0.0, %v5122
    %v5124 = vpop.f32.mrb[0].mxu0
    %v5125 = vadd.f32 0.0, %v5124
    %v5126 = vpop.f32.mrb[0].mxu0
    %v5127 = vadd.f32 0.0, %v5126
    %5128 = vmatprep.mubr.bf16.mxu0 %v2027
    %5129 = vmatmul.mubr.bf16.gmra.mrb[0].mxu0 %v2026
    %v5130 = vpop.f32.mrb[0].mxu0
    %v5131 = vadd.f32 0.0, %v5130
    %v5132 = vpop.f32.mrb[0].mxu0
    %v5133 = vadd.f32 0.0, %v5132
    %v5134 = vpop.f32.mrb[0].mxu0
    %v5135 = vadd.f32 0.0, %v5134
    %v5136 = vpop.f32.mrb[0].mxu0
    %v5137 = vadd.f32 0.0, %v5136
    %5138 = vmatprep.mubr.bf16.mxu0 %v4469
    %5139 = vmatmul.mubr.bf16.gmra.mrb[0].mxu0 %v4468
    %v5140 = vpop.f32.mrb[0].mxu0
    %v5141 = vadd.f32 0.0, %v5140
    %v5142 = vpop.f32.mrb[0].mxu0
    %v5143 = vadd.f32 0.0, %v5142
    %v5144 = vpop.f32.mrb[0].mxu0
    %v5145 = vadd.f32 0.0, %v5144
    %v5146 = vpop.f32.mrb[0].mxu0
    %v5147 = vadd.f32 0.0, %v5146
    %5148 = vdwg.mxu0
    %5149 = vmatprep.subr.bf16.mxu0 %v4886
    %5150 = vmatpush1.bf16.msra.mxu0 %v4885
    %5151 = vmatprep.subr.bf16.mxu0 %v4889
    %5152 = vmatpush1.bf16.msra.mxu0 %v4888
    %5153 = vmatprep.subr.bf16.mxu0 %v4892
    %5154 = vmatpush1.bf16.msra.mxu0 %v4891
    %5155 = vmatprep.subr.bf16.mxu0 %v4895
    %5156 = vmatpush1.bf16.msra.mxu0 %v4894
    %5157 = vmatprep.subr.bf16.mxu0 %v4898
    %5158 = vmatpush1.bf16.msra.mxu0 %v4897
    %5159 = vmatprep.subr.bf16.mxu0 %v4901
    %5160 = vmatpush1.bf16.msra.mxu0 %v4900
    %5161 = vmatprep.subr.bf16.mxu0 %v4904
    %5162 = vmatpush1.bf16.msra.mxu0 %v4903
    %5163 = vmatprep.subr.bf16.mxu0 %v4907
    %5164 = vmatpush1.bf16.msra.mxu0 %v4906
    %5165 = vmatprep.subr.bf16.mxu0 %v4910
    %5166 = vmatpush1.bf16.msra.mxu0 %v4909
    %5167 = vmatprep.subr.bf16.mxu0 %v4913
    %5168 = vmatpush1.bf16.msra.mxu0 %v4912
    %5169 = vmatprep.subr.bf16.mxu0 0
    %5170 = vmatpush1.bf16.msra.mxu0 0
    %5171 = vmatprep.subr.bf16.mxu0 0
    %5172 = vmatpush1.bf16.msra.mxu0 0
    %5173 = vmatprep.subr.bf16.mxu0 0
    %5174 = vmatpush1.bf16.msra.mxu0 0
    %5175 = vmatprep.subr.bf16.mxu0 0
    %5176 = vmatpush1.bf16.msra.mxu0 0
    %5177 = vmatprep.subr.bf16.mxu0 0
    %5178 = vmatpush1.bf16.msra.mxu0 0
    %5179 = vmatprep.subr.bf16.mxu0 0
    %5180 = vmatpush1.bf16.msra.mxu0 0
    %5181 = vmatprep.mubr.bf16.mxu0 %v3872
    %5182 = vmatmul.mubr.bf16.gmra.mrb[0].mxu0 %v1988
    %v5183 = vpop.f32.mrb[0].mxu0
    %v5184 = vadd.f32 %v5031, %v5183
    %v5185 = vpop.f32.mrb[0].mxu0
    %v5186 = vadd.f32 %v5033, %v5185
    %v5187 = vpop.f32.mrb[0].mxu0
    %v5188 = vadd.f32 %v5035, %v5187
    %v5189 = vpop.f32.mrb[0].mxu0
    %v5190 = vadd.f32 %v5037, %v5189
    %5191 = vmatprep.mubr.bf16.mxu0 %v3875
    %5192 = vmatmul.mubr.bf16.gmra.mrb[0].mxu0 %v1992
    %v5193 = vpop.f32.mrb[0].mxu0
    %v5194 = vadd.f32 %v5041, %v5193
    %v5195 = vpop.f32.mrb[0].mxu0
    %v5196 = vadd.f32 %v5043, %v5195
    %v5197 = vpop.f32.mrb[0].mxu0
    %v5198 = vadd.f32 %v5045, %v5197
    %v5199 = vpop.f32.mrb[0].mxu0
    %v5200 = vadd.f32 %v5047, %v5199
    %5201 = vmatprep.mubr.bf16.mxu0 %v3878
    %5202 = vmatmul.mubr.bf16.gmra.mrb[0].mxu0 %v1996
    %v5203 = vpop.f32.mrb[0].mxu0
    %v5204 = vadd.f32 %v5051, %v5203
    %v5205 = vpop.f32.mrb[0].mxu0
    %v5206 = vadd.f32 %v5053, %v5205
    %v5207 = vpop.f32.mrb[0].mxu0
    %v5208 = vadd.f32 %v5055, %v5207
    %v5209 = vpop.f32.mrb[0].mxu0
    %v5210 = vadd.f32 %v5057, %v5209
    %5211 = vmatprep.mubr.bf16.mxu0 %v3881
    %5212 = vmatmul.mubr.bf16.gmra.mrb[0].mxu0 %v2000
    %v5213 = vpop.f32.mrb[0].mxu0
    %v5214 = vadd.f32 %v5061, %v5213
    %v5215 = vpop.f32.mrb[0].mxu0
    %v5216 = vadd.f32 %v5063, %v5215
    %v5217 = vpop.f32.mrb[0].mxu0
    %v5218 = vadd.f32 %v5065, %v5217
    %v5219 = vpop.f32.mrb[0].mxu0
    %v5220 = vadd.f32 %v5067, %v5219
    %5221 = vmatprep.mubr.bf16.mxu0 %v3884
    %5222 = vmatmul.mubr.bf16.gmra.mrb[0].mxu0 %v2004
    %v5223 = vpop.f32.mrb[0].mxu0
    %v5224 = vadd.f32 %v5071, %v5223
    %v5225 = vpop.f32.mrb[0].mxu0
    %v5226 = vadd.f32 %v5073, %v5225
    %v5227 = vpop.f32.mrb[0].mxu0
    %v5228 = vadd.f32 %v5075, %v5227
    %v5229 = vpop.f32.mrb[0].mxu0
    %v5230 = vadd.f32 %v5077, %v5229
    %5231 = vmatprep.mubr.bf16.mxu0 %v3887
    %5232 = vmatmul.mubr.bf16.gmra.mrb[0].mxu0 %v2008
    %v5233 = vpop.f32.mrb[0].mxu0
    %v5234 = vadd.f32 %v5081, %v5233
    %v5235 = vpop.f32.mrb[0].mxu0
    %v5236 = vadd.f32 %v5083, %v5235
    %v5237 = vpop.f32.mrb[0].mxu0
    %v5238 = vadd.f32 %v5085, %v5237
    %v5239 = vpop.f32.mrb[0].mxu0
    %v5240 = vadd.f32 %v5087, %v5239
    %5241 = vmatprep.mubr.bf16.mxu0 %v3890
    %5242 = vmatmul.mubr.bf16.gmra.mrb[0].mxu0 %v2012
    %v5243 = vpop.f32.mrb[0].mxu0
    %v5244 = vadd.f32 %v5091, %v5243
    %v5245 = vpop.f32.mrb[0].mxu0
    %v5246 = vadd.f32 %v5093, %v5245
    %v5247 = vpop.f32.mrb[0].mxu0
    %v5248 = vadd.f32 %v5095, %v5247
    %v5249 = vpop.f32.mrb[0].mxu0
    %v5250 = vadd.f32 %v5097, %v5249
    %5251 = vmatprep.mubr.bf16.mxu0 %v3893
    %5252 = vmatmul.mubr.bf16.gmra.mrb[0].mxu0 %v2016
    %v5253 = vpop.f32.mrb[0].mxu0
    %v5254 = vadd.f32 %v5101, %v5253
    %v5255 = vpop.f32.mrb[0].mxu0
    %v5256 = vadd.f32 %v5103, %v5255
    %v5257 = vpop.f32.mrb[0].mxu0
    %v5258 = vadd.f32 %v5105, %v5257
    %v5259 = vpop.f32.mrb[0].mxu0
    %v5260 = vadd.f32 %v5107, %v5259
    %5261 = vmatprep.mubr.bf16.mxu0 %v3896
    %5262 = vmatmul.mubr.bf16.gmra.mrb[0].mxu0 %v2020
    %v5263 = vpop.f32.mrb[0].mxu0
    %v5264 = vadd.f32 %v5111, %v5263
    %v5265 = vpop.f32.mrb[0].mxu0
    %v5266 = vadd.f32 %v5113, %v5265
    %v5267 = vpop.f32.mrb[0].mxu0
    %v5268 = vadd.f32 %v5115, %v5267
    %v5269 = vpop.f32.mrb[0].mxu0
    %v5270 = vadd.f32 %v5117, %v5269
    %5271 = vmatprep.mubr.bf16.mxu0 %v3899
    %5272 = vmatmul.mubr.bf16.gmra.mrb[0].mxu0 %v2024
    %v5273 = vpop.f32.mrb[0].mxu0
    %v5274 = vadd.f32 %v5121, %v5273
    %v5275 = vpop.f32.mrb[0].mxu0
    %v5276 = vadd.f32 %v5123, %v5275
    %v5277 = vpop.f32.mrb[0].mxu0
    %v5278 = vadd.f32 %v5125, %v5277
    %v5279 = vpop.f32.mrb[0].mxu0
    %v5280 = vadd.f32 %v5127, %v5279
    %5281 = vmatprep.mubr.bf16.mxu0 %v3902
    %5282 = vmatmul.mubr.bf16.gmra.mrb[0].mxu0 %v2028
    %v5283 = vpop.f32.mrb[0].mxu0
    %v5284 = vadd.f32 %v5131, %v5283
    %v5285 = vpop.f32.mrb[0].mxu0
    %v5286 = vadd.f32 %v5133, %v5285
    %v5287 = vpop.f32.mrb[0].mxu0
    %v5288 = vadd.f32 %v5135, %v5287
    %v5289 = vpop.f32.mrb[0].mxu0
    %v5290 = vadd.f32 %v5137, %v5289
    %5291 = vmatprep.mubr.bf16.mxu0 %v4994
    %5292 = vmatmul.mubr.bf16.gmra.mrb[0].mxu0 %v4470
    %v5293 = vpop.f32.mrb[0].mxu0
    %v5294 = vadd.f32 %v5141, %v5293
    %v5295 = vpop.f32.mrb[0].mxu0
    %v5296 = vadd.f32 %v5143, %v5295
    %v5297 = vpop.f32.mrb[0].mxu0
    %v5298 = vadd.f32 %v5145, %v5297
    %v5299 = vpop.f32.mrb[0].mxu0
    %v5300 = vadd.f32 %v5147, %v5299
    %5301 = vdwg.mxu0
    %5302 = vmatprep.subr.bf16.mxu0 0
    %5303 = vmatpush1.bf16.msra.mxu0 %v4839
    %5304 = vmatprep.subr.bf16.mxu0 0
    %5305 = vmatpush1.bf16.msra.mxu0 %v4842
    %5306 = vmatprep.subr.bf16.mxu0 0
    %5307 = vmatpush1.bf16.msra.mxu0 %v4845
    %5308 = vmatprep.subr.bf16.mxu0 0
    %5309 = vmatpush1.bf16.msra.mxu0 %v4848
    %5310 = vmatprep.subr.bf16.mxu0 0
    %5311 = vmatpush1.bf16.msra.mxu0 %v4851
    %5312 = vmatprep.subr.bf16.mxu0 0
    %5313 = vmatpush1.bf16.msra.mxu0 %v4854
    %5314 = vmatprep.subr.bf16.mxu0 0
    %5315 = vmatpush1.bf16.msra.mxu0 %v4857
    %5316 = vmatprep.subr.bf16.mxu0 0
    %5317 = vmatpush1.bf16.msra.mxu0 %v4860
    %5318 = vmatprep.subr.bf16.mxu0 0
    %5319 = vmatpush1.bf16.msra.mxu0 %v4863
    %5320 = vmatprep.subr.bf16.mxu0 0
    %5321 = vmatpush1.bf16.msra.mxu0 %v4866
    %5322 = vmatprep.subr.bf16.mxu0 0
    %5323 = vmatpush1.bf16.msra.mxu0 %v4869
    %5324 = vmatprep.subr.bf16.mxu0 0
    %5325 = vmatpush1.bf16.msra.mxu0 %v4872
    %5326 = vmatprep.subr.bf16.mxu0 0
    %5327 = vmatpush1.bf16.msra.mxu0 %v4875
    %5328 = vmatprep.subr.bf16.mxu0 0
    %5329 = vmatpush1.bf16.msra.mxu0 %v4878
    %5330 = vmatprep.subr.bf16.mxu0 0
    %5331 = vmatpush1.bf16.msra.mxu0 %v4881
    %5332 = vmatprep.subr.bf16.mxu0 0
    %5333 = vmatpush1.bf16.msra.mxu0 %v4884
    %5334 = vmatprep.mubr.bf16.mxu0 %v1987
    %5335 = vmatmul.mubr.bf16.gmra.mrb[0].mxu0 %v1986
    %v5336 = vpop.f32.mrb[0].mxu0
    %v5337 = vadd.f32 0.0, %v5336
    %v5338 = vpop.f32.mrb[0].mxu0
    %v5339 = vpop.f32.mrb[0].mxu0
    %v5340 = vadd.f32 0.0, %v5339
    %v5341 = vpop.f32.mrb[0].mxu0
    %5342 = vmatprep.mubr.bf16.mxu0 %v1991
    %5343 = vmatmul.mubr.bf16.gmra.mrb[0].mxu0 %v1990
    %v5344 = vpop.f32.mrb[0].mxu0
    %v5345 = vadd.f32 0.0, %v5344
    %v5346 = vpop.f32.mrb[0].mxu0
    %v5347 = vpop.f32.mrb[0].mxu0
    %v5348 = vadd.f32 0.0, %v5347
    %v5349 = vpop.f32.mrb[0].mxu0
    %5350 = vmatprep.mubr.bf16.mxu0 %v1995
    %5351 = vmatmul.mubr.bf16.gmra.mrb[0].mxu0 %v1994
    %v5352 = vpop.f32.mrb[0].mxu0
    %v5353 = vadd.f32 0.0, %v5352
    %v5354 = vpop.f32.mrb[0].mxu0
    %v5355 = vpop.f32.mrb[0].mxu0
    %v5356 = vadd.f32 0.0, %v5355
    %v5357 = vpop.f32.mrb[0].mxu0
    %5358 = vmatprep.mubr.bf16.mxu0 %v1999
    %5359 = vmatmul.mubr.bf16.gmra.mrb[0].mxu0 %v1998
    %v5360 = vpop.f32.mrb[0].mxu0
    %v5361 = vadd.f32 0.0, %v5360
    %v5362 = vpop.f32.mrb[0].mxu0
    %v5363 = vpop.f32.mrb[0].mxu0
    %v5364 = vadd.f32 0.0, %v5363
    %v5365 = vpop.f32.mrb[0].mxu0
    %5366 = vmatprep.mubr.bf16.mxu0 %v2003
    %5367 = vmatmul.mubr.bf16.gmra.mrb[0].mxu0 %v2002
    %v5368 = vpop.f32.mrb[0].mxu0
    %v5369 = vadd.f32 0.0, %v5368
    %v5370 = vpop.f32.mrb[0].mxu0
    %v5371 = vpop.f32.mrb[0].mxu0
    %v5372 = vadd.f32 0.0, %v5371
    %v5373 = vpop.f32.mrb[0].mxu0
    %5374 = vmatprep.mubr.bf16.mxu0 %v2007
    %5375 = vmatmul.mubr.bf16.gmra.mrb[0].mxu0 %v2006
    %v5376 = vpop.f32.mrb[0].mxu0
    %v5377 = vadd.f32 0.0, %v5376
    %v5378 = vpop.f32.mrb[0].mxu0
    %v5379 = vpop.f32.mrb[0].mxu0
    %v5380 = vadd.f32 0.0, %v5379
    %v5381 = vpop.f32.mrb[0].mxu0
    %5382 = vmatprep.mubr.bf16.mxu0 %v2011
    %5383 = vmatmul.mubr.bf16.gmra.mrb[0].mxu0 %v2010
    %v5384 = vpop.f32.mrb[0].mxu0
    %v5385 = vadd.f32 0.0, %v5384
    %v5386 = vpop.f32.mrb[0].mxu0
    %v5387 = vpop.f32.mrb[0].mxu0
    %v5388 = vadd.f32 0.0, %v5387
    %v5389 = vpop.f32.mrb[0].mxu0
    %5390 = vmatprep.mubr.bf16.mxu0 %v2015
    %5391 = vmatmul.mubr.bf16.gmra.mrb[0].mxu0 %v2014
    %v5392 = vpop.f32.mrb[0].mxu0
    %v5393 = vadd.f32 0.0, %v5392
    %v5394 = vpop.f32.mrb[0].mxu0
    %v5395 = vpop.f32.mrb[0].mxu0
    %v5396 = vadd.f32 0.0, %v5395
    %v5397 = vpop.f32.mrb[0].mxu0
    %5398 = vmatprep.mubr.bf16.mxu0 %v2019
    %5399 = vmatmul.mubr.bf16.gmra.mrb[0].mxu0 %v2018
    %v5400 = vpop.f32.mrb[0].mxu0
    %v5401 = vadd.f32 0.0, %v5400
    %v5402 = vpop.f32.mrb[0].mxu0
    %v5403 = vpop.f32.mrb[0].mxu0
    %v5404 = vadd.f32 0.0, %v5403
    %v5405 = vpop.f32.mrb[0].mxu0
    %5406 = vmatprep.mubr.bf16.mxu0 %v2023
    %5407 = vmatmul.mubr.bf16.gmra.mrb[0].mxu0 %v2022
    %v5408 = vpop.f32.mrb[0].mxu0
    %v5409 = vadd.f32 0.0, %v5408
    %v5410 = vpop.f32.mrb[0].mxu0
    %v5411 = vpop.f32.mrb[0].mxu0
    %v5412 = vadd.f32 0.0, %v5411
    %v5413 = vpop.f32.mrb[0].mxu0
    %5414 = vmatprep.mubr.bf16.mxu0 %v2027
    %5415 = vmatmul.mubr.bf16.gmra.mrb[0].mxu0 %v2026
    %v5416 = vpop.f32.mrb[0].mxu0
    %v5417 = vadd.f32 0.0, %v5416
    %v5418 = vpop.f32.mrb[0].mxu0
    %v5419 = vpop.f32.mrb[0].mxu0
    %v5420 = vadd.f32 0.0, %v5419
    %v5421 = vpop.f32.mrb[0].mxu0
    %5422 = vmatprep.mubr.bf16.mxu0 %v4469
    %5423 = vmatmul.mubr.bf16.gmra.mrb[0].mxu0 %v4468
    %v5424 = vpop.f32.mrb[0].mxu0
    %v5425 = vadd.f32 0.0, %v5424
    %v5426 = vpop.f32.mrb[0].mxu0
    %v5427 = vpop.f32.mrb[0].mxu0
    %v5428 = vadd.f32 0.0, %v5427
    %v5429 = vpop.f32.mrb[0].mxu0
    %5430 = vdwg.mxu0
    %5431 = vmatprep.subr.bf16.mxu0 0
    %5432 = vmatpush1.bf16.msra.mxu0 %v4887
    %5433 = vmatprep.subr.bf16.mxu0 0
    %5434 = vmatpush1.bf16.msra.mxu0 %v4890
    %5435 = vmatprep.subr.bf16.mxu0 0
    %5436 = vmatpush1.bf16.msra.mxu0 %v4893
    %5437 = vmatprep.subr.bf16.mxu0 0
    %5438 = vmatpush1.bf16.msra.mxu0 %v4896
    %5439 = vmatprep.subr.bf16.mxu0 0
    %5440 = vmatpush1.bf16.msra.mxu0 %v4899
    %5441 = vmatprep.subr.bf16.mxu0 0
    %5442 = vmatpush1.bf16.msra.mxu0 %v4902
    %5443 = vmatprep.subr.bf16.mxu0 0
    %5444 = vmatpush1.bf16.msra.mxu0 %v4905
    %5445 = vmatprep.subr.bf16.mxu0 0
    %5446 = vmatpush1.bf16.msra.mxu0 %v4908
    %5447 = vmatprep.subr.bf16.mxu0 0
    %5448 = vmatpush1.bf16.msra.mxu0 %v4911
    %5449 = vmatprep.subr.bf16.mxu0 0
    %5450 = vmatpush1.bf16.msra.mxu0 %v4914
    %5451 = vmatprep.subr.bf16.mxu0 0
    %5452 = vmatpush1.bf16.msra.mxu0 0
    %5453 = vmatprep.subr.bf16.mxu0 0
    %5454 = vmatpush1.bf16.msra.mxu0 0
    %5455 = vmatprep.subr.bf16.mxu0 0
    %5456 = vmatpush1.bf16.msra.mxu0 0
    %5457 = vmatprep.subr.bf16.mxu0 0
    %5458 = vmatpush1.bf16.msra.mxu0 0
    %5459 = vmatprep.subr.bf16.mxu0 0
    %5460 = vmatpush1.bf16.msra.mxu0 0
    %5461 = vmatprep.subr.bf16.mxu0 0
    %5462 = vmatpush1.bf16.msra.mxu0 0
    %5463 = vmatprep.mubr.bf16.mxu0 %v3872
    %5464 = vmatmul.mubr.bf16.gmra.mrb[0].mxu0 %v1988
    %v5465 = vpop.f32.mrb[0].mxu0
    %v5466 = vadd.f32 %v5337, %v5465
    %v5467 = vpop.f32.mrb[0].mxu0
    %v5468 = vpop.f32.mrb[0].mxu0
    %v5469 = vadd.f32 %v5340, %v5468
    %v5470 = vpop.f32.mrb[0].mxu0
    %5471 = vmatprep.mubr.bf16.mxu0 %v3875
    %5472 = vmatmul.mubr.bf16.gmra.mrb[0].mxu0 %v1992
    %v5473 = vpop.f32.mrb[0].mxu0
    %v5474 = vadd.f32 %v5345, %v5473
    %v5475 = vpop.f32.mrb[0].mxu0
    %v5476 = vpop.f32.mrb[0].mxu0
    %v5477 = vadd.f32 %v5348, %v5476
    %v5478 = vpop.f32.mrb[0].mxu0
    %5479 = vmatprep.mubr.bf16.mxu0 %v3878
    %5480 = vmatmul.mubr.bf16.gmra.mrb[0].mxu0 %v1996
    %v5481 = vpop.f32.mrb[0].mxu0
    %v5482 = vadd.f32 %v5353, %v5481
    %v5483 = vpop.f32.mrb[0].mxu0
    %v5484 = vpop.f32.mrb[0].mxu0
    %v5485 = vadd.f32 %v5356, %v5484
    %v5486 = vpop.f32.mrb[0].mxu0
    %5487 = vmatprep.mubr.bf16.mxu0 %v3881
    %5488 = vmatmul.mubr.bf16.gmra.mrb[0].mxu0 %v2000
    %v5489 = vpop.f32.mrb[0].mxu0
    %v5490 = vadd.f32 %v5361, %v5489
    %v5491 = vpop.f32.mrb[0].mxu0
    %v5492 = vpop.f32.mrb[0].mxu0
    %v5493 = vadd.f32 %v5364, %v5492
    %v5494 = vpop.f32.mrb[0].mxu0
    %5495 = vmatprep.mubr.bf16.mxu0 %v3884
    %5496 = vmatmul.mubr.bf16.gmra.mrb[0].mxu0 %v2004
    %v5497 = vpop.f32.mrb[0].mxu0
    %v5498 = vadd.f32 %v5369, %v5497
    %v5499 = vpop.f32.mrb[0].mxu0
    %v5500 = vpop.f32.mrb[0].mxu0
    %v5501 = vadd.f32 %v5372, %v5500
    %v5502 = vpop.f32.mrb[0].mxu0
    %5503 = vmatprep.mubr.bf16.mxu0 %v3887
    %5504 = vmatmul.mubr.bf16.gmra.mrb[0].mxu0 %v2008
    %v5505 = vpop.f32.mrb[0].mxu0
    %v5506 = vadd.f32 %v5377, %v5505
    %v5507 = vpop.f32.mrb[0].mxu0
    %v5508 = vpop.f32.mrb[0].mxu0
    %v5509 = vadd.f32 %v5380, %v5508
    %v5510 = vpop.f32.mrb[0].mxu0
    %5511 = vmatprep.mubr.bf16.mxu0 %v3890
    %5512 = vmatmul.mubr.bf16.gmra.mrb[0].mxu0 %v2012
    %v5513 = vpop.f32.mrb[0].mxu0
    %v5514 = vadd.f32 %v5385, %v5513
    %v5515 = vpop.f32.mrb[0].mxu0
    %v5516 = vpop.f32.mrb[0].mxu0
    %v5517 = vadd.f32 %v5388, %v5516
    %v5518 = vpop.f32.mrb[0].mxu0
    %5519 = vmatprep.mubr.bf16.mxu0 %v3893
    %5520 = vmatmul.mubr.bf16.gmra.mrb[0].mxu0 %v2016
    %v5521 = vpop.f32.mrb[0].mxu0
    %v5522 = vadd.f32 %v5393, %v5521
    %v5523 = vpop.f32.mrb[0].mxu0
    %v5524 = vpop.f32.mrb[0].mxu0
    %v5525 = vadd.f32 %v5396, %v5524
    %v5526 = vpop.f32.mrb[0].mxu0
    %5527 = vmatprep.mubr.bf16.mxu0 %v3896
    %5528 = vmatmul.mubr.bf16.gmra.mrb[0].mxu0 %v2020
    %v5529 = vpop.f32.mrb[0].mxu0
    %v5530 = vadd.f32 %v5401, %v5529
    %v5531 = vpop.f32.mrb[0].mxu0
    %v5532 = vpop.f32.mrb[0].mxu0
    %v5533 = vadd.f32 %v5404, %v5532
    %v5534 = vpop.f32.mrb[0].mxu0
    %5535 = vmatprep.mubr.bf16.mxu0 %v3899
    %5536 = vmatmul.mubr.bf16.gmra.mrb[0].mxu0 %v2024
    %v5537 = vpop.f32.mrb[0].mxu0
    %v5538 = vadd.f32 %v5409, %v5537
    %v5539 = vpop.f32.mrb[0].mxu0
    %v5540 = vpop.f32.mrb[0].mxu0
    %v5541 = vadd.f32 %v5412, %v5540
    %v5542 = vpop.f32.mrb[0].mxu0
    %5543 = vmatprep.mubr.bf16.mxu0 %v3902
    %5544 = vmatmul.mubr.bf16.gmra.mrb[0].mxu0 %v2028
    %v5545 = vpop.f32.mrb[0].mxu0
    %v5546 = vadd.f32 %v5417, %v5545
    %v5547 = vpop.f32.mrb[0].mxu0
    %v5548 = vpop.f32.mrb[0].mxu0
    %v5549 = vadd.f32 %v5420, %v5548
    %v5550 = vpop.f32.mrb[0].mxu0
    %5551 = vmatprep.mubr.bf16.mxu0 %v4994
    %5552 = vmatmul.mubr.bf16.gmra.mrb[0].mxu0 %v4470
    %v5553 = vpop.f32.mrb[0].mxu0
    %v5554 = vadd.f32 %v5425, %v5553
    %v5555 = vpop.f32.mrb[0].mxu0
    %v5556 = vpop.f32.mrb[0].mxu0
    %v5557 = vadd.f32 %v5428, %v5556
    %v5558 = vpop.f32.mrb[0].mxu0
    %5559 = vdwg.mxu0
    %v5560 = vadd.f32 %v4092, %v5184
    %v5561 = vadd.f32 %v4094, %v5186
    %v5562 = vadd.f32 %v4374, %v5466
    %v5563 = vadd.f32 %v4096, %v5188
    %v5564 = vadd.f32 %v4098, %v5190
    %v5565 = vadd.f32 %v4377, %v5469
    %v5566 = vadd.f32 %v4102, %v5194
    %v5567 = vadd.f32 %v4104, %v5196
    %v5568 = vadd.f32 %v4382, %v5474
    %v5569 = vadd.f32 %v4106, %v5198
    %v5570 = vadd.f32 %v4108, %v5200
    %v5571 = vadd.f32 %v4385, %v5477
    %v5572 = vadd.f32 %v4112, %v5204
    %v5573 = vadd.f32 %v4114, %v5206
    %v5574 = vadd.f32 %v4390, %v5482
    %v5575 = vadd.f32 %v4116, %v5208
    %v5576 = vadd.f32 %v4118, %v5210
    %v5577 = vadd.f32 %v4393, %v5485
    %v5578 = vadd.f32 %v4122, %v5214
    %v5579 = vadd.f32 %v4124, %v5216
    %v5580 = vadd.f32 %v4398, %v5490
    %v5581 = vadd.f32 %v4126, %v5218
    %v5582 = vadd.f32 %v4128, %v5220
    %v5583 = vadd.f32 %v4401, %v5493
    %v5584 = vadd.f32 %v4132, %v5224
    %v5585 = vadd.f32 %v4134, %v5226
    %v5586 = vadd.f32 %v4406, %v5498
    %v5587 = vadd.f32 %v4136, %v5228
    %v5588 = vadd.f32 %v4138, %v5230
    %v5589 = vadd.f32 %v4409, %v5501
    %v5590 = vadd.f32 %v4142, %v5234
    %v5591 = vadd.f32 %v4144, %v5236
    %v5592 = vadd.f32 %v4414, %v5506
    %v5593 = vadd.f32 %v4146, %v5238
    %v5594 = vadd.f32 %v4148, %v5240
    %v5595 = vadd.f32 %v4417, %v5509
    %v5596 = vadd.f32 %v4152, %v5244
    %v5597 = vadd.f32 %v4154, %v5246
    %v5598 = vadd.f32 %v4422, %v5514
    %v5599 = vadd.f32 %v4156, %v5248
    %v5600 = vadd.f32 %v4158, %v5250
    %v5601 = vadd.f32 %v4425, %v5517
    %v5602 = vadd.f32 %v4162, %v5254
    %v5603 = vadd.f32 %v4164, %v5256
    %v5604 = vadd.f32 %v4430, %v5522
    %v5605 = vadd.f32 %v4166, %v5258
    %v5606 = vadd.f32 %v4168, %v5260
    %v5607 = vadd.f32 %v4433, %v5525
    %v5608 = vadd.f32 %v4172, %v5264
    %v5609 = vadd.f32 %v4174, %v5266
    %v5610 = vadd.f32 %v4438, %v5530
    %v5611 = vadd.f32 %v4176, %v5268
    %v5612 = vadd.f32 %v4178, %v5270
    %v5613 = vadd.f32 %v4441, %v5533
    %v5614 = vadd.f32 %v4182, %v5274
    %v5615 = vadd.f32 %v4184, %v5276
    %v5616 = vadd.f32 %v4446, %v5538
    %v5617 = vadd.f32 %v4186, %v5278
    %v5618 = vadd.f32 %v4188, %v5280
    %v5619 = vadd.f32 %v4449, %v5541
    %v5620 = vadd.f32 %v4192, %v5284
    %v5621 = vadd.f32 %v4194, %v5286
    %v5622 = vadd.f32 %v4454, %v5546
    %v5623 = vadd.f32 %v4196, %v5288
    %v5624 = vadd.f32 %v4198, %v5290
    %v5625 = vadd.f32 %v4457, %v5549
    %v5626 = vadd.f32 %v4202, %v5294
    %v5627 = vadd.f32 %v4204, %v5296
    %v5628 = vadd.f32 %v4462, %v5554
    %v5629 = vadd.f32 %v4206, %v5298
    %v5630 = vadd.f32 %v4208, %v5300
    %v5631 = vadd.f32 %v4465, %v5557
    %v5632 = vld [vmem:[%s4] sm:$0x7]
    %v5634 = vlaneseq
    %v5635 = vshrl.u32 %v5634, 7
    %v5636 = vsub.s32 0, %v5635
    %v5637 = vrot.slane %v5632, %v5636
    %v5638 = vlaneseq
    %v5639 = vshrl.u32 %v5638, 7
    %v5640 = vsub.s32 1, %v5639
    %v5641 = vrot.slane %v5632, %v5640
    %v5642 = vlaneseq
    %v5643 = vshrl.u32 %v5642, 7
    %v5644 = vsub.s32 2, %v5643
    %v5645 = vrot.slane %v5632, %v5644
    %v5649 = vadd.f32 %v5560, %v5637
    %v5650 = vadd.f32 %v5561, %v5641
    %v5651 = vadd.f32 %v5562, %v5645
    %v5652 = vadd.f32 %v5563, %v5637
    %v5653 = vadd.f32 %v5564, %v5641
    %v5654 = vadd.f32 %v5565, %v5645
    %v5655 = vadd.f32 %v5566, %v5637
    %v5656 = vadd.f32 %v5567, %v5641
    %v5657 = vadd.f32 %v5568, %v5645
    %v5658 = vadd.f32 %v5569, %v5637
    %v5659 = vadd.f32 %v5570, %v5641
    %v5660 = vadd.f32 %v5571, %v5645
    %v5661 = vadd.f32 %v5572, %v5637
    %v5662 = vadd.f32 %v5573, %v5641
    %v5663 = vadd.f32 %v5574, %v5645
    %v5664 = vadd.f32 %v5575, %v5637
    %v5665 = vadd.f32 %v5576, %v5641
    %v5666 = vadd.f32 %v5577, %v5645
    %v5667 = vadd.f32 %v5578, %v5637
    %v5668 = vadd.f32 %v5579, %v5641
    %v5669 = vadd.f32 %v5580, %v5645
    %v5670 = vadd.f32 %v5581, %v5637
    %v5671 = vadd.f32 %v5582, %v5641
    %v5672 = vadd.f32 %v5583, %v5645
    %v5673 = vadd.f32 %v5584, %v5637
    %v5674 = vadd.f32 %v5585, %v5641
    %v5675 = vadd.f32 %v5586, %v5645
    %v5676 = vadd.f32 %v5587, %v5637
    %v5677 = vadd.f32 %v5588, %v5641
    %v5678 = vadd.f32 %v5589, %v5645
    %v5679 = vadd.f32 %v5590, %v5637
    %v5680 = vadd.f32 %v5591, %v5641
    %v5681 = vadd.f32 %v5592, %v5645
    %v5682 = vadd.f32 %v5593, %v5637
    %v5683 = vadd.f32 %v5594, %v5641
    %v5684 = vadd.f32 %v5595, %v5645
    %v5685 = vadd.f32 %v5596, %v5637
    %v5686 = vadd.f32 %v5597, %v5641
    %v5687 = vadd.f32 %v5598, %v5645
    %v5688 = vadd.f32 %v5599, %v5637
    %v5689 = vadd.f32 %v5600, %v5641
    %v5690 = vadd.f32 %v5601, %v5645
    %v5691 = vadd.f32 %v5602, %v5637
    %v5692 = vadd.f32 %v5603, %v5641
    %v5693 = vadd.f32 %v5604, %v5645
    %v5694 = vadd.f32 %v5605, %v5637
    %v5695 = vadd.f32 %v5606, %v5641
    %v5696 = vadd.f32 %v5607, %v5645
    %v5697 = vadd.f32 %v5608, %v5637
    %v5698 = vadd.f32 %v5609, %v5641
    %v5699 = vadd.f32 %v5610, %v5645
    %v5700 = vadd.f32 %v5611, %v5637
    %v5701 = vadd.f32 %v5612, %v5641
    %v5702 = vadd.f32 %v5613, %v5645
    %v5703 = vadd.f32 %v5614, %v5637
    %v5704 = vadd.f32 %v5615, %v5641
    %v5705 = vadd.f32 %v5616, %v5645
    %v5706 = vadd.f32 %v5617, %v5637
    %v5707 = vadd.f32 %v5618, %v5641
    %v5708 = vadd.f32 %v5619, %v5645
    %v5709 = vadd.f32 %v5620, %v5637
    %v5710 = vadd.f32 %v5621, %v5641
    %v5711 = vadd.f32 %v5622, %v5645
    %v5712 = vadd.f32 %v5623, %v5637
    %v5713 = vadd.f32 %v5624, %v5641
    %v5714 = vadd.f32 %v5625, %v5645
    %v5715 = vadd.f32 %v5626, %v5637
    %v5716 = vadd.f32 %v5627, %v5641
    %v5717 = vadd.f32 %v5628, %v5645
    %v5718 = vadd.f32 %v5629, %v5637
    %v5719 = vadd.f32 %v5630, %v5641
    %v5720 = vadd.f32 %v5631, %v5645
    %v5721 = vmax.f32 %v5649, 0.0
    %v5722 = vmax.f32 %v5650, 0.0
    %v5723 = vmax.f32 %v5651, 0.0
    %v5724 = vmax.f32 %v5652, 0.0
    %v5725 = vmax.f32 %v5653, 0.0
    %v5726 = vmax.f32 %v5654, 0.0
    %v5727 = vmax.f32 %v5655, 0.0
    %v5728 = vmax.f32 %v5656, 0.0
    %v5729 = vmax.f32 %v5657, 0.0
    %v5730 = vmax.f32 %v5658, 0.0
    %v5731 = vmax.f32 %v5659, 0.0
    %v5732 = vmax.f32 %v5660, 0.0
    %v5733 = vmax.f32 %v5661, 0.0
    %v5734 = vmax.f32 %v5662, 0.0
    %v5735 = vmax.f32 %v5663, 0.0
    %v5736 = vmax.f32 %v5664, 0.0
    %v5737 = vmax.f32 %v5665, 0.0
    %v5738 = vmax.f32 %v5666, 0.0
    %v5739 = vmax.f32 %v5667, 0.0
    %v5740 = vmax.f32 %v5668, 0.0
    %v5741 = vmax.f32 %v5669, 0.0
    %v5742 = vmax.f32 %v5670, 0.0
    %v5743 = vmax.f32 %v5671, 0.0
    %v5744 = vmax.f32 %v5672, 0.0
    %v5745 = vmax.f32 %v5673, 0.0
    %v5746 = vmax.f32 %v5674, 0.0
    %v5747 = vmax.f32 %v5675, 0.0
    %v5748 = vmax.f32 %v5676, 0.0
    %v5749 = vmax.f32 %v5677, 0.0
    %v5750 = vmax.f32 %v5678, 0.0
    %v5751 = vmax.f32 %v5679, 0.0
    %v5752 = vmax.f32 %v5680, 0.0
    %v5753 = vmax.f32 %v5681, 0.0
    %v5754 = vmax.f32 %v5682, 0.0
    %v5755 = vmax.f32 %v5683, 0.0
    %v5756 = vmax.f32 %v5684, 0.0
    %v5757 = vmax.f32 %v5685, 0.0
    %v5758 = vmax.f32 %v5686, 0.0
    %v5759 = vmax.f32 %v5687, 0.0
    %v5760 = vmax.f32 %v5688, 0.0
    %v5761 = vmax.f32 %v5689, 0.0
    %v5762 = vmax.f32 %v5690, 0.0
    %v5763 = vmax.f32 %v5691, 0.0
    %v5764 = vmax.f32 %v5692, 0.0
    %v5765 = vmax.f32 %v5693, 0.0
    %v5766 = vmax.f32 %v5694, 0.0
    %v5767 = vmax.f32 %v5695, 0.0
    %v5768 = vmax.f32 %v5696, 0.0
    %v5769 = vmax.f32 %v5697, 0.0
    %v5770 = vmax.f32 %v5698, 0.0
    %v5771 = vmax.f32 %v5699, 0.0
    %v5772 = vmax.f32 %v5700, 0.0
    %v5773 = vmax.f32 %v5701, 0.0
    %v5774 = vmax.f32 %v5702, 0.0
    %v5775 = vmax.f32 %v5703, 0.0
    %v5776 = vmax.f32 %v5704, 0.0
    %v5777 = vmax.f32 %v5705, 0.0
    %v5778 = vmax.f32 %v5706, 0.0
    %v5779 = vmax.f32 %v5707, 0.0
    %v5780 = vmax.f32 %v5708, 0.0
    %v5781 = vmax.f32 %v5709, 0.0
    %v5782 = vmax.f32 %v5710, 0.0
    %v5783 = vmax.f32 %v5711, 0.0
    %v5784 = vmax.f32 %v5712, 0.0
    %v5785 = vmax.f32 %v5713, 0.0
    %v5786 = vmax.f32 %v5714, 0.0
    %v5787 = vmax.f32 %v5715, 0.0
    %v5788 = vmax.f32 %v5716, 0.0
    %v5789 = vmax.f32 %v5717, 0.0
    %v5790 = vmax.f32 %v5718, 0.0
    %v5791 = vmax.f32 %v5719, 0.0
    %v5792 = vmax.f32 %v5720, 0.0
    %v5793 = vpack.c.bf16 %v5724, %v5721
    %v5794 = vpack.c.bf16 %v5725, %v5722
    %v5795 = vpack.c.bf16 %v5726, %v5723
    %v5796 = vpack.c.bf16 %v5730, %v5727
    %v5797 = vpack.c.bf16 %v5731, %v5728
    %v5798 = vpack.c.bf16 %v5732, %v5729
    %v5799 = vpack.c.bf16 %v5736, %v5733
    %v5800 = vpack.c.bf16 %v5737, %v5734
    %v5801 = vpack.c.bf16 %v5738, %v5735
    %v5802 = vpack.c.bf16 %v5742, %v5739
    %v5803 = vpack.c.bf16 %v5743, %v5740
    %v5804 = vpack.c.bf16 %v5744, %v5741
    %v5805 = vpack.c.bf16 %v5748, %v5745
    %v5806 = vpack.c.bf16 %v5749, %v5746
    %v5807 = vpack.c.bf16 %v5750, %v5747
    %v5808 = vpack.c.bf16 %v5754, %v5751
    %v5809 = vpack.c.bf16 %v5755, %v5752
    %v5810 = vpack.c.bf16 %v5756, %v5753
    %v5811 = vpack.c.bf16 %v5760, %v5757
    %v5812 = vpack.c.bf16 %v5761, %v5758
    %v5813 = vpack.c.bf16 %v5762, %v5759
    %v5814 = vpack.c.bf16 %v5766, %v5763
    %v5815 = vpack.c.bf16 %v5767, %v5764
    %v5816 = vpack.c.bf16 %v5768, %v5765
    %v5817 = vpack.c.bf16 %v5772, %v5769
    %v5818 = vpack.c.bf16 %v5773, %v5770
    %v5819 = vpack.c.bf16 %v5774, %v5771
    %v5820 = vpack.c.bf16 %v5778, %v5775
    %v5821 = vpack.c.bf16 %v5779, %v5776
    %v5822 = vpack.c.bf16 %v5780, %v5777
    %v5823 = vpack.c.bf16 %v5784, %v5781
    %v5824 = vpack.c.bf16 %v5785, %v5782
    %v5825 = vpack.c.bf16 %v5786, %v5783
    %v5826 = vpack.c.bf16 %v5790, %v5787
    %v5827 = vpack.c.bf16 %v5791, %v5788
    %v5828 = vpack.c.bf16 %v5792, %v5789
    %5829 = vst [vmem:[#allocation3] sm:$0xff] %v5793
    %5830 = vst [vmem:[#allocation3 + $0x8] sm:$0xff] %v5794
    %5831 = vst [vmem:[#allocation3 + $0x10] sm:$0xff] %v5795
    %5832 = vst [vmem:[#allocation3 + $0x18] sm:$0xff] %v5796
    %5833 = vst [vmem:[#allocation3 + $0x20] sm:$0xff] %v5797
    %5834 = vst [vmem:[#allocation3 + $0x28] sm:$0xff] %v5798
    %5835 = vst [vmem:[#allocation3 + $0x30] sm:$0xff] %v5799
    %5836 = vst [vmem:[#allocation3 + $0x38] sm:$0xff] %v5800
    %5837 = vst [vmem:[#allocation3 + $0x40] sm:$0xff] %v5801
    %5838 = vst [vmem:[#allocation3 + $0x48] sm:$0xff] %v5802
    %5839 = vst [vmem:[#allocation3 + $0x50] sm:$0xff] %v5803
    %5840 = vst [vmem:[#allocation3 + $0x58] sm:$0xff] %v5804
    %5841 = vst [vmem:[#allocation3 + $0x60] sm:$0xff] %v5805
    %5842 = vst [vmem:[#allocation3 + $0x68] sm:$0xff] %v5806
    %5843 = vst [vmem:[#allocation3 + $0x70] sm:$0xff] %v5807
    %5844 = vst [vmem:[#allocation3 + $0x78] sm:$0xff] %v5808
    %5845 = vst [vmem:[#allocation3 + $0x80] sm:$0xff] %v5809
    %5846 = vst [vmem:[#allocation3 + $0x88] sm:$0xff] %v5810
    %5847 = vst [vmem:[#allocation3 + $0x90] sm:$0xff] %v5811
    %5848 = vst [vmem:[#allocation3 + $0x98] sm:$0xff] %v5812
    %5849 = vst [vmem:[#allocation3 + $0xa0] sm:$0xff] %v5813
    %5850 = vst [vmem:[#allocation3 + $0xa8] sm:$0xff] %v5814
    %5851 = vst [vmem:[#allocation3 + $0xb0] sm:$0xff] %v5815
    %5852 = vst [vmem:[#allocation3 + $0xb8] sm:$0xff] %v5816
    %5853 = vst [vmem:[#allocation3 + $0xc0] sm:$0xff] %v5817
    %5854 = vst [vmem:[#allocation3 + $0xc8] sm:$0xff] %v5818
    %5855 = vst [vmem:[#allocation3 + $0xd0] sm:$0xff] %v5819
    %5856 = vst [vmem:[#allocation3 + $0xd8] sm:$0xff] %v5820
    %5857 = vst [vmem:[#allocation3 + $0xe0] sm:$0xff] %v5821
    %5858 = vst [vmem:[#allocation3 + $0xe8] sm:$0xff] %v5822
    %5859 = vst [vmem:[#allocation3 + $0xf0] sm:$0xff] %v5823
    %5860 = vst [vmem:[#allocation3 + $0xf8] sm:$0xff] %v5824
    %5861 = vst [vmem:[#allocation3 + $0x100] sm:$0xff] %v5825
    %5862 = vst [vmem:[#allocation3 + $0x108] sm:$0xff] %v5826
    %5863 = vst [vmem:[#allocation3 + $0x110] sm:$0xff] %v5827
    %5864 = vst [vmem:[#allocation3 + $0x118] sm:$0xff] %v5828
    %v5865 = vld [vmem:[#allocation3] sm:$0xf]
    %v5866 = vld [vmem:[#allocation3 + $0x8] sm:$0xf]
    %v5867 = vld [vmem:[#allocation3 + $0x10] sm:$0xf]
    %v5868 = vld [vmem:[#allocation9] sm:$0xff]
    %v5869 = vld [vmem:[#allocation9 + $0x8] sm:$0xf]
    %v5870 = vld [vmem:[#allocation9 + $0xc] sm:$0xff]
    %v5871 = vld [vmem:[#allocation9 + $0x14] sm:$0xf]
    %v5872 = vld [vmem:[#allocation9 + $0x18] sm:$0xff]
    %v5873 = vld [vmem:[#allocation9 + $0x20] sm:$0xf]
    %v5874 = vld [vmem:[#allocation9 + $0x24] sm:$0xff]
    %v5875 = vld [vmem:[#allocation9 + $0x2c] sm:$0xf]
    %v5876 = vld [vmem:[#allocation3] sm:$0xf0]
    %v5877 = vld [vmem:[#allocation3 + $0x8] sm:$0xf0]
    %v5878 = vld [vmem:[#allocation3 + $0x10] sm:$0xf0]
    %s5879 = scalar_lea.vmem [#allocation9], 48
    %v5880 = vld [vmem:[%s5879] sm:$0xff]
    %v5881 = vld [vmem:[%s5879 + $0x8] sm:$0xf]
    %v5882 = vld [vmem:[%s5879 + $0xc] sm:$0xff]
    %v5883 = vld [vmem:[%s5879 + $0x14] sm:$0xf]
    %v5884 = vld [vmem:[%s5879 + $0x18] sm:$0xff]
    %v5885 = vld [vmem:[%s5879 + $0x20] sm:$0xf]
    %v5886 = vld [vmem:[%s5879 + $0x24] sm:$0xff]
    %v5887 = vld [vmem:[%s5879 + $0x2c] sm:$0xf]
    %v5891 = vrot.slane %v5876, 4
    %v5892 = vrot.slane %v5877, 4
    %v5893 = vrot.slane %v5878, 4
    %v5905 = vunpack.c.l.b16 %v5880
    %v5906 = vunpack.c.h.b16 %v5880
    %v5907 = vunpack.c.l.b16 %v5881
    %v5908 = vunpack.c.l.b16 %v5882
    %v5909 = vunpack.c.h.b16 %v5882
    %v5910 = vunpack.c.l.b16 %v5883
    %v5911 = vunpack.c.l.b16 %v5884
    %v5912 = vunpack.c.h.b16 %v5884
    %v5913 = vunpack.c.l.b16 %v5885
    %v5914 = vunpack.c.l.b16 %v5886
    %v5915 = vunpack.c.h.b16 %v5886
    %v5916 = vunpack.c.l.b16 %v5887
    %v5917 = vpack.c.b16 %v5908, %v5905
    %v5918 = vpack.c.b16 %v5909, %v5906
    %v5919 = vpack.c.b16 %v5910, %v5907
    %v5920 = vpack.c.b16 %v5914, %v5911
    %v5921 = vpack.c.b16 %v5915, %v5912
    %v5922 = vpack.c.b16 %v5916, %v5913
    %5929 = vmatprep.subr.bf16.mxu0 %v5918
    %5930 = vmatpush1.bf16.xpose.msra.mxu0 %v5917
    %5931 = vmatprep.subr.bf16.mxu0 %v5921
    %5932 = vmatpush1.bf16.xpose.msra.mxu0 %v5920
    %5933 = vmatprep.subr.bf16.mxu0 0
    %5934 = vmatpush1.bf16.xpose.msra.mxu0 0
    %5935 = vmatprep.subr.bf16.mxu0 0
    %5936 = vmatpush1.bf16.xpose.msra.mxu0 0
    %5937 = vmatprep.subr.bf16.mxu0 0
    %5938 = vmatpush1.bf16.xpose.msra.mxu0 0
    %5939 = vmatprep.subr.bf16.mxu0 0
    %5940 = vmatpush1.bf16.xpose.msra.mxu0 0
    %5941 = vmatprep.subr.bf16.mxu0 0
    %5942 = vmatpush1.bf16.xpose.msra.mxu0 0
    %5943 = vmatprep.subr.bf16.mxu0 0
    %5944 = vmatpush1.bf16.xpose.msra.mxu0 0
    %5945 = vmatprep.subr.bf16.mxu0 0
    %5946 = vmatpush1.bf16.xpose.msra.mxu0 0
    %5947 = vmatprep.subr.bf16.mxu0 0
    %5948 = vmatpush1.bf16.xpose.msra.mxu0 0
    %5949 = vmatprep.subr.bf16.mxu0 0
    %5950 = vmatpush1.bf16.xpose.msra.mxu0 0
    %5951 = vmatprep.subr.bf16.mxu0 0
    %5952 = vmatpush1.bf16.xpose.msra.mxu0 0
    %5953 = vmatprep.subr.bf16.mxu0 0
    %5954 = vmatpush1.bf16.xpose.msra.mxu0 0
    %5955 = vmatprep.subr.bf16.mxu0 0
    %5956 = vmatpush1.bf16.xpose.msra.mxu0 0
    %5957 = vmatprep.subr.bf16.mxu0 0
    %5958 = vmatpush1.bf16.xpose.msra.mxu0 0
    %5959 = vmatprep.subr.bf16.mxu0 0
    %5960 = vmatpush1.bf16.xpose.msra.mxu0 0
    %5961 = vmatprep.mubr.bf16.mxu0 %v5892
    %5962 = vmatmul.mubr.bf16.gmra.mrb[0].mxu0 %v5891
    %v5963 = vpop.f32.mrb[0].mxu0
    %v5964 = vadd.f32 0.0, %v5963
    %v5965 = vpop.f32.mrb[0].mxu0
    %v5966 = vpop.f32.mrb[0].mxu0
    %v5967 = vpop.f32.mrb[0].mxu0
    %5968 = vdwg.mxu0
    %5969 = vmatprep.subr.bf16.mxu0 0
    %5970 = vmatpush1.bf16.xpose.msra.mxu0 %v5919
    %5971 = vmatprep.subr.bf16.mxu0 0
    %5972 = vmatpush1.bf16.xpose.msra.mxu0 %v5922
    %5973 = vmatprep.subr.bf16.mxu0 0
    %5974 = vmatpush1.bf16.xpose.msra.mxu0 0
    %5975 = vmatprep.subr.bf16.mxu0 0
    %5976 = vmatpush1.bf16.xpose.msra.mxu0 0
    %5977 = vmatprep.subr.bf16.mxu0 0
    %5978 = vmatpush1.bf16.xpose.msra.mxu0 0
    %5979 = vmatprep.subr.bf16.mxu0 0
    %5980 = vmatpush1.bf16.xpose.msra.mxu0 0
    %5981 = vmatprep.subr.bf16.mxu0 0
    %5982 = vmatpush1.bf16.xpose.msra.mxu0 0
    %5983 = vmatprep.subr.bf16.mxu0 0
    %5984 = vmatpush1.bf16.xpose.msra.mxu0 0
    %5985 = vmatprep.subr.bf16.mxu0 0
    %5986 = vmatpush1.bf16.xpose.msra.mxu0 0
    %5987 = vmatprep.subr.bf16.mxu0 0
    %5988 = vmatpush1.bf16.xpose.msra.mxu0 0
    %5989 = vmatprep.subr.bf16.mxu0 0
    %5990 = vmatpush1.bf16.xpose.msra.mxu0 0
    %5991 = vmatprep.subr.bf16.mxu0 0
    %5992 = vmatpush1.bf16.xpose.msra.mxu0 0
    %5993 = vmatprep.subr.bf16.mxu0 0
    %5994 = vmatpush1.bf16.xpose.msra.mxu0 0
    %5995 = vmatprep.subr.bf16.mxu0 0
    %5996 = vmatpush1.bf16.xpose.msra.mxu0 0
    %5997 = vmatprep.subr.bf16.mxu0 0
    %5998 = vmatpush1.bf16.xpose.msra.mxu0 0
    %5999 = vmatprep.subr.bf16.mxu0 0
    %6000 = vmatpush1.bf16.xpose.msra.mxu0 0
    %6001 = vmatprep.mubr.bf16.mxu0 0
    %6002 = vmatmul.mubr.bf16.gmra.mrb[0].mxu0 %v5893
    %v6003 = vpop.f32.mrb[0].mxu0
    %v6004 = vadd.f32 %v5964, %v6003
    %v6005 = vpop.f32.mrb[0].mxu0
    %v6006 = vpop.f32.mrb[0].mxu0
    %v6007 = vpop.f32.mrb[0].mxu0
    %6008 = vdwg.mxu0
    %v6017 = vunpack.c.l.b16 %v5868
    %v6018 = vunpack.c.h.b16 %v5868
    %v6019 = vunpack.c.l.b16 %v5869
    %v6020 = vunpack.c.l.b16 %v5870
    %v6021 = vunpack.c.h.b16 %v5870
    %v6022 = vunpack.c.l.b16 %v5871
    %v6023 = vunpack.c.l.b16 %v5872
    %v6024 = vunpack.c.h.b16 %v5872
    %v6025 = vunpack.c.l.b16 %v5873
    %v6026 = vunpack.c.l.b16 %v5874
    %v6027 = vunpack.c.h.b16 %v5874
    %v6028 = vunpack.c.l.b16 %v5875
    %v6029 = vpack.c.b16 %v6020, %v6017
    %v6030 = vpack.c.b16 %v6021, %v6018
    %v6031 = vpack.c.b16 %v6022, %v6019
    %v6032 = vpack.c.b16 %v6026, %v6023
    %v6033 = vpack.c.b16 %v6027, %v6024
    %v6034 = vpack.c.b16 %v6028, %v6025
    %6041 = vmatprep.subr.bf16.mxu0 %v6030
    %6042 = vmatpush1.bf16.xpose.msra.mxu0 %v6029
    %6043 = vmatprep.subr.bf16.mxu0 %v6033
    %6044 = vmatpush1.bf16.xpose.msra.mxu0 %v6032
    %6045 = vmatprep.subr.bf16.mxu0 0
    %6046 = vmatpush1.bf16.xpose.msra.mxu0 0
    %6047 = vmatprep.subr.bf16.mxu0 0
    %6048 = vmatpush1.bf16.xpose.msra.mxu0 0
    %6049 = vmatprep.subr.bf16.mxu0 0
    %6050 = vmatpush1.bf16.xpose.msra.mxu0 0
    %6051 = vmatprep.subr.bf16.mxu0 0
    %6052 = vmatpush1.bf16.xpose.msra.mxu0 0
    %6053 = vmatprep.subr.bf16.mxu0 0
    %6054 = vmatpush1.bf16.xpose.msra.mxu0 0
    %6055 = vmatprep.subr.bf16.mxu0 0
    %6056 = vmatpush1.bf16.xpose.msra.mxu0 0
    %6057 = vmatprep.subr.bf16.mxu0 0
    %6058 = vmatpush1.bf16.xpose.msra.mxu0 0
    %6059 = vmatprep.subr.bf16.mxu0 0
    %6060 = vmatpush1.bf16.xpose.msra.mxu0 0
    %6061 = vmatprep.subr.bf16.mxu0 0
    %6062 = vmatpush1.bf16.xpose.msra.mxu0 0
    %6063 = vmatprep.subr.bf16.mxu0 0
    %6064 = vmatpush1.bf16.xpose.msra.mxu0 0
    %6065 = vmatprep.subr.bf16.mxu0 0
    %6066 = vmatpush1.bf16.xpose.msra.mxu0 0
    %6067 = vmatprep.subr.bf16.mxu0 0
    %6068 = vmatpush1.bf16.xpose.msra.mxu0 0
    %6069 = vmatprep.subr.bf16.mxu0 0
    %6070 = vmatpush1.bf16.xpose.msra.mxu0 0
    %6071 = vmatprep.subr.bf16.mxu0 0
    %6072 = vmatpush1.bf16.xpose.msra.mxu0 0
    %6073 = vmatprep.mubr.bf16.mxu0 %v5866
    %6074 = vmatmul.mubr.bf16.gmra.mrb[0].mxu0 %v5865
    %v6075 = vpop.f32.mrb[0].mxu0
    %v6076 = vadd.f32 %v6004, %v6075
    %v6077 = vpop.f32.mrb[0].mxu0
    %v6078 = vpop.f32.mrb[0].mxu0
    %v6079 = vpop.f32.mrb[0].mxu0
    %6080 = vdwg.mxu0
    %6081 = vmatprep.subr.bf16.mxu0 0
    %6082 = vmatpush1.bf16.xpose.msra.mxu0 %v6031
    %6083 = vmatprep.subr.bf16.mxu0 0
    %6084 = vmatpush1.bf16.xpose.msra.mxu0 %v6034
    %6085 = vmatprep.subr.bf16.mxu0 0
    %6086 = vmatpush1.bf16.xpose.msra.mxu0 0
    %6087 = vmatprep.subr.bf16.mxu0 0
    %6088 = vmatpush1.bf16.xpose.msra.mxu0 0
    %6089 = vmatprep.subr.bf16.mxu0 0
    %6090 = vmatpush1.bf16.xpose.msra.mxu0 0
    %6091 = vmatprep.subr.bf16.mxu0 0
    %6092 = vmatpush1.bf16.xpose.msra.mxu0 0
    %6093 = vmatprep.subr.bf16.mxu0 0
    %6094 = vmatpush1.bf16.xpose.msra.mxu0 0
    %6095 = vmatprep.subr.bf16.mxu0 0
    %6096 = vmatpush1.bf16.xpose.msra.mxu0 0
    %6097 = vmatprep.subr.bf16.mxu0 0
    %6098 = vmatpush1.bf16.xpose.msra.mxu0 0
    %6099 = vmatprep.subr.bf16.mxu0 0
    %6100 = vmatpush1.bf16.xpose.msra.mxu0 0
    %6101 = vmatprep.subr.bf16.mxu0 0
    %6102 = vmatpush1.bf16.xpose.msra.mxu0 0
    %6103 = vmatprep.subr.bf16.mxu0 0
    %6104 = vmatpush1.bf16.xpose.msra.mxu0 0
    %6105 = vmatprep.subr.bf16.mxu0 0
    %6106 = vmatpush1.bf16.xpose.msra.mxu0 0
    %6107 = vmatprep.subr.bf16.mxu0 0
    %6108 = vmatpush1.bf16.xpose.msra.mxu0 0
    %6109 = vmatprep.subr.bf16.mxu0 0
    %6110 = vmatpush1.bf16.xpose.msra.mxu0 0
    %6111 = vmatprep.subr.bf16.mxu0 0
    %6112 = vmatpush1.bf16.xpose.msra.mxu0 0
    %6113 = vmatprep.mubr.bf16.mxu0 0
    %6114 = vmatmul.mubr.bf16.gmra.mrb[0].mxu0 %v5867
    %v6115 = vpop.f32.mrb[0].mxu0
    %v6116 = vadd.f32 %v6076, %v6115
    %v6117 = vpop.f32.mrb[0].mxu0
    %v6118 = vpop.f32.mrb[0].mxu0
    %v6119 = vpop.f32.mrb[0].mxu0
    %6120 = vdwg.mxu0
    %v6121 = vld [vmem:[#allocation3 + $0x18] sm:$0xf]
    %v6122 = vld [vmem:[#allocation3 + $0x20] sm:$0xf]
    %v6123 = vld [vmem:[#allocation3 + $0x28] sm:$0xf]
    %s6124 = scalar_lea.vmem [#allocation9], 96
    %v6125 = vld [vmem:[%s6124] sm:$0xff]
    %v6126 = vld [vmem:[%s6124 + $0x8] sm:$0xf]
    %v6127 = vld [vmem:[%s6124 + $0xc] sm:$0xff]
    %v6128 = vld [vmem:[%s6124 + $0x14] sm:$0xf]
    %v6129 = vld [vmem:[%s6124 + $0x18] sm:$0xff]
    %v6130 = vld [vmem:[%s6124 + $0x20] sm:$0xf]
    %v6131 = vld [vmem:[%s6124 + $0x24] sm:$0xff]
    %v6132 = vld [vmem:[%s6124 + $0x2c] sm:$0xf]
    %v6141 = vunpack.c.l.b16 %v6125
    %v6142 = vunpack.c.h.b16 %v6125
    %v6143 = vunpack.c.l.b16 %v6126
    %v6144 = vunpack.c.l.b16 %v6127
    %v6145 = vunpack.c.h.b16 %v6127
    %v6146 = vunpack.c.l.b16 %v6128
    %v6147 = vunpack.c.l.b16 %v6129
    %v6148 = vunpack.c.h.b16 %v6129
    %v6149 = vunpack.c.l.b16 %v6130
    %v6150 = vunpack.c.l.b16 %v6131
    %v6151 = vunpack.c.h.b16 %v6131
    %v6152 = vunpack.c.l.b16 %v6132
    %v6153 = vpack.c.b16 %v6144, %v6141
    %v6154 = vpack.c.b16 %v6145, %v6142
    %v6155 = vpack.c.b16 %v6146, %v6143
    %v6156 = vpack.c.b16 %v6150, %v6147
    %v6157 = vpack.c.b16 %v6151, %v6148
    %v6158 = vpack.c.b16 %v6152, %v6149
    %6165 = vmatprep.subr.bf16.mxu0 %v6154
    %6166 = vmatpush1.bf16.xpose.msra.mxu0 %v6153
    %6167 = vmatprep.subr.bf16.mxu0 %v6157
    %6168 = vmatpush1.bf16.xpose.msra.mxu0 %v6156
    %6169 = vmatprep.subr.bf16.mxu0 0
    %6170 = vmatpush1.bf16.xpose.msra.mxu0 0
    %6171 = vmatprep.subr.bf16.mxu0 0
    %6172 = vmatpush1.bf16.xpose.msra.mxu0 0
    %6173 = vmatprep.subr.bf16.mxu0 0
    %6174 = vmatpush1.bf16.xpose.msra.mxu0 0
    %6175 = vmatprep.subr.bf16.mxu0 0
    %6176 = vmatpush1.bf16.xpose.msra.mxu0 0
    %6177 = vmatprep.subr.bf16.mxu0 0
    %6178 = vmatpush1.bf16.xpose.msra.mxu0 0
    %6179 = vmatprep.subr.bf16.mxu0 0
    %6180 = vmatpush1.bf16.xpose.msra.mxu0 0
    %6181 = vmatprep.subr.bf16.mxu0 0
    %6182 = vmatpush1.bf16.xpose.msra.mxu0 0
    %6183 = vmatprep.subr.bf16.mxu0 0
    %6184 = vmatpush1.bf16.xpose.msra.mxu0 0
    %6185 = vmatprep.subr.bf16.mxu0 0
    %6186 = vmatpush1.bf16.xpose.msra.mxu0 0
    %6187 = vmatprep.subr.bf16.mxu0 0
    %6188 = vmatpush1.bf16.xpose.msra.mxu0 0
    %6189 = vmatprep.subr.bf16.mxu0 0
    %6190 = vmatpush1.bf16.xpose.msra.mxu0 0
    %6191 = vmatprep.subr.bf16.mxu0 0
    %6192 = vmatpush1.bf16.xpose.msra.mxu0 0
    %6193 = vmatprep.subr.bf16.mxu0 0
    %6194 = vmatpush1.bf16.xpose.msra.mxu0 0
    %6195 = vmatprep.subr.bf16.mxu0 0
    %6196 = vmatpush1.bf16.xpose.msra.mxu0 0
    %6197 = vmatprep.mubr.bf16.mxu0 %v6122
    %6198 = vmatmul.mubr.bf16.gmra.mrb[0].mxu0 %v6121
    %v6199 = vpop.f32.mrb[0].mxu0
    %v6200 = vadd.f32 0.0, %v6199
    %v6201 = vpop.f32.mrb[0].mxu0
    %v6202 = vpop.f32.mrb[0].mxu0
    %v6203 = vpop.f32.mrb[0].mxu0
    %6204 = vdwg.mxu0
    %6205 = vmatprep.subr.bf16.mxu0 0
    %6206 = vmatpush1.bf16.xpose.msra.mxu0 %v6155
    %6207 = vmatprep.subr.bf16.mxu0 0
    %6208 = vmatpush1.bf16.xpose.msra.mxu0 %v6158
    %6209 = vmatprep.subr.bf16.mxu0 0
    %6210 = vmatpush1.bf16.xpose.msra.mxu0 0
    %6211 = vmatprep.subr.bf16.mxu0 0
    %6212 = vmatpush1.bf16.xpose.msra.mxu0 0
    %6213 = vmatprep.subr.bf16.mxu0 0
    %6214 = vmatpush1.bf16.xpose.msra.mxu0 0
    %6215 = vmatprep.subr.bf16.mxu0 0
    %6216 = vmatpush1.bf16.xpose.msra.mxu0 0
    %6217 = vmatprep.subr.bf16.mxu0 0
    %6218 = vmatpush1.bf16.xpose.msra.mxu0 0
    %6219 = vmatprep.subr.bf16.mxu0 0
    %6220 = vmatpush1.bf16.xpose.msra.mxu0 0
    %6221 = vmatprep.subr.bf16.mxu0 0
    %6222 = vmatpush1.bf16.xpose.msra.mxu0 0
    %6223 = vmatprep.subr.bf16.mxu0 0
    %6224 = vmatpush1.bf16.xpose.msra.mxu0 0
    %6225 = vmatprep.subr.bf16.mxu0 0
    %6226 = vmatpush1.bf16.xpose.msra.mxu0 0
    %6227 = vmatprep.subr.bf16.mxu0 0
    %6228 = vmatpush1.bf16.xpose.msra.mxu0 0
    %6229 = vmatprep.subr.bf16.mxu0 0
    %6230 = vmatpush1.bf16.xpose.msra.mxu0 0
    %6231 = vmatprep.subr.bf16.mxu0 0
    %6232 = vmatpush1.bf16.xpose.msra.mxu0 0
    %6233 = vmatprep.subr.bf16.mxu0 0
    %6234 = vmatpush1.bf16.xpose.msra.mxu0 0
    %6235 = vmatprep.subr.bf16.mxu0 0
    %6236 = vmatpush1.bf16.xpose.msra.mxu0 0
    %6237 = vmatprep.mubr.bf16.mxu0 0
    %6238 = vmatmul.mubr.bf16.gmra.mrb[0].mxu0 %v6123
    %v6239 = vpop.f32.mrb[0].mxu0
    %v6240 = vadd.f32 %v6200, %v6239
    %v6241 = vpop.f32.mrb[0].mxu0
    %v6242 = vpop.f32.mrb[0].mxu0
    %v6243 = vpop.f32.mrb[0].mxu0
    %6244 = vdwg.mxu0
    %v6245 = vadd.f32 %v6116, %v6240
    %v6246 = vld [vmem:[#allocation3 + $0x18] sm:$0xf0]
    %v6247 = vld [vmem:[#allocation3 + $0x20] sm:$0xf0]
    %v6248 = vld [vmem:[#allocation3 + $0x28] sm:$0xf0]
    %s6249 = scalar_lea.vmem [#allocation9], 144
    %v6250 = vld [vmem:[%s6249] sm:$0xff]
    %v6251 = vld [vmem:[%s6249 + $0x8] sm:$0xf]
    %v6252 = vld [vmem:[%s6249 + $0xc] sm:$0xff]
    %v6253 = vld [vmem:[%s6249 + $0x14] sm:$0xf]
    %v6254 = vld [vmem:[%s6249 + $0x18] sm:$0xff]
    %v6255 = vld [vmem:[%s6249 + $0x20] sm:$0xf]
    %v6256 = vld [vmem:[%s6249 + $0x24] sm:$0xff]
    %v6257 = vld [vmem:[%s6249 + $0x2c] sm:$0xf]
    %v6261 = vrot.slane %v6246, 4
    %v6262 = vrot.slane %v6247, 4
    %v6263 = vrot.slane %v6248, 4
    %v6275 = vunpack.c.l.b16 %v6250
    %v6276 = vunpack.c.h.b16 %v6250
    %v6277 = vunpack.c.l.b16 %v6251
    %v6278 = vunpack.c.l.b16 %v6252
    %v6279 = vunpack.c.h.b16 %v6252
    %v6280 = vunpack.c.l.b16 %v6253
    %v6281 = vunpack.c.l.b16 %v6254
    %v6282 = vunpack.c.h.b16 %v6254
    %v6283 = vunpack.c.l.b16 %v6255
    %v6284 = vunpack.c.l.b16 %v6256
    %v6285 = vunpack.c.h.b16 %v6256
    %v6286 = vunpack.c.l.b16 %v6257
    %v6287 = vpack.c.b16 %v6278, %v6275
    %v6288 = vpack.c.b16 %v6279, %v6276
    %v6289 = vpack.c.b16 %v6280, %v6277
    %v6290 = vpack.c.b16 %v6284, %v6281
    %v6291 = vpack.c.b16 %v6285, %v6282
    %v6292 = vpack.c.b16 %v6286, %v6283
    %6299 = vmatprep.subr.bf16.mxu0 %v6288
    %6300 = vmatpush1.bf16.xpose.msra.mxu0 %v6287
    %6301 = vmatprep.subr.bf16.mxu0 %v6291
    %6302 = vmatpush1.bf16.xpose.msra.mxu0 %v6290
    %6303 = vmatprep.subr.bf16.mxu0 0
    %6304 = vmatpush1.bf16.xpose.msra.mxu0 0
    %6305 = vmatprep.subr.bf16.mxu0 0
    %6306 = vmatpush1.bf16.xpose.msra.mxu0 0
    %6307 = vmatprep.subr.bf16.mxu0 0
    %6308 = vmatpush1.bf16.xpose.msra.mxu0 0
    %6309 = vmatprep.subr.bf16.mxu0 0
    %6310 = vmatpush1.bf16.xpose.msra.mxu0 0
    %6311 = vmatprep.subr.bf16.mxu0 0
    %6312 = vmatpush1.bf16.xpose.msra.mxu0 0
    %6313 = vmatprep.subr.bf16.mxu0 0
    %6314 = vmatpush1.bf16.xpose.msra.mxu0 0
    %6315 = vmatprep.subr.bf16.mxu0 0
    %6316 = vmatpush1.bf16.xpose.msra.mxu0 0
    %6317 = vmatprep.subr.bf16.mxu0 0
    %6318 = vmatpush1.bf16.xpose.msra.mxu0 0
    %6319 = vmatprep.subr.bf16.mxu0 0
    %6320 = vmatpush1.bf16.xpose.msra.mxu0 0
    %6321 = vmatprep.subr.bf16.mxu0 0
    %6322 = vmatpush1.bf16.xpose.msra.mxu0 0
    %6323 = vmatprep.subr.bf16.mxu0 0
    %6324 = vmatpush1.bf16.xpose.msra.mxu0 0
    %6325 = vmatprep.subr.bf16.mxu0 0
    %6326 = vmatpush1.bf16.xpose.msra.mxu0 0
    %6327 = vmatprep.subr.bf16.mxu0 0
    %6328 = vmatpush1.bf16.xpose.msra.mxu0 0
    %6329 = vmatprep.subr.bf16.mxu0 0
    %6330 = vmatpush1.bf16.xpose.msra.mxu0 0
    %6331 = vmatprep.mubr.bf16.mxu0 %v6262
    %6332 = vmatmul.mubr.bf16.gmra.mrb[0].mxu0 %v6261
    %v6333 = vpop.f32.mrb[0].mxu0
    %v6334 = vadd.f32 0.0, %v6333
    %v6335 = vpop.f32.mrb[0].mxu0
    %v6336 = vpop.f32.mrb[0].mxu0
    %v6337 = vpop.f32.mrb[0].mxu0
    %6338 = vdwg.mxu0
    %6339 = vmatprep.subr.bf16.mxu0 0
    %6340 = vmatpush1.bf16.xpose.msra.mxu0 %v6289
    %6341 = vmatprep.subr.bf16.mxu0 0
    %6342 = vmatpush1.bf16.xpose.msra.mxu0 %v6292
    %6343 = vmatprep.subr.bf16.mxu0 0
    %6344 = vmatpush1.bf16.xpose.msra.mxu0 0
    %6345 = vmatprep.subr.bf16.mxu0 0
    %6346 = vmatpush1.bf16.xpose.msra.mxu0 0
    %6347 = vmatprep.subr.bf16.mxu0 0
    %6348 = vmatpush1.bf16.xpose.msra.mxu0 0
    %6349 = vmatprep.subr.bf16.mxu0 0
    %6350 = vmatpush1.bf16.xpose.msra.mxu0 0
    %6351 = vmatprep.subr.bf16.mxu0 0
    %6352 = vmatpush1.bf16.xpose.msra.mxu0 0
    %6353 = vmatprep.subr.bf16.mxu0 0
    %6354 = vmatpush1.bf16.xpose.msra.mxu0 0
    %6355 = vmatprep.subr.bf16.mxu0 0
    %6356 = vmatpush1.bf16.xpose.msra.mxu0 0
    %6357 = vmatprep.subr.bf16.mxu0 0
    %6358 = vmatpush1.bf16.xpose.msra.mxu0 0
    %6359 = vmatprep.subr.bf16.mxu0 0
    %6360 = vmatpush1.bf16.xpose.msra.mxu0 0
    %6361 = vmatprep.subr.bf16.mxu0 0
    %6362 = vmatpush1.bf16.xpose.msra.mxu0 0
    %6363 = vmatprep.subr.bf16.mxu0 0
    %6364 = vmatpush1.bf16.xpose.msra.mxu0 0
    %6365 = vmatprep.subr.bf16.mxu0 0
    %6366 = vmatpush1.bf16.xpose.msra.mxu0 0
    %6367 = vmatprep.subr.bf16.mxu0 0
    %6368 = vmatpush1.bf16.xpose.msra.mxu0 0
    %6369 = vmatprep.subr.bf16.mxu0 0
    %6370 = vmatpush1.bf16.xpose.msra.mxu0 0
    %6371 = vmatprep.mubr.bf16.mxu0 0
    %6372 = vmatmul.mubr.bf16.gmra.mrb[0].mxu0 %v6263
    %v6373 = vpop.f32.mrb[0].mxu0
    %v6374 = vadd.f32 %v6334, %v6373
    %v6375 = vpop.f32.mrb[0].mxu0
    %v6376 = vpop.f32.mrb[0].mxu0
    %v6377 = vpop.f32.mrb[0].mxu0
    %6378 = vdwg.mxu0
    %v6379 = vadd.f32 %v6245, %v6374
    %v6380 = vld [vmem:[#allocation3 + $0x30] sm:$0xf]
    %v6381 = vld [vmem:[#allocation3 + $0x38] sm:$0xf]
    %v6382 = vld [vmem:[#allocation3 + $0x40] sm:$0xf]
    %s6383 = scalar_lea.vmem [#allocation9], 192
    %v6384 = vld [vmem:[%s6383] sm:$0xff]
    %v6385 = vld [vmem:[%s6383 + $0x8] sm:$0xf]
    %v6386 = vld [vmem:[%s6383 + $0xc] sm:$0xff]
    %v6387 = vld [vmem:[%s6383 + $0x14] sm:$0xf]
    %v6388 = vld [vmem:[%s6383 + $0x18] sm:$0xff]
    %v6389 = vld [vmem:[%s6383 + $0x20] sm:$0xf]
    %v6390 = vld [vmem:[%s6383 + $0x24] sm:$0xff]
    %v6391 = vld [vmem:[%s6383 + $0x2c] sm:$0xf]
    %v6400 = vunpack.c.l.b16 %v6384
    %v6401 = vunpack.c.h.b16 %v6384
    %v6402 = vunpack.c.l.b16 %v6385
    %v6403 = vunpack.c.l.b16 %v6386
    %v6404 = vunpack.c.h.b16 %v6386
    %v6405 = vunpack.c.l.b16 %v6387
    %v6406 = vunpack.c.l.b16 %v6388
    %v6407 = vunpack.c.h.b16 %v6388
    %v6408 = vunpack.c.l.b16 %v6389
    %v6409 = vunpack.c.l.b16 %v6390
    %v6410 = vunpack.c.h.b16 %v6390
    %v6411 = vunpack.c.l.b16 %v6391
    %v6412 = vpack.c.b16 %v6403, %v6400
    %v6413 = vpack.c.b16 %v6404, %v6401
    %v6414 = vpack.c.b16 %v6405, %v6402
    %v6415 = vpack.c.b16 %v6409, %v6406
    %v6416 = vpack.c.b16 %v6410, %v6407
    %v6417 = vpack.c.b16 %v6411, %v6408
    %6424 = vmatprep.subr.bf16.mxu0 %v6413
    %6425 = vmatpush1.bf16.xpose.msra.mxu0 %v6412
    %6426 = vmatprep.subr.bf16.mxu0 %v6416
    %6427 = vmatpush1.bf16.xpose.msra.mxu0 %v6415
    %6428 = vmatprep.subr.bf16.mxu0 0
    %6429 = vmatpush1.bf16.xpose.msra.mxu0 0
    %6430 = vmatprep.subr.bf16.mxu0 0
    %6431 = vmatpush1.bf16.xpose.msra.mxu0 0
    %6432 = vmatprep.subr.bf16.mxu0 0
    %6433 = vmatpush1.bf16.xpose.msra.mxu0 0
    %6434 = vmatprep.subr.bf16.mxu0 0
    %6435 = vmatpush1.bf16.xpose.msra.mxu0 0
    %6436 = vmatprep.subr.bf16.mxu0 0
    %6437 = vmatpush1.bf16.xpose.msra.mxu0 0
    %6438 = vmatprep.subr.bf16.mxu0 0
    %6439 = vmatpush1.bf16.xpose.msra.mxu0 0
    %6440 = vmatprep.subr.bf16.mxu0 0
    %6441 = vmatpush1.bf16.xpose.msra.mxu0 0
    %6442 = vmatprep.subr.bf16.mxu0 0
    %6443 = vmatpush1.bf16.xpose.msra.mxu0 0
    %6444 = vmatprep.subr.bf16.mxu0 0
    %6445 = vmatpush1.bf16.xpose.msra.mxu0 0
    %6446 = vmatprep.subr.bf16.mxu0 0
    %6447 = vmatpush1.bf16.xpose.msra.mxu0 0
    %6448 = vmatprep.subr.bf16.mxu0 0
    %6449 = vmatpush1.bf16.xpose.msra.mxu0 0
    %6450 = vmatprep.subr.bf16.mxu0 0
    %6451 = vmatpush1.bf16.xpose.msra.mxu0 0
    %6452 = vmatprep.subr.bf16.mxu0 0
    %6453 = vmatpush1.bf16.xpose.msra.mxu0 0
    %6454 = vmatprep.subr.bf16.mxu0 0
    %6455 = vmatpush1.bf16.xpose.msra.mxu0 0
    %6456 = vmatprep.mubr.bf16.mxu0 %v6381
    %6457 = vmatmul.mubr.bf16.gmra.mrb[0].mxu0 %v6380
    %v6458 = vpop.f32.mrb[0].mxu0
    %v6459 = vadd.f32 0.0, %v6458
    %v6460 = vpop.f32.mrb[0].mxu0
    %v6461 = vpop.f32.mrb[0].mxu0
    %v6462 = vpop.f32.mrb[0].mxu0
    %6463 = vdwg.mxu0
    %6464 = vmatprep.subr.bf16.mxu0 0
    %6465 = vmatpush1.bf16.xpose.msra.mxu0 %v6414
    %6466 = vmatprep.subr.bf16.mxu0 0
    %6467 = vmatpush1.bf16.xpose.msra.mxu0 %v6417
    %6468 = vmatprep.subr.bf16.mxu0 0
    %6469 = vmatpush1.bf16.xpose.msra.mxu0 0
    %6470 = vmatprep.subr.bf16.mxu0 0
    %6471 = vmatpush1.bf16.xpose.msra.mxu0 0
    %6472 = vmatprep.subr.bf16.mxu0 0
    %6473 = vmatpush1.bf16.xpose.msra.mxu0 0
    %6474 = vmatprep.subr.bf16.mxu0 0
    %6475 = vmatpush1.bf16.xpose.msra.mxu0 0
    %6476 = vmatprep.subr.bf16.mxu0 0
    %6477 = vmatpush1.bf16.xpose.msra.mxu0 0
    %6478 = vmatprep.subr.bf16.mxu0 0
    %6479 = vmatpush1.bf16.xpose.msra.mxu0 0
    %6480 = vmatprep.subr.bf16.mxu0 0
    %6481 = vmatpush1.bf16.xpose.msra.mxu0 0
    %6482 = vmatprep.subr.bf16.mxu0 0
    %6483 = vmatpush1.bf16.xpose.msra.mxu0 0
    %6484 = vmatprep.subr.bf16.mxu0 0
    %6485 = vmatpush1.bf16.xpose.msra.mxu0 0
    %6486 = vmatprep.subr.bf16.mxu0 0
    %6487 = vmatpush1.bf16.xpose.msra.mxu0 0
    %6488 = vmatprep.subr.bf16.mxu0 0
    %6489 = vmatpush1.bf16.xpose.msra.mxu0 0
    %6490 = vmatprep.subr.bf16.mxu0 0
    %6491 = vmatpush1.bf16.xpose.msra.mxu0 0
    %6492 = vmatprep.subr.bf16.mxu0 0
    %6493 = vmatpush1.bf16.xpose.msra.mxu0 0
    %6494 = vmatprep.subr.bf16.mxu0 0
    %6495 = vmatpush1.bf16.xpose.msra.mxu0 0
    %6496 = vmatprep.mubr.bf16.mxu0 0
    %6497 = vmatmul.mubr.bf16.gmra.mrb[0].mxu0 %v6382
    %v6498 = vpop.f32.mrb[0].mxu0
    %v6499 = vadd.f32 %v6459, %v6498
    %v6500 = vpop.f32.mrb[0].mxu0
    %v6501 = vpop.f32.mrb[0].mxu0
    %v6502 = vpop.f32.mrb[0].mxu0
    %6503 = vdwg.mxu0
    %v6504 = vadd.f32 %v6379, %v6499
    %v6505 = vld [vmem:[#allocation3 + $0x30] sm:$0xf0]
    %v6506 = vld [vmem:[#allocation3 + $0x38] sm:$0xf0]
    %v6507 = vld [vmem:[#allocation3 + $0x40] sm:$0xf0]
    %s6508 = scalar_lea.vmem [#allocation9], 240
    %v6509 = vld [vmem:[%s6508] sm:$0xff]
    %v6510 = vld [vmem:[%s6508 + $0x8] sm:$0xf]
    %v6511 = vld [vmem:[%s6508 + $0xc] sm:$0xff]
    %v6512 = vld [vmem:[%s6508 + $0x14] sm:$0xf]
    %v6513 = vld [vmem:[%s6508 + $0x18] sm:$0xff]
    %v6514 = vld [vmem:[%s6508 + $0x20] sm:$0xf]
    %v6515 = vld [vmem:[%s6508 + $0x24] sm:$0xff]
    %v6516 = vld [vmem:[%s6508 + $0x2c] sm:$0xf]
    %v6520 = vrot.slane %v6505, 4
    %v6521 = vrot.slane %v6506, 4
    %v6522 = vrot.slane %v6507, 4
    %v6534 = vunpack.c.l.b16 %v6509
    %v6535 = vunpack.c.h.b16 %v6509
    %v6536 = vunpack.c.l.b16 %v6510
    %v6537 = vunpack.c.l.b16 %v6511
    %v6538 = vunpack.c.h.b16 %v6511
    %v6539 = vunpack.c.l.b16 %v6512
    %v6540 = vunpack.c.l.b16 %v6513
    %v6541 = vunpack.c.h.b16 %v6513
    %v6542 = vunpack.c.l.b16 %v6514
    %v6543 = vunpack.c.l.b16 %v6515
    %v6544 = vunpack.c.h.b16 %v6515
    %v6545 = vunpack.c.l.b16 %v6516
    %v6546 = vpack.c.b16 %v6537, %v6534
    %v6547 = vpack.c.b16 %v6538, %v6535
    %v6548 = vpack.c.b16 %v6539, %v6536
    %v6549 = vpack.c.b16 %v6543, %v6540
    %v6550 = vpack.c.b16 %v6544, %v6541
    %v6551 = vpack.c.b16 %v6545, %v6542
    %6558 = vmatprep.subr.bf16.mxu0 %v6547
    %6559 = vmatpush1.bf16.xpose.msra.mxu0 %v6546
    %6560 = vmatprep.subr.bf16.mxu0 %v6550
    %6561 = vmatpush1.bf16.xpose.msra.mxu0 %v6549
    %6562 = vmatprep.subr.bf16.mxu0 0
    %6563 = vmatpush1.bf16.xpose.msra.mxu0 0
    %6564 = vmatprep.subr.bf16.mxu0 0
    %6565 = vmatpush1.bf16.xpose.msra.mxu0 0
    %6566 = vmatprep.subr.bf16.mxu0 0
    %6567 = vmatpush1.bf16.xpose.msra.mxu0 0
    %6568 = vmatprep.subr.bf16.mxu0 0
    %6569 = vmatpush1.bf16.xpose.msra.mxu0 0
    %6570 = vmatprep.subr.bf16.mxu0 0
    %6571 = vmatpush1.bf16.xpose.msra.mxu0 0
    %6572 = vmatprep.subr.bf16.mxu0 0
    %6573 = vmatpush1.bf16.xpose.msra.mxu0 0
    %6574 = vmatprep.subr.bf16.mxu0 0
    %6575 = vmatpush1.bf16.xpose.msra.mxu0 0
    %6576 = vmatprep.subr.bf16.mxu0 0
    %6577 = vmatpush1.bf16.xpose.msra.mxu0 0
    %6578 = vmatprep.subr.bf16.mxu0 0
    %6579 = vmatpush1.bf16.xpose.msra.mxu0 0
    %6580 = vmatprep.subr.bf16.mxu0 0
    %6581 = vmatpush1.bf16.xpose.msra.mxu0 0
    %6582 = vmatprep.subr.bf16.mxu0 0
    %6583 = vmatpush1.bf16.xpose.msra.mxu0 0
    %6584 = vmatprep.subr.bf16.mxu0 0
    %6585 = vmatpush1.bf16.xpose.msra.mxu0 0
    %6586 = vmatprep.subr.bf16.mxu0 0
    %6587 = vmatpush1.bf16.xpose.msra.mxu0 0
    %6588 = vmatprep.subr.bf16.mxu0 0
    %6589 = vmatpush1.bf16.xpose.msra.mxu0 0
    %6590 = vmatprep.mubr.bf16.mxu0 %v6521
    %6591 = vmatmul.mubr.bf16.gmra.mrb[0].mxu0 %v6520
    %v6592 = vpop.f32.mrb[0].mxu0
    %v6593 = vadd.f32 0.0, %v6592
    %v6594 = vpop.f32.mrb[0].mxu0
    %v6595 = vpop.f32.mrb[0].mxu0
    %v6596 = vpop.f32.mrb[0].mxu0
    %6597 = vdwg.mxu0
    %6598 = vmatprep.subr.bf16.mxu0 0
    %6599 = vmatpush1.bf16.xpose.msra.mxu0 %v6548
    %6600 = vmatprep.subr.bf16.mxu0 0
    %6601 = vmatpush1.bf16.xpose.msra.mxu0 %v6551
    %6602 = vmatprep.subr.bf16.mxu0 0
    %6603 = vmatpush1.bf16.xpose.msra.mxu0 0
    %6604 = vmatprep.subr.bf16.mxu0 0
    %6605 = vmatpush1.bf16.xpose.msra.mxu0 0
    %6606 = vmatprep.subr.bf16.mxu0 0
    %6607 = vmatpush1.bf16.xpose.msra.mxu0 0
    %6608 = vmatprep.subr.bf16.mxu0 0
    %6609 = vmatpush1.bf16.xpose.msra.mxu0 0
    %6610 = vmatprep.subr.bf16.mxu0 0
    %6611 = vmatpush1.bf16.xpose.msra.mxu0 0
    %6612 = vmatprep.subr.bf16.mxu0 0
    %6613 = vmatpush1.bf16.xpose.msra.mxu0 0
    %6614 = vmatprep.subr.bf16.mxu0 0
    %6615 = vmatpush1.bf16.xpose.msra.mxu0 0
    %6616 = vmatprep.subr.bf16.mxu0 0
    %6617 = vmatpush1.bf16.xpose.msra.mxu0 0
    %6618 = vmatprep.subr.bf16.mxu0 0
    %6619 = vmatpush1.bf16.xpose.msra.mxu0 0
    %6620 = vmatprep.subr.bf16.mxu0 0
    %6621 = vmatpush1.bf16.xpose.msra.mxu0 0
    %6622 = vmatprep.subr.bf16.mxu0 0
    %6623 = vmatpush1.bf16.xpose.msra.mxu0 0
    %6624 = vmatprep.subr.bf16.mxu0 0
    %6625 = vmatpush1.bf16.xpose.msra.mxu0 0
    %6626 = vmatprep.subr.bf16.mxu0 0
    %6627 = vmatpush1.bf16.xpose.msra.mxu0 0
    %6628 = vmatprep.subr.bf16.mxu0 0
    %6629 = vmatpush1.bf16.xpose.msra.mxu0 0
    %6630 = vmatprep.mubr.bf16.mxu0 0
    %6631 = vmatmul.mubr.bf16.gmra.mrb[0].mxu0 %v6522
    %v6632 = vpop.f32.mrb[0].mxu0
    %v6633 = vadd.f32 %v6593, %v6632
    %v6634 = vpop.f32.mrb[0].mxu0
    %v6635 = vpop.f32.mrb[0].mxu0
    %v6636 = vpop.f32.mrb[0].mxu0
    %6637 = vdwg.mxu0
    %v6638 = vadd.f32 %v6504, %v6633
    %v6639 = vld [vmem:[#allocation3 + $0x48] sm:$0xf]
    %v6640 = vld [vmem:[#allocation3 + $0x50] sm:$0xf]
    %v6641 = vld [vmem:[#allocation3 + $0x58] sm:$0xf]
    %s6642 = scalar_lea.vmem [#allocation9], 288
    %v6643 = vld [vmem:[%s6642] sm:$0xff]
    %v6644 = vld [vmem:[%s6642 + $0x8] sm:$0xf]
    %v6645 = vld [vmem:[%s6642 + $0xc] sm:$0xff]
    %v6646 = vld [vmem:[%s6642 + $0x14] sm:$0xf]
    %v6647 = vld [vmem:[%s6642 + $0x18] sm:$0xff]
    %v6648 = vld [vmem:[%s6642 + $0x20] sm:$0xf]
    %v6649 = vld [vmem:[%s6642 + $0x24] sm:$0xff]
    %v6650 = vld [vmem:[%s6642 + $0x2c] sm:$0xf]
    %v6659 = vunpack.c.l.b16 %v6643
    %v6660 = vunpack.c.h.b16 %v6643
    %v6661 = vunpack.c.l.b16 %v6644
    %v6662 = vunpack.c.l.b16 %v6645
    %v6663 = vunpack.c.h.b16 %v6645
    %v6664 = vunpack.c.l.b16 %v6646
    %v6665 = vunpack.c.l.b16 %v6647
    %v6666 = vunpack.c.h.b16 %v6647
    %v6667 = vunpack.c.l.b16 %v6648
    %v6668 = vunpack.c.l.b16 %v6649
    %v6669 = vunpack.c.h.b16 %v6649
    %v6670 = vunpack.c.l.b16 %v6650
    %v6671 = vpack.c.b16 %v6662, %v6659
    %v6672 = vpack.c.b16 %v6663, %v6660
    %v6673 = vpack.c.b16 %v6664, %v6661
    %v6674 = vpack.c.b16 %v6668, %v6665
    %v6675 = vpack.c.b16 %v6669, %v6666
    %v6676 = vpack.c.b16 %v6670, %v6667
    %6683 = vmatprep.subr.bf16.mxu0 %v6672
    %6684 = vmatpush1.bf16.xpose.msra.mxu0 %v6671
    %6685 = vmatprep.subr.bf16.mxu0 %v6675
    %6686 = vmatpush1.bf16.xpose.msra.mxu0 %v6674
    %6687 = vmatprep.subr.bf16.mxu0 0
    %6688 = vmatpush1.bf16.xpose.msra.mxu0 0
    %6689 = vmatprep.subr.bf16.mxu0 0
    %6690 = vmatpush1.bf16.xpose.msra.mxu0 0
    %6691 = vmatprep.subr.bf16.mxu0 0
    %6692 = vmatpush1.bf16.xpose.msra.mxu0 0
    %6693 = vmatprep.subr.bf16.mxu0 0
    %6694 = vmatpush1.bf16.xpose.msra.mxu0 0
    %6695 = vmatprep.subr.bf16.mxu0 0
    %6696 = vmatpush1.bf16.xpose.msra.mxu0 0
    %6697 = vmatprep.subr.bf16.mxu0 0
    %6698 = vmatpush1.bf16.xpose.msra.mxu0 0
    %6699 = vmatprep.subr.bf16.mxu0 0
    %6700 = vmatpush1.bf16.xpose.msra.mxu0 0
    %6701 = vmatprep.subr.bf16.mxu0 0
    %6702 = vmatpush1.bf16.xpose.msra.mxu0 0
    %6703 = vmatprep.subr.bf16.mxu0 0
    %6704 = vmatpush1.bf16.xpose.msra.mxu0 0
    %6705 = vmatprep.subr.bf16.mxu0 0
    %6706 = vmatpush1.bf16.xpose.msra.mxu0 0
    %6707 = vmatprep.subr.bf16.mxu0 0
    %6708 = vmatpush1.bf16.xpose.msra.mxu0 0
    %6709 = vmatprep.subr.bf16.mxu0 0
    %6710 = vmatpush1.bf16.xpose.msra.mxu0 0
    %6711 = vmatprep.subr.bf16.mxu0 0
    %6712 = vmatpush1.bf16.xpose.msra.mxu0 0
    %6713 = vmatprep.subr.bf16.mxu0 0
    %6714 = vmatpush1.bf16.xpose.msra.mxu0 0
    %6715 = vmatprep.mubr.bf16.mxu0 %v6640
    %6716 = vmatmul.mubr.bf16.gmra.mrb[0].mxu0 %v6639
    %v6717 = vpop.f32.mrb[0].mxu0
    %v6718 = vadd.f32 0.0, %v6717
    %v6719 = vpop.f32.mrb[0].mxu0
    %v6720 = vpop.f32.mrb[0].mxu0
    %v6721 = vpop.f32.mrb[0].mxu0
    %6722 = vdwg.mxu0
    %6723 = vmatprep.subr.bf16.mxu0 0
    %6724 = vmatpush1.bf16.xpose.msra.mxu0 %v6673
    %6725 = vmatprep.subr.bf16.mxu0 0
    %6726 = vmatpush1.bf16.xpose.msra.mxu0 %v6676
    %6727 = vmatprep.subr.bf16.mxu0 0
    %6728 = vmatpush1.bf16.xpose.msra.mxu0 0
    %6729 = vmatprep.subr.bf16.mxu0 0
    %6730 = vmatpush1.bf16.xpose.msra.mxu0 0
    %6731 = vmatprep.subr.bf16.mxu0 0
    %6732 = vmatpush1.bf16.xpose.msra.mxu0 0
    %6733 = vmatprep.subr.bf16.mxu0 0
    %6734 = vmatpush1.bf16.xpose.msra.mxu0 0
    %6735 = vmatprep.subr.bf16.mxu0 0
    %6736 = vmatpush1.bf16.xpose.msra.mxu0 0
    %6737 = vmatprep.subr.bf16.mxu0 0
    %6738 = vmatpush1.bf16.xpose.msra.mxu0 0
    %6739 = vmatprep.subr.bf16.mxu0 0
    %6740 = vmatpush1.bf16.xpose.msra.mxu0 0
    %6741 = vmatprep.subr.bf16.mxu0 0
    %6742 = vmatpush1.bf16.xpose.msra.mxu0 0
    %6743 = vmatprep.subr.bf16.mxu0 0
    %6744 = vmatpush1.bf16.xpose.msra.mxu0 0
    %6745 = vmatprep.subr.bf16.mxu0 0
    %6746 = vmatpush1.bf16.xpose.msra.mxu0 0
    %6747 = vmatprep.subr.bf16.mxu0 0
    %6748 = vmatpush1.bf16.xpose.msra.mxu0 0
    %6749 = vmatprep.subr.bf16.mxu0 0
    %6750 = vmatpush1.bf16.xpose.msra.mxu0 0
    %6751 = vmatprep.subr.bf16.mxu0 0
    %6752 = vmatpush1.bf16.xpose.msra.mxu0 0
    %6753 = vmatprep.subr.bf16.mxu0 0
    %6754 = vmatpush1.bf16.xpose.msra.mxu0 0
    %6755 = vmatprep.mubr.bf16.mxu0 0
    %6756 = vmatmul.mubr.bf16.gmra.mrb[0].mxu0 %v6641
    %v6757 = vpop.f32.mrb[0].mxu0
    %v6758 = vadd.f32 %v6718, %v6757
    %v6759 = vpop.f32.mrb[0].mxu0
    %v6760 = vpop.f32.mrb[0].mxu0
    %v6761 = vpop.f32.mrb[0].mxu0
    %6762 = vdwg.mxu0
    %v6763 = vadd.f32 %v6638, %v6758
    %v6764 = vld [vmem:[#allocation3 + $0x48] sm:$0xf0]
    %v6765 = vld [vmem:[#allocation3 + $0x50] sm:$0xf0]
    %v6766 = vld [vmem:[#allocation3 + $0x58] sm:$0xf0]
    %s6767 = scalar_lea.vmem [#allocation9], 336
    %v6768 = vld [vmem:[%s6767] sm:$0xff]
    %v6769 = vld [vmem:[%s6767 + $0x8] sm:$0xf]
    %v6770 = vld [vmem:[%s6767 + $0xc] sm:$0xff]
    %v6771 = vld [vmem:[%s6767 + $0x14] sm:$0xf]
    %v6772 = vld [vmem:[%s6767 + $0x18] sm:$0xff]
    %v6773 = vld [vmem:[%s6767 + $0x20] sm:$0xf]
    %v6774 = vld [vmem:[%s6767 + $0x24] sm:$0xff]
    %v6775 = vld [vmem:[%s6767 + $0x2c] sm:$0xf]
    %v6779 = vrot.slane %v6764, 4
    %v6780 = vrot.slane %v6765, 4
    %v6781 = vrot.slane %v6766, 4
    %v6793 = vunpack.c.l.b16 %v6768
    %v6794 = vunpack.c.h.b16 %v6768
    %v6795 = vunpack.c.l.b16 %v6769
    %v6796 = vunpack.c.l.b16 %v6770
    %v6797 = vunpack.c.h.b16 %v6770
    %v6798 = vunpack.c.l.b16 %v6771
    %v6799 = vunpack.c.l.b16 %v6772
    %v6800 = vunpack.c.h.b16 %v6772
    %v6801 = vunpack.c.l.b16 %v6773
    %v6802 = vunpack.c.l.b16 %v6774
    %v6803 = vunpack.c.h.b16 %v6774
    %v6804 = vunpack.c.l.b16 %v6775
    %v6805 = vpack.c.b16 %v6796, %v6793
    %v6806 = vpack.c.b16 %v6797, %v6794
    %v6807 = vpack.c.b16 %v6798, %v6795
    %v6808 = vpack.c.b16 %v6802, %v6799
    %v6809 = vpack.c.b16 %v6803, %v6800
    %v6810 = vpack.c.b16 %v6804, %v6801
    %6817 = vmatprep.subr.bf16.mxu0 %v6806
    %6818 = vmatpush1.bf16.xpose.msra.mxu0 %v6805
    %6819 = vmatprep.subr.bf16.mxu0 %v6809
    %6820 = vmatpush1.bf16.xpose.msra.mxu0 %v6808
    %6821 = vmatprep.subr.bf16.mxu0 0
    %6822 = vmatpush1.bf16.xpose.msra.mxu0 0
    %6823 = vmatprep.subr.bf16.mxu0 0
    %6824 = vmatpush1.bf16.xpose.msra.mxu0 0
    %6825 = vmatprep.subr.bf16.mxu0 0
    %6826 = vmatpush1.bf16.xpose.msra.mxu0 0
    %6827 = vmatprep.subr.bf16.mxu0 0
    %6828 = vmatpush1.bf16.xpose.msra.mxu0 0
    %6829 = vmatprep.subr.bf16.mxu0 0
    %6830 = vmatpush1.bf16.xpose.msra.mxu0 0
    %6831 = vmatprep.subr.bf16.mxu0 0
    %6832 = vmatpush1.bf16.xpose.msra.mxu0 0
    %6833 = vmatprep.subr.bf16.mxu0 0
    %6834 = vmatpush1.bf16.xpose.msra.mxu0 0
    %6835 = vmatprep.subr.bf16.mxu0 0
    %6836 = vmatpush1.bf16.xpose.msra.mxu0 0
    %6837 = vmatprep.subr.bf16.mxu0 0
    %6838 = vmatpush1.bf16.xpose.msra.mxu0 0
    %6839 = vmatprep.subr.bf16.mxu0 0
    %6840 = vmatpush1.bf16.xpose.msra.mxu0 0
    %6841 = vmatprep.subr.bf16.mxu0 0
    %6842 = vmatpush1.bf16.xpose.msra.mxu0 0
    %6843 = vmatprep.subr.bf16.mxu0 0
    %6844 = vmatpush1.bf16.xpose.msra.mxu0 0
    %6845 = vmatprep.subr.bf16.mxu0 0
    %6846 = vmatpush1.bf16.xpose.msra.mxu0 0
    %6847 = vmatprep.subr.bf16.mxu0 0
    %6848 = vmatpush1.bf16.xpose.msra.mxu0 0
    %6849 = vmatprep.mubr.bf16.mxu0 %v6780
    %6850 = vmatmul.mubr.bf16.gmra.mrb[0].mxu0 %v6779
    %v6851 = vpop.f32.mrb[0].mxu0
    %v6852 = vadd.f32 0.0, %v6851
    %v6853 = vpop.f32.mrb[0].mxu0
    %v6854 = vpop.f32.mrb[0].mxu0
    %v6855 = vpop.f32.mrb[0].mxu0
    %6856 = vdwg.mxu0
    %6857 = vmatprep.subr.bf16.mxu0 0
    %6858 = vmatpush1.bf16.xpose.msra.mxu0 %v6807
    %6859 = vmatprep.subr.bf16.mxu0 0
    %6860 = vmatpush1.bf16.xpose.msra.mxu0 %v6810
    %6861 = vmatprep.subr.bf16.mxu0 0
    %6862 = vmatpush1.bf16.xpose.msra.mxu0 0
    %6863 = vmatprep.subr.bf16.mxu0 0
    %6864 = vmatpush1.bf16.xpose.msra.mxu0 0
    %6865 = vmatprep.subr.bf16.mxu0 0
    %6866 = vmatpush1.bf16.xpose.msra.mxu0 0
    %6867 = vmatprep.subr.bf16.mxu0 0
    %6868 = vmatpush1.bf16.xpose.msra.mxu0 0
    %6869 = vmatprep.subr.bf16.mxu0 0
    %6870 = vmatpush1.bf16.xpose.msra.mxu0 0
    %6871 = vmatprep.subr.bf16.mxu0 0
    %6872 = vmatpush1.bf16.xpose.msra.mxu0 0
    %6873 = vmatprep.subr.bf16.mxu0 0
    %6874 = vmatpush1.bf16.xpose.msra.mxu0 0
    %6875 = vmatprep.subr.bf16.mxu0 0
    %6876 = vmatpush1.bf16.xpose.msra.mxu0 0
    %6877 = vmatprep.subr.bf16.mxu0 0
    %6878 = vmatpush1.bf16.xpose.msra.mxu0 0
    %6879 = vmatprep.subr.bf16.mxu0 0
    %6880 = vmatpush1.bf16.xpose.msra.mxu0 0
    %6881 = vmatprep.subr.bf16.mxu0 0
    %6882 = vmatpush1.bf16.xpose.msra.mxu0 0
    %6883 = vmatprep.subr.bf16.mxu0 0
    %6884 = vmatpush1.bf16.xpose.msra.mxu0 0
    %6885 = vmatprep.subr.bf16.mxu0 0
    %6886 = vmatpush1.bf16.xpose.msra.mxu0 0
    %6887 = vmatprep.subr.bf16.mxu0 0
    %6888 = vmatpush1.bf16.xpose.msra.mxu0 0
    %6889 = vmatprep.mubr.bf16.mxu0 0
    %6890 = vmatmul.mubr.bf16.gmra.mrb[0].mxu0 %v6781
    %v6891 = vpop.f32.mrb[0].mxu0
    %v6892 = vadd.f32 %v6852, %v6891
    %v6893 = vpop.f32.mrb[0].mxu0
    %v6894 = vpop.f32.mrb[0].mxu0
    %v6895 = vpop.f32.mrb[0].mxu0
    %6896 = vdwg.mxu0
    %v6897 = vadd.f32 %v6763, %v6892
    %v6898 = vld [vmem:[#allocation3 + $0x60] sm:$0xf]
    %v6899 = vld [vmem:[#allocation3 + $0x68] sm:$0xf]
    %v6900 = vld [vmem:[#allocation3 + $0x70] sm:$0xf]
    %s6901 = scalar_lea.vmem [#allocation9], 384
    %v6902 = vld [vmem:[%s6901] sm:$0xff]
    %v6903 = vld [vmem:[%s6901 + $0x8] sm:$0xf]
    %v6904 = vld [vmem:[%s6901 + $0xc] sm:$0xff]
    %v6905 = vld [vmem:[%s6901 + $0x14] sm:$0xf]
    %v6906 = vld [vmem:[%s6901 + $0x18] sm:$0xff]
    %v6907 = vld [vmem:[%s6901 + $0x20] sm:$0xf]
    %v6908 = vld [vmem:[%s6901 + $0x24] sm:$0xff]
    %v6909 = vld [vmem:[%s6901 + $0x2c] sm:$0xf]
    %v6918 = vunpack.c.l.b16 %v6902
    %v6919 = vunpack.c.h.b16 %v6902
    %v6920 = vunpack.c.l.b16 %v6903
    %v6921 = vunpack.c.l.b16 %v6904
    %v6922 = vunpack.c.h.b16 %v6904
    %v6923 = vunpack.c.l.b16 %v6905
    %v6924 = vunpack.c.l.b16 %v6906
    %v6925 = vunpack.c.h.b16 %v6906
    %v6926 = vunpack.c.l.b16 %v6907
    %v6927 = vunpack.c.l.b16 %v6908
    %v6928 = vunpack.c.h.b16 %v6908
    %v6929 = vunpack.c.l.b16 %v6909
    %v6930 = vpack.c.b16 %v6921, %v6918
    %v6931 = vpack.c.b16 %v6922, %v6919
    %v6932 = vpack.c.b16 %v6923, %v6920
    %v6933 = vpack.c.b16 %v6927, %v6924
    %v6934 = vpack.c.b16 %v6928, %v6925
    %v6935 = vpack.c.b16 %v6929, %v6926
    %6942 = vmatprep.subr.bf16.mxu0 %v6931
    %6943 = vmatpush1.bf16.xpose.msra.mxu0 %v6930
    %6944 = vmatprep.subr.bf16.mxu0 %v6934
    %6945 = vmatpush1.bf16.xpose.msra.mxu0 %v6933
    %6946 = vmatprep.subr.bf16.mxu0 0
    %6947 = vmatpush1.bf16.xpose.msra.mxu0 0
    %6948 = vmatprep.subr.bf16.mxu0 0
    %6949 = vmatpush1.bf16.xpose.msra.mxu0 0
    %6950 = vmatprep.subr.bf16.mxu0 0
    %6951 = vmatpush1.bf16.xpose.msra.mxu0 0
    %6952 = vmatprep.subr.bf16.mxu0 0
    %6953 = vmatpush1.bf16.xpose.msra.mxu0 0
    %6954 = vmatprep.subr.bf16.mxu0 0
    %6955 = vmatpush1.bf16.xpose.msra.mxu0 0
    %6956 = vmatprep.subr.bf16.mxu0 0
    %6957 = vmatpush1.bf16.xpose.msra.mxu0 0
    %6958 = vmatprep.subr.bf16.mxu0 0
    %6959 = vmatpush1.bf16.xpose.msra.mxu0 0
    %6960 = vmatprep.subr.bf16.mxu0 0
    %6961 = vmatpush1.bf16.xpose.msra.mxu0 0
    %6962 = vmatprep.subr.bf16.mxu0 0
    %6963 = vmatpush1.bf16.xpose.msra.mxu0 0
    %6964 = vmatprep.subr.bf16.mxu0 0
    %6965 = vmatpush1.bf16.xpose.msra.mxu0 0
    %6966 = vmatprep.subr.bf16.mxu0 0
    %6967 = vmatpush1.bf16.xpose.msra.mxu0 0
    %6968 = vmatprep.subr.bf16.mxu0 0
    %6969 = vmatpush1.bf16.xpose.msra.mxu0 0
    %6970 = vmatprep.subr.bf16.mxu0 0
    %6971 = vmatpush1.bf16.xpose.msra.mxu0 0
    %6972 = vmatprep.subr.bf16.mxu0 0
    %6973 = vmatpush1.bf16.xpose.msra.mxu0 0
    %6974 = vmatprep.mubr.bf16.mxu0 %v6899
    %6975 = vmatmul.mubr.bf16.gmra.mrb[0].mxu0 %v6898
    %v6976 = vpop.f32.mrb[0].mxu0
    %v6977 = vadd.f32 0.0, %v6976
    %v6978 = vpop.f32.mrb[0].mxu0
    %v6979 = vpop.f32.mrb[0].mxu0
    %v6980 = vpop.f32.mrb[0].mxu0
    %6981 = vdwg.mxu0
    %6982 = vmatprep.subr.bf16.mxu0 0
    %6983 = vmatpush1.bf16.xpose.msra.mxu0 %v6932
    %6984 = vmatprep.subr.bf16.mxu0 0
    %6985 = vmatpush1.bf16.xpose.msra.mxu0 %v6935
    %6986 = vmatprep.subr.bf16.mxu0 0
    %6987 = vmatpush1.bf16.xpose.msra.mxu0 0
    %6988 = vmatprep.subr.bf16.mxu0 0
    %6989 = vmatpush1.bf16.xpose.msra.mxu0 0
    %6990 = vmatprep.subr.bf16.mxu0 0
    %6991 = vmatpush1.bf16.xpose.msra.mxu0 0
    %6992 = vmatprep.subr.bf16.mxu0 0
    %6993 = vmatpush1.bf16.xpose.msra.mxu0 0
    %6994 = vmatprep.subr.bf16.mxu0 0
    %6995 = vmatpush1.bf16.xpose.msra.mxu0 0
    %6996 = vmatprep.subr.bf16.mxu0 0
    %6997 = vmatpush1.bf16.xpose.msra.mxu0 0
    %6998 = vmatprep.subr.bf16.mxu0 0
    %6999 = vmatpush1.bf16.xpose.msra.mxu0 0
    %7000 = vmatprep.subr.bf16.mxu0 0
    %7001 = vmatpush1.bf16.xpose.msra.mxu0 0
    %7002 = vmatprep.subr.bf16.mxu0 0
    %7003 = vmatpush1.bf16.xpose.msra.mxu0 0
    %7004 = vmatprep.subr.bf16.mxu0 0
    %7005 = vmatpush1.bf16.xpose.msra.mxu0 0
    %7006 = vmatprep.subr.bf16.mxu0 0
    %7007 = vmatpush1.bf16.xpose.msra.mxu0 0
    %7008 = vmatprep.subr.bf16.mxu0 0
    %7009 = vmatpush1.bf16.xpose.msra.mxu0 0
    %7010 = vmatprep.subr.bf16.mxu0 0
    %7011 = vmatpush1.bf16.xpose.msra.mxu0 0
    %7012 = vmatprep.subr.bf16.mxu0 0
    %7013 = vmatpush1.bf16.xpose.msra.mxu0 0
    %7014 = vmatprep.mubr.bf16.mxu0 0
    %7015 = vmatmul.mubr.bf16.gmra.mrb[0].mxu0 %v6900
    %v7016 = vpop.f32.mrb[0].mxu0
    %v7017 = vadd.f32 %v6977, %v7016
    %v7018 = vpop.f32.mrb[0].mxu0
    %v7019 = vpop.f32.mrb[0].mxu0
    %v7020 = vpop.f32.mrb[0].mxu0
    %7021 = vdwg.mxu0
    %v7022 = vadd.f32 %v6897, %v7017
    %v7023 = vld [vmem:[#allocation3 + $0x60] sm:$0xf0]
    %v7024 = vld [vmem:[#allocation3 + $0x68] sm:$0xf0]
    %v7025 = vld [vmem:[#allocation3 + $0x70] sm:$0xf0]
    %s7026 = scalar_lea.vmem [#allocation9], 432
    %v7027 = vld [vmem:[%s7026] sm:$0xff]
    %v7028 = vld [vmem:[%s7026 + $0x8] sm:$0xf]
    %v7029 = vld [vmem:[%s7026 + $0xc] sm:$0xff]
    %v7030 = vld [vmem:[%s7026 + $0x14] sm:$0xf]
    %v7031 = vld [vmem:[%s7026 + $0x18] sm:$0xff]
    %v7032 = vld [vmem:[%s7026 + $0x20] sm:$0xf]
    %v7033 = vld [vmem:[%s7026 + $0x24] sm:$0xff]
    %v7034 = vld [vmem:[%s7026 + $0x2c] sm:$0xf]
    %v7038 = vrot.slane %v7023, 4
    %v7039 = vrot.slane %v7024, 4
    %v7040 = vrot.slane %v7025, 4
    %v7052 = vunpack.c.l.b16 %v7027
    %v7053 = vunpack.c.h.b16 %v7027
    %v7054 = vunpack.c.l.b16 %v7028
    %v7055 = vunpack.c.l.b16 %v7029
    %v7056 = vunpack.c.h.b16 %v7029
    %v7057 = vunpack.c.l.b16 %v7030
    %v7058 = vunpack.c.l.b16 %v7031
    %v7059 = vunpack.c.h.b16 %v7031
    %v7060 = vunpack.c.l.b16 %v7032
    %v7061 = vunpack.c.l.b16 %v7033
    %v7062 = vunpack.c.h.b16 %v7033
    %v7063 = vunpack.c.l.b16 %v7034
    %v7064 = vpack.c.b16 %v7055, %v7052
    %v7065 = vpack.c.b16 %v7056, %v7053
    %v7066 = vpack.c.b16 %v7057, %v7054
    %v7067 = vpack.c.b16 %v7061, %v7058
    %v7068 = vpack.c.b16 %v7062, %v7059
    %v7069 = vpack.c.b16 %v7063, %v7060
    %7076 = vmatprep.subr.bf16.mxu0 %v7065
    %7077 = vmatpush1.bf16.xpose.msra.mxu0 %v7064
    %7078 = vmatprep.subr.bf16.mxu0 %v7068
    %7079 = vmatpush1.bf16.xpose.msra.mxu0 %v7067
    %7080 = vmatprep.subr.bf16.mxu0 0
    %7081 = vmatpush1.bf16.xpose.msra.mxu0 0
    %7082 = vmatprep.subr.bf16.mxu0 0
    %7083 = vmatpush1.bf16.xpose.msra.mxu0 0
    %7084 = vmatprep.subr.bf16.mxu0 0
    %7085 = vmatpush1.bf16.xpose.msra.mxu0 0
    %7086 = vmatprep.subr.bf16.mxu0 0
    %7087 = vmatpush1.bf16.xpose.msra.mxu0 0
    %7088 = vmatprep.subr.bf16.mxu0 0
    %7089 = vmatpush1.bf16.xpose.msra.mxu0 0
    %7090 = vmatprep.subr.bf16.mxu0 0
    %7091 = vmatpush1.bf16.xpose.msra.mxu0 0
    %7092 = vmatprep.subr.bf16.mxu0 0
    %7093 = vmatpush1.bf16.xpose.msra.mxu0 0
    %7094 = vmatprep.subr.bf16.mxu0 0
    %7095 = vmatpush1.bf16.xpose.msra.mxu0 0
    %7096 = vmatprep.subr.bf16.mxu0 0
    %7097 = vmatpush1.bf16.xpose.msra.mxu0 0
    %7098 = vmatprep.subr.bf16.mxu0 0
    %7099 = vmatpush1.bf16.xpose.msra.mxu0 0
    %7100 = vmatprep.subr.bf16.mxu0 0
    %7101 = vmatpush1.bf16.xpose.msra.mxu0 0
    %7102 = vmatprep.subr.bf16.mxu0 0
    %7103 = vmatpush1.bf16.xpose.msra.mxu0 0
    %7104 = vmatprep.subr.bf16.mxu0 0
    %7105 = vmatpush1.bf16.xpose.msra.mxu0 0
    %7106 = vmatprep.subr.bf16.mxu0 0
    %7107 = vmatpush1.bf16.xpose.msra.mxu0 0
    %7108 = vmatprep.mubr.bf16.mxu0 %v7039
    %7109 = vmatmul.mubr.bf16.gmra.mrb[0].mxu0 %v7038
    %v7110 = vpop.f32.mrb[0].mxu0
    %v7111 = vadd.f32 0.0, %v7110
    %v7112 = vpop.f32.mrb[0].mxu0
    %v7113 = vpop.f32.mrb[0].mxu0
    %v7114 = vpop.f32.mrb[0].mxu0
    %7115 = vdwg.mxu0
    %7116 = vmatprep.subr.bf16.mxu0 0
    %7117 = vmatpush1.bf16.xpose.msra.mxu0 %v7066
    %7118 = vmatprep.subr.bf16.mxu0 0
    %7119 = vmatpush1.bf16.xpose.msra.mxu0 %v7069
    %7120 = vmatprep.subr.bf16.mxu0 0
    %7121 = vmatpush1.bf16.xpose.msra.mxu0 0
    %7122 = vmatprep.subr.bf16.mxu0 0
    %7123 = vmatpush1.bf16.xpose.msra.mxu0 0
    %7124 = vmatprep.subr.bf16.mxu0 0
    %7125 = vmatpush1.bf16.xpose.msra.mxu0 0
    %7126 = vmatprep.subr.bf16.mxu0 0
    %7127 = vmatpush1.bf16.xpose.msra.mxu0 0
    %7128 = vmatprep.subr.bf16.mxu0 0
    %7129 = vmatpush1.bf16.xpose.msra.mxu0 0
    %7130 = vmatprep.subr.bf16.mxu0 0
    %7131 = vmatpush1.bf16.xpose.msra.mxu0 0
    %7132 = vmatprep.subr.bf16.mxu0 0
    %7133 = vmatpush1.bf16.xpose.msra.mxu0 0
    %7134 = vmatprep.subr.bf16.mxu0 0
    %7135 = vmatpush1.bf16.xpose.msra.mxu0 0
    %7136 = vmatprep.subr.bf16.mxu0 0
    %7137 = vmatpush1.bf16.xpose.msra.mxu0 0
    %7138 = vmatprep.subr.bf16.mxu0 0
    %7139 = vmatpush1.bf16.xpose.msra.mxu0 0
    %7140 = vmatprep.subr.bf16.mxu0 0
    %7141 = vmatpush1.bf16.xpose.msra.mxu0 0
    %7142 = vmatprep.subr.bf16.mxu0 0
    %7143 = vmatpush1.bf16.xpose.msra.mxu0 0
    %7144 = vmatprep.subr.bf16.mxu0 0
    %7145 = vmatpush1.bf16.xpose.msra.mxu0 0
    %7146 = vmatprep.subr.bf16.mxu0 0
    %7147 = vmatpush1.bf16.xpose.msra.mxu0 0
    %7148 = vmatprep.mubr.bf16.mxu0 0
    %7149 = vmatmul.mubr.bf16.gmra.mrb[0].mxu0 %v7040
    %v7150 = vpop.f32.mrb[0].mxu0
    %v7151 = vadd.f32 %v7111, %v7150
    %v7152 = vpop.f32.mrb[0].mxu0
    %v7153 = vpop.f32.mrb[0].mxu0
    %v7154 = vpop.f32.mrb[0].mxu0
    %7155 = vdwg.mxu0
    %v7156 = vadd.f32 %v7022, %v7151
    %v7157 = vld [vmem:[#allocation3 + $0x78] sm:$0xf]
    %v7158 = vld [vmem:[#allocation3 + $0x80] sm:$0xf]
    %v7159 = vld [vmem:[#allocation3 + $0x88] sm:$0xf]
    %s7160 = scalar_lea.vmem [#allocation9], 480
    %v7161 = vld [vmem:[%s7160] sm:$0xff]
    %v7162 = vld [vmem:[%s7160 + $0x8] sm:$0xf]
    %v7163 = vld [vmem:[%s7160 + $0xc] sm:$0xff]
    %v7164 = vld [vmem:[%s7160 + $0x14] sm:$0xf]
    %v7165 = vld [vmem:[%s7160 + $0x18] sm:$0xff]
    %v7166 = vld [vmem:[%s7160 + $0x20] sm:$0xf]
    %v7167 = vld [vmem:[%s7160 + $0x24] sm:$0xff]
    %v7168 = vld [vmem:[%s7160 + $0x2c] sm:$0xf]
    %v7177 = vunpack.c.l.b16 %v7161
    %v7178 = vunpack.c.h.b16 %v7161
    %v7179 = vunpack.c.l.b16 %v7162
    %v7180 = vunpack.c.l.b16 %v7163
    %v7181 = vunpack.c.h.b16 %v7163
    %v7182 = vunpack.c.l.b16 %v7164
    %v7183 = vunpack.c.l.b16 %v7165
    %v7184 = vunpack.c.h.b16 %v7165
    %v7185 = vunpack.c.l.b16 %v7166
    %v7186 = vunpack.c.l.b16 %v7167
    %v7187 = vunpack.c.h.b16 %v7167
    %v7188 = vunpack.c.l.b16 %v7168
    %v7189 = vpack.c.b16 %v7180, %v7177
    %v7190 = vpack.c.b16 %v7181, %v7178
    %v7191 = vpack.c.b16 %v7182, %v7179
    %v7192 = vpack.c.b16 %v7186, %v7183
    %v7193 = vpack.c.b16 %v7187, %v7184
    %v7194 = vpack.c.b16 %v7188, %v7185
    %7201 = vmatprep.subr.bf16.mxu0 %v7190
    %7202 = vmatpush1.bf16.xpose.msra.mxu0 %v7189
    %7203 = vmatprep.subr.bf16.mxu0 %v7193
    %7204 = vmatpush1.bf16.xpose.msra.mxu0 %v7192
    %7205 = vmatprep.subr.bf16.mxu0 0
    %7206 = vmatpush1.bf16.xpose.msra.mxu0 0
    %7207 = vmatprep.subr.bf16.mxu0 0
    %7208 = vmatpush1.bf16.xpose.msra.mxu0 0
    %7209 = vmatprep.subr.bf16.mxu0 0
    %7210 = vmatpush1.bf16.xpose.msra.mxu0 0
    %7211 = vmatprep.subr.bf16.mxu0 0
    %7212 = vmatpush1.bf16.xpose.msra.mxu0 0
    %7213 = vmatprep.subr.bf16.mxu0 0
    %7214 = vmatpush1.bf16.xpose.msra.mxu0 0
    %7215 = vmatprep.subr.bf16.mxu0 0
    %7216 = vmatpush1.bf16.xpose.msra.mxu0 0
    %7217 = vmatprep.subr.bf16.mxu0 0
    %7218 = vmatpush1.bf16.xpose.msra.mxu0 0
    %7219 = vmatprep.subr.bf16.mxu0 0
    %7220 = vmatpush1.bf16.xpose.msra.mxu0 0
    %7221 = vmatprep.subr.bf16.mxu0 0
    %7222 = vmatpush1.bf16.xpose.msra.mxu0 0
    %7223 = vmatprep.subr.bf16.mxu0 0
    %7224 = vmatpush1.bf16.xpose.msra.mxu0 0
    %7225 = vmatprep.subr.bf16.mxu0 0
    %7226 = vmatpush1.bf16.xpose.msra.mxu0 0
    %7227 = vmatprep.subr.bf16.mxu0 0
    %7228 = vmatpush1.bf16.xpose.msra.mxu0 0
    %7229 = vmatprep.subr.bf16.mxu0 0
    %7230 = vmatpush1.bf16.xpose.msra.mxu0 0
    %7231 = vmatprep.subr.bf16.mxu0 0
    %7232 = vmatpush1.bf16.xpose.msra.mxu0 0
    %7233 = vmatprep.mubr.bf16.mxu0 %v7158
    %7234 = vmatmul.mubr.bf16.gmra.mrb[0].mxu0 %v7157
    %v7235 = vpop.f32.mrb[0].mxu0
    %v7236 = vadd.f32 0.0, %v7235
    %v7237 = vpop.f32.mrb[0].mxu0
    %v7238 = vpop.f32.mrb[0].mxu0
    %v7239 = vpop.f32.mrb[0].mxu0
    %7240 = vdwg.mxu0
    %7241 = vmatprep.subr.bf16.mxu0 0
    %7242 = vmatpush1.bf16.xpose.msra.mxu0 %v7191
    %7243 = vmatprep.subr.bf16.mxu0 0
    %7244 = vmatpush1.bf16.xpose.msra.mxu0 %v7194
    %7245 = vmatprep.subr.bf16.mxu0 0
    %7246 = vmatpush1.bf16.xpose.msra.mxu0 0
    %7247 = vmatprep.subr.bf16.mxu0 0
    %7248 = vmatpush1.bf16.xpose.msra.mxu0 0
    %7249 = vmatprep.subr.bf16.mxu0 0
    %7250 = vmatpush1.bf16.xpose.msra.mxu0 0
    %7251 = vmatprep.subr.bf16.mxu0 0
    %7252 = vmatpush1.bf16.xpose.msra.mxu0 0
    %7253 = vmatprep.subr.bf16.mxu0 0
    %7254 = vmatpush1.bf16.xpose.msra.mxu0 0
    %7255 = vmatprep.subr.bf16.mxu0 0
    %7256 = vmatpush1.bf16.xpose.msra.mxu0 0
    %7257 = vmatprep.subr.bf16.mxu0 0
    %7258 = vmatpush1.bf16.xpose.msra.mxu0 0
    %7259 = vmatprep.subr.bf16.mxu0 0
    %7260 = vmatpush1.bf16.xpose.msra.mxu0 0
    %7261 = vmatprep.subr.bf16.mxu0 0
    %7262 = vmatpush1.bf16.xpose.msra.mxu0 0
    %7263 = vmatprep.subr.bf16.mxu0 0
    %7264 = vmatpush1.bf16.xpose.msra.mxu0 0
    %7265 = vmatprep.subr.bf16.mxu0 0
    %7266 = vmatpush1.bf16.xpose.msra.mxu0 0
    %7267 = vmatprep.subr.bf16.mxu0 0
    %7268 = vmatpush1.bf16.xpose.msra.mxu0 0
    %7269 = vmatprep.subr.bf16.mxu0 0
    %7270 = vmatpush1.bf16.xpose.msra.mxu0 0
    %7271 = vmatprep.subr.bf16.mxu0 0
    %7272 = vmatpush1.bf16.xpose.msra.mxu0 0
    %7273 = vmatprep.mubr.bf16.mxu0 0
    %7274 = vmatmul.mubr.bf16.gmra.mrb[0].mxu0 %v7159
    %v7275 = vpop.f32.mrb[0].mxu0
    %v7276 = vadd.f32 %v7236, %v7275
    %v7277 = vpop.f32.mrb[0].mxu0
    %v7278 = vpop.f32.mrb[0].mxu0
    %v7279 = vpop.f32.mrb[0].mxu0
    %7280 = vdwg.mxu0
    %v7281 = vadd.f32 %v7156, %v7276
    %v7282 = vld [vmem:[#allocation3 + $0x78] sm:$0xf0]
    %v7283 = vld [vmem:[#allocation3 + $0x80] sm:$0xf0]
    %v7284 = vld [vmem:[#allocation3 + $0x88] sm:$0xf0]
    %s7285 = scalar_lea.vmem [#allocation9], 528
    %v7286 = vld [vmem:[%s7285] sm:$0xff]
    %v7287 = vld [vmem:[%s7285 + $0x8] sm:$0xf]
    %v7288 = vld [vmem:[%s7285 + $0xc] sm:$0xff]
    %v7289 = vld [vmem:[%s7285 + $0x14] sm:$0xf]
    %v7290 = vld [vmem:[%s7285 + $0x18] sm:$0xff]
    %v7291 = vld [vmem:[%s7285 + $0x20] sm:$0xf]
    %v7292 = vld [vmem:[%s7285 + $0x24] sm:$0xff]
    %v7293 = vld [vmem:[%s7285 + $0x2c] sm:$0xf]
    %v7297 = vrot.slane %v7282, 4
    %v7298 = vrot.slane %v7283, 4
    %v7299 = vrot.slane %v7284, 4
    %v7311 = vunpack.c.l.b16 %v7286
    %v7312 = vunpack.c.h.b16 %v7286
    %v7313 = vunpack.c.l.b16 %v7287
    %v7314 = vunpack.c.l.b16 %v7288
    %v7315 = vunpack.c.h.b16 %v7288
    %v7316 = vunpack.c.l.b16 %v7289
    %v7317 = vunpack.c.l.b16 %v7290
    %v7318 = vunpack.c.h.b16 %v7290
    %v7319 = vunpack.c.l.b16 %v7291
    %v7320 = vunpack.c.l.b16 %v7292
    %v7321 = vunpack.c.h.b16 %v7292
    %v7322 = vunpack.c.l.b16 %v7293
    %v7323 = vpack.c.b16 %v7314, %v7311
    %v7324 = vpack.c.b16 %v7315, %v7312
    %v7325 = vpack.c.b16 %v7316, %v7313
    %v7326 = vpack.c.b16 %v7320, %v7317
    %v7327 = vpack.c.b16 %v7321, %v7318
    %v7328 = vpack.c.b16 %v7322, %v7319
    %7335 = vmatprep.subr.bf16.mxu0 %v7324
    %7336 = vmatpush1.bf16.xpose.msra.mxu0 %v7323
    %7337 = vmatprep.subr.bf16.mxu0 %v7327
    %7338 = vmatpush1.bf16.xpose.msra.mxu0 %v7326
    %7339 = vmatprep.subr.bf16.mxu0 0
    %7340 = vmatpush1.bf16.xpose.msra.mxu0 0
    %7341 = vmatprep.subr.bf16.mxu0 0
    %7342 = vmatpush1.bf16.xpose.msra.mxu0 0
    %7343 = vmatprep.subr.bf16.mxu0 0
    %7344 = vmatpush1.bf16.xpose.msra.mxu0 0
    %7345 = vmatprep.subr.bf16.mxu0 0
    %7346 = vmatpush1.bf16.xpose.msra.mxu0 0
    %7347 = vmatprep.subr.bf16.mxu0 0
    %7348 = vmatpush1.bf16.xpose.msra.mxu0 0
    %7349 = vmatprep.subr.bf16.mxu0 0
    %7350 = vmatpush1.bf16.xpose.msra.mxu0 0
    %7351 = vmatprep.subr.bf16.mxu0 0
    %7352 = vmatpush1.bf16.xpose.msra.mxu0 0
    %7353 = vmatprep.subr.bf16.mxu0 0
    %7354 = vmatpush1.bf16.xpose.msra.mxu0 0
    %7355 = vmatprep.subr.bf16.mxu0 0
    %7356 = vmatpush1.bf16.xpose.msra.mxu0 0
    %7357 = vmatprep.subr.bf16.mxu0 0
    %7358 = vmatpush1.bf16.xpose.msra.mxu0 0
    %7359 = vmatprep.subr.bf16.mxu0 0
    %7360 = vmatpush1.bf16.xpose.msra.mxu0 0
    %7361 = vmatprep.subr.bf16.mxu0 0
    %7362 = vmatpush1.bf16.xpose.msra.mxu0 0
    %7363 = vmatprep.subr.bf16.mxu0 0
    %7364 = vmatpush1.bf16.xpose.msra.mxu0 0
    %7365 = vmatprep.subr.bf16.mxu0 0
    %7366 = vmatpush1.bf16.xpose.msra.mxu0 0
    %7367 = vmatprep.mubr.bf16.mxu0 %v7298
    %7368 = vmatmul.mubr.bf16.gmra.mrb[0].mxu0 %v7297
    %v7369 = vpop.f32.mrb[0].mxu0
    %v7370 = vadd.f32 0.0, %v7369
    %v7371 = vpop.f32.mrb[0].mxu0
    %v7372 = vpop.f32.mrb[0].mxu0
    %v7373 = vpop.f32.mrb[0].mxu0
    %7374 = vdwg.mxu0
    %7375 = vmatprep.subr.bf16.mxu0 0
    %7376 = vmatpush1.bf16.xpose.msra.mxu0 %v7325
    %7377 = vmatprep.subr.bf16.mxu0 0
    %7378 = vmatpush1.bf16.xpose.msra.mxu0 %v7328
    %7379 = vmatprep.subr.bf16.mxu0 0
    %7380 = vmatpush1.bf16.xpose.msra.mxu0 0
    %7381 = vmatprep.subr.bf16.mxu0 0
    %7382 = vmatpush1.bf16.xpose.msra.mxu0 0
    %7383 = vmatprep.subr.bf16.mxu0 0
    %7384 = vmatpush1.bf16.xpose.msra.mxu0 0
    %7385 = vmatprep.subr.bf16.mxu0 0
    %7386 = vmatpush1.bf16.xpose.msra.mxu0 0
    %7387 = vmatprep.subr.bf16.mxu0 0
    %7388 = vmatpush1.bf16.xpose.msra.mxu0 0
    %7389 = vmatprep.subr.bf16.mxu0 0
    %7390 = vmatpush1.bf16.xpose.msra.mxu0 0
    %7391 = vmatprep.subr.bf16.mxu0 0
    %7392 = vmatpush1.bf16.xpose.msra.mxu0 0
    %7393 = vmatprep.subr.bf16.mxu0 0
    %7394 = vmatpush1.bf16.xpose.msra.mxu0 0
    %7395 = vmatprep.subr.bf16.mxu0 0
    %7396 = vmatpush1.bf16.xpose.msra.mxu0 0
    %7397 = vmatprep.subr.bf16.mxu0 0
    %7398 = vmatpush1.bf16.xpose.msra.mxu0 0
    %7399 = vmatprep.subr.bf16.mxu0 0
    %7400 = vmatpush1.bf16.xpose.msra.mxu0 0
    %7401 = vmatprep.subr.bf16.mxu0 0
    %7402 = vmatpush1.bf16.xpose.msra.mxu0 0
    %7403 = vmatprep.subr.bf16.mxu0 0
    %7404 = vmatpush1.bf16.xpose.msra.mxu0 0
    %7405 = vmatprep.subr.bf16.mxu0 0
    %7406 = vmatpush1.bf16.xpose.msra.mxu0 0
    %7407 = vmatprep.mubr.bf16.mxu0 0
    %7408 = vmatmul.mubr.bf16.gmra.mrb[0].mxu0 %v7299
    %v7409 = vpop.f32.mrb[0].mxu0
    %v7410 = vadd.f32 %v7370, %v7409
    %v7411 = vpop.f32.mrb[0].mxu0
    %v7412 = vpop.f32.mrb[0].mxu0
    %v7413 = vpop.f32.mrb[0].mxu0
    %7414 = vdwg.mxu0
    %v7415 = vadd.f32 %v7281, %v7410
    %v7416 = vld [vmem:[#allocation3 + $0x90] sm:$0xf]
    %v7417 = vld [vmem:[#allocation3 + $0x98] sm:$0xf]
    %v7418 = vld [vmem:[#allocation3 + $0xa0] sm:$0xf]
    %s7419 = scalar_lea.vmem [#allocation9], 576
    %v7420 = vld [vmem:[%s7419] sm:$0xff]
    %v7421 = vld [vmem:[%s7419 + $0x8] sm:$0xf]
    %v7422 = vld [vmem:[%s7419 + $0xc] sm:$0xff]
    %v7423 = vld [vmem:[%s7419 + $0x14] sm:$0xf]
    %v7424 = vld [vmem:[%s7419 + $0x18] sm:$0xff]
    %v7425 = vld [vmem:[%s7419 + $0x20] sm:$0xf]
    %v7426 = vld [vmem:[%s7419 + $0x24] sm:$0xff]
    %v7427 = vld [vmem:[%s7419 + $0x2c] sm:$0xf]
    %v7436 = vunpack.c.l.b16 %v7420
    %v7437 = vunpack.c.h.b16 %v7420
    %v7438 = vunpack.c.l.b16 %v7421
    %v7439 = vunpack.c.l.b16 %v7422
    %v7440 = vunpack.c.h.b16 %v7422
    %v7441 = vunpack.c.l.b16 %v7423
    %v7442 = vunpack.c.l.b16 %v7424
    %v7443 = vunpack.c.h.b16 %v7424
    %v7444 = vunpack.c.l.b16 %v7425
    %v7445 = vunpack.c.l.b16 %v7426
    %v7446 = vunpack.c.h.b16 %v7426
    %v7447 = vunpack.c.l.b16 %v7427
    %v7448 = vpack.c.b16 %v7439, %v7436
    %v7449 = vpack.c.b16 %v7440, %v7437
    %v7450 = vpack.c.b16 %v7441, %v7438
    %v7451 = vpack.c.b16 %v7445, %v7442
    %v7452 = vpack.c.b16 %v7446, %v7443
    %v7453 = vpack.c.b16 %v7447, %v7444
    %7460 = vmatprep.subr.bf16.mxu0 %v7449
    %7461 = vmatpush1.bf16.xpose.msra.mxu0 %v7448
    %7462 = vmatprep.subr.bf16.mxu0 %v7452
    %7463 = vmatpush1.bf16.xpose.msra.mxu0 %v7451
    %7464 = vmatprep.subr.bf16.mxu0 0
    %7465 = vmatpush1.bf16.xpose.msra.mxu0 0
    %7466 = vmatprep.subr.bf16.mxu0 0
    %7467 = vmatpush1.bf16.xpose.msra.mxu0 0
    %7468 = vmatprep.subr.bf16.mxu0 0
    %7469 = vmatpush1.bf16.xpose.msra.mxu0 0
    %7470 = vmatprep.subr.bf16.mxu0 0
    %7471 = vmatpush1.bf16.xpose.msra.mxu0 0
    %7472 = vmatprep.subr.bf16.mxu0 0
    %7473 = vmatpush1.bf16.xpose.msra.mxu0 0
    %7474 = vmatprep.subr.bf16.mxu0 0
    %7475 = vmatpush1.bf16.xpose.msra.mxu0 0
    %7476 = vmatprep.subr.bf16.mxu0 0
    %7477 = vmatpush1.bf16.xpose.msra.mxu0 0
    %7478 = vmatprep.subr.bf16.mxu0 0
    %7479 = vmatpush1.bf16.xpose.msra.mxu0 0
    %7480 = vmatprep.subr.bf16.mxu0 0
    %7481 = vmatpush1.bf16.xpose.msra.mxu0 0
    %7482 = vmatprep.subr.bf16.mxu0 0
    %7483 = vmatpush1.bf16.xpose.msra.mxu0 0
    %7484 = vmatprep.subr.bf16.mxu0 0
    %7485 = vmatpush1.bf16.xpose.msra.mxu0 0
    %7486 = vmatprep.subr.bf16.mxu0 0
    %7487 = vmatpush1.bf16.xpose.msra.mxu0 0
    %7488 = vmatprep.subr.bf16.mxu0 0
    %7489 = vmatpush1.bf16.xpose.msra.mxu0 0
    %7490 = vmatprep.subr.bf16.mxu0 0
    %7491 = vmatpush1.bf16.xpose.msra.mxu0 0
    %7492 = vmatprep.mubr.bf16.mxu0 %v7417
    %7493 = vmatmul.mubr.bf16.gmra.mrb[0].mxu0 %v7416
    %v7494 = vpop.f32.mrb[0].mxu0
    %v7495 = vadd.f32 0.0, %v7494
    %v7496 = vpop.f32.mrb[0].mxu0
    %v7497 = vpop.f32.mrb[0].mxu0
    %v7498 = vpop.f32.mrb[0].mxu0
    %7499 = vdwg.mxu0
    %7500 = vmatprep.subr.bf16.mxu0 0
    %7501 = vmatpush1.bf16.xpose.msra.mxu0 %v7450
    %7502 = vmatprep.subr.bf16.mxu0 0
    %7503 = vmatpush1.bf16.xpose.msra.mxu0 %v7453
    %7504 = vmatprep.subr.bf16.mxu0 0
    %7505 = vmatpush1.bf16.xpose.msra.mxu0 0
    %7506 = vmatprep.subr.bf16.mxu0 0
    %7507 = vmatpush1.bf16.xpose.msra.mxu0 0
    %7508 = vmatprep.subr.bf16.mxu0 0
    %7509 = vmatpush1.bf16.xpose.msra.mxu0 0
    %7510 = vmatprep.subr.bf16.mxu0 0
    %7511 = vmatpush1.bf16.xpose.msra.mxu0 0
    %7512 = vmatprep.subr.bf16.mxu0 0
    %7513 = vmatpush1.bf16.xpose.msra.mxu0 0
    %7514 = vmatprep.subr.bf16.mxu0 0
    %7515 = vmatpush1.bf16.xpose.msra.mxu0 0
    %7516 = vmatprep.subr.bf16.mxu0 0
    %7517 = vmatpush1.bf16.xpose.msra.mxu0 0
    %7518 = vmatprep.subr.bf16.mxu0 0
    %7519 = vmatpush1.bf16.xpose.msra.mxu0 0
    %7520 = vmatprep.subr.bf16.mxu0 0
    %7521 = vmatpush1.bf16.xpose.msra.mxu0 0
    %7522 = vmatprep.subr.bf16.mxu0 0
    %7523 = vmatpush1.bf16.xpose.msra.mxu0 0
    %7524 = vmatprep.subr.bf16.mxu0 0
    %7525 = vmatpush1.bf16.xpose.msra.mxu0 0
    %7526 = vmatprep.subr.bf16.mxu0 0
    %7527 = vmatpush1.bf16.xpose.msra.mxu0 0
    %7528 = vmatprep.subr.bf16.mxu0 0
    %7529 = vmatpush1.bf16.xpose.msra.mxu0 0
    %7530 = vmatprep.subr.bf16.mxu0 0
    %7531 = vmatpush1.bf16.xpose.msra.mxu0 0
    %7532 = vmatprep.mubr.bf16.mxu0 0
    %7533 = vmatmul.mubr.bf16.gmra.mrb[0].mxu0 %v7418
    %v7534 = vpop.f32.mrb[0].mxu0
    %v7535 = vadd.f32 %v7495, %v7534
    %v7536 = vpop.f32.mrb[0].mxu0
    %v7537 = vpop.f32.mrb[0].mxu0
    %v7538 = vpop.f32.mrb[0].mxu0
    %7539 = vdwg.mxu0
    %v7540 = vadd.f32 %v7415, %v7535
    %v7541 = vld [vmem:[#allocation3 + $0x90] sm:$0xf0]
    %v7542 = vld [vmem:[#allocation3 + $0x98] sm:$0xf0]
    %v7543 = vld [vmem:[#allocation3 + $0xa0] sm:$0xf0]
    %s7544 = scalar_lea.vmem [#allocation9], 624
    %v7545 = vld [vmem:[%s7544] sm:$0xff]
    %v7546 = vld [vmem:[%s7544 + $0x8] sm:$0xf]
    %v7547 = vld [vmem:[%s7544 + $0xc] sm:$0xff]
    %v7548 = vld [vmem:[%s7544 + $0x14] sm:$0xf]
    %v7549 = vld [vmem:[%s7544 + $0x18] sm:$0xff]
    %v7550 = vld [vmem:[%s7544 + $0x20] sm:$0xf]
    %v7551 = vld [vmem:[%s7544 + $0x24] sm:$0xff]
    %v7552 = vld [vmem:[%s7544 + $0x2c] sm:$0xf]
    %v7556 = vrot.slane %v7541, 4
    %v7557 = vrot.slane %v7542, 4
    %v7558 = vrot.slane %v7543, 4
    %v7570 = vunpack.c.l.b16 %v7545
    %v7571 = vunpack.c.h.b16 %v7545
    %v7572 = vunpack.c.l.b16 %v7546
    %v7573 = vunpack.c.l.b16 %v7547
    %v7574 = vunpack.c.h.b16 %v7547
    %v7575 = vunpack.c.l.b16 %v7548
    %v7576 = vunpack.c.l.b16 %v7549
    %v7577 = vunpack.c.h.b16 %v7549
    %v7578 = vunpack.c.l.b16 %v7550
    %v7579 = vunpack.c.l.b16 %v7551
    %v7580 = vunpack.c.h.b16 %v7551
    %v7581 = vunpack.c.l.b16 %v7552
    %v7582 = vpack.c.b16 %v7573, %v7570
    %v7583 = vpack.c.b16 %v7574, %v7571
    %v7584 = vpack.c.b16 %v7575, %v7572
    %v7585 = vpack.c.b16 %v7579, %v7576
    %v7586 = vpack.c.b16 %v7580, %v7577
    %v7587 = vpack.c.b16 %v7581, %v7578
    %7594 = vmatprep.subr.bf16.mxu0 %v7583
    %7595 = vmatpush1.bf16.xpose.msra.mxu0 %v7582
    %7596 = vmatprep.subr.bf16.mxu0 %v7586
    %7597 = vmatpush1.bf16.xpose.msra.mxu0 %v7585
    %7598 = vmatprep.subr.bf16.mxu0 0
    %7599 = vmatpush1.bf16.xpose.msra.mxu0 0
    %7600 = vmatprep.subr.bf16.mxu0 0
    %7601 = vmatpush1.bf16.xpose.msra.mxu0 0
    %7602 = vmatprep.subr.bf16.mxu0 0
    %7603 = vmatpush1.bf16.xpose.msra.mxu0 0
    %7604 = vmatprep.subr.bf16.mxu0 0
    %7605 = vmatpush1.bf16.xpose.msra.mxu0 0
    %7606 = vmatprep.subr.bf16.mxu0 0
    %7607 = vmatpush1.bf16.xpose.msra.mxu0 0
    %7608 = vmatprep.subr.bf16.mxu0 0
    %7609 = vmatpush1.bf16.xpose.msra.mxu0 0
    %7610 = vmatprep.subr.bf16.mxu0 0
    %7611 = vmatpush1.bf16.xpose.msra.mxu0 0
    %7612 = vmatprep.subr.bf16.mxu0 0
    %7613 = vmatpush1.bf16.xpose.msra.mxu0 0
    %7614 = vmatprep.subr.bf16.mxu0 0
    %7615 = vmatpush1.bf16.xpose.msra.mxu0 0
    %7616 = vmatprep.subr.bf16.mxu0 0
    %7617 = vmatpush1.bf16.xpose.msra.mxu0 0
    %7618 = vmatprep.subr.bf16.mxu0 0
    %7619 = vmatpush1.bf16.xpose.msra.mxu0 0
    %7620 = vmatprep.subr.bf16.mxu0 0
    %7621 = vmatpush1.bf16.xpose.msra.mxu0 0
    %7622 = vmatprep.subr.bf16.mxu0 0
    %7623 = vmatpush1.bf16.xpose.msra.mxu0 0
    %7624 = vmatprep.subr.bf16.mxu0 0
    %7625 = vmatpush1.bf16.xpose.msra.mxu0 0
    %7626 = vmatprep.mubr.bf16.mxu0 %v7557
    %7627 = vmatmul.mubr.bf16.gmra.mrb[0].mxu0 %v7556
    %v7628 = vpop.f32.mrb[0].mxu0
    %v7629 = vadd.f32 0.0, %v7628
    %v7630 = vpop.f32.mrb[0].mxu0
    %v7631 = vpop.f32.mrb[0].mxu0
    %v7632 = vpop.f32.mrb[0].mxu0
    %7633 = vdwg.mxu0
    %7634 = vmatprep.subr.bf16.mxu0 0
    %7635 = vmatpush1.bf16.xpose.msra.mxu0 %v7584
    %7636 = vmatprep.subr.bf16.mxu0 0
    %7637 = vmatpush1.bf16.xpose.msra.mxu0 %v7587
    %7638 = vmatprep.subr.bf16.mxu0 0
    %7639 = vmatpush1.bf16.xpose.msra.mxu0 0
    %7640 = vmatprep.subr.bf16.mxu0 0
    %7641 = vmatpush1.bf16.xpose.msra.mxu0 0
    %7642 = vmatprep.subr.bf16.mxu0 0
    %7643 = vmatpush1.bf16.xpose.msra.mxu0 0
    %7644 = vmatprep.subr.bf16.mxu0 0
    %7645 = vmatpush1.bf16.xpose.msra.mxu0 0
    %7646 = vmatprep.subr.bf16.mxu0 0
    %7647 = vmatpush1.bf16.xpose.msra.mxu0 0
    %7648 = vmatprep.subr.bf16.mxu0 0
    %7649 = vmatpush1.bf16.xpose.msra.mxu0 0
    %7650 = vmatprep.subr.bf16.mxu0 0
    %7651 = vmatpush1.bf16.xpose.msra.mxu0 0
    %7652 = vmatprep.subr.bf16.mxu0 0
    %7653 = vmatpush1.bf16.xpose.msra.mxu0 0
    %7654 = vmatprep.subr.bf16.mxu0 0
    %7655 = vmatpush1.bf16.xpose.msra.mxu0 0
    %7656 = vmatprep.subr.bf16.mxu0 0
    %7657 = vmatpush1.bf16.xpose.msra.mxu0 0
    %7658 = vmatprep.subr.bf16.mxu0 0
    %7659 = vmatpush1.bf16.xpose.msra.mxu0 0
    %7660 = vmatprep.subr.bf16.mxu0 0
    %7661 = vmatpush1.bf16.xpose.msra.mxu0 0
    %7662 = vmatprep.subr.bf16.mxu0 0
    %7663 = vmatpush1.bf16.xpose.msra.mxu0 0
    %7664 = vmatprep.subr.bf16.mxu0 0
    %7665 = vmatpush1.bf16.xpose.msra.mxu0 0
    %7666 = vmatprep.mubr.bf16.mxu0 0
    %7667 = vmatmul.mubr.bf16.gmra.mrb[0].mxu0 %v7558
    %v7668 = vpop.f32.mrb[0].mxu0
    %v7669 = vadd.f32 %v7629, %v7668
    %v7670 = vpop.f32.mrb[0].mxu0
    %v7671 = vpop.f32.mrb[0].mxu0
    %v7672 = vpop.f32.mrb[0].mxu0
    %7673 = vdwg.mxu0
    %v7674 = vadd.f32 %v7540, %v7669
    %v7675 = vld [vmem:[#allocation3 + $0xa8] sm:$0xf]
    %v7676 = vld [vmem:[#allocation3 + $0xb0] sm:$0xf]
    %v7677 = vld [vmem:[#allocation3 + $0xb8] sm:$0xf]
    %s7678 = scalar_lea.vmem [#allocation9], 672
    %v7679 = vld [vmem:[%s7678] sm:$0xff]
    %v7680 = vld [vmem:[%s7678 + $0x8] sm:$0xf]
    %v7681 = vld [vmem:[%s7678 + $0xc] sm:$0xff]
    %v7682 = vld [vmem:[%s7678 + $0x14] sm:$0xf]
    %v7683 = vld [vmem:[%s7678 + $0x18] sm:$0xff]
    %v7684 = vld [vmem:[%s7678 + $0x20] sm:$0xf]
    %v7685 = vld [vmem:[%s7678 + $0x24] sm:$0xff]
    %v7686 = vld [vmem:[%s7678 + $0x2c] sm:$0xf]
    %v7695 = vunpack.c.l.b16 %v7679
    %v7696 = vunpack.c.h.b16 %v7679
    %v7697 = vunpack.c.l.b16 %v7680
    %v7698 = vunpack.c.l.b16 %v7681
    %v7699 = vunpack.c.h.b16 %v7681
    %v7700 = vunpack.c.l.b16 %v7682
    %v7701 = vunpack.c.l.b16 %v7683
    %v7702 = vunpack.c.h.b16 %v7683
    %v7703 = vunpack.c.l.b16 %v7684
    %v7704 = vunpack.c.l.b16 %v7685
    %v7705 = vunpack.c.h.b16 %v7685
    %v7706 = vunpack.c.l.b16 %v7686
    %v7707 = vpack.c.b16 %v7698, %v7695
    %v7708 = vpack.c.b16 %v7699, %v7696
    %v7709 = vpack.c.b16 %v7700, %v7697
    %v7710 = vpack.c.b16 %v7704, %v7701
    %v7711 = vpack.c.b16 %v7705, %v7702
    %v7712 = vpack.c.b16 %v7706, %v7703
    %7719 = vmatprep.subr.bf16.mxu0 %v7708
    %7720 = vmatpush1.bf16.xpose.msra.mxu0 %v7707
    %7721 = vmatprep.subr.bf16.mxu0 %v7711
    %7722 = vmatpush1.bf16.xpose.msra.mxu0 %v7710
    %7723 = vmatprep.subr.bf16.mxu0 0
    %7724 = vmatpush1.bf16.xpose.msra.mxu0 0
    %7725 = vmatprep.subr.bf16.mxu0 0
    %7726 = vmatpush1.bf16.xpose.msra.mxu0 0
    %7727 = vmatprep.subr.bf16.mxu0 0
    %7728 = vmatpush1.bf16.xpose.msra.mxu0 0
    %7729 = vmatprep.subr.bf16.mxu0 0
    %7730 = vmatpush1.bf16.xpose.msra.mxu0 0
    %7731 = vmatprep.subr.bf16.mxu0 0
    %7732 = vmatpush1.bf16.xpose.msra.mxu0 0
    %7733 = vmatprep.subr.bf16.mxu0 0
    %7734 = vmatpush1.bf16.xpose.msra.mxu0 0
    %7735 = vmatprep.subr.bf16.mxu0 0
    %7736 = vmatpush1.bf16.xpose.msra.mxu0 0
    %7737 = vmatprep.subr.bf16.mxu0 0
    %7738 = vmatpush1.bf16.xpose.msra.mxu0 0
    %7739 = vmatprep.subr.bf16.mxu0 0
    %7740 = vmatpush1.bf16.xpose.msra.mxu0 0
    %7741 = vmatprep.subr.bf16.mxu0 0
    %7742 = vmatpush1.bf16.xpose.msra.mxu0 0
    %7743 = vmatprep.subr.bf16.mxu0 0
    %7744 = vmatpush1.bf16.xpose.msra.mxu0 0
    %7745 = vmatprep.subr.bf16.mxu0 0
    %7746 = vmatpush1.bf16.xpose.msra.mxu0 0
    %7747 = vmatprep.subr.bf16.mxu0 0
    %7748 = vmatpush1.bf16.xpose.msra.mxu0 0
    %7749 = vmatprep.subr.bf16.mxu0 0
    %7750 = vmatpush1.bf16.xpose.msra.mxu0 0
    %7751 = vmatprep.mubr.bf16.mxu0 %v7676
    %7752 = vmatmul.mubr.bf16.gmra.mrb[0].mxu0 %v7675
    %v7753 = vpop.f32.mrb[0].mxu0
    %v7754 = vadd.f32 0.0, %v7753
    %v7755 = vpop.f32.mrb[0].mxu0
    %v7756 = vpop.f32.mrb[0].mxu0
    %v7757 = vpop.f32.mrb[0].mxu0
    %7758 = vdwg.mxu0
    %7759 = vmatprep.subr.bf16.mxu0 0
    %7760 = vmatpush1.bf16.xpose.msra.mxu0 %v7709
    %7761 = vmatprep.subr.bf16.mxu0 0
    %7762 = vmatpush1.bf16.xpose.msra.mxu0 %v7712
    %7763 = vmatprep.subr.bf16.mxu0 0
    %7764 = vmatpush1.bf16.xpose.msra.mxu0 0
    %7765 = vmatprep.subr.bf16.mxu0 0
    %7766 = vmatpush1.bf16.xpose.msra.mxu0 0
    %7767 = vmatprep.subr.bf16.mxu0 0
    %7768 = vmatpush1.bf16.xpose.msra.mxu0 0
    %7769 = vmatprep.subr.bf16.mxu0 0
    %7770 = vmatpush1.bf16.xpose.msra.mxu0 0
    %7771 = vmatprep.subr.bf16.mxu0 0
    %7772 = vmatpush1.bf16.xpose.msra.mxu0 0
    %7773 = vmatprep.subr.bf16.mxu0 0
    %7774 = vmatpush1.bf16.xpose.msra.mxu0 0
    %7775 = vmatprep.subr.bf16.mxu0 0
    %7776 = vmatpush1.bf16.xpose.msra.mxu0 0
    %7777 = vmatprep.subr.bf16.mxu0 0
    %7778 = vmatpush1.bf16.xpose.msra.mxu0 0
    %7779 = vmatprep.subr.bf16.mxu0 0
    %7780 = vmatpush1.bf16.xpose.msra.mxu0 0
    %7781 = vmatprep.subr.bf16.mxu0 0
    %7782 = vmatpush1.bf16.xpose.msra.mxu0 0
    %7783 = vmatprep.subr.bf16.mxu0 0
    %7784 = vmatpush1.bf16.xpose.msra.mxu0 0
    %7785 = vmatprep.subr.bf16.mxu0 0
    %7786 = vmatpush1.bf16.xpose.msra.mxu0 0
    %7787 = vmatprep.subr.bf16.mxu0 0
    %7788 = vmatpush1.bf16.xpose.msra.mxu0 0
    %7789 = vmatprep.subr.bf16.mxu0 0
    %7790 = vmatpush1.bf16.xpose.msra.mxu0 0
    %7791 = vmatprep.mubr.bf16.mxu0 0
    %7792 = vmatmul.mubr.bf16.gmra.mrb[0].mxu0 %v7677
    %v7793 = vpop.f32.mrb[0].mxu0
    %v7794 = vadd.f32 %v7754, %v7793
    %v7795 = vpop.f32.mrb[0].mxu0
    %v7796 = vpop.f32.mrb[0].mxu0
    %v7797 = vpop.f32.mrb[0].mxu0
    %7798 = vdwg.mxu0
    %v7799 = vadd.f32 %v7674, %v7794
    %v7800 = vld [vmem:[#allocation3 + $0xa8] sm:$0xf0]
    %v7801 = vld [vmem:[#allocation3 + $0xb0] sm:$0xf0]
    %v7802 = vld [vmem:[#allocation3 + $0xb8] sm:$0xf0]
    %s7803 = scalar_lea.vmem [#allocation9], 720
    %v7804 = vld [vmem:[%s7803] sm:$0xff]
    %v7805 = vld [vmem:[%s7803 + $0x8] sm:$0xf]
    %v7806 = vld [vmem:[%s7803 + $0xc] sm:$0xff]
    %v7807 = vld [vmem:[%s7803 + $0x14] sm:$0xf]
    %v7808 = vld [vmem:[%s7803 + $0x18] sm:$0xff]
    %v7809 = vld [vmem:[%s7803 + $0x20] sm:$0xf]
    %v7810 = vld [vmem:[%s7803 + $0x24] sm:$0xff]
    %v7811 = vld [vmem:[%s7803 + $0x2c] sm:$0xf]
    %v7815 = vrot.slane %v7800, 4
    %v7816 = vrot.slane %v7801, 4
    %v7817 = vrot.slane %v7802, 4
    %v7829 = vunpack.c.l.b16 %v7804
    %v7830 = vunpack.c.h.b16 %v7804
    %v7831 = vunpack.c.l.b16 %v7805
    %v7832 = vunpack.c.l.b16 %v7806
    %v7833 = vunpack.c.h.b16 %v7806
    %v7834 = vunpack.c.l.b16 %v7807
    %v7835 = vunpack.c.l.b16 %v7808
    %v7836 = vunpack.c.h.b16 %v7808
    %v7837 = vunpack.c.l.b16 %v7809
    %v7838 = vunpack.c.l.b16 %v7810
    %v7839 = vunpack.c.h.b16 %v7810
    %v7840 = vunpack.c.l.b16 %v7811
    %v7841 = vpack.c.b16 %v7832, %v7829
    %v7842 = vpack.c.b16 %v7833, %v7830
    %v7843 = vpack.c.b16 %v7834, %v7831
    %v7844 = vpack.c.b16 %v7838, %v7835
    %v7845 = vpack.c.b16 %v7839, %v7836
    %v7846 = vpack.c.b16 %v7840, %v7837
    %7853 = vmatprep.subr.bf16.mxu0 %v7842
    %7854 = vmatpush1.bf16.xpose.msra.mxu0 %v7841
    %7855 = vmatprep.subr.bf16.mxu0 %v7845
    %7856 = vmatpush1.bf16.xpose.msra.mxu0 %v7844
    %7857 = vmatprep.subr.bf16.mxu0 0
    %7858 = vmatpush1.bf16.xpose.msra.mxu0 0
    %7859 = vmatprep.subr.bf16.mxu0 0
    %7860 = vmatpush1.bf16.xpose.msra.mxu0 0
    %7861 = vmatprep.subr.bf16.mxu0 0
    %7862 = vmatpush1.bf16.xpose.msra.mxu0 0
    %7863 = vmatprep.subr.bf16.mxu0 0
    %7864 = vmatpush1.bf16.xpose.msra.mxu0 0
    %7865 = vmatprep.subr.bf16.mxu0 0
    %7866 = vmatpush1.bf16.xpose.msra.mxu0 0
    %7867 = vmatprep.subr.bf16.mxu0 0
    %7868 = vmatpush1.bf16.xpose.msra.mxu0 0
    %7869 = vmatprep.subr.bf16.mxu0 0
    %7870 = vmatpush1.bf16.xpose.msra.mxu0 0
    %7871 = vmatprep.subr.bf16.mxu0 0
    %7872 = vmatpush1.bf16.xpose.msra.mxu0 0
    %7873 = vmatprep.subr.bf16.mxu0 0
    %7874 = vmatpush1.bf16.xpose.msra.mxu0 0
    %7875 = vmatprep.subr.bf16.mxu0 0
    %7876 = vmatpush1.bf16.xpose.msra.mxu0 0
    %7877 = vmatprep.subr.bf16.mxu0 0
    %7878 = vmatpush1.bf16.xpose.msra.mxu0 0
    %7879 = vmatprep.subr.bf16.mxu0 0
    %7880 = vmatpush1.bf16.xpose.msra.mxu0 0
    %7881 = vmatprep.subr.bf16.mxu0 0
    %7882 = vmatpush1.bf16.xpose.msra.mxu0 0
    %7883 = vmatprep.subr.bf16.mxu0 0
    %7884 = vmatpush1.bf16.xpose.msra.mxu0 0
    %7885 = vmatprep.mubr.bf16.mxu0 %v7816
    %7886 = vmatmul.mubr.bf16.gmra.mrb[0].mxu0 %v7815
    %v7887 = vpop.f32.mrb[0].mxu0
    %v7888 = vadd.f32 0.0, %v7887
    %v7889 = vpop.f32.mrb[0].mxu0
    %v7890 = vpop.f32.mrb[0].mxu0
    %v7891 = vpop.f32.mrb[0].mxu0
    %7892 = vdwg.mxu0
    %7893 = vmatprep.subr.bf16.mxu0 0
    %7894 = vmatpush1.bf16.xpose.msra.mxu0 %v7843
    %7895 = vmatprep.subr.bf16.mxu0 0
    %7896 = vmatpush1.bf16.xpose.msra.mxu0 %v7846
    %7897 = vmatprep.subr.bf16.mxu0 0
    %7898 = vmatpush1.bf16.xpose.msra.mxu0 0
    %7899 = vmatprep.subr.bf16.mxu0 0
    %7900 = vmatpush1.bf16.xpose.msra.mxu0 0
    %7901 = vmatprep.subr.bf16.mxu0 0
    %7902 = vmatpush1.bf16.xpose.msra.mxu0 0
    %7903 = vmatprep.subr.bf16.mxu0 0
    %7904 = vmatpush1.bf16.xpose.msra.mxu0 0
    %7905 = vmatprep.subr.bf16.mxu0 0
    %7906 = vmatpush1.bf16.xpose.msra.mxu0 0
    %7907 = vmatprep.subr.bf16.mxu0 0
    %7908 = vmatpush1.bf16.xpose.msra.mxu0 0
    %7909 = vmatprep.subr.bf16.mxu0 0
    %7910 = vmatpush1.bf16.xpose.msra.mxu0 0
    %7911 = vmatprep.subr.bf16.mxu0 0
    %7912 = vmatpush1.bf16.xpose.msra.mxu0 0
    %7913 = vmatprep.subr.bf16.mxu0 0
    %7914 = vmatpush1.bf16.xpose.msra.mxu0 0
    %7915 = vmatprep.subr.bf16.mxu0 0
    %7916 = vmatpush1.bf16.xpose.msra.mxu0 0
    %7917 = vmatprep.subr.bf16.mxu0 0
    %7918 = vmatpush1.bf16.xpose.msra.mxu0 0
    %7919 = vmatprep.subr.bf16.mxu0 0
    %7920 = vmatpush1.bf16.xpose.msra.mxu0 0
    %7921 = vmatprep.subr.bf16.mxu0 0
    %7922 = vmatpush1.bf16.xpose.msra.mxu0 0
    %7923 = vmatprep.subr.bf16.mxu0 0
    %7924 = vmatpush1.bf16.xpose.msra.mxu0 0
    %7925 = vmatprep.mubr.bf16.mxu0 0
    %7926 = vmatmul.mubr.bf16.gmra.mrb[0].mxu0 %v7817
    %v7927 = vpop.f32.mrb[0].mxu0
    %v7928 = vadd.f32 %v7888, %v7927
    %v7929 = vpop.f32.mrb[0].mxu0
    %v7930 = vpop.f32.mrb[0].mxu0
    %v7931 = vpop.f32.mrb[0].mxu0
    %7932 = vdwg.mxu0
    %v7933 = vadd.f32 %v7799, %v7928
    %v7934 = vld [vmem:[#allocation3 + $0xc0] sm:$0xf]
    %v7935 = vld [vmem:[#allocation3 + $0xc8] sm:$0xf]
    %v7936 = vld [vmem:[#allocation3 + $0xd0] sm:$0xf]
    %s7937 = scalar_lea.vmem [#allocation9], 768
    %v7938 = vld [vmem:[%s7937] sm:$0xff]
    %v7939 = vld [vmem:[%s7937 + $0x8] sm:$0xf]
    %v7940 = vld [vmem:[%s7937 + $0xc] sm:$0xff]
    %v7941 = vld [vmem:[%s7937 + $0x14] sm:$0xf]
    %v7942 = vld [vmem:[%s7937 + $0x18] sm:$0xff]
    %v7943 = vld [vmem:[%s7937 + $0x20] sm:$0xf]
    %v7944 = vld [vmem:[%s7937 + $0x24] sm:$0xff]
    %v7945 = vld [vmem:[%s7937 + $0x2c] sm:$0xf]
    %v7954 = vunpack.c.l.b16 %v7938
    %v7955 = vunpack.c.h.b16 %v7938
    %v7956 = vunpack.c.l.b16 %v7939
    %v7957 = vunpack.c.l.b16 %v7940
    %v7958 = vunpack.c.h.b16 %v7940
    %v7959 = vunpack.c.l.b16 %v7941
    %v7960 = vunpack.c.l.b16 %v7942
    %v7961 = vunpack.c.h.b16 %v7942
    %v7962 = vunpack.c.l.b16 %v7943
    %v7963 = vunpack.c.l.b16 %v7944
    %v7964 = vunpack.c.h.b16 %v7944
    %v7965 = vunpack.c.l.b16 %v7945
    %v7966 = vpack.c.b16 %v7957, %v7954
    %v7967 = vpack.c.b16 %v7958, %v7955
    %v7968 = vpack.c.b16 %v7959, %v7956
    %v7969 = vpack.c.b16 %v7963, %v7960
    %v7970 = vpack.c.b16 %v7964, %v7961
    %v7971 = vpack.c.b16 %v7965, %v7962
    %7978 = vmatprep.subr.bf16.mxu0 %v7967
    %7979 = vmatpush1.bf16.xpose.msra.mxu0 %v7966
    %7980 = vmatprep.subr.bf16.mxu0 %v7970
    %7981 = vmatpush1.bf16.xpose.msra.mxu0 %v7969
    %7982 = vmatprep.subr.bf16.mxu0 0
    %7983 = vmatpush1.bf16.xpose.msra.mxu0 0
    %7984 = vmatprep.subr.bf16.mxu0 0
    %7985 = vmatpush1.bf16.xpose.msra.mxu0 0
    %7986 = vmatprep.subr.bf16.mxu0 0
    %7987 = vmatpush1.bf16.xpose.msra.mxu0 0
    %7988 = vmatprep.subr.bf16.mxu0 0
    %7989 = vmatpush1.bf16.xpose.msra.mxu0 0
    %7990 = vmatprep.subr.bf16.mxu0 0
    %7991 = vmatpush1.bf16.xpose.msra.mxu0 0
    %7992 = vmatprep.subr.bf16.mxu0 0
    %7993 = vmatpush1.bf16.xpose.msra.mxu0 0
    %7994 = vmatprep.subr.bf16.mxu0 0
    %7995 = vmatpush1.bf16.xpose.msra.mxu0 0
    %7996 = vmatprep.subr.bf16.mxu0 0
    %7997 = vmatpush1.bf16.xpose.msra.mxu0 0
    %7998 = vmatprep.subr.bf16.mxu0 0
    %7999 = vmatpush1.bf16.xpose.msra.mxu0 0
    %8000 = vmatprep.subr.bf16.mxu0 0
    %8001 = vmatpush1.bf16.xpose.msra.mxu0 0
    %8002 = vmatprep.subr.bf16.mxu0 0
    %8003 = vmatpush1.bf16.xpose.msra.mxu0 0
    %8004 = vmatprep.subr.bf16.mxu0 0
    %8005 = vmatpush1.bf16.xpose.msra.mxu0 0
    %8006 = vmatprep.subr.bf16.mxu0 0
    %8007 = vmatpush1.bf16.xpose.msra.mxu0 0
    %8008 = vmatprep.subr.bf16.mxu0 0
    %8009 = vmatpush1.bf16.xpose.msra.mxu0 0
    %8010 = vmatprep.mubr.bf16.mxu0 %v7935
    %8011 = vmatmul.mubr.bf16.gmra.mrb[0].mxu0 %v7934
    %v8012 = vpop.f32.mrb[0].mxu0
    %v8013 = vadd.f32 0.0, %v8012
    %v8014 = vpop.f32.mrb[0].mxu0
    %v8015 = vpop.f32.mrb[0].mxu0
    %v8016 = vpop.f32.mrb[0].mxu0
    %8017 = vdwg.mxu0
    %8018 = vmatprep.subr.bf16.mxu0 0
    %8019 = vmatpush1.bf16.xpose.msra.mxu0 %v7968
    %8020 = vmatprep.subr.bf16.mxu0 0
    %8021 = vmatpush1.bf16.xpose.msra.mxu0 %v7971
    %8022 = vmatprep.subr.bf16.mxu0 0
    %8023 = vmatpush1.bf16.xpose.msra.mxu0 0
    %8024 = vmatprep.subr.bf16.mxu0 0
    %8025 = vmatpush1.bf16.xpose.msra.mxu0 0
    %8026 = vmatprep.subr.bf16.mxu0 0
    %8027 = vmatpush1.bf16.xpose.msra.mxu0 0
    %8028 = vmatprep.subr.bf16.mxu0 0
    %8029 = vmatpush1.bf16.xpose.msra.mxu0 0
    %8030 = vmatprep.subr.bf16.mxu0 0
    %8031 = vmatpush1.bf16.xpose.msra.mxu0 0
    %8032 = vmatprep.subr.bf16.mxu0 0
    %8033 = vmatpush1.bf16.xpose.msra.mxu0 0
    %8034 = vmatprep.subr.bf16.mxu0 0
    %8035 = vmatpush1.bf16.xpose.msra.mxu0 0
    %8036 = vmatprep.subr.bf16.mxu0 0
    %8037 = vmatpush1.bf16.xpose.msra.mxu0 0
    %8038 = vmatprep.subr.bf16.mxu0 0
    %8039 = vmatpush1.bf16.xpose.msra.mxu0 0
    %8040 = vmatprep.subr.bf16.mxu0 0
    %8041 = vmatpush1.bf16.xpose.msra.mxu0 0
    %8042 = vmatprep.subr.bf16.mxu0 0
    %8043 = vmatpush1.bf16.xpose.msra.mxu0 0
    %8044 = vmatprep.subr.bf16.mxu0 0
    %8045 = vmatpush1.bf16.xpose.msra.mxu0 0
    %8046 = vmatprep.subr.bf16.mxu0 0
    %8047 = vmatpush1.bf16.xpose.msra.mxu0 0
    %8048 = vmatprep.subr.bf16.mxu0 0
    %8049 = vmatpush1.bf16.xpose.msra.mxu0 0
    %8050 = vmatprep.mubr.bf16.mxu0 0
    %8051 = vmatmul.mubr.bf16.gmra.mrb[0].mxu0 %v7936
    %v8052 = vpop.f32.mrb[0].mxu0
    %v8053 = vadd.f32 %v8013, %v8052
    %v8054 = vpop.f32.mrb[0].mxu0
    %v8055 = vpop.f32.mrb[0].mxu0
    %v8056 = vpop.f32.mrb[0].mxu0
    %8057 = vdwg.mxu0
    %v8058 = vadd.f32 %v7933, %v8053
    %v8059 = vld [vmem:[#allocation3 + $0xc0] sm:$0xf0]
    %v8060 = vld [vmem:[#allocation3 + $0xc8] sm:$0xf0]
    %v8061 = vld [vmem:[#allocation3 + $0xd0] sm:$0xf0]
    %s8062 = scalar_lea.vmem [#allocation9], 816
    %v8063 = vld [vmem:[%s8062] sm:$0xff]
    %v8064 = vld [vmem:[%s8062 + $0x8] sm:$0xf]
    %v8065 = vld [vmem:[%s8062 + $0xc] sm:$0xff]
    %v8066 = vld [vmem:[%s8062 + $0x14] sm:$0xf]
    %v8067 = vld [vmem:[%s8062 + $0x18] sm:$0xff]
    %v8068 = vld [vmem:[%s8062 + $0x20] sm:$0xf]
    %v8069 = vld [vmem:[%s8062 + $0x24] sm:$0xff]
    %v8070 = vld [vmem:[%s8062 + $0x2c] sm:$0xf]
    %v8074 = vrot.slane %v8059, 4
    %v8075 = vrot.slane %v8060, 4
    %v8076 = vrot.slane %v8061, 4
    %v8088 = vunpack.c.l.b16 %v8063
    %v8089 = vunpack.c.h.b16 %v8063
    %v8090 = vunpack.c.l.b16 %v8064
    %v8091 = vunpack.c.l.b16 %v8065
    %v8092 = vunpack.c.h.b16 %v8065
    %v8093 = vunpack.c.l.b16 %v8066
    %v8094 = vunpack.c.l.b16 %v8067
    %v8095 = vunpack.c.h.b16 %v8067
    %v8096 = vunpack.c.l.b16 %v8068
    %v8097 = vunpack.c.l.b16 %v8069
    %v8098 = vunpack.c.h.b16 %v8069
    %v8099 = vunpack.c.l.b16 %v8070
    %v8100 = vpack.c.b16 %v8091, %v8088
    %v8101 = vpack.c.b16 %v8092, %v8089
    %v8102 = vpack.c.b16 %v8093, %v8090
    %v8103 = vpack.c.b16 %v8097, %v8094
    %v8104 = vpack.c.b16 %v8098, %v8095
    %v8105 = vpack.c.b16 %v8099, %v8096
    %8112 = vmatprep.subr.bf16.mxu0 %v8101
    %8113 = vmatpush1.bf16.xpose.msra.mxu0 %v8100
    %8114 = vmatprep.subr.bf16.mxu0 %v8104
    %8115 = vmatpush1.bf16.xpose.msra.mxu0 %v8103
    %8116 = vmatprep.subr.bf16.mxu0 0
    %8117 = vmatpush1.bf16.xpose.msra.mxu0 0
    %8118 = vmatprep.subr.bf16.mxu0 0
    %8119 = vmatpush1.bf16.xpose.msra.mxu0 0
    %8120 = vmatprep.subr.bf16.mxu0 0
    %8121 = vmatpush1.bf16.xpose.msra.mxu0 0
    %8122 = vmatprep.subr.bf16.mxu0 0
    %8123 = vmatpush1.bf16.xpose.msra.mxu0 0
    %8124 = vmatprep.subr.bf16.mxu0 0
    %8125 = vmatpush1.bf16.xpose.msra.mxu0 0
    %8126 = vmatprep.subr.bf16.mxu0 0
    %8127 = vmatpush1.bf16.xpose.msra.mxu0 0
    %8128 = vmatprep.subr.bf16.mxu0 0
    %8129 = vmatpush1.bf16.xpose.msra.mxu0 0
    %8130 = vmatprep.subr.bf16.mxu0 0
    %8131 = vmatpush1.bf16.xpose.msra.mxu0 0
    %8132 = vmatprep.subr.bf16.mxu0 0
    %8133 = vmatpush1.bf16.xpose.msra.mxu0 0
    %8134 = vmatprep.subr.bf16.mxu0 0
    %8135 = vmatpush1.bf16.xpose.msra.mxu0 0
    %8136 = vmatprep.subr.bf16.mxu0 0
    %8137 = vmatpush1.bf16.xpose.msra.mxu0 0
    %8138 = vmatprep.subr.bf16.mxu0 0
    %8139 = vmatpush1.bf16.xpose.msra.mxu0 0
    %8140 = vmatprep.subr.bf16.mxu0 0
    %8141 = vmatpush1.bf16.xpose.msra.mxu0 0
    %8142 = vmatprep.subr.bf16.mxu0 0
    %8143 = vmatpush1.bf16.xpose.msra.mxu0 0
    %8144 = vmatprep.mubr.bf16.mxu0 %v8075
    %8145 = vmatmul.mubr.bf16.gmra.mrb[0].mxu0 %v8074
    %v8146 = vpop.f32.mrb[0].mxu0
    %v8147 = vadd.f32 0.0, %v8146
    %v8148 = vpop.f32.mrb[0].mxu0
    %v8149 = vpop.f32.mrb[0].mxu0
    %v8150 = vpop.f32.mrb[0].mxu0
    %8151 = vdwg.mxu0
    %8152 = vmatprep.subr.bf16.mxu0 0
    %8153 = vmatpush1.bf16.xpose.msra.mxu0 %v8102
    %8154 = vmatprep.subr.bf16.mxu0 0
    %8155 = vmatpush1.bf16.xpose.msra.mxu0 %v8105
    %8156 = vmatprep.subr.bf16.mxu0 0
    %8157 = vmatpush1.bf16.xpose.msra.mxu0 0
    %8158 = vmatprep.subr.bf16.mxu0 0
    %8159 = vmatpush1.bf16.xpose.msra.mxu0 0
    %8160 = vmatprep.subr.bf16.mxu0 0
    %8161 = vmatpush1.bf16.xpose.msra.mxu0 0
    %8162 = vmatprep.subr.bf16.mxu0 0
    %8163 = vmatpush1.bf16.xpose.msra.mxu0 0
    %8164 = vmatprep.subr.bf16.mxu0 0
    %8165 = vmatpush1.bf16.xpose.msra.mxu0 0
    %8166 = vmatprep.subr.bf16.mxu0 0
    %8167 = vmatpush1.bf16.xpose.msra.mxu0 0
    %8168 = vmatprep.subr.bf16.mxu0 0
    %8169 = vmatpush1.bf16.xpose.msra.mxu0 0
    %8170 = vmatprep.subr.bf16.mxu0 0
    %8171 = vmatpush1.bf16.xpose.msra.mxu0 0
    %8172 = vmatprep.subr.bf16.mxu0 0
    %8173 = vmatpush1.bf16.xpose.msra.mxu0 0
    %8174 = vmatprep.subr.bf16.mxu0 0
    %8175 = vmatpush1.bf16.xpose.msra.mxu0 0
    %8176 = vmatprep.subr.bf16.mxu0 0
    %8177 = vmatpush1.bf16.xpose.msra.mxu0 0
    %8178 = vmatprep.subr.bf16.mxu0 0
    %8179 = vmatpush1.bf16.xpose.msra.mxu0 0
    %8180 = vmatprep.subr.bf16.mxu0 0
    %8181 = vmatpush1.bf16.xpose.msra.mxu0 0
    %8182 = vmatprep.subr.bf16.mxu0 0
    %8183 = vmatpush1.bf16.xpose.msra.mxu0 0
    %8184 = vmatprep.mubr.bf16.mxu0 0
    %8185 = vmatmul.mubr.bf16.gmra.mrb[0].mxu0 %v8076
    %v8186 = vpop.f32.mrb[0].mxu0
    %v8187 = vadd.f32 %v8147, %v8186
    %v8188 = vpop.f32.mrb[0].mxu0
    %v8189 = vpop.f32.mrb[0].mxu0
    %v8190 = vpop.f32.mrb[0].mxu0
    %8191 = vdwg.mxu0
    %v8192 = vadd.f32 %v8058, %v8187
    %v8193 = vld [vmem:[#allocation3 + $0xd8] sm:$0xf]
    %v8194 = vld [vmem:[#allocation3 + $0xe0] sm:$0xf]
    %v8195 = vld [vmem:[#allocation3 + $0xe8] sm:$0xf]
    %s8196 = scalar_lea.vmem [#allocation9], 864
    %v8197 = vld [vmem:[%s8196] sm:$0xff]
    %v8198 = vld [vmem:[%s8196 + $0x8] sm:$0xf]
    %v8199 = vld [vmem:[%s8196 + $0xc] sm:$0xff]
    %v8200 = vld [vmem:[%s8196 + $0x14] sm:$0xf]
    %v8201 = vld [vmem:[%s8196 + $0x18] sm:$0xff]
    %v8202 = vld [vmem:[%s8196 + $0x20] sm:$0xf]
    %v8203 = vld [vmem:[%s8196 + $0x24] sm:$0xff]
    %v8204 = vld [vmem:[%s8196 + $0x2c] sm:$0xf]
    %v8213 = vunpack.c.l.b16 %v8197
    %v8214 = vunpack.c.h.b16 %v8197
    %v8215 = vunpack.c.l.b16 %v8198
    %v8216 = vunpack.c.l.b16 %v8199
    %v8217 = vunpack.c.h.b16 %v8199
    %v8218 = vunpack.c.l.b16 %v8200
    %v8219 = vunpack.c.l.b16 %v8201
    %v8220 = vunpack.c.h.b16 %v8201
    %v8221 = vunpack.c.l.b16 %v8202
    %v8222 = vunpack.c.l.b16 %v8203
    %v8223 = vunpack.c.h.b16 %v8203
    %v8224 = vunpack.c.l.b16 %v8204
    %v8225 = vpack.c.b16 %v8216, %v8213
    %v8226 = vpack.c.b16 %v8217, %v8214
    %v8227 = vpack.c.b16 %v8218, %v8215
    %v8228 = vpack.c.b16 %v8222, %v8219
    %v8229 = vpack.c.b16 %v8223, %v8220
    %v8230 = vpack.c.b16 %v8224, %v8221
    %8237 = vmatprep.subr.bf16.mxu0 %v8226
    %8238 = vmatpush1.bf16.xpose.msra.mxu0 %v8225
    %8239 = vmatprep.subr.bf16.mxu0 %v8229
    %8240 = vmatpush1.bf16.xpose.msra.mxu0 %v8228
    %8241 = vmatprep.subr.bf16.mxu0 0
    %8242 = vmatpush1.bf16.xpose.msra.mxu0 0
    %8243 = vmatprep.subr.bf16.mxu0 0
    %8244 = vmatpush1.bf16.xpose.msra.mxu0 0
    %8245 = vmatprep.subr.bf16.mxu0 0
    %8246 = vmatpush1.bf16.xpose.msra.mxu0 0
    %8247 = vmatprep.subr.bf16.mxu0 0
    %8248 = vmatpush1.bf16.xpose.msra.mxu0 0
    %8249 = vmatprep.subr.bf16.mxu0 0
    %8250 = vmatpush1.bf16.xpose.msra.mxu0 0
    %8251 = vmatprep.subr.bf16.mxu0 0
    %8252 = vmatpush1.bf16.xpose.msra.mxu0 0
    %8253 = vmatprep.subr.bf16.mxu0 0
    %8254 = vmatpush1.bf16.xpose.msra.mxu0 0
    %8255 = vmatprep.subr.bf16.mxu0 0
    %8256 = vmatpush1.bf16.xpose.msra.mxu0 0
    %8257 = vmatprep.subr.bf16.mxu0 0
    %8258 = vmatpush1.bf16.xpose.msra.mxu0 0
    %8259 = vmatprep.subr.bf16.mxu0 0
    %8260 = vmatpush1.bf16.xpose.msra.mxu0 0
    %8261 = vmatprep.subr.bf16.mxu0 0
    %8262 = vmatpush1.bf16.xpose.msra.mxu0 0
    %8263 = vmatprep.subr.bf16.mxu0 0
    %8264 = vmatpush1.bf16.xpose.msra.mxu0 0
    %8265 = vmatprep.subr.bf16.mxu0 0
    %8266 = vmatpush1.bf16.xpose.msra.mxu0 0
    %8267 = vmatprep.subr.bf16.mxu0 0
    %8268 = vmatpush1.bf16.xpose.msra.mxu0 0
    %8269 = vmatprep.mubr.bf16.mxu0 %v8194
    %8270 = vmatmul.mubr.bf16.gmra.mrb[0].mxu0 %v8193
    %v8271 = vpop.f32.mrb[0].mxu0
    %v8272 = vadd.f32 0.0, %v8271
    %v8273 = vpop.f32.mrb[0].mxu0
    %v8274 = vpop.f32.mrb[0].mxu0
    %v8275 = vpop.f32.mrb[0].mxu0
    %8276 = vdwg.mxu0
    %8277 = vmatprep.subr.bf16.mxu0 0
    %8278 = vmatpush1.bf16.xpose.msra.mxu0 %v8227
    %8279 = vmatprep.subr.bf16.mxu0 0
    %8280 = vmatpush1.bf16.xpose.msra.mxu0 %v8230
    %8281 = vmatprep.subr.bf16.mxu0 0
    %8282 = vmatpush1.bf16.xpose.msra.mxu0 0
    %8283 = vmatprep.subr.bf16.mxu0 0
    %8284 = vmatpush1.bf16.xpose.msra.mxu0 0
    %8285 = vmatprep.subr.bf16.mxu0 0
    %8286 = vmatpush1.bf16.xpose.msra.mxu0 0
    %8287 = vmatprep.subr.bf16.mxu0 0
    %8288 = vmatpush1.bf16.xpose.msra.mxu0 0
    %8289 = vmatprep.subr.bf16.mxu0 0
    %8290 = vmatpush1.bf16.xpose.msra.mxu0 0
    %8291 = vmatprep.subr.bf16.mxu0 0
    %8292 = vmatpush1.bf16.xpose.msra.mxu0 0
    %8293 = vmatprep.subr.bf16.mxu0 0
    %8294 = vmatpush1.bf16.xpose.msra.mxu0 0
    %8295 = vmatprep.subr.bf16.mxu0 0
    %8296 = vmatpush1.bf16.xpose.msra.mxu0 0
    %8297 = vmatprep.subr.bf16.mxu0 0
    %8298 = vmatpush1.bf16.xpose.msra.mxu0 0
    %8299 = vmatprep.subr.bf16.mxu0 0
    %8300 = vmatpush1.bf16.xpose.msra.mxu0 0
    %8301 = vmatprep.subr.bf16.mxu0 0
    %8302 = vmatpush1.bf16.xpose.msra.mxu0 0
    %8303 = vmatprep.subr.bf16.mxu0 0
    %8304 = vmatpush1.bf16.xpose.msra.mxu0 0
    %8305 = vmatprep.subr.bf16.mxu0 0
    %8306 = vmatpush1.bf16.xpose.msra.mxu0 0
    %8307 = vmatprep.subr.bf16.mxu0 0
    %8308 = vmatpush1.bf16.xpose.msra.mxu0 0
    %8309 = vmatprep.mubr.bf16.mxu0 0
    %8310 = vmatmul.mubr.bf16.gmra.mrb[0].mxu0 %v8195
    %v8311 = vpop.f32.mrb[0].mxu0
    %v8312 = vadd.f32 %v8272, %v8311
    %v8313 = vpop.f32.mrb[0].mxu0
    %v8314 = vpop.f32.mrb[0].mxu0
    %v8315 = vpop.f32.mrb[0].mxu0
    %8316 = vdwg.mxu0
    %v8317 = vadd.f32 %v8192, %v8312
    %v8318 = vld [vmem:[#allocation3 + $0xd8] sm:$0xf0]
    %v8319 = vld [vmem:[#allocation3 + $0xe0] sm:$0xf0]
    %v8320 = vld [vmem:[#allocation3 + $0xe8] sm:$0xf0]
    %s8321 = scalar_lea.vmem [#allocation9], 912
    %v8322 = vld [vmem:[%s8321] sm:$0xff]
    %v8323 = vld [vmem:[%s8321 + $0x8] sm:$0xf]
    %v8324 = vld [vmem:[%s8321 + $0xc] sm:$0xff]
    %v8325 = vld [vmem:[%s8321 + $0x14] sm:$0xf]
    %v8326 = vld [vmem:[%s8321 + $0x18] sm:$0xff]
    %v8327 = vld [vmem:[%s8321 + $0x20] sm:$0xf]
    %v8328 = vld [vmem:[%s8321 + $0x24] sm:$0xff]
    %v8329 = vld [vmem:[%s8321 + $0x2c] sm:$0xf]
    %v8333 = vrot.slane %v8318, 4
    %v8334 = vrot.slane %v8319, 4
    %v8335 = vrot.slane %v8320, 4
    %v8347 = vunpack.c.l.b16 %v8322
    %v8348 = vunpack.c.h.b16 %v8322
    %v8349 = vunpack.c.l.b16 %v8323
    %v8350 = vunpack.c.l.b16 %v8324
    %v8351 = vunpack.c.h.b16 %v8324
    %v8352 = vunpack.c.l.b16 %v8325
    %v8353 = vunpack.c.l.b16 %v8326
    %v8354 = vunpack.c.h.b16 %v8326
    %v8355 = vunpack.c.l.b16 %v8327
    %v8356 = vunpack.c.l.b16 %v8328
    %v8357 = vunpack.c.h.b16 %v8328
    %v8358 = vunpack.c.l.b16 %v8329
    %v8359 = vpack.c.b16 %v8350, %v8347
    %v8360 = vpack.c.b16 %v8351, %v8348
    %v8361 = vpack.c.b16 %v8352, %v8349
    %v8362 = vpack.c.b16 %v8356, %v8353
    %v8363 = vpack.c.b16 %v8357, %v8354
    %v8364 = vpack.c.b16 %v8358, %v8355
    %8371 = vmatprep.subr.bf16.mxu0 %v8360
    %8372 = vmatpush1.bf16.xpose.msra.mxu0 %v8359
    %8373 = vmatprep.subr.bf16.mxu0 %v8363
    %8374 = vmatpush1.bf16.xpose.msra.mxu0 %v8362
    %8375 = vmatprep.subr.bf16.mxu0 0
    %8376 = vmatpush1.bf16.xpose.msra.mxu0 0
    %8377 = vmatprep.subr.bf16.mxu0 0
    %8378 = vmatpush1.bf16.xpose.msra.mxu0 0
    %8379 = vmatprep.subr.bf16.mxu0 0
    %8380 = vmatpush1.bf16.xpose.msra.mxu0 0
    %8381 = vmatprep.subr.bf16.mxu0 0
    %8382 = vmatpush1.bf16.xpose.msra.mxu0 0
    %8383 = vmatprep.subr.bf16.mxu0 0
    %8384 = vmatpush1.bf16.xpose.msra.mxu0 0
    %8385 = vmatprep.subr.bf16.mxu0 0
    %8386 = vmatpush1.bf16.xpose.msra.mxu0 0
    %8387 = vmatprep.subr.bf16.mxu0 0
    %8388 = vmatpush1.bf16.xpose.msra.mxu0 0
    %8389 = vmatprep.subr.bf16.mxu0 0
    %8390 = vmatpush1.bf16.xpose.msra.mxu0 0
    %8391 = vmatprep.subr.bf16.mxu0 0
    %8392 = vmatpush1.bf16.xpose.msra.mxu0 0
    %8393 = vmatprep.subr.bf16.mxu0 0
    %8394 = vmatpush1.bf16.xpose.msra.mxu0 0
    %8395 = vmatprep.subr.bf16.mxu0 0
    %8396 = vmatpush1.bf16.xpose.msra.mxu0 0
    %8397 = vmatprep.subr.bf16.mxu0 0
    %8398 = vmatpush1.bf16.xpose.msra.mxu0 0
    %8399 = vmatprep.subr.bf16.mxu0 0
    %8400 = vmatpush1.bf16.xpose.msra.mxu0 0
    %8401 = vmatprep.subr.bf16.mxu0 0
    %8402 = vmatpush1.bf16.xpose.msra.mxu0 0
    %8403 = vmatprep.mubr.bf16.mxu0 %v8334
    %8404 = vmatmul.mubr.bf16.gmra.mrb[0].mxu0 %v8333
    %v8405 = vpop.f32.mrb[0].mxu0
    %v8406 = vadd.f32 0.0, %v8405
    %v8407 = vpop.f32.mrb[0].mxu0
    %v8408 = vpop.f32.mrb[0].mxu0
    %v8409 = vpop.f32.mrb[0].mxu0
    %8410 = vdwg.mxu0
    %8411 = vmatprep.subr.bf16.mxu0 0
    %8412 = vmatpush1.bf16.xpose.msra.mxu0 %v8361
    %8413 = vmatprep.subr.bf16.mxu0 0
    %8414 = vmatpush1.bf16.xpose.msra.mxu0 %v8364
    %8415 = vmatprep.subr.bf16.mxu0 0
    %8416 = vmatpush1.bf16.xpose.msra.mxu0 0
    %8417 = vmatprep.subr.bf16.mxu0 0
    %8418 = vmatpush1.bf16.xpose.msra.mxu0 0
    %8419 = vmatprep.subr.bf16.mxu0 0
    %8420 = vmatpush1.bf16.xpose.msra.mxu0 0
    %8421 = vmatprep.subr.bf16.mxu0 0
    %8422 = vmatpush1.bf16.xpose.msra.mxu0 0
    %8423 = vmatprep.subr.bf16.mxu0 0
    %8424 = vmatpush1.bf16.xpose.msra.mxu0 0
    %8425 = vmatprep.subr.bf16.mxu0 0
    %8426 = vmatpush1.bf16.xpose.msra.mxu0 0
    %8427 = vmatprep.subr.bf16.mxu0 0
    %8428 = vmatpush1.bf16.xpose.msra.mxu0 0
    %8429 = vmatprep.subr.bf16.mxu0 0
    %8430 = vmatpush1.bf16.xpose.msra.mxu0 0
    %8431 = vmatprep.subr.bf16.mxu0 0
    %8432 = vmatpush1.bf16.xpose.msra.mxu0 0
    %8433 = vmatprep.subr.bf16.mxu0 0
    %8434 = vmatpush1.bf16.xpose.msra.mxu0 0
    %8435 = vmatprep.subr.bf16.mxu0 0
    %8436 = vmatpush1.bf16.xpose.msra.mxu0 0
    %8437 = vmatprep.subr.bf16.mxu0 0
    %8438 = vmatpush1.bf16.xpose.msra.mxu0 0
    %8439 = vmatprep.subr.bf16.mxu0 0
    %8440 = vmatpush1.bf16.xpose.msra.mxu0 0
    %8441 = vmatprep.subr.bf16.mxu0 0
    %8442 = vmatpush1.bf16.xpose.msra.mxu0 0
    %8443 = vmatprep.mubr.bf16.mxu0 0
    %8444 = vmatmul.mubr.bf16.gmra.mrb[0].mxu0 %v8335
    %v8445 = vpop.f32.mrb[0].mxu0
    %v8446 = vadd.f32 %v8406, %v8445
    %v8447 = vpop.f32.mrb[0].mxu0
    %v8448 = vpop.f32.mrb[0].mxu0
    %v8449 = vpop.f32.mrb[0].mxu0
    %8450 = vdwg.mxu0
    %v8451 = vadd.f32 %v8317, %v8446
    %v8452 = vld [vmem:[#allocation3 + $0xf0] sm:$0xf]
    %v8453 = vld [vmem:[#allocation3 + $0xf8] sm:$0xf]
    %v8454 = vld [vmem:[#allocation3 + $0x100] sm:$0xf]
    %s8455 = scalar_lea.vmem [#allocation9], 960
    %v8456 = vld [vmem:[%s8455] sm:$0xff]
    %v8457 = vld [vmem:[%s8455 + $0x8] sm:$0xf]
    %v8458 = vld [vmem:[%s8455 + $0xc] sm:$0xff]
    %v8459 = vld [vmem:[%s8455 + $0x14] sm:$0xf]
    %v8460 = vld [vmem:[%s8455 + $0x18] sm:$0xff]
    %v8461 = vld [vmem:[%s8455 + $0x20] sm:$0xf]
    %v8462 = vld [vmem:[%s8455 + $0x24] sm:$0xff]
    %v8463 = vld [vmem:[%s8455 + $0x2c] sm:$0xf]
    %v8472 = vunpack.c.l.b16 %v8456
    %v8473 = vunpack.c.h.b16 %v8456
    %v8474 = vunpack.c.l.b16 %v8457
    %v8475 = vunpack.c.l.b16 %v8458
    %v8476 = vunpack.c.h.b16 %v8458
    %v8477 = vunpack.c.l.b16 %v8459
    %v8478 = vunpack.c.l.b16 %v8460
    %v8479 = vunpack.c.h.b16 %v8460
    %v8480 = vunpack.c.l.b16 %v8461
    %v8481 = vunpack.c.l.b16 %v8462
    %v8482 = vunpack.c.h.b16 %v8462
    %v8483 = vunpack.c.l.b16 %v8463
    %v8484 = vpack.c.b16 %v8475, %v8472
    %v8485 = vpack.c.b16 %v8476, %v8473
    %v8486 = vpack.c.b16 %v8477, %v8474
    %v8487 = vpack.c.b16 %v8481, %v8478
    %v8488 = vpack.c.b16 %v8482, %v8479
    %v8489 = vpack.c.b16 %v8483, %v8480
    %8496 = vmatprep.subr.bf16.mxu0 %v8485
    %8497 = vmatpush1.bf16.xpose.msra.mxu0 %v8484
    %8498 = vmatprep.subr.bf16.mxu0 %v8488
    %8499 = vmatpush1.bf16.xpose.msra.mxu0 %v8487
    %8500 = vmatprep.subr.bf16.mxu0 0
    %8501 = vmatpush1.bf16.xpose.msra.mxu0 0
    %8502 = vmatprep.subr.bf16.mxu0 0
    %8503 = vmatpush1.bf16.xpose.msra.mxu0 0
    %8504 = vmatprep.subr.bf16.mxu0 0
    %8505 = vmatpush1.bf16.xpose.msra.mxu0 0
    %8506 = vmatprep.subr.bf16.mxu0 0
    %8507 = vmatpush1.bf16.xpose.msra.mxu0 0
    %8508 = vmatprep.subr.bf16.mxu0 0
    %8509 = vmatpush1.bf16.xpose.msra.mxu0 0
    %8510 = vmatprep.subr.bf16.mxu0 0
    %8511 = vmatpush1.bf16.xpose.msra.mxu0 0
    %8512 = vmatprep.subr.bf16.mxu0 0
    %8513 = vmatpush1.bf16.xpose.msra.mxu0 0
    %8514 = vmatprep.subr.bf16.mxu0 0
    %8515 = vmatpush1.bf16.xpose.msra.mxu0 0
    %8516 = vmatprep.subr.bf16.mxu0 0
    %8517 = vmatpush1.bf16.xpose.msra.mxu0 0
    %8518 = vmatprep.subr.bf16.mxu0 0
    %8519 = vmatpush1.bf16.xpose.msra.mxu0 0
    %8520 = vmatprep.subr.bf16.mxu0 0
    %8521 = vmatpush1.bf16.xpose.msra.mxu0 0
    %8522 = vmatprep.subr.bf16.mxu0 0
    %8523 = vmatpush1.bf16.xpose.msra.mxu0 0
    %8524 = vmatprep.subr.bf16.mxu0 0
    %8525 = vmatpush1.bf16.xpose.msra.mxu0 0
    %8526 = vmatprep.subr.bf16.mxu0 0
    %8527 = vmatpush1.bf16.xpose.msra.mxu0 0
    %8528 = vmatprep.mubr.bf16.mxu0 %v8453
    %8529 = vmatmul.mubr.bf16.gmra.mrb[0].mxu0 %v8452
    %v8530 = vpop.f32.mrb[0].mxu0
    %v8531 = vadd.f32 0.0, %v8530
    %v8532 = vpop.f32.mrb[0].mxu0
    %v8533 = vpop.f32.mrb[0].mxu0
    %v8534 = vpop.f32.mrb[0].mxu0
    %8535 = vdwg.mxu0
    %8536 = vmatprep.subr.bf16.mxu0 0
    %8537 = vmatpush1.bf16.xpose.msra.mxu0 %v8486
    %8538 = vmatprep.subr.bf16.mxu0 0
    %8539 = vmatpush1.bf16.xpose.msra.mxu0 %v8489
    %8540 = vmatprep.subr.bf16.mxu0 0
    %8541 = vmatpush1.bf16.xpose.msra.mxu0 0
    %8542 = vmatprep.subr.bf16.mxu0 0
    %8543 = vmatpush1.bf16.xpose.msra.mxu0 0
    %8544 = vmatprep.subr.bf16.mxu0 0
    %8545 = vmatpush1.bf16.xpose.msra.mxu0 0
    %8546 = vmatprep.subr.bf16.mxu0 0
    %8547 = vmatpush1.bf16.xpose.msra.mxu0 0
    %8548 = vmatprep.subr.bf16.mxu0 0
    %8549 = vmatpush1.bf16.xpose.msra.mxu0 0
    %8550 = vmatprep.subr.bf16.mxu0 0
    %8551 = vmatpush1.bf16.xpose.msra.mxu0 0
    %8552 = vmatprep.subr.bf16.mxu0 0
    %8553 = vmatpush1.bf16.xpose.msra.mxu0 0
    %8554 = vmatprep.subr.bf16.mxu0 0
    %8555 = vmatpush1.bf16.xpose.msra.mxu0 0
    %8556 = vmatprep.subr.bf16.mxu0 0
    %8557 = vmatpush1.bf16.xpose.msra.mxu0 0
    %8558 = vmatprep.subr.bf16.mxu0 0
    %8559 = vmatpush1.bf16.xpose.msra.mxu0 0
    %8560 = vmatprep.subr.bf16.mxu0 0
    %8561 = vmatpush1.bf16.xpose.msra.mxu0 0
    %8562 = vmatprep.subr.bf16.mxu0 0
    %8563 = vmatpush1.bf16.xpose.msra.mxu0 0
    %8564 = vmatprep.subr.bf16.mxu0 0
    %8565 = vmatpush1.bf16.xpose.msra.mxu0 0
    %8566 = vmatprep.subr.bf16.mxu0 0
    %8567 = vmatpush1.bf16.xpose.msra.mxu0 0
    %8568 = vmatprep.mubr.bf16.mxu0 0
    %8569 = vmatmul.mubr.bf16.gmra.mrb[0].mxu0 %v8454
    %v8570 = vpop.f32.mrb[0].mxu0
    %v8571 = vadd.f32 %v8531, %v8570
    %v8572 = vpop.f32.mrb[0].mxu0
    %v8573 = vpop.f32.mrb[0].mxu0
    %v8574 = vpop.f32.mrb[0].mxu0
    %8575 = vdwg.mxu0
    %v8576 = vadd.f32 %v8451, %v8571
    %v8577 = vld [vmem:[#allocation3 + $0xf0] sm:$0xf0]
    %v8578 = vld [vmem:[#allocation3 + $0xf8] sm:$0xf0]
    %v8579 = vld [vmem:[#allocation3 + $0x100] sm:$0xf0]
    %s8580 = scalar_lea.vmem [#allocation9], 1008
    %v8581 = vld [vmem:[%s8580] sm:$0xff]
    %v8582 = vld [vmem:[%s8580 + $0x8] sm:$0xf]
    %v8583 = vld [vmem:[%s8580 + $0xc] sm:$0xff]
    %v8584 = vld [vmem:[%s8580 + $0x14] sm:$0xf]
    %v8585 = vld [vmem:[%s8580 + $0x18] sm:$0xff]
    %v8586 = vld [vmem:[%s8580 + $0x20] sm:$0xf]
    %v8587 = vld [vmem:[%s8580 + $0x24] sm:$0xff]
    %v8588 = vld [vmem:[%s8580 + $0x2c] sm:$0xf]
    %v8592 = vrot.slane %v8577, 4
    %v8593 = vrot.slane %v8578, 4
    %v8594 = vrot.slane %v8579, 4
    %v8606 = vunpack.c.l.b16 %v8581
    %v8607 = vunpack.c.h.b16 %v8581
    %v8608 = vunpack.c.l.b16 %v8582
    %v8609 = vunpack.c.l.b16 %v8583
    %v8610 = vunpack.c.h.b16 %v8583
    %v8611 = vunpack.c.l.b16 %v8584
    %v8612 = vunpack.c.l.b16 %v8585
    %v8613 = vunpack.c.h.b16 %v8585
    %v8614 = vunpack.c.l.b16 %v8586
    %v8615 = vunpack.c.l.b16 %v8587
    %v8616 = vunpack.c.h.b16 %v8587
    %v8617 = vunpack.c.l.b16 %v8588
    %v8618 = vpack.c.b16 %v8609, %v8606
    %v8619 = vpack.c.b16 %v8610, %v8607
    %v8620 = vpack.c.b16 %v8611, %v8608
    %v8621 = vpack.c.b16 %v8615, %v8612
    %v8622 = vpack.c.b16 %v8616, %v8613
    %v8623 = vpack.c.b16 %v8617, %v8614
    %8630 = vmatprep.subr.bf16.mxu0 %v8619
    %8631 = vmatpush1.bf16.xpose.msra.mxu0 %v8618
    %8632 = vmatprep.subr.bf16.mxu0 %v8622
    %8633 = vmatpush1.bf16.xpose.msra.mxu0 %v8621
    %8634 = vmatprep.subr.bf16.mxu0 0
    %8635 = vmatpush1.bf16.xpose.msra.mxu0 0
    %8636 = vmatprep.subr.bf16.mxu0 0
    %8637 = vmatpush1.bf16.xpose.msra.mxu0 0
    %8638 = vmatprep.subr.bf16.mxu0 0
    %8639 = vmatpush1.bf16.xpose.msra.mxu0 0
    %8640 = vmatprep.subr.bf16.mxu0 0
    %8641 = vmatpush1.bf16.xpose.msra.mxu0 0
    %8642 = vmatprep.subr.bf16.mxu0 0
    %8643 = vmatpush1.bf16.xpose.msra.mxu0 0
    %8644 = vmatprep.subr.bf16.mxu0 0
    %8645 = vmatpush1.bf16.xpose.msra.mxu0 0
    %8646 = vmatprep.subr.bf16.mxu0 0
    %8647 = vmatpush1.bf16.xpose.msra.mxu0 0
    %8648 = vmatprep.subr.bf16.mxu0 0
    %8649 = vmatpush1.bf16.xpose.msra.mxu0 0
    %8650 = vmatprep.subr.bf16.mxu0 0
    %8651 = vmatpush1.bf16.xpose.msra.mxu0 0
    %8652 = vmatprep.subr.bf16.mxu0 0
    %8653 = vmatpush1.bf16.xpose.msra.mxu0 0
    %8654 = vmatprep.subr.bf16.mxu0 0
    %8655 = vmatpush1.bf16.xpose.msra.mxu0 0
    %8656 = vmatprep.subr.bf16.mxu0 0
    %8657 = vmatpush1.bf16.xpose.msra.mxu0 0
    %8658 = vmatprep.subr.bf16.mxu0 0
    %8659 = vmatpush1.bf16.xpose.msra.mxu0 0
    %8660 = vmatprep.subr.bf16.mxu0 0
    %8661 = vmatpush1.bf16.xpose.msra.mxu0 0
    %8662 = vmatprep.mubr.bf16.mxu0 %v8593
    %8663 = vmatmul.mubr.bf16.gmra.mrb[0].mxu0 %v8592
    %v8664 = vpop.f32.mrb[0].mxu0
    %v8665 = vadd.f32 0.0, %v8664
    %v8666 = vpop.f32.mrb[0].mxu0
    %v8667 = vpop.f32.mrb[0].mxu0
    %v8668 = vpop.f32.mrb[0].mxu0
    %8669 = vdwg.mxu0
    %8670 = vmatprep.subr.bf16.mxu0 0
    %8671 = vmatpush1.bf16.xpose.msra.mxu0 %v8620
    %8672 = vmatprep.subr.bf16.mxu0 0
    %8673 = vmatpush1.bf16.xpose.msra.mxu0 %v8623
    %8674 = vmatprep.subr.bf16.mxu0 0
    %8675 = vmatpush1.bf16.xpose.msra.mxu0 0
    %8676 = vmatprep.subr.bf16.mxu0 0
    %8677 = vmatpush1.bf16.xpose.msra.mxu0 0
    %8678 = vmatprep.subr.bf16.mxu0 0
    %8679 = vmatpush1.bf16.xpose.msra.mxu0 0
    %8680 = vmatprep.subr.bf16.mxu0 0
    %8681 = vmatpush1.bf16.xpose.msra.mxu0 0
    %8682 = vmatprep.subr.bf16.mxu0 0
    %8683 = vmatpush1.bf16.xpose.msra.mxu0 0
    %8684 = vmatprep.subr.bf16.mxu0 0
    %8685 = vmatpush1.bf16.xpose.msra.mxu0 0
    %8686 = vmatprep.subr.bf16.mxu0 0
    %8687 = vmatpush1.bf16.xpose.msra.mxu0 0
    %8688 = vmatprep.subr.bf16.mxu0 0
    %8689 = vmatpush1.bf16.xpose.msra.mxu0 0
    %8690 = vmatprep.subr.bf16.mxu0 0
    %8691 = vmatpush1.bf16.xpose.msra.mxu0 0
    %8692 = vmatprep.subr.bf16.mxu0 0
    %8693 = vmatpush1.bf16.xpose.msra.mxu0 0
    %8694 = vmatprep.subr.bf16.mxu0 0
    %8695 = vmatpush1.bf16.xpose.msra.mxu0 0
    %8696 = vmatprep.subr.bf16.mxu0 0
    %8697 = vmatpush1.bf16.xpose.msra.mxu0 0
    %8698 = vmatprep.subr.bf16.mxu0 0
    %8699 = vmatpush1.bf16.xpose.msra.mxu0 0
    %8700 = vmatprep.subr.bf16.mxu0 0
    %8701 = vmatpush1.bf16.xpose.msra.mxu0 0
    %8702 = vmatprep.mubr.bf16.mxu0 0
    %8703 = vmatmul.mubr.bf16.gmra.mrb[0].mxu0 %v8594
    %v8704 = vpop.f32.mrb[0].mxu0
    %v8705 = vadd.f32 %v8665, %v8704
    %v8706 = vpop.f32.mrb[0].mxu0
    %v8707 = vpop.f32.mrb[0].mxu0
    %v8708 = vpop.f32.mrb[0].mxu0
    %8709 = vdwg.mxu0
    %v8710 = vadd.f32 %v8576, %v8705
    %v8711 = vld [vmem:[#allocation3 + $0x108] sm:$0xf]
    %v8712 = vld [vmem:[#allocation3 + $0x110] sm:$0xf]
    %v8713 = vld [vmem:[#allocation3 + $0x118] sm:$0xf]
    %s8714 = scalar_lea.vmem [#allocation9], 1056
    %v8715 = vld [vmem:[%s8714] sm:$0xff]
    %v8716 = vld [vmem:[%s8714 + $0x8] sm:$0xf]
    %v8717 = vld [vmem:[%s8714 + $0xc] sm:$0xff]
    %v8718 = vld [vmem:[%s8714 + $0x14] sm:$0xf]
    %v8719 = vld [vmem:[%s8714 + $0x18] sm:$0xff]
    %v8720 = vld [vmem:[%s8714 + $0x20] sm:$0xf]
    %v8721 = vld [vmem:[%s8714 + $0x24] sm:$0xff]
    %v8722 = vld [vmem:[%s8714 + $0x2c] sm:$0xf]
    %v8731 = vunpack.c.l.b16 %v8715
    %v8732 = vunpack.c.h.b16 %v8715
    %v8733 = vunpack.c.l.b16 %v8716
    %v8734 = vunpack.c.l.b16 %v8717
    %v8735 = vunpack.c.h.b16 %v8717
    %v8736 = vunpack.c.l.b16 %v8718
    %v8737 = vunpack.c.l.b16 %v8719
    %v8738 = vunpack.c.h.b16 %v8719
    %v8739 = vunpack.c.l.b16 %v8720
    %v8740 = vunpack.c.l.b16 %v8721
    %v8741 = vunpack.c.h.b16 %v8721
    %v8742 = vunpack.c.l.b16 %v8722
    %v8743 = vpack.c.b16 %v8734, %v8731
    %v8744 = vpack.c.b16 %v8735, %v8732
    %v8745 = vpack.c.b16 %v8736, %v8733
    %v8746 = vpack.c.b16 %v8740, %v8737
    %v8747 = vpack.c.b16 %v8741, %v8738
    %v8748 = vpack.c.b16 %v8742, %v8739
    %8755 = vmatprep.subr.bf16.mxu0 %v8744
    %8756 = vmatpush1.bf16.xpose.msra.mxu0 %v8743
    %8757 = vmatprep.subr.bf16.mxu0 %v8747
    %8758 = vmatpush1.bf16.xpose.msra.mxu0 %v8746
    %8759 = vmatprep.subr.bf16.mxu0 0
    %8760 = vmatpush1.bf16.xpose.msra.mxu0 0
    %8761 = vmatprep.subr.bf16.mxu0 0
    %8762 = vmatpush1.bf16.xpose.msra.mxu0 0
    %8763 = vmatprep.subr.bf16.mxu0 0
    %8764 = vmatpush1.bf16.xpose.msra.mxu0 0
    %8765 = vmatprep.subr.bf16.mxu0 0
    %8766 = vmatpush1.bf16.xpose.msra.mxu0 0
    %8767 = vmatprep.subr.bf16.mxu0 0
    %8768 = vmatpush1.bf16.xpose.msra.mxu0 0
    %8769 = vmatprep.subr.bf16.mxu0 0
    %8770 = vmatpush1.bf16.xpose.msra.mxu0 0
    %8771 = vmatprep.subr.bf16.mxu0 0
    %8772 = vmatpush1.bf16.xpose.msra.mxu0 0
    %8773 = vmatprep.subr.bf16.mxu0 0
    %8774 = vmatpush1.bf16.xpose.msra.mxu0 0
    %8775 = vmatprep.subr.bf16.mxu0 0
    %8776 = vmatpush1.bf16.xpose.msra.mxu0 0
    %8777 = vmatprep.subr.bf16.mxu0 0
    %8778 = vmatpush1.bf16.xpose.msra.mxu0 0
    %8779 = vmatprep.subr.bf16.mxu0 0
    %8780 = vmatpush1.bf16.xpose.msra.mxu0 0
    %8781 = vmatprep.subr.bf16.mxu0 0
    %8782 = vmatpush1.bf16.xpose.msra.mxu0 0
    %8783 = vmatprep.subr.bf16.mxu0 0
    %8784 = vmatpush1.bf16.xpose.msra.mxu0 0
    %8785 = vmatprep.subr.bf16.mxu0 0
    %8786 = vmatpush1.bf16.xpose.msra.mxu0 0
    %8787 = vmatprep.mubr.bf16.mxu0 %v8712
    %8788 = vmatmul.mubr.bf16.gmra.mrb[0].mxu0 %v8711
    %v8789 = vpop.f32.mrb[0].mxu0
    %v8790 = vadd.f32 0.0, %v8789
    %v8791 = vpop.f32.mrb[0].mxu0
    %v8792 = vpop.f32.mrb[0].mxu0
    %v8793 = vpop.f32.mrb[0].mxu0
    %8794 = vdwg.mxu0
    %8795 = vmatprep.subr.bf16.mxu0 0
    %8796 = vmatpush1.bf16.xpose.msra.mxu0 %v8745
    %8797 = vmatprep.subr.bf16.mxu0 0
    %8798 = vmatpush1.bf16.xpose.msra.mxu0 %v8748
    %8799 = vmatprep.subr.bf16.mxu0 0
    %8800 = vmatpush1.bf16.xpose.msra.mxu0 0
    %8801 = vmatprep.subr.bf16.mxu0 0
    %8802 = vmatpush1.bf16.xpose.msra.mxu0 0
    %8803 = vmatprep.subr.bf16.mxu0 0
    %8804 = vmatpush1.bf16.xpose.msra.mxu0 0
    %8805 = vmatprep.subr.bf16.mxu0 0
    %8806 = vmatpush1.bf16.xpose.msra.mxu0 0
    %8807 = vmatprep.subr.bf16.mxu0 0
    %8808 = vmatpush1.bf16.xpose.msra.mxu0 0
    %8809 = vmatprep.subr.bf16.mxu0 0
    %8810 = vmatpush1.bf16.xpose.msra.mxu0 0
    %8811 = vmatprep.subr.bf16.mxu0 0
    %8812 = vmatpush1.bf16.xpose.msra.mxu0 0
    %8813 = vmatprep.subr.bf16.mxu0 0
    %8814 = vmatpush1.bf16.xpose.msra.mxu0 0
    %8815 = vmatprep.subr.bf16.mxu0 0
    %8816 = vmatpush1.bf16.xpose.msra.mxu0 0
    %8817 = vmatprep.subr.bf16.mxu0 0
    %8818 = vmatpush1.bf16.xpose.msra.mxu0 0
    %8819 = vmatprep.subr.bf16.mxu0 0
    %8820 = vmatpush1.bf16.xpose.msra.mxu0 0
    %8821 = vmatprep.subr.bf16.mxu0 0
    %8822 = vmatpush1.bf16.xpose.msra.mxu0 0
    %8823 = vmatprep.subr.bf16.mxu0 0
    %8824 = vmatpush1.bf16.xpose.msra.mxu0 0
    %8825 = vmatprep.subr.bf16.mxu0 0
    %8826 = vmatpush1.bf16.xpose.msra.mxu0 0
    %8827 = vmatprep.mubr.bf16.mxu0 0
    %8828 = vmatmul.mubr.bf16.gmra.mrb[0].mxu0 %v8713
    %v8829 = vpop.f32.mrb[0].mxu0
    %v8830 = vadd.f32 %v8790, %v8829
    %v8831 = vpop.f32.mrb[0].mxu0
    %v8832 = vpop.f32.mrb[0].mxu0
    %v8833 = vpop.f32.mrb[0].mxu0
    %8834 = vdwg.mxu0
    %v8835 = vadd.f32 %v8710, %v8830
    %v8836 = vld [vmem:[#allocation3 + $0x108] sm:$0xf0]
    %v8837 = vld [vmem:[#allocation3 + $0x110] sm:$0xf0]
    %v8838 = vld [vmem:[#allocation3 + $0x118] sm:$0xf0]
    %s8839 = scalar_lea.vmem [#allocation9], 1104
    %v8840 = vld [vmem:[%s8839] sm:$0xff]
    %v8841 = vld [vmem:[%s8839 + $0x8] sm:$0xf]
    %v8842 = vld [vmem:[%s8839 + $0xc] sm:$0xff]
    %v8843 = vld [vmem:[%s8839 + $0x14] sm:$0xf]
    %v8844 = vld [vmem:[%s8839 + $0x18] sm:$0xff]
    %v8845 = vld [vmem:[%s8839 + $0x20] sm:$0xf]
    %v8846 = vld [vmem:[%s8839 + $0x24] sm:$0xff]
    %v8847 = vld [vmem:[%s8839 + $0x2c] sm:$0xf]
    %v8851 = vrot.slane %v8836, 4
    %v8852 = vrot.slane %v8837, 4
    %v8853 = vrot.slane %v8838, 4
    %v8865 = vunpack.c.l.b16 %v8840
    %v8866 = vunpack.c.h.b16 %v8840
    %v8867 = vunpack.c.l.b16 %v8841
    %v8868 = vunpack.c.l.b16 %v8842
    %v8869 = vunpack.c.h.b16 %v8842
    %v8870 = vunpack.c.l.b16 %v8843
    %v8871 = vunpack.c.l.b16 %v8844
    %v8872 = vunpack.c.h.b16 %v8844
    %v8873 = vunpack.c.l.b16 %v8845
    %v8874 = vunpack.c.l.b16 %v8846
    %v8875 = vunpack.c.h.b16 %v8846
    %v8876 = vunpack.c.l.b16 %v8847
    %v8877 = vpack.c.b16 %v8868, %v8865
    %v8878 = vpack.c.b16 %v8869, %v8866
    %v8879 = vpack.c.b16 %v8870, %v8867
    %v8880 = vpack.c.b16 %v8874, %v8871
    %v8881 = vpack.c.b16 %v8875, %v8872
    %v8882 = vpack.c.b16 %v8876, %v8873
    %8889 = vmatprep.subr.bf16.mxu0 %v8878
    %8890 = vmatpush1.bf16.xpose.msra.mxu0 %v8877
    %8891 = vmatprep.subr.bf16.mxu0 %v8881
    %8892 = vmatpush1.bf16.xpose.msra.mxu0 %v8880
    %8893 = vmatprep.subr.bf16.mxu0 0
    %8894 = vmatpush1.bf16.xpose.msra.mxu0 0
    %8895 = vmatprep.subr.bf16.mxu0 0
    %8896 = vmatpush1.bf16.xpose.msra.mxu0 0
    %8897 = vmatprep.subr.bf16.mxu0 0
    %8898 = vmatpush1.bf16.xpose.msra.mxu0 0
    %8899 = vmatprep.subr.bf16.mxu0 0
    %8900 = vmatpush1.bf16.xpose.msra.mxu0 0
    %8901 = vmatprep.subr.bf16.mxu0 0
    %8902 = vmatpush1.bf16.xpose.msra.mxu0 0
    %8903 = vmatprep.subr.bf16.mxu0 0
    %8904 = vmatpush1.bf16.xpose.msra.mxu0 0
    %8905 = vmatprep.subr.bf16.mxu0 0
    %8906 = vmatpush1.bf16.xpose.msra.mxu0 0
    %8907 = vmatprep.subr.bf16.mxu0 0
    %8908 = vmatpush1.bf16.xpose.msra.mxu0 0
    %8909 = vmatprep.subr.bf16.mxu0 0
    %8910 = vmatpush1.bf16.xpose.msra.mxu0 0
    %8911 = vmatprep.subr.bf16.mxu0 0
    %8912 = vmatpush1.bf16.xpose.msra.mxu0 0
    %8913 = vmatprep.subr.bf16.mxu0 0
    %8914 = vmatpush1.bf16.xpose.msra.mxu0 0
    %8915 = vmatprep.subr.bf16.mxu0 0
    %8916 = vmatpush1.bf16.xpose.msra.mxu0 0
    %8917 = vmatprep.subr.bf16.mxu0 0
    %8918 = vmatpush1.bf16.xpose.msra.mxu0 0
    %8919 = vmatprep.subr.bf16.mxu0 0
    %8920 = vmatpush1.bf16.xpose.msra.mxu0 0
    %8921 = vmatprep.mubr.bf16.mxu0 %v8852
    %8922 = vmatmul.mubr.bf16.gmra.mrb[0].mxu0 %v8851
    %v8923 = vpop.f32.mrb[0].mxu0
    %v8924 = vadd.f32 0.0, %v8923
    %v8925 = vpop.f32.mrb[0].mxu0
    %v8926 = vpop.f32.mrb[0].mxu0
    %v8927 = vpop.f32.mrb[0].mxu0
    %8928 = vdwg.mxu0
    %8929 = vmatprep.subr.bf16.mxu0 0
    %8930 = vmatpush1.bf16.xpose.msra.mxu0 %v8879
    %8931 = vmatprep.subr.bf16.mxu0 0
    %8932 = vmatpush1.bf16.xpose.msra.mxu0 %v8882
    %8933 = vmatprep.subr.bf16.mxu0 0
    %8934 = vmatpush1.bf16.xpose.msra.mxu0 0
    %8935 = vmatprep.subr.bf16.mxu0 0
    %8936 = vmatpush1.bf16.xpose.msra.mxu0 0
    %8937 = vmatprep.subr.bf16.mxu0 0
    %8938 = vmatpush1.bf16.xpose.msra.mxu0 0
    %8939 = vmatprep.subr.bf16.mxu0 0
    %8940 = vmatpush1.bf16.xpose.msra.mxu0 0
    %8941 = vmatprep.subr.bf16.mxu0 0
    %8942 = vmatpush1.bf16.xpose.msra.mxu0 0
    %8943 = vmatprep.subr.bf16.mxu0 0
    %8944 = vmatpush1.bf16.xpose.msra.mxu0 0
    %8945 = vmatprep.subr.bf16.mxu0 0
    %8946 = vmatpush1.bf16.xpose.msra.mxu0 0
    %8947 = vmatprep.subr.bf16.mxu0 0
    %8948 = vmatpush1.bf16.xpose.msra.mxu0 0
    %8949 = vmatprep.subr.bf16.mxu0 0
    %8950 = vmatpush1.bf16.xpose.msra.mxu0 0
    %8951 = vmatprep.subr.bf16.mxu0 0
    %8952 = vmatpush1.bf16.xpose.msra.mxu0 0
    %8953 = vmatprep.subr.bf16.mxu0 0
    %8954 = vmatpush1.bf16.xpose.msra.mxu0 0
    %8955 = vmatprep.subr.bf16.mxu0 0
    %8956 = vmatpush1.bf16.xpose.msra.mxu0 0
    %8957 = vmatprep.subr.bf16.mxu0 0
    %8958 = vmatpush1.bf16.xpose.msra.mxu0 0
    %8959 = vmatprep.subr.bf16.mxu0 0
    %8960 = vmatpush1.bf16.xpose.msra.mxu0 0
    %8961 = vmatprep.mubr.bf16.mxu0 0
    %8962 = vmatmul.mubr.bf16.gmra.mrb[0].mxu0 %v8853
    %v8963 = vpop.f32.mrb[0].mxu0
    %v8964 = vadd.f32 %v8924, %v8963
    %v8965 = vpop.f32.mrb[0].mxu0
    %v8966 = vpop.f32.mrb[0].mxu0
    %v8967 = vpop.f32.mrb[0].mxu0
    %8968 = vdwg.mxu0
    %v8969 = vadd.f32 %v8835, %v8964
    %v8970 = vld [vmem:[%s6] sm:$0x1]
    %v8972 = vlaneseq
    %v8973 = vshrl.u32 %v8972, 7
    %v8974 = vsub.s32 0, %v8973
    %v8975 = vrot.slane %v8970, %v8974
    %v8977 = vadd.f32 %v8969, %v8975
    %v8978 = vmax.f32 %v8977, 0.0
    %v8979 = vld [vmem:[%s9] sm:$0xff]
    %v8980 = vmul.f32 %v8978, %v8979
    %v8981 = vpack.c.bf16 %v8980, %v8980
    %v8982 = vld [vmem:[%s7] sm:$0xf]
    %v8983 = vld [vmem:[%s7 + $0x4] sm:$0xf]
    %v8984 = vld [vmem:[%s7 + $0x8] sm:$0xf]
    %v8985 = vld [vmem:[%s7 + $0xc] sm:$0xf]
    %v8986 = vld [vmem:[%s8] sm:$0x1]
    %v8988 = vlaneseq
    %v8989 = vshrl.u32 %v8988, 7
    %v8990 = vsub.s32 0, %v8989
    %v8991 = vrot.slane %v8986, %v8990
    %v8997 = vunpack.c.l.b16 %v8982
    %v8998 = vunpack.c.l.b16 %v8983
    %v8999 = vunpack.c.l.b16 %v8984
    %v9000 = vunpack.c.l.b16 %v8985
    %v9001 = vpack.c.b16 %v8998, %v8997
    %v9002 = vpack.c.b16 %v9000, %v8999
    %v9006 = vsel %vm1932, %v8981, 0
    %9008 = vmatprep.subr.bf16.mxu0 0
    %9009 = vmatpush1.bf16.msra.mxu0 %v9001
    %9010 = vmatprep.subr.bf16.mxu0 0
    %9011 = vmatpush1.bf16.msra.mxu0 %v9002
    %9012 = vmatprep.subr.bf16.mxu0 0
    %9013 = vmatpush1.bf16.msra.mxu0 0
    %9014 = vmatprep.subr.bf16.mxu0 0
    %9015 = vmatpush1.bf16.msra.mxu0 0
    %9016 = vmatprep.subr.bf16.mxu0 0
    %9017 = vmatpush1.bf16.msra.mxu0 0
    %9018 = vmatprep.subr.bf16.mxu0 0
    %9019 = vmatpush1.bf16.msra.mxu0 0
    %9020 = vmatprep.subr.bf16.mxu0 0
    %9021 = vmatpush1.bf16.msra.mxu0 0
    %9022 = vmatprep.subr.bf16.mxu0 0
    %9023 = vmatpush1.bf16.msra.mxu0 0
    %9024 = vmatprep.subr.bf16.mxu0 0
    %9025 = vmatpush1.bf16.msra.mxu0 0
    %9026 = vmatprep.subr.bf16.mxu0 0
    %9027 = vmatpush1.bf16.msra.mxu0 0
    %9028 = vmatprep.subr.bf16.mxu0 0
    %9029 = vmatpush1.bf16.msra.mxu0 0
    %9030 = vmatprep.subr.bf16.mxu0 0
    %9031 = vmatpush1.bf16.msra.mxu0 0
    %9032 = vmatprep.subr.bf16.mxu0 0
    %9033 = vmatpush1.bf16.msra.mxu0 0
    %9034 = vmatprep.subr.bf16.mxu0 0
    %9035 = vmatpush1.bf16.msra.mxu0 0
    %9036 = vmatprep.subr.bf16.mxu0 0
    %9037 = vmatpush1.bf16.msra.mxu0 0
    %9038 = vmatprep.subr.bf16.mxu0 0
    %9039 = vmatpush1.bf16.msra.mxu0 0
    %9040 = vmatprep.mubr.bf16.mxu0 0
    %9041 = vmatmul.mubr.bf16.gmra.mrb[0].mxu0 %v9006
    %v9042 = vpop.f32.mrb[0].mxu0
    %v9043 = vadd.f32 %v8991, %v9042
    %v9044 = vpop.f32.mrb[0].mxu0
    %v9045 = vpop.f32.mrb[0].mxu0
    %v9046 = vpop.f32.mrb[0].mxu0
    %9047 = vdwg.mxu0
    %vm9048 = vcmask 80896
    %v9049 = vsel %vm9048, %v9043, -inf
    %9050 = vmax.xlane.f32.xlu0 %v9049
    %v9051 = vpop.xlane.xlu0 %9050
    %v9052 = vsub.f32 %v9043, %v9051
    %v9053 = vmul.f32 %v9052, 1.442695
    %v9054 = vpow.pop %v9053
    %v9055 = vsel %vm9048, %v9054, 0.0
    %9056 = vadd.xlane.f32.xlu0 %v9055
    %v9057 = vpop.xlane.xlu0 %9056
    %v9058 = vlog2.pop %v9057
    %v9059 = vmul.f32 %v9058, 0.6931472
    %v9060 = vsub.f32 %v9052, %v9059
    %9061 = vst.msk [vmem:[#allocation10] sm:$0xff] %vm9048, %v9060
    // Predicated region
    $region54: #{tpu_custom_call.1} parent=1 // pred_check
      _
    $region55: #{tpu_custom_call.1} parent=1 // pred_check_branch
      %9063 = sbr.rel (0) target = $region57
    $region56: #{tpu_custom_call.1} parent=1 // pred_region
      %s9065 = ssub.s32 128, 128
      %9066 = vsyncadd [#allocation6], %s9065
      %s9068 = sshll.u32 [#allocation10], 4
      %s9069 = int_to_ptr.vmem [resolvable:$true] %s9068
      %9071 = dma.vmem_to_hbm [thread:$0]  %s9069, 128, %s10, [#allocation6]
    $region57: #{tpu_custom_call.1} parent=1 // pred_fallthru
      _
    // Predicated region
    $region58: #{tpu_custom_call.1} parent=1 // pred_check
      _
    $region59: #{tpu_custom_call.1} parent=1 // pred_check_branch
      %9073 = sbr.rel (0) target = $region61
    $region60: #{tpu_custom_call.1} parent=1 // pred_region
      %9074 = dma.done [#allocation6], 128
    $region61: #{tpu_custom_call.1} parent=1 // pred_fallthru
      _
    %9075 = vsyncpa [#allocation5], 1
    %9076 = vsyncpa [#allocation8], 1
    %9077 = vsyncpa [#allocation6], 1

</llo_original>
